<compile_context>
chip_gen: v6e
topology: v6e:2x2x1
jax: 0.10.0
libtpu: 0.0.40
codegen_flags: <defaults>
</compile_context>

<pallas_src>
import math
from functools import partial

import jax
import jax.numpy as jnp
from jax.experimental import pallas as pl
from jax.experimental.pallas import tpu as pltpu

LANES = 128


def _round_up(x, m):
    return (x + m - 1) // m * m


def _mrdm1_kernel(x_ref, w1_ref, w2_ref, w3_ref, wt_ref, b_ref, mask_ref,
                  o_ref, ypad_ref, *, P, Wp, M, cin, cout):
    # x_ref:    (P_ext, 128) bf16  flattened, spatially padded input; channels
    #                              replicated along lanes with period `cin`.
    # w1_ref:   (128, 128)   bf16  conv1 tap-packed weights (row = tap*cin + i).
    # w2_ref:   (128, 128)   bf16  conv2 tap-packed weights (row = tap*cout + i).
    # w3_ref:   (128, 128)   bf16  conv3 tap-packed weights.
    # wt_ref:   (128, 128)   bf16  conv4 + BN-folded conv5 tail weights.
    # b_ref:    (4, 128)     f32   lane-replicated biases [b1, b2, b3, b_tail].
    # mask_ref: (P, 1)       f32   1.0 on interior pixels of the padded grid.
    # o_ref:    (P, 128)     bf16  output (real channels in lanes [0, cout)).
    # ypad_ref: (P_ext, 128) bf16  scratch: zero-padded intermediate activation.
    f32, bf16 = jnp.float32, jnp.bfloat16
    taps = tuple(dh * Wp + dw for dh in (-1, 0, 1) for dw in (-1, 0, 1))
    lane = jax.lax.broadcasted_iota(jnp.int32, (1, LANES), 1)

    mask = mask_ref[...]                        # (P, 1)
    b = b_ref[...]                              # (4, 128)

    def im2col(slab, cg):
        # Pack the 9 sublane-shifted slabs of a lane-replicated source into the
        # 128 lanes of a single K block: lane group [t*cg, (t+1)*cg) takes tap
        # t.  Sublane-contiguous loads + lane-masked selects only; K stays 128.
        acc = slab(taps[0])
        for t in range(1, 9):
            acc = jnp.where(lane >= t * cg, slab(taps[t]), acc)
        return acc                              # (P, 128) bf16

    x_slab = lambda s: x_ref[pl.ds(M + s, P), :]
    y_slab = lambda s: ypad_ref[pl.ds(M + s, P), :]

    # Zero the scratch margins (cheap; done every step so it is safe under any
    # megacore partitioning of the batch grid axis).
    zeros_m = jnp.zeros((M, LANES), bf16)
    ypad_ref[pl.ds(0, M), :] = zeros_m
    ypad_ref[pl.ds(M + P, M), :] = zeros_m

    # conv1 (3x3, pad=1): one (P,128)x(128,128) MXU matmul, f32 accumulation.
    y1 = jnp.dot(im2col(x_slab, cin), w1_ref[...], preferred_element_type=f32)
    y1b = ((y1 + b[0:1, :]) * mask).astype(bf16)    # bias + zero padded ring
    ypad_ref[pl.ds(M, P), :] = y1b                  # scratch-based re-pad

    # conv2
    y2 = jnp.dot(im2col(y_slab, cout), w2_ref[...], preferred_element_type=f32)
    y2b = ((y2 + b[1:2, :]) * mask).astype(bf16)
    ypad_ref[pl.ds(M, P), :] = y2b

    # conv3 (ring junk is sliced off outside the kernel)
    y3 = jnp.dot(im2col(y_slab, cout), w3_ref[...], preferred_element_type=f32)
    y3b = (y3 + b[2:3, :]).astype(bf16)

    # conv4 (1x1) + BatchNorm + conv5 (1x1) + residual fused into one tail
    # matmul over the never-materialized concat([x, x1, x2, x3]).  Because all
    # operands are lane-replicated with their own period, the concat is just
    # three lane-masked selects (no lane shifts).
    xc = x_ref[pl.ds(M, P), :]
    cat = jnp.where(lane < cin, xc,
          jnp.where(lane < cin + cout, y1b,
          jnp.where(lane < cin + 2 * cout, y2b, y3b)))
    out = jnp.dot(cat, wt_ref[...], preferred_element_type=f32) + b[3:4, :]
    o_ref[...] = jnp.maximum(out, 0.0).astype(o_ref.dtype)


def mrdm1_forward(x, w1, b1, w2, b2, w3, b3, w4, b4, w5, b5,
                  bn_gamma, bn_beta, bn_mean, bn_var, eps=1e-5):
    """x: (N, Cin, H, W) f32.  Conv weights in PyTorch OIHW layout.  Returns NCHW f32."""
    N, Cin, H, W = x.shape
    Cout = w1.shape[0]
    # Small-channel tap-packed layout (all 9 taps share one 128-lane K block).
    # TODO(synk): fall back to the 128-padded per-tap-accumulate layout when
    #             9*Cin > 128 or 9*Cout > 128.
    assert 9 * Cin <= LANES and 9 * Cout <= LANES and Cin + 3 * Cout <= LANES

    Hp, Wp = H + 2, W + 2
    P = Hp * Wp                               # flattened padded grid
    M = _round_up(Wp + 1, 8)                  # flat-row margin for the 9 tap slices
    P_ext = P + 2 * M

    f32, bf16 = jnp.float32, jnp.bfloat16

    def rep_lanes(a, c):
        # Replicate the last axis (size c) along lanes up to 128.
        reps = -(-LANES // c)
        return jnp.tile(a, (1,) * (a.ndim - 1) + (reps,))[..., :LANES]

    # ---- activations: NCHW -> spatially padded NHWC, flattened, channels
    #      replicated along lanes with period Cin, bf16 ----
    x_nhwc = jnp.transpose(x, (0, 2, 3, 1))
    x_nhwc = jnp.pad(x_nhwc, ((0, 0), (1, 1), (1, 1), (0, 0)))
    x_rep = rep_lanes(x_nhwc.reshape(N, P, Cin), Cin)
    x_rep = jnp.pad(x_rep, ((0, 0), (M, M), (0, 0))).astype(bf16)

    # ---- 3x3 weights: tap-packed K (row = tap*c + i); output columns
    #      replicated with period Cout so conv outputs are born lane-replicated ----
    def conv3x3_packed(w, c):
        t = jnp.transpose(w, (2, 3, 1, 0)).reshape(9 * c, Cout)   # tap = kh*3+kw
        t = rep_lanes(t, Cout)
        return jnp.pad(t, ((0, LANES - 9 * c), (0, 0))).astype(bf16)

    w1m = conv3x3_packed(w1, Cin)
    w2m = conv3x3_packed(w2, Cout)
    w3m = conv3x3_packed(w3, Cout)

    # ---- conv4 + eval-mode BN + conv5 folded into one tail matmul ----
    scale = bn_gamma / jnp.sqrt(bn_var + eps)                     # (3*Cout,)
    shift = bn_beta - bn_mean * scale                             # (3*Cout,)
    w5m = w5.reshape(Cout, 3 * Cout)                              # (Cout, 3*Cout)
    v = (w5m * scale[None, :]).T.reshape(3, Cout, Cout)           # v[j, i, o]
    b_tail = b4 + b5 + w5m @ shift                                # (Cout,)

    wt = jnp.zeros((LANES, Cout), f32)
    wt = wt.at[:Cin].set(w4.reshape(Cout, Cin).T)                 # x group
    for j in range(3):                                            # y1/y2/y3 groups
        g = Cin + j * Cout
        idx = (g + jnp.arange(Cout)) % Cout   # lane l of group j reads y_j[l % Cout]
        wt = wt.at[g:g + Cout].set(v[j][idx])
    wt = jnp.pad(wt, ((0, 0), (0, LANES - Cout))).astype(bf16)

    bias = jnp.stack([rep_lanes(b1, Cout), rep_lanes(b2, Cout),
                      rep_lanes(b3, Cout), rep_lanes(b_tail, Cout)]).astype(f32)

    # interior-pixel mask over the flattened padded grid (tiny: P*4 bytes)
    hp = jnp.arange(P, dtype=jnp.int32) // Wp
    wp = jnp.arange(P, dtype=jnp.int32) % Wp
    mask = (((hp >= 1) & (hp <= H) & (wp >= 1) & (wp <= W))
            .astype(f32).reshape(P, 1))

    kernel = partial(_mrdm1_kernel, P=P, Wp=Wp, M=M, cin=Cin, cout=Cout)

    # Actually-performed MXU work: 4 (P,128)x(128,128) matmuls per image.
    flops = 2 * N * P * LANES * LANES * 4
    bytes_accessed = (x_rep.size * 2
                      + (w1m.size + w2m.size + w3m.size + wt.size) * 2
                      + bias.size * 4 + mask.size * 4
                      + N * P * LANES * 2)

    # Real per-step footprint (double-buffered blocks + weights + scratch) plus
    # generous headroom for f32 temps / Mosaic internals; well under v7x 64 MiB.
    vmem_bytes = (2 * P_ext * LANES * 2 + 2 * P * LANES * 2
                  + 4 * LANES * LANES * 2 + P_ext * LANES * 2
                  + 8 * 1024 * 1024)

    out_flat = pl.pallas_call(
        kernel,
        out_shape=jax.ShapeDtypeStruct((N, P, LANES), bf16),
        grid_spec=pltpu.PrefetchScalarGridSpec(
            num_scalar_prefetch=0,
            grid=(N,),
            in_specs=[
                pl.BlockSpec((None, P_ext, LANES), lambda n: (n, 0, 0)),
                pl.BlockSpec((LANES, LANES), lambda n: (0, 0)),
                pl.BlockSpec((LANES, LANES), lambda n: (0, 0)),
                pl.BlockSpec((LANES, LANES), lambda n: (0, 0)),
                pl.BlockSpec((LANES, LANES), lambda n: (0, 0)),
                pl.BlockSpec((4, LANES), lambda n: (0, 0)),
                pl.BlockSpec((P, 1), lambda n: (0, 0)),
            ],
            out_specs=pl.BlockSpec((None, P, LANES), lambda n: (n, 0, 0)),
            scratch_shapes=[pltpu.VMEM((P_ext, LANES), bf16)],
        ),
        compiler_params=pltpu.CompilerParams(
            dimension_semantics=("parallel",),
            vmem_limit_bytes=min(vmem_bytes, 64 * 1024 * 1024)),
        cost_estimate=pl.CostEstimate(
            flops=flops, transcendentals=0, bytes_accessed=bytes_accessed),
    )(x_rep, w1m, w2m, w3m, wt, bias, mask)

    # flat padded grid -> NCHW interior, real channels only (done in XLA on bf16)
    out = out_flat.reshape(N, Hp, Wp, LANES)[:, 1:1 + H, 1:1 + W, :Cout]
    return jnp.transpose(out, (0, 3, 1, 2)).astype(f32)


def _reference_forward(x, w1, b1, w2, b2, w3, b3, w4, b4, w5, b5,
                       bn_gamma, bn_beta, bn_mean, bn_var, eps=1e-5):
    """Pure-JAX f32 reference mirroring the PyTorch module (eval-mode BN)."""
    def conv(inp, w, b, pad):
        y = jax.lax.conv_general_dilated(
            inp, w, (1, 1), ((pad, pad), (pad, pad)),
            dimension_numbers=("NCHW", "OIHW", "NCHW"))
        return y + b.reshape(1, -1, 1, 1)

    x1 = conv(x, w1, b1, 1)
    x2 = conv(x1, w2, b2, 1)
    x3 = conv(x2, w3, b3, 1)
    x4 = conv(x, w4, b4, 0)
    cat = jnp.concatenate([x1, x2, x3], axis=1)
    sc = (bn_gamma / jnp.sqrt(bn_var + eps)).reshape(1, -1, 1, 1)
    sh = (bn_beta - bn_mean * bn_gamma / jnp.sqrt(bn_var + eps)).reshape(1, -1, 1, 1)
    out3 = conv(cat * sc + sh, w5, b5, 0)
    return jnp.maximum(x4 + out3, 0.0)


if __name__ == "__main__":
    N, Cin, H, W = 2, 4, 16, 16
    Cout = 8

    key = jax.random.PRNGKey(0)
    keys = jax.random.split(key, 16)

    def conv_init(kw_, kb_, cout, cin, k):
        # PyTorch Conv2d default init: U(-1/sqrt(fan_in), 1/sqrt(fan_in))
        bound = 1.0 / math.sqrt(cin * k * k)
        w = jax.random.uniform(kw_, (cout, cin, k, k), jnp.float32, -bound, bound)
        b = jax.random.uniform(kb_, (cout,), jnp.float32, -bound, bound)
        return w, b

    w1, b1 = conv_init(keys[0], keys[1], Cout, Cin, 3)
    w2, b2 = conv_init(keys[2], keys[3], Cout, Cout, 3)
    w3, b3 = conv_init(keys[4], keys[5], Cout, Cout, 3)
    w4, b4 = conv_init(keys[6], keys[7], Cout, Cin, 1)
    w5, b5 = conv_init(keys[8], keys[9], Cout, 3 * Cout, 1)

    bn_gamma = 1.0 + 0.1 * jax.random.normal(keys[10], (3 * Cout,), jnp.float32)
    bn_beta = 0.1 * jax.random.normal(keys[11], (3 * Cout,), jnp.float32)
    bn_mean = 0.1 * jax.random.normal(keys[12], (3 * Cout,), jnp.float32)
    bn_var = jax.random.uniform(keys[13], (3 * Cout,), jnp.float32, 0.5, 1.5)

    x = jax.random.normal(keys[14], (N, Cin, H, W), dtype=jnp.float32)

    out = mrdm1_forward(x, w1, b1, w2, b2, w3, b3, w4, b4, w5, b5,
                        bn_gamma, bn_beta, bn_mean, bn_var)
    out = jax.block_until_ready(out)

    ref = _reference_forward(x, w1, b1, w2, b2, w3, b3, w4, b4, w5, b5,
                             bn_gamma, bn_beta, bn_mean, bn_var)
    assert out.shape == (N, Cout, H, W), out.shape
    # bf16 MXU inputs / bf16 output through a 3-deep conv chain -> 5e-2 slack
    assert jnp.allclose(out, ref, rtol=5e-2, atol=5e-2), \
        float(jnp.max(jnp.abs(out - ref)))

    print("KERNEL_OK")
</pallas_src>

<mosaic_0001>
module attributes {stable_mosaic.version = 11 : i64} {
  func.func @_mrdm1_kernel(%arg0: i32, %arg1: memref<1x372x128xbf16, #tpu.memory_space<vmem>>, %arg2: memref<128x128xbf16, #tpu.memory_space<vmem>>, %arg3: memref<128x128xbf16, #tpu.memory_space<vmem>>, %arg4: memref<128x128xbf16, #tpu.memory_space<vmem>>, %arg5: memref<128x128xbf16, #tpu.memory_space<vmem>>, %arg6: memref<4x128xf32, #tpu.memory_space<vmem>>, %arg7: memref<324x1xf32, #tpu.memory_space<vmem>>, %arg8: memref<1x324x128xbf16, #tpu.memory_space<vmem>>, %arg9: memref<372x128xbf16, #tpu.memory_space<vmem>>) attributes {dimension_semantics = [#tpu.dimension_semantics<parallel>], iteration_bounds = array<i64: 2>, scalar_prefetch = 0 : i64, scratch_operands = 1 : i64, tpu.core_type = #tpu.core_type<tc>, window_params = [{transform_indices = @transform_0, window_bounds = array<i64: 1, 372, 128>}, {pipeline_mode = #tpu.pipeline_mode<synchronous>, transform_indices = @transform_1, window_bounds = array<i64: 128, 128>}, {pipeline_mode = #tpu.pipeline_mode<synchronous>, transform_indices = @transform_2, window_bounds = array<i64: 128, 128>}, {pipeline_mode = #tpu.pipeline_mode<synchronous>, transform_indices = @transform_3, window_bounds = array<i64: 128, 128>}, {pipeline_mode = #tpu.pipeline_mode<synchronous>, transform_indices = @transform_4, window_bounds = array<i64: 128, 128>}, {pipeline_mode = #tpu.pipeline_mode<synchronous>, transform_indices = @transform_5, window_bounds = array<i64: 4, 128>}, {pipeline_mode = #tpu.pipeline_mode<synchronous>, transform_indices = @transform_6, window_bounds = array<i64: 324, 1>}, {transform_indices = @transform_7, window_bounds = array<i64: 1, 324, 128>}]} {
    %0 = tpu.iota {dimensions = array<i32: 1>} : vector<1x128xi32>
    %c0 = arith.constant 0 : index
    %c0_0 = arith.constant 0 : index
    %1 = vector.load %arg7[%c0, %c0_0] : memref<324x1xf32, #tpu.memory_space<vmem>>, vector<324x1xf32>
    %c0_1 = arith.constant 0 : index
    %c0_2 = arith.constant 0 : index
    %2 = vector.load %arg6[%c0_1, %c0_2] : memref<4x128xf32, #tpu.memory_space<vmem>>, vector<4x128xf32>
    %cst = arith.constant 0.000000e+00 : bf16
    %3 = vector.broadcast %cst : bf16 to vector<24x128xbf16>
    %c0_3 = arith.constant 0 : index
    %c0_4 = arith.constant 0 : index
    %4 = vector.load %arg9[%c0_3, %c0_4] : memref<372x128xbf16, #tpu.memory_space<vmem>>, vector<24x128xbf16>
    tpu.vector_store %arg9[%c0_3, %c0_4], %3 {strides = array<i32>} : memref<372x128xbf16, #tpu.memory_space<vmem>>, vector<24x128xbf16>,
    %c348 = arith.constant 348 : index
    %c0_5 = arith.constant 0 : index
    %5 = vector.load %arg9[%c348, %c0_5] : memref<372x128xbf16, #tpu.memory_space<vmem>>, vector<24x128xbf16>
    tpu.vector_store %arg9[%c348, %c0_5], %3 {strides = array<i32>} : memref<372x128xbf16, #tpu.memory_space<vmem>>, vector<24x128xbf16>,
    %c0_6 = arith.constant 0 : index
    %c5 = arith.constant 5 : index
    %c0_7 = arith.constant 0 : index
    %6 = vector.load %arg1[%c0_6, %c5, %c0_7] : memref<1x372x128xbf16, #tpu.memory_space<vmem>>, vector<1x324x128xbf16>
    %7 = vector.shape_cast %6 : vector<1x324x128xbf16> to vector<324x128xbf16>
    %c4_i32 = arith.constant 4 : i32
    %8 = vector.broadcast %c4_i32 : i32 to vector<1x128xi32>
    %9 = arith.cmpi sge, %0, %8 : vector<1x128xi32>
    %c0_8 = arith.constant 0 : index
    %c6 = arith.constant 6 : index
    %c0_9 = arith.constant 0 : index
    %10 = vector.load %arg1[%c0_8, %c6, %c0_9] : memref<1x372x128xbf16, #tpu.memory_space<vmem>>, vector<1x324x128xbf16>
    %11 = vector.shape_cast %10 : vector<1x324x128xbf16> to vector<324x128xbf16>
    %12 = vector.shape_cast %9 : vector<1x128xi1> to vector<1x128xi1>
    %13 = vector.broadcast %12 : vector<1x128xi1> to vector<324x128xi1>
    %14 = arith.select %13, %11, %7 : vector<324x128xi1>, vector<324x128xbf16>
    %c8_i32 = arith.constant 8 : i32
    %15 = vector.broadcast %c8_i32 : i32 to vector<1x128xi32>
    %16 = arith.cmpi sge, %0, %15 : vector<1x128xi32>
    %c0_10 = arith.constant 0 : index
    %c7 = arith.constant 7 : index
    %c0_11 = arith.constant 0 : index
    %17 = vector.load %arg1[%c0_10, %c7, %c0_11] : memref<1x372x128xbf16, #tpu.memory_space<vmem>>, vector<1x324x128xbf16>
    %18 = vector.shape_cast %17 : vector<1x324x128xbf16> to vector<324x128xbf16>
    %19 = vector.shape_cast %16 : vector<1x128xi1> to vector<1x128xi1>
    %20 = vector.broadcast %19 : vector<1x128xi1> to vector<324x128xi1>
    %21 = arith.select %20, %18, %14 : vector<324x128xi1>, vector<324x128xbf16>
    %c12_i32 = arith.constant 12 : i32
    %22 = vector.broadcast %c12_i32 : i32 to vector<1x128xi32>
    %23 = arith.cmpi sge, %0, %22 : vector<1x128xi32>
    %c0_12 = arith.constant 0 : index
    %c23 = arith.constant 23 : index
    %c0_13 = arith.constant 0 : index
    %24 = vector.load %arg1[%c0_12, %c23, %c0_13] : memref<1x372x128xbf16, #tpu.memory_space<vmem>>, vector<1x324x128xbf16>
    %25 = vector.shape_cast %24 : vector<1x324x128xbf16> to vector<324x128xbf16>
    %26 = vector.shape_cast %23 : vector<1x128xi1> to vector<1x128xi1>
    %27 = vector.broadcast %26 : vector<1x128xi1> to vector<324x128xi1>
    %28 = arith.select %27, %25, %21 : vector<324x128xi1>, vector<324x128xbf16>
    %c16_i32 = arith.constant 16 : i32
    %29 = vector.broadcast %c16_i32 : i32 to vector<1x128xi32>
    %30 = arith.cmpi sge, %0, %29 : vector<1x128xi32>
    %c0_14 = arith.constant 0 : index
    %c24 = arith.constant 24 : index
    %c0_15 = arith.constant 0 : index
    %31 = vector.load %arg1[%c0_14, %c24, %c0_15] : memref<1x372x128xbf16, #tpu.memory_space<vmem>>, vector<1x324x128xbf16>
    %32 = vector.shape_cast %31 : vector<1x324x128xbf16> to vector<324x128xbf16>
    %33 = vector.shape_cast %30 : vector<1x128xi1> to vector<1x128xi1>
    %34 = vector.broadcast %33 : vector<1x128xi1> to vector<324x128xi1>
    %35 = arith.select %34, %32, %28 : vector<324x128xi1>, vector<324x128xbf16>
    %c20_i32 = arith.constant 20 : i32
    %36 = vector.broadcast %c20_i32 : i32 to vector<1x128xi32>
    %37 = arith.cmpi sge, %0, %36 : vector<1x128xi32>
    %c0_16 = arith.constant 0 : index
    %c25 = arith.constant 25 : index
    %c0_17 = arith.constant 0 : index
    %38 = vector.load %arg1[%c0_16, %c25, %c0_17] : memref<1x372x128xbf16, #tpu.memory_space<vmem>>, vector<1x324x128xbf16>
    %39 = vector.shape_cast %38 : vector<1x324x128xbf16> to vector<324x128xbf16>
    %40 = vector.shape_cast %37 : vector<1x128xi1> to vector<1x128xi1>
    %41 = vector.broadcast %40 : vector<1x128xi1> to vector<324x128xi1>
    %42 = arith.select %41, %39, %35 : vector<324x128xi1>, vector<324x128xbf16>
    %c24_i32 = arith.constant 24 : i32
    %43 = vector.broadcast %c24_i32 : i32 to vector<1x128xi32>
    %44 = arith.cmpi sge, %0, %43 : vector<1x128xi32>
    %c0_18 = arith.constant 0 : index
    %c41 = arith.constant 41 : index
    %c0_19 = arith.constant 0 : index
    %45 = vector.load %arg1[%c0_18, %c41, %c0_19] : memref<1x372x128xbf16, #tpu.memory_space<vmem>>, vector<1x324x128xbf16>
    %46 = vector.shape_cast %45 : vector<1x324x128xbf16> to vector<324x128xbf16>
    %47 = vector.shape_cast %44 : vector<1x128xi1> to vector<1x128xi1>
    %48 = vector.broadcast %47 : vector<1x128xi1> to vector<324x128xi1>
    %49 = arith.select %48, %46, %42 : vector<324x128xi1>, vector<324x128xbf16>
    %c28_i32 = arith.constant 28 : i32
    %50 = vector.broadcast %c28_i32 : i32 to vector<1x128xi32>
    %51 = arith.cmpi sge, %0, %50 : vector<1x128xi32>
    %c0_20 = arith.constant 0 : index
    %c42 = arith.constant 42 : index
    %c0_21 = arith.constant 0 : index
    %52 = vector.load %arg1[%c0_20, %c42, %c0_21] : memref<1x372x128xbf16, #tpu.memory_space<vmem>>, vector<1x324x128xbf16>
    %53 = vector.shape_cast %52 : vector<1x324x128xbf16> to vector<324x128xbf16>
    %54 = vector.shape_cast %51 : vector<1x128xi1> to vector<1x128xi1>
    %55 = vector.broadcast %54 : vector<1x128xi1> to vector<324x128xi1>
    %56 = arith.select %55, %53, %49 : vector<324x128xi1>, vector<324x128xbf16>
    %c32_i32 = arith.constant 32 : i32
    %57 = vector.broadcast %c32_i32 : i32 to vector<1x128xi32>
    %58 = arith.cmpi sge, %0, %57 : vector<1x128xi32>
    %c0_22 = arith.constant 0 : index
    %c43 = arith.constant 43 : index
    %c0_23 = arith.constant 0 : index
    %59 = vector.load %arg1[%c0_22, %c43, %c0_23] : memref<1x372x128xbf16, #tpu.memory_space<vmem>>, vector<1x324x128xbf16>
    %60 = vector.shape_cast %59 : vector<1x324x128xbf16> to vector<324x128xbf16>
    %61 = vector.shape_cast %58 : vector<1x128xi1> to vector<1x128xi1>
    %62 = vector.broadcast %61 : vector<1x128xi1> to vector<324x128xi1>
    %63 = arith.select %62, %60, %56 : vector<324x128xi1>, vector<324x128xbf16>
    %c0_24 = arith.constant 0 : index
    %c0_25 = arith.constant 0 : index
    %64 = vector.load %arg2[%c0_24, %c0_25] : memref<128x128xbf16, #tpu.memory_space<vmem>>, vector<128x128xbf16>
    %cst_26 = arith.constant dense<0.000000e+00> : vector<324x128xf32>
    %65 = tpu.matmul %63, %64, %cst_26 {dimension_numbers = #tpu.dot_dimension_numbers<[1], [0], [0], [1], [0, 0, 1, 1], [], []>} : vector<324x128xbf16>, vector<128x128xbf16>, vector<324x128xf32> -> vector<324x128xf32>
    %66 = vector.extract_strided_slice %2 {offsets = [0, 0], sizes = [1, 128], strides = [1, 1]} : vector<4x128xf32> to vector<1x128xf32>
    %67 = vector.broadcast %66 : vector<1x128xf32> to vector<324x128xf32>
    %68 = arith.addf %65, %67 : vector<324x128xf32>
    %69 = vector.broadcast %1 : vector<324x1xf32> to vector<324x128xf32>
    %70 = arith.mulf %68, %69 : vector<324x128xf32>
    %71 = arith.truncf %70 : vector<324x128xf32> to vector<324x128xbf16>
    %c24_27 = arith.constant 24 : index
    %c0_28 = arith.constant 0 : index
    %72 = vector.load %arg9[%c24_27, %c0_28] : memref<372x128xbf16, #tpu.memory_space<vmem>>, vector<324x128xbf16>
    tpu.vector_store %arg9[%c24_27, %c0_28], %71 {strides = array<i32>} : memref<372x128xbf16, #tpu.memory_space<vmem>>, vector<324x128xbf16>,
    %c5_29 = arith.constant 5 : index
    %c0_30 = arith.constant 0 : index
    %73 = vector.load %arg9[%c5_29, %c0_30] : memref<372x128xbf16, #tpu.memory_space<vmem>>, vector<324x128xbf16>
    %c8_i32_31 = arith.constant 8 : i32
    %74 = vector.broadcast %c8_i32_31 : i32 to vector<1x128xi32>
    %75 = arith.cmpi sge, %0, %74 : vector<1x128xi32>
    %c6_32 = arith.constant 6 : index
    %c0_33 = arith.constant 0 : index
    %76 = vector.load %arg9[%c6_32, %c0_33] : memref<372x128xbf16, #tpu.memory_space<vmem>>, vector<324x128xbf16>
    %77 = vector.shape_cast %75 : vector<1x128xi1> to vector<1x128xi1>
    %78 = vector.broadcast %77 : vector<1x128xi1> to vector<324x128xi1>
    %79 = arith.select %78, %76, %73 : vector<324x128xi1>, vector<324x128xbf16>
    %c16_i32_34 = arith.constant 16 : i32
    %80 = vector.broadcast %c16_i32_34 : i32 to vector<1x128xi32>
    %81 = arith.cmpi sge, %0, %80 : vector<1x128xi32>
    %c7_35 = arith.constant 7 : index
    %c0_36 = arith.constant 0 : index
    %82 = vector.load %arg9[%c7_35, %c0_36] : memref<372x128xbf16, #tpu.memory_space<vmem>>, vector<324x128xbf16>
    %83 = vector.shape_cast %81 : vector<1x128xi1> to vector<1x128xi1>
    %84 = vector.broadcast %83 : vector<1x128xi1> to vector<324x128xi1>
    %85 = arith.select %84, %82, %79 : vector<324x128xi1>, vector<324x128xbf16>
    %c24_i32_37 = arith.constant 24 : i32
    %86 = vector.broadcast %c24_i32_37 : i32 to vector<1x128xi32>
    %87 = arith.cmpi sge, %0, %86 : vector<1x128xi32>
    %c23_38 = arith.constant 23 : index
    %c0_39 = arith.constant 0 : index
    %88 = vector.load %arg9[%c23_38, %c0_39] : memref<372x128xbf16, #tpu.memory_space<vmem>>, vector<324x128xbf16>
    %89 = vector.shape_cast %87 : vector<1x128xi1> to vector<1x128xi1>
    %90 = vector.broadcast %89 : vector<1x128xi1> to vector<324x128xi1>
    %91 = arith.select %90, %88, %85 : vector<324x128xi1>, vector<324x128xbf16>
    %c32_i32_40 = arith.constant 32 : i32
    %92 = vector.broadcast %c32_i32_40 : i32 to vector<1x128xi32>
    %93 = arith.cmpi sge, %0, %92 : vector<1x128xi32>
    %c24_41 = arith.constant 24 : index
    %c0_42 = arith.constant 0 : index
    %94 = vector.load %arg9[%c24_41, %c0_42] : memref<372x128xbf16, #tpu.memory_space<vmem>>, vector<324x128xbf16>
    %95 = vector.shape_cast %93 : vector<1x128xi1> to vector<1x128xi1>
    %96 = vector.broadcast %95 : vector<1x128xi1> to vector<324x128xi1>
    %97 = arith.select %96, %94, %91 : vector<324x128xi1>, vector<324x128xbf16>
    %c40_i32 = arith.constant 40 : i32
    %98 = vector.broadcast %c40_i32 : i32 to vector<1x128xi32>
    %99 = arith.cmpi sge, %0, %98 : vector<1x128xi32>
    %c25_43 = arith.constant 25 : index
    %c0_44 = arith.constant 0 : index
    %100 = vector.load %arg9[%c25_43, %c0_44] : memref<372x128xbf16, #tpu.memory_space<vmem>>, vector<324x128xbf16>
    %101 = vector.shape_cast %99 : vector<1x128xi1> to vector<1x128xi1>
    %102 = vector.broadcast %101 : vector<1x128xi1> to vector<324x128xi1>
    %103 = arith.select %102, %100, %97 : vector<324x128xi1>, vector<324x128xbf16>
    %c48_i32 = arith.constant 48 : i32
    %104 = vector.broadcast %c48_i32 : i32 to vector<1x128xi32>
    %105 = arith.cmpi sge, %0, %104 : vector<1x128xi32>
    %c41_45 = arith.constant 41 : index
    %c0_46 = arith.constant 0 : index
    %106 = vector.load %arg9[%c41_45, %c0_46] : memref<372x128xbf16, #tpu.memory_space<vmem>>, vector<324x128xbf16>
    %107 = vector.shape_cast %105 : vector<1x128xi1> to vector<1x128xi1>
    %108 = vector.broadcast %107 : vector<1x128xi1> to vector<324x128xi1>
    %109 = arith.select %108, %106, %103 : vector<324x128xi1>, vector<324x128xbf16>
    %c56_i32 = arith.constant 56 : i32
    %110 = vector.broadcast %c56_i32 : i32 to vector<1x128xi32>
    %111 = arith.cmpi sge, %0, %110 : vector<1x128xi32>
    %c42_47 = arith.constant 42 : index
    %c0_48 = arith.constant 0 : index
    %112 = vector.load %arg9[%c42_47, %c0_48] : memref<372x128xbf16, #tpu.memory_space<vmem>>, vector<324x128xbf16>
    %113 = vector.shape_cast %111 : vector<1x128xi1> to vector<1x128xi1>
    %114 = vector.broadcast %113 : vector<1x128xi1> to vector<324x128xi1>
    %115 = arith.select %114, %112, %109 : vector<324x128xi1>, vector<324x128xbf16>
    %c64_i32 = arith.constant 64 : i32
    %116 = vector.broadcast %c64_i32 : i32 to vector<1x128xi32>
    %117 = arith.cmpi sge, %0, %116 : vector<1x128xi32>
    %c43_49 = arith.constant 43 : index
    %c0_50 = arith.constant 0 : index
    %118 = vector.load %arg9[%c43_49, %c0_50] : memref<372x128xbf16, #tpu.memory_space<vmem>>, vector<324x128xbf16>
    %119 = vector.shape_cast %117 : vector<1x128xi1> to vector<1x128xi1>
    %120 = vector.broadcast %119 : vector<1x128xi1> to vector<324x128xi1>
    %121 = arith.select %120, %118, %115 : vector<324x128xi1>, vector<324x128xbf16>
    %c0_51 = arith.constant 0 : index
    %c0_52 = arith.constant 0 : index
    %122 = vector.load %arg3[%c0_51, %c0_52] : memref<128x128xbf16, #tpu.memory_space<vmem>>, vector<128x128xbf16>
    %cst_53 = arith.constant dense<0.000000e+00> : vector<324x128xf32>
    %123 = tpu.matmul %121, %122, %cst_53 {dimension_numbers = #tpu.dot_dimension_numbers<[1], [0], [0], [1], [0, 0, 1, 1], [], []>} : vector<324x128xbf16>, vector<128x128xbf16>, vector<324x128xf32> -> vector<324x128xf32>
    %124 = vector.extract_strided_slice %2 {offsets = [1, 0], sizes = [1, 128], strides = [1, 1]} : vector<4x128xf32> to vector<1x128xf32>
    %125 = vector.broadcast %124 : vector<1x128xf32> to vector<324x128xf32>
    %126 = arith.addf %123, %125 : vector<324x128xf32>
    %127 = vector.broadcast %1 : vector<324x1xf32> to vector<324x128xf32>
    %128 = arith.mulf %126, %127 : vector<324x128xf32>
    %129 = arith.truncf %128 : vector<324x128xf32> to vector<324x128xbf16>
    %c24_54 = arith.constant 24 : index
    %c0_55 = arith.constant 0 : index
    %130 = vector.load %arg9[%c24_54, %c0_55] : memref<372x128xbf16, #tpu.memory_space<vmem>>, vector<324x128xbf16>
    tpu.vector_store %arg9[%c24_54, %c0_55], %129 {strides = array<i32>} : memref<372x128xbf16, #tpu.memory_space<vmem>>, vector<324x128xbf16>,
    %c5_56 = arith.constant 5 : index
    %c0_57 = arith.constant 0 : index
    %131 = vector.load %arg9[%c5_56, %c0_57] : memref<372x128xbf16, #tpu.memory_space<vmem>>, vector<324x128xbf16>
    %c8_i32_58 = arith.constant 8 : i32
    %132 = vector.broadcast %c8_i32_58 : i32 to vector<1x128xi32>
    %133 = arith.cmpi sge, %0, %132 : vector<1x128xi32>
    %c6_59 = arith.constant 6 : index
    %c0_60 = arith.constant 0 : index
    %134 = vector.load %arg9[%c6_59, %c0_60] : memref<372x128xbf16, #tpu.memory_space<vmem>>, vector<324x128xbf16>
    %135 = vector.shape_cast %133 : vector<1x128xi1> to vector<1x128xi1>
    %136 = vector.broadcast %135 : vector<1x128xi1> to vector<324x128xi1>
    %137 = arith.select %136, %134, %131 : vector<324x128xi1>, vector<324x128xbf16>
    %c16_i32_61 = arith.constant 16 : i32
    %138 = vector.broadcast %c16_i32_61 : i32 to vector<1x128xi32>
    %139 = arith.cmpi sge, %0, %138 : vector<1x128xi32>
    %c7_62 = arith.constant 7 : index
    %c0_63 = arith.constant 0 : index
    %140 = vector.load %arg9[%c7_62, %c0_63] : memref<372x128xbf16, #tpu.memory_space<vmem>>, vector<324x128xbf16>
    %141 = vector.shape_cast %139 : vector<1x128xi1> to vector<1x128xi1>
    %142 = vector.broadcast %141 : vector<1x128xi1> to vector<324x128xi1>
    %143 = arith.select %142, %140, %137 : vector<324x128xi1>, vector<324x128xbf16>
    %c24_i32_64 = arith.constant 24 : i32
    %144 = vector.broadcast %c24_i32_64 : i32 to vector<1x128xi32>
    %145 = arith.cmpi sge, %0, %144 : vector<1x128xi32>
    %c23_65 = arith.constant 23 : index
    %c0_66 = arith.constant 0 : index
    %146 = vector.load %arg9[%c23_65, %c0_66] : memref<372x128xbf16, #tpu.memory_space<vmem>>, vector<324x128xbf16>
    %147 = vector.shape_cast %145 : vector<1x128xi1> to vector<1x128xi1>
    %148 = vector.broadcast %147 : vector<1x128xi1> to vector<324x128xi1>
    %149 = arith.select %148, %146, %143 : vector<324x128xi1>, vector<324x128xbf16>
    %c32_i32_67 = arith.constant 32 : i32
    %150 = vector.broadcast %c32_i32_67 : i32 to vector<1x128xi32>
    %151 = arith.cmpi sge, %0, %150 : vector<1x128xi32>
    %c24_68 = arith.constant 24 : index
    %c0_69 = arith.constant 0 : index
    %152 = vector.load %arg9[%c24_68, %c0_69] : memref<372x128xbf16, #tpu.memory_space<vmem>>, vector<324x128xbf16>
    %153 = vector.shape_cast %151 : vector<1x128xi1> to vector<1x128xi1>
    %154 = vector.broadcast %153 : vector<1x128xi1> to vector<324x128xi1>
    %155 = arith.select %154, %152, %149 : vector<324x128xi1>, vector<324x128xbf16>
    %c40_i32_70 = arith.constant 40 : i32
    %156 = vector.broadcast %c40_i32_70 : i32 to vector<1x128xi32>
    %157 = arith.cmpi sge, %0, %156 : vector<1x128xi32>
    %c25_71 = arith.constant 25 : index
    %c0_72 = arith.constant 0 : index
    %158 = vector.load %arg9[%c25_71, %c0_72] : memref<372x128xbf16, #tpu.memory_space<vmem>>, vector<324x128xbf16>
    %159 = vector.shape_cast %157 : vector<1x128xi1> to vector<1x128xi1>
    %160 = vector.broadcast %159 : vector<1x128xi1> to vector<324x128xi1>
    %161 = arith.select %160, %158, %155 : vector<324x128xi1>, vector<324x128xbf16>
    %c48_i32_73 = arith.constant 48 : i32
    %162 = vector.broadcast %c48_i32_73 : i32 to vector<1x128xi32>
    %163 = arith.cmpi sge, %0, %162 : vector<1x128xi32>
    %c41_74 = arith.constant 41 : index
    %c0_75 = arith.constant 0 : index
    %164 = vector.load %arg9[%c41_74, %c0_75] : memref<372x128xbf16, #tpu.memory_space<vmem>>, vector<324x128xbf16>
    %165 = vector.shape_cast %163 : vector<1x128xi1> to vector<1x128xi1>
    %166 = vector.broadcast %165 : vector<1x128xi1> to vector<324x128xi1>
    %167 = arith.select %166, %164, %161 : vector<324x128xi1>, vector<324x128xbf16>
    %c56_i32_76 = arith.constant 56 : i32
    %168 = vector.broadcast %c56_i32_76 : i32 to vector<1x128xi32>
    %169 = arith.cmpi sge, %0, %168 : vector<1x128xi32>
    %c42_77 = arith.constant 42 : index
    %c0_78 = arith.constant 0 : index
    %170 = vector.load %arg9[%c42_77, %c0_78] : memref<372x128xbf16, #tpu.memory_space<vmem>>, vector<324x128xbf16>
    %171 = vector.shape_cast %169 : vector<1x128xi1> to vector<1x128xi1>
    %172 = vector.broadcast %171 : vector<1x128xi1> to vector<324x128xi1>
    %173 = arith.select %172, %170, %167 : vector<324x128xi1>, vector<324x128xbf16>
    %c64_i32_79 = arith.constant 64 : i32
    %174 = vector.broadcast %c64_i32_79 : i32 to vector<1x128xi32>
    %175 = arith.cmpi sge, %0, %174 : vector<1x128xi32>
    %c43_80 = arith.constant 43 : index
    %c0_81 = arith.constant 0 : index
    %176 = vector.load %arg9[%c43_80, %c0_81] : memref<372x128xbf16, #tpu.memory_space<vmem>>, vector<324x128xbf16>
    %177 = vector.shape_cast %175 : vector<1x128xi1> to vector<1x128xi1>
    %178 = vector.broadcast %177 : vector<1x128xi1> to vector<324x128xi1>
    %179 = arith.select %178, %176, %173 : vector<324x128xi1>, vector<324x128xbf16>
    %c0_82 = arith.constant 0 : index
    %c0_83 = arith.constant 0 : index
    %180 = vector.load %arg4[%c0_82, %c0_83] : memref<128x128xbf16, #tpu.memory_space<vmem>>, vector<128x128xbf16>
    %cst_84 = arith.constant dense<0.000000e+00> : vector<324x128xf32>
    %181 = tpu.matmul %179, %180, %cst_84 {dimension_numbers = #tpu.dot_dimension_numbers<[1], [0], [0], [1], [0, 0, 1, 1], [], []>} : vector<324x128xbf16>, vector<128x128xbf16>, vector<324x128xf32> -> vector<324x128xf32>
    %182 = vector.extract_strided_slice %2 {offsets = [2, 0], sizes = [1, 128], strides = [1, 1]} : vector<4x128xf32> to vector<1x128xf32>
    %183 = vector.broadcast %182 : vector<1x128xf32> to vector<324x128xf32>
    %184 = arith.addf %181, %183 : vector<324x128xf32>
    %185 = arith.truncf %184 : vector<324x128xf32> to vector<324x128xbf16>
    %c0_85 = arith.constant 0 : index
    %c24_86 = arith.constant 24 : index
    %c0_87 = arith.constant 0 : index
    %186 = vector.load %arg1[%c0_85, %c24_86, %c0_87] : memref<1x372x128xbf16, #tpu.memory_space<vmem>>, vector<1x324x128xbf16>
    %187 = vector.shape_cast %186 : vector<1x324x128xbf16> to vector<324x128xbf16>
    %c4_i32_88 = arith.constant 4 : i32
    %188 = vector.broadcast %c4_i32_88 : i32 to vector<1x128xi32>
    %189 = arith.cmpi slt, %0, %188 : vector<1x128xi32>
    %c12_i32_89 = arith.constant 12 : i32
    %190 = vector.broadcast %c12_i32_89 : i32 to vector<1x128xi32>
    %191 = arith.cmpi slt, %0, %190 : vector<1x128xi32>
    %c20_i32_90 = arith.constant 20 : i32
    %192 = vector.broadcast %c20_i32_90 : i32 to vector<1x128xi32>
    %193 = arith.cmpi slt, %0, %192 : vector<1x128xi32>
    %194 = vector.shape_cast %193 : vector<1x128xi1> to vector<1x128xi1>
    %195 = vector.broadcast %194 : vector<1x128xi1> to vector<324x128xi1>
    %196 = arith.select %195, %129, %185 : vector<324x128xi1>, vector<324x128xbf16>
    %197 = vector.shape_cast %191 : vector<1x128xi1> to vector<1x128xi1>
    %198 = vector.broadcast %197 : vector<1x128xi1> to vector<324x128xi1>
    %199 = arith.select %198, %71, %196 : vector<324x128xi1>, vector<324x128xbf16>
    %200 = vector.shape_cast %189 : vector<1x128xi1> to vector<1x128xi1>
    %201 = vector.broadcast %200 : vector<1x128xi1> to vector<324x128xi1>
    %202 = arith.select %201, %187, %199 : vector<324x128xi1>, vector<324x128xbf16>
    %c0_91 = arith.constant 0 : index
    %c0_92 = arith.constant 0 : index
    %203 = vector.load %arg5[%c0_91, %c0_92] : memref<128x128xbf16, #tpu.memory_space<vmem>>, vector<128x128xbf16>
    %cst_93 = arith.constant dense<0.000000e+00> : vector<324x128xf32>
    %204 = tpu.matmul %202, %203, %cst_93 {dimension_numbers = #tpu.dot_dimension_numbers<[1], [0], [0], [1], [0, 0, 1, 1], [], []>} : vector<324x128xbf16>, vector<128x128xbf16>, vector<324x128xf32> -> vector<324x128xf32>
    %205 = vector.extract_strided_slice %2 {offsets = [3, 0], sizes = [1, 128], strides = [1, 1]} : vector<4x128xf32> to vector<1x128xf32>
    %206 = vector.broadcast %205 : vector<1x128xf32> to vector<324x128xf32>
    %207 = arith.addf %204, %206 : vector<324x128xf32>
    %cst_94 = arith.constant 0.000000e+00 : f32
    %208 = vector.broadcast %cst_94 : f32 to vector<324x128xf32>
    %209 = arith.maximumf %207, %208 : vector<324x128xf32>
    %210 = arith.truncf %209 : vector<324x128xf32> to vector<324x128xbf16>
    %c0_95 = arith.constant 0 : index
    %c0_96 = arith.constant 0 : index
    %c0_97 = arith.constant 0 : index
    %211 = vector.load %arg8[%c0_95, %c0_96, %c0_97] : memref<1x324x128xbf16, #tpu.memory_space<vmem>>, vector<1x324x128xbf16>
    %212 = vector.shape_cast %211 : vector<1x324x128xbf16> to vector<324x128xbf16>
    %213 = vector.shape_cast %210 : vector<324x128xbf16> to vector<1x324x128xbf16>
    tpu.vector_store %arg8[%c0_95, %c0_96, %c0_97], %213 {strides = array<i32>} : memref<1x324x128xbf16, #tpu.memory_space<vmem>>, vector<1x324x128xbf16>,
    return
  }
  func.func @transform_0(%arg0: i32) -> (i32, i32, i32) {
    %c0_i32 = arith.constant 0 : i32
    %c0_i32_0 = arith.constant 0 : i32
    %c0_i32_1 = arith.constant 0 : i32
    return %arg0, %c0_i32, %c0_i32_0 : i32, i32, i32
  }
  func.func @transform_1(%arg0: i32) -> (i32, i32) {
    %c0_i32 = arith.constant 0 : i32
    %c0_i32_0 = arith.constant 0 : i32
    %c0_i32_1 = arith.constant 0 : i32
    return %c0_i32, %c0_i32_0 : i32, i32
  }
  func.func @transform_2(%arg0: i32) -> (i32, i32) {
    %c0_i32 = arith.constant 0 : i32
    %c0_i32_0 = arith.constant 0 : i32
    %c0_i32_1 = arith.constant 0 : i32
    return %c0_i32, %c0_i32_0 : i32, i32
  }
  func.func @transform_3(%arg0: i32) -> (i32, i32) {
    %c0_i32 = arith.constant 0 : i32
    %c0_i32_0 = arith.constant 0 : i32
    %c0_i32_1 = arith.constant 0 : i32
    return %c0_i32, %c0_i32_0 : i32, i32
  }
  func.func @transform_4(%arg0: i32) -> (i32, i32) {
    %c0_i32 = arith.constant 0 : i32
    %c0_i32_0 = arith.constant 0 : i32
    %c0_i32_1 = arith.constant 0 : i32
    return %c0_i32, %c0_i32_0 : i32, i32
  }
  func.func @transform_5(%arg0: i32) -> (i32, i32) {
    %c0_i32 = arith.constant 0 : i32
    %c0_i32_0 = arith.constant 0 : i32
    %c0_i32_1 = arith.constant 0 : i32
    return %c0_i32, %c0_i32_0 : i32, i32
  }
  func.func @transform_6(%arg0: i32) -> (i32, i32) {
    %c0_i32 = arith.constant 0 : i32
    %c0_i32_0 = arith.constant 0 : i32
    %c0_i32_1 = arith.constant 0 : i32
    return %c0_i32, %c0_i32_0 : i32, i32
  }
  func.func @transform_7(%arg0: i32) -> (i32, i32, i32) {
    %c0_i32 = arith.constant 0 : i32
    %c0_i32_0 = arith.constant 0 : i32
    %c0_i32_1 = arith.constant 0 : i32
    return %arg0, %c0_i32, %c0_i32_0 : i32, i32, i32
  }
}

</mosaic_0001>

<llo_original>
// kernel: tpu_custom_call.1
$region0: #{tpu_custom_call.1}
  #allocation0 [shape = 'u32[]', space=smem, size = 0x4, offset = 0x4, fixed_abs, tag = 'smem constant byte address 0x4 - core index']
  #allocation1 [shape = 'u32[144,128]{1,0:T(1,128)}', space=vmem, size = 0x12000, scoped, tag = 'internal scratch']
  #allocation2 [shape = 'bf16[372,128]{1,0:T(8,128)(2,1)}', space=vmem, size = 0x17800, scoped, tag = 'scratch operand']
  %s0 = inlined_call_operand.vmem [shape: bf16[2,372,128], index: 0, kind: input, shape index: {}]
  %s1 = inlined_call_operand.vmem [shape: bf16[128,128], index: 1, kind: input, shape index: {}]
  %s2 = inlined_call_operand.vmem [shape: bf16[128,128], index: 2, kind: input, shape index: {}]
  %s3 = inlined_call_operand.vmem [shape: bf16[128,128], index: 3, kind: input, shape index: {}]
  %s4 = inlined_call_operand.vmem [shape: bf16[128,128], index: 4, kind: input, shape index: {}]
  %s5 = inlined_call_operand.vmem [shape: f32[4,128], index: 5, kind: input, shape index: {}]
  %s6 = inlined_call_operand.vmem [shape: f32[324,1], index: 6, kind: input, shape index: {}]
  %s7 = inlined_call_operand.vmem [shape: bf16[2,324,128], index: 7, kind: output, shape index: {}]
  %s8 = sld [smem:[#allocation0]]
  $region61: #{tpu_custom_call.1} parent=0
    _
  %s10 = ssub.s32 1, %s8
  %s11 = scalar_select 0, %s10, %s8
  loop: start=0, step=1, limit=4
  $region2: #{tpu_custom_call.1} parent=0 // loop_pre_header
    _
  $region3: #{tpu_custom_call.1} parent=0 // loop_header
    %s13 = sphi 0, %s17
    %p14 = scmp.ge.s32.totalorder %s13, 4
    %s23 = sphi 0, %s25
    %s26 = sphi 0, %s23
    %s27 = sphi 0, %s26
    %s43 = sphi 0, %s27
    %s47 = sphi 0, %s47
    %s49 = sphi 0, %s47
    %s50 = sphi 0, %s49
    %s64 = sphi 0, %s50
    %s68 = sphi 0, %s68
    %s70 = sphi 0, %s68
    %s71 = sphi 0, %s70
    %s85 = sphi 0, %s71
    %s89 = sphi 0, %s89
    %s91 = sphi 0, %s89
    %s92 = sphi 0, %s91
    %s106 = sphi 0, %s92
    %s110 = sphi 0, %s110
    %s112 = sphi 0, %s110
    %s113 = sphi 0, %s112
    %s127 = sphi 0, %s113
    %s131 = sphi 0, %s131
    %s133 = sphi 0, %s131
    %s134 = sphi 0, %s133
    %s148 = sphi 0, %s134
    %s152 = sphi 0, %s152
    %s154 = sphi 0, %s152
    %s155 = sphi 0, %s154
    %s169 = sphi 0, %s155
    %s175 = sphi 0, %s177
    %s178 = sphi 0, %s175
    %s179 = sphi 0, %s178
    %s195 = sphi 0, %s179
  $region4: #{tpu_custom_call.1} parent=0 // loop_header_branch
    %16 = sbr.rel (%p14) target = $region8
  $region5: #{tpu_custom_call.1} parent=0 // loop_body
    %s18 = ssub.s32 %s13, 1
    %s19 = ssub.s32 %s13, 2
    %s20 = sadd.s32 %s13, 1
    %s21 = ssub.s32 %s13, %s20
    %p22 = scmp.eq.s32.totalorder %s21, 0
    %s24 = sadd.s32 %s23, 1
    %s25 = scalar_select %p22, %s23, %s24
    %p28 = pneg %p22
    %p29 = scmp.eq.s32.totalorder %s13, 1
    %p30 = por %p28, %p29
    %p31 = scmp.ne.s32.totalorder %s23, %s26
    %p32 = scmp.eq.s32.totalorder %s13, 0
    %p33 = por %p31, %p32
    %p34 = scmp.ne.s32.totalorder %s23, %s26
    %p35 = scmp.eq.s32.totalorder %s18, 1
    %p36 = por %p34, %p35
    %p37 = scmp.ne.s32.totalorder %s26, %s27
    %p38 = scmp.eq.s32.totalorder %s18, 0
    %p39 = por %p37, %p38
    %p40 = scmp.ne.s32.totalorder %s26, %s27
    %p41 = scmp.eq.s32.totalorder %s19, 1
    %p42 = por %p40, %p41
    %p44 = scmp.ne.s32.totalorder %s27, %s43
    %p45 = scmp.eq.s32.totalorder %s19, 0
    %p46 = por %p44, %p45
    %s48 = sadd.s32 %s47, 1
    %p51 = scmp.eq.s32.totalorder %s13, 1
    %p52 = scmp.ne.s32.totalorder %s47, %s49
    %p53 = scmp.eq.s32.totalorder %s13, 0
    %p54 = por %p52, %p53
    %p55 = scmp.ne.s32.totalorder %s47, %s49
    %p56 = scmp.eq.s32.totalorder %s18, 1
    %p57 = por %p55, %p56
    %p58 = scmp.ne.s32.totalorder %s49, %s50
    %p59 = scmp.eq.s32.totalorder %s18, 0
    %p60 = por %p58, %p59
    %p61 = scmp.ne.s32.totalorder %s49, %s50
    %p62 = scmp.eq.s32.totalorder %s19, 1
    %p63 = por %p61, %p62
    %p65 = scmp.ne.s32.totalorder %s50, %s64
    %p66 = scmp.eq.s32.totalorder %s19, 0
    %p67 = por %p65, %p66
    %s69 = sadd.s32 %s68, 1
    %p72 = scmp.eq.s32.totalorder %s13, 1
    %p73 = scmp.ne.s32.totalorder %s68, %s70
    %p74 = scmp.eq.s32.totalorder %s13, 0
    %p75 = por %p73, %p74
    %p76 = scmp.ne.s32.totalorder %s68, %s70
    %p77 = scmp.eq.s32.totalorder %s18, 1
    %p78 = por %p76, %p77
    %p79 = scmp.ne.s32.totalorder %s70, %s71
    %p80 = scmp.eq.s32.totalorder %s18, 0
    %p81 = por %p79, %p80
    %p82 = scmp.ne.s32.totalorder %s70, %s71
    %p83 = scmp.eq.s32.totalorder %s19, 1
    %p84 = por %p82, %p83
    %p86 = scmp.ne.s32.totalorder %s71, %s85
    %p87 = scmp.eq.s32.totalorder %s19, 0
    %p88 = por %p86, %p87
    %s90 = sadd.s32 %s89, 1
    %p93 = scmp.eq.s32.totalorder %s13, 1
    %p94 = scmp.ne.s32.totalorder %s89, %s91
    %p95 = scmp.eq.s32.totalorder %s13, 0
    %p96 = por %p94, %p95
    %p97 = scmp.ne.s32.totalorder %s89, %s91
    %p98 = scmp.eq.s32.totalorder %s18, 1
    %p99 = por %p97, %p98
    %p100 = scmp.ne.s32.totalorder %s91, %s92
    %p101 = scmp.eq.s32.totalorder %s18, 0
    %p102 = por %p100, %p101
    %p103 = scmp.ne.s32.totalorder %s91, %s92
    %p104 = scmp.eq.s32.totalorder %s19, 1
    %p105 = por %p103, %p104
    %p107 = scmp.ne.s32.totalorder %s92, %s106
    %p108 = scmp.eq.s32.totalorder %s19, 0
    %p109 = por %p107, %p108
    %s111 = sadd.s32 %s110, 1
    %p114 = scmp.eq.s32.totalorder %s13, 1
    %p115 = scmp.ne.s32.totalorder %s110, %s112
    %p116 = scmp.eq.s32.totalorder %s13, 0
    %p117 = por %p115, %p116
    %p118 = scmp.ne.s32.totalorder %s110, %s112
    %p119 = scmp.eq.s32.totalorder %s18, 1
    %p120 = por %p118, %p119
    %p121 = scmp.ne.s32.totalorder %s112, %s113
    %p122 = scmp.eq.s32.totalorder %s18, 0
    %p123 = por %p121, %p122
    %p124 = scmp.ne.s32.totalorder %s112, %s113
    %p125 = scmp.eq.s32.totalorder %s19, 1
    %p126 = por %p124, %p125
    %p128 = scmp.ne.s32.totalorder %s113, %s127
    %p129 = scmp.eq.s32.totalorder %s19, 0
    %p130 = por %p128, %p129
    %s132 = sadd.s32 %s131, 1
    %p135 = scmp.eq.s32.totalorder %s13, 1
    %p136 = scmp.ne.s32.totalorder %s131, %s133
    %p137 = scmp.eq.s32.totalorder %s13, 0
    %p138 = por %p136, %p137
    %p139 = scmp.ne.s32.totalorder %s131, %s133
    %p140 = scmp.eq.s32.totalorder %s18, 1
    %p141 = por %p139, %p140
    %p142 = scmp.ne.s32.totalorder %s133, %s134
    %p143 = scmp.eq.s32.totalorder %s18, 0
    %p144 = por %p142, %p143
    %p145 = scmp.ne.s32.totalorder %s133, %s134
    %p146 = scmp.eq.s32.totalorder %s19, 1
    %p147 = por %p145, %p146
    %p149 = scmp.ne.s32.totalorder %s134, %s148
    %p150 = scmp.eq.s32.totalorder %s19, 0
    %p151 = por %p149, %p150
    %s153 = sadd.s32 %s152, 1
    %p156 = scmp.eq.s32.totalorder %s13, 1
    %p157 = scmp.ne.s32.totalorder %s152, %s154
    %p158 = scmp.eq.s32.totalorder %s13, 0
    %p159 = por %p157, %p158
    %p160 = scmp.ne.s32.totalorder %s152, %s154
    %p161 = scmp.eq.s32.totalorder %s18, 1
    %p162 = por %p160, %p161
    %p163 = scmp.ne.s32.totalorder %s154, %s155
    %p164 = scmp.eq.s32.totalorder %s18, 0
    %p165 = por %p163, %p164
    %p166 = scmp.ne.s32.totalorder %s154, %s155
    %p167 = scmp.eq.s32.totalorder %s19, 1
    %p168 = por %p166, %p167
    %p170 = scmp.ne.s32.totalorder %s155, %s169
    %p171 = scmp.eq.s32.totalorder %s19, 0
    %p172 = por %p170, %p171
    %s173 = ssub.s32 %s13, %s20
    %p174 = scmp.eq.s32.totalorder %s173, 0
    %s176 = sadd.s32 %s175, 1
    %s177 = scalar_select %p174, %s175, %s176
    %p180 = pneg %p174
    %p181 = scmp.eq.s32.totalorder %s13, 1
    %p182 = por %p180, %p181
    %p183 = scmp.ne.s32.totalorder %s175, %s178
    %p184 = scmp.eq.s32.totalorder %s13, 0
    %p185 = por %p183, %p184
    %p186 = scmp.ne.s32.totalorder %s175, %s178
    %p187 = scmp.eq.s32.totalorder %s18, 1
    %p188 = por %p186, %p187
    %p189 = scmp.ne.s32.totalorder %s178, %s179
    %p190 = scmp.eq.s32.totalorder %s18, 0
    %p191 = por %p189, %p190
    %p192 = scmp.ne.s32.totalorder %s178, %s179
    %p193 = scmp.eq.s32.totalorder %s19, 1
    %p194 = por %p192, %p193
    %p196 = scmp.ne.s32.totalorder %s179, %s195
    %p197 = scmp.eq.s32.totalorder %s19, 0
    %p198 = por %p196, %p197
    %p199 = scmp.le.s32.totalorder 1, %s13
    %p200 = scmp.lt.s32.totalorder %s13, 3
    %p201 = pnand %p199, %p200
    %p202 = pneg %p201
    // Predicated region
    $region9: #{tpu_custom_call.1} parent=5 // pred_check
      _
    $region10: #{tpu_custom_call.1} parent=5 // pred_check_branch
      %204 = sbr.rel (%p201) target = $region12
    $region11: #{tpu_custom_call.1} parent=5 // pred_region
      %s205 = ssub.s32 %s13, 1
      // Predicated region
      $region13: #{tpu_custom_call.1} parent=11 // pred_check
        %p206 = pneg %p60
      $region14: #{tpu_custom_call.1} parent=11 // pred_check_branch
        %208 = sbr.rel (%p206) target = $region16
      $region15: #{tpu_custom_call.1} parent=11 // pred_region
        _
      $region16: #{tpu_custom_call.1} parent=11 // pred_fallthru
        _
      // Predicated region
      $region17: #{tpu_custom_call.1} parent=11 // pred_check
        %p209 = pneg %p81
      $region18: #{tpu_custom_call.1} parent=11 // pred_check_branch
        %211 = sbr.rel (%p209) target = $region20
      $region19: #{tpu_custom_call.1} parent=11 // pred_region
        _
      $region20: #{tpu_custom_call.1} parent=11 // pred_fallthru
        _
      // Predicated region
      $region21: #{tpu_custom_call.1} parent=11 // pred_check
        %p212 = pneg %p102
      $region22: #{tpu_custom_call.1} parent=11 // pred_check_branch
        %214 = sbr.rel (%p212) target = $region24
      $region23: #{tpu_custom_call.1} parent=11 // pred_region
        _
      $region24: #{tpu_custom_call.1} parent=11 // pred_fallthru
        _
      // Predicated region
      $region25: #{tpu_custom_call.1} parent=11 // pred_check
        %p215 = pneg %p123
      $region26: #{tpu_custom_call.1} parent=11 // pred_check_branch
        %217 = sbr.rel (%p215) target = $region28
      $region27: #{tpu_custom_call.1} parent=11 // pred_region
        _
      $region28: #{tpu_custom_call.1} parent=11 // pred_fallthru
        _
      // Predicated region
      $region29: #{tpu_custom_call.1} parent=11 // pred_check
        %p218 = pneg %p144
      $region30: #{tpu_custom_call.1} parent=11 // pred_check_branch
        %220 = sbr.rel (%p218) target = $region32
      $region31: #{tpu_custom_call.1} parent=11 // pred_region
        _
      $region32: #{tpu_custom_call.1} parent=11 // pred_fallthru
        _
      // Predicated region
      $region33: #{tpu_custom_call.1} parent=11 // pred_check
        %p221 = pneg %p165
      $region34: #{tpu_custom_call.1} parent=11 // pred_check_branch
        %223 = sbr.rel (%p221) target = $region36
      $region35: #{tpu_custom_call.1} parent=11 // pred_region
        _
      $region36: #{tpu_custom_call.1} parent=11 // pred_fallthru
        _
    $region12: #{tpu_custom_call.1} parent=5 // pred_fallthru
      _
    %p224 = scmp.lt.s32.totalorder %s13, 2
    // Predicated region
    $region37: #{tpu_custom_call.1} parent=5 // pred_check
      %p225 = pneg %p224
    $region38: #{tpu_custom_call.1} parent=5 // pred_check_branch
      %227 = sbr.rel (%p225) target = $region40
    $region39: #{tpu_custom_call.1} parent=5 // pred_region
      // Predicated region
      $region41: #{tpu_custom_call.1} parent=39 // pred_check
        %p228 = pneg %p33
      $region42: #{tpu_custom_call.1} parent=39 // pred_check_branch
        %230 = sbr.rel (%p228) target = $region44
      $region43: #{tpu_custom_call.1} parent=39 // pred_region
        %p231 = scmp.lt.s32.totalorder %s13, 1
        %s232 = scalar_select %p231, %s13, 1
        %s233 = smul.addr %s232, 47
        %s234 = smul.addr %s233, 4
        %s235 = scalar_lea.vmem %s0, %s234
      $region44: #{tpu_custom_call.1} parent=39 // pred_fallthru
        _
    $region40: #{tpu_custom_call.1} parent=5 // pred_fallthru
      _
    %p236 = scmp.le.s32.totalorder 1, %s13
    %p237 = scmp.lt.s32.totalorder %s13, 3
    %p238 = pnand %p236, %p237
    %p239 = pneg %p238
    // Predicated region
    $region45: #{tpu_custom_call.1} parent=5 // pred_check
      _
    $region46: #{tpu_custom_call.1} parent=5 // pred_check_branch
      %241 = sbr.rel (%p238) target = $region48
    $region47: #{tpu_custom_call.1} parent=5 // pred_region
      %s242 = ssub.s32 %s13, 1
      %p243 = scmp.lt.s32.totalorder %s18, 1
      %s244 = scalar_select %p243, %s18, 1
      %s245 = smul.addr %s244, 47
      %s246 = smul.addr %s245, 4
      %s247 = scalar_lea.vmem %s0, %s246
      %p248 = pneg %p39
      %p249 = pneg %p36
      %p250 = pneg %p60
      %p251 = pneg %p57
      %p252 = pneg %p81
      %p253 = pneg %p78
      %p254 = pneg %p102
      %p255 = pneg %p99
      %p256 = pneg %p123
      %p257 = pneg %p120
      %p258 = pneg %p144
      %p259 = pneg %p141
      %p260 = pneg %p165
      %p261 = pneg %p162
      %p262 = pneg %p191
      %p263 = pneg %p188
      %p264 = scmp.lt.s32.totalorder %s18, 1
      %s265 = scalar_select %p264, %s18, 1
      %s266 = smul.addr %s265, 41
      %s267 = smul.addr %s266, 4
      %s268 = scalar_lea.vmem %s7, %s267
      %p269 = scmp.lt.s32.totalorder %s18, 1
      %s270 = scalar_select %p269, %s18, 1
      %s271 = smul.addr %s270, 47
      %s272 = smul.addr %s271, 4
      %s273 = scalar_lea.vmem %s0, %s272
      %p274 = scmp.lt.s32.totalorder %s18, 1
      %s275 = scalar_select %p274, %s18, 1
      %s276 = smul.addr %s275, 41
      %s277 = smul.addr %s276, 4
      %s278 = scalar_lea.vmem %s7, %s277
      %v282 = vlaneseq
      %v283 = vand.u32 %v282, 127
      %v284 = vld [vmem:[%s6] sm:$0xff]
      %v285 = vld [vmem:[%s6 + $0x8] sm:$0xff]
      %v286 = vld [vmem:[%s6 + $0x10] sm:$0xff]
      %v287 = vld [vmem:[%s6 + $0x18] sm:$0xff]
      %v288 = vld [vmem:[%s6 + $0x20] sm:$0xff]
      %v289 = vld [vmem:[%s6 + $0x28] sm:$0xff]
      %v290 = vld [vmem:[%s6 + $0x30] sm:$0xff]
      %v291 = vld [vmem:[%s6 + $0x38] sm:$0xff]
      %v292 = vld [vmem:[%s6 + $0x40] sm:$0xff]
      %v293 = vld [vmem:[%s6 + $0x48] sm:$0xff]
      %v294 = vld [vmem:[%s6 + $0x50] sm:$0xff]
      %v295 = vld [vmem:[%s6 + $0x58] sm:$0xff]
      %v296 = vld [vmem:[%s6 + $0x60] sm:$0xff]
      %v297 = vld [vmem:[%s6 + $0x68] sm:$0xff]
      %v298 = vld [vmem:[%s6 + $0x70] sm:$0xff]
      %v299 = vld [vmem:[%s6 + $0x78] sm:$0xff]
      %v300 = vld [vmem:[%s6 + $0x80] sm:$0xff]
      %v301 = vld [vmem:[%s6 + $0x88] sm:$0xff]
      %v302 = vld [vmem:[%s6 + $0x90] sm:$0xff]
      %v303 = vld [vmem:[%s6 + $0x98] sm:$0xff]
      %v304 = vld [vmem:[%s6 + $0xa0] sm:$0xff]
      %v305 = vld [vmem:[%s6 + $0xa8] sm:$0xff]
      %v306 = vld [vmem:[%s6 + $0xb0] sm:$0xff]
      %v307 = vld [vmem:[%s6 + $0xb8] sm:$0xff]
      %v308 = vld [vmem:[%s6 + $0xc0] sm:$0xff]
      %v309 = vld [vmem:[%s6 + $0xc8] sm:$0xff]
      %v310 = vld [vmem:[%s6 + $0xd0] sm:$0xff]
      %v311 = vld [vmem:[%s6 + $0xd8] sm:$0xff]
      %v312 = vld [vmem:[%s6 + $0xe0] sm:$0xff]
      %v313 = vld [vmem:[%s6 + $0xe8] sm:$0xff]
      %v314 = vld [vmem:[%s6 + $0xf0] sm:$0xff]
      %v315 = vld [vmem:[%s6 + $0xf8] sm:$0xff]
      %v316 = vld [vmem:[%s6 + $0x100] sm:$0xff]
      %v317 = vld [vmem:[%s6 + $0x108] sm:$0xff]
      %v318 = vld [vmem:[%s6 + $0x110] sm:$0xff]
      %v319 = vld [vmem:[%s6 + $0x118] sm:$0xff]
      %v320 = vld [vmem:[%s6 + $0x120] sm:$0xff]
      %v321 = vld [vmem:[%s6 + $0x128] sm:$0xff]
      %v322 = vld [vmem:[%s6 + $0x130] sm:$0xff]
      %v323 = vld [vmem:[%s6 + $0x138] sm:$0xff]
      %v324 = vld [vmem:[%s6 + $0x140] sm:$0xf]
      %v325 = vld [vmem:[%s5] sm:$0xf]
      %326 = vst [vmem:[#allocation2] sm:$0xf] 0
      %327 = vst [vmem:[#allocation2 + $0x4] sm:$0xf] 0
      %328 = vst [vmem:[#allocation2 + $0x8] sm:$0xf] 0
      %329 = vst [vmem:[#allocation2 + $0xac] sm:$0xc] 0
      %330 = vst [vmem:[#allocation2 + $0xb0] sm:$0xf] 0
      %331 = vst [vmem:[#allocation2 + $0xb4] sm:$0xf] 0
      %332 = vst [vmem:[#allocation2 + $0xb8] sm:$0x3] 0
      %v333 = vld [vmem:[%s273] sm:$0xc]
      %v334 = vld [vmem:[%s273 + $0x4] sm:$0xf]
      %v335 = vld [vmem:[%s273 + $0x8] sm:$0xf]
      %v336 = vld [vmem:[%s273 + $0xc] sm:$0xf]
      %v337 = vld [vmem:[%s273 + $0x10] sm:$0xf]
      %v338 = vld [vmem:[%s273 + $0x14] sm:$0xf]
      %v339 = vld [vmem:[%s273 + $0x18] sm:$0xf]
      %v340 = vld [vmem:[%s273 + $0x1c] sm:$0xf]
      %v341 = vld [vmem:[%s273 + $0x20] sm:$0xf]
      %v342 = vld [vmem:[%s273 + $0x24] sm:$0xf]
      %v343 = vld [vmem:[%s273 + $0x28] sm:$0xf]
      %v344 = vld [vmem:[%s273 + $0x2c] sm:$0xf]
      %v345 = vld [vmem:[%s273 + $0x30] sm:$0xf]
      %v346 = vld [vmem:[%s273 + $0x34] sm:$0xf]
      %v347 = vld [vmem:[%s273 + $0x38] sm:$0xf]
      %v348 = vld [vmem:[%s273 + $0x3c] sm:$0xf]
      %v349 = vld [vmem:[%s273 + $0x40] sm:$0xf]
      %v350 = vld [vmem:[%s273 + $0x44] sm:$0xf]
      %v351 = vld [vmem:[%s273 + $0x48] sm:$0xf]
      %v352 = vld [vmem:[%s273 + $0x4c] sm:$0xf]
      %v353 = vld [vmem:[%s273 + $0x50] sm:$0xf]
      %v354 = vld [vmem:[%s273 + $0x54] sm:$0xf]
      %v355 = vld [vmem:[%s273 + $0x58] sm:$0xf]
      %v356 = vld [vmem:[%s273 + $0x5c] sm:$0xf]
      %v357 = vld [vmem:[%s273 + $0x60] sm:$0xf]
      %v358 = vld [vmem:[%s273 + $0x64] sm:$0xf]
      %v359 = vld [vmem:[%s273 + $0x68] sm:$0xf]
      %v360 = vld [vmem:[%s273 + $0x6c] sm:$0xf]
      %v361 = vld [vmem:[%s273 + $0x70] sm:$0xf]
      %v362 = vld [vmem:[%s273 + $0x74] sm:$0xf]
      %v363 = vld [vmem:[%s273 + $0x78] sm:$0xf]
      %v364 = vld [vmem:[%s273 + $0x7c] sm:$0xf]
      %v365 = vld [vmem:[%s273 + $0x80] sm:$0xf]
      %v366 = vld [vmem:[%s273 + $0x84] sm:$0xf]
      %v367 = vld [vmem:[%s273 + $0x88] sm:$0xf]
      %v368 = vld [vmem:[%s273 + $0x8c] sm:$0xf]
      %v369 = vld [vmem:[%s273 + $0x90] sm:$0xf]
      %v370 = vld [vmem:[%s273 + $0x94] sm:$0xf]
      %v371 = vld [vmem:[%s273 + $0x98] sm:$0xf]
      %v372 = vld [vmem:[%s273 + $0x9c] sm:$0xf]
      %v373 = vld [vmem:[%s273 + $0xa0] sm:$0xf]
      %v374 = vld [vmem:[%s273 + $0xa4] sm:$0x1]
      %vm375 = vcmp.ge.s32.totalorder %v283, 4
      %v376 = vld [vmem:[%s273] sm:$0x8]
      %v377 = vsel %vm375, 1, 0
      %vm378 = vcmp.eq.s32.totalorder %v377, 1
      %vm379 = vmpackc.low %vm378, %vm378
      %vm380 = vsmask.f32 256
      %vm381 = vsmask.f32 4368
      %vm382 = vmor %vm380, %vm381
      %v384 = vshrl.u32 %v333, 16
      %v386 = vrot.slane %v384, 7
      %v387 = vshll.u32 %v333, 16
      %v389 = vor.u32 %v386, %v387
      %v390 = vrot.slane %v386, 4
      %v392 = vshrl.u32 %v334, 16
      %v394 = vrot.slane %v392, 7
      %v395 = vshll.u32 %v334, 16
      %v397 = vor.u32 %v394, %v395
      %v398 = vsel %vm382, %v390, %v397
      %v399 = vrot.slane %v394, 4
      %v401 = vshrl.u32 %v335, 16
      %v403 = vrot.slane %v401, 7
      %v404 = vshll.u32 %v335, 16
      %v406 = vor.u32 %v403, %v404
      %v407 = vsel %vm382, %v399, %v406
      %v408 = vrot.slane %v403, 4
      %v410 = vshrl.u32 %v336, 16
      %v412 = vrot.slane %v410, 7
      %v413 = vshll.u32 %v336, 16
      %v415 = vor.u32 %v412, %v413
      %v416 = vsel %vm382, %v408, %v415
      %v417 = vrot.slane %v412, 4
      %v419 = vshrl.u32 %v337, 16
      %v421 = vrot.slane %v419, 7
      %v422 = vshll.u32 %v337, 16
      %v424 = vor.u32 %v421, %v422
      %v425 = vsel %vm382, %v417, %v424
      %v426 = vrot.slane %v421, 4
      %v428 = vshrl.u32 %v338, 16
      %v430 = vrot.slane %v428, 7
      %v431 = vshll.u32 %v338, 16
      %v433 = vor.u32 %v430, %v431
      %v434 = vsel %vm382, %v426, %v433
      %v435 = vrot.slane %v430, 4
      %v437 = vshrl.u32 %v339, 16
      %v439 = vrot.slane %v437, 7
      %v440 = vshll.u32 %v339, 16
      %v442 = vor.u32 %v439, %v440
      %v443 = vsel %vm382, %v435, %v442
      %v444 = vrot.slane %v439, 4
      %v446 = vshrl.u32 %v340, 16
      %v448 = vrot.slane %v446, 7
      %v449 = vshll.u32 %v340, 16
      %v451 = vor.u32 %v448, %v449
      %v452 = vsel %vm382, %v444, %v451
      %v453 = vrot.slane %v448, 4
      %v455 = vshrl.u32 %v341, 16
      %v457 = vrot.slane %v455, 7
      %v458 = vshll.u32 %v341, 16
      %v460 = vor.u32 %v457, %v458
      %v461 = vsel %vm382, %v453, %v460
      %v462 = vrot.slane %v457, 4
      %v464 = vshrl.u32 %v342, 16
      %v466 = vrot.slane %v464, 7
      %v467 = vshll.u32 %v342, 16
      %v469 = vor.u32 %v466, %v467
      %v470 = vsel %vm382, %v462, %v469
      %v471 = vrot.slane %v466, 4
      %v473 = vshrl.u32 %v343, 16
      %v475 = vrot.slane %v473, 7
      %v476 = vshll.u32 %v343, 16
      %v478 = vor.u32 %v475, %v476
      %v479 = vsel %vm382, %v471, %v478
      %v480 = vrot.slane %v475, 4
      %v482 = vshrl.u32 %v344, 16
      %v484 = vrot.slane %v482, 7
      %v485 = vshll.u32 %v344, 16
      %v487 = vor.u32 %v484, %v485
      %v488 = vsel %vm382, %v480, %v487
      %v489 = vrot.slane %v484, 4
      %v491 = vshrl.u32 %v345, 16
      %v493 = vrot.slane %v491, 7
      %v494 = vshll.u32 %v345, 16
      %v496 = vor.u32 %v493, %v494
      %v497 = vsel %vm382, %v489, %v496
      %v498 = vrot.slane %v493, 4
      %v500 = vshrl.u32 %v346, 16
      %v502 = vrot.slane %v500, 7
      %v503 = vshll.u32 %v346, 16
      %v505 = vor.u32 %v502, %v503
      %v506 = vsel %vm382, %v498, %v505
      %v507 = vrot.slane %v502, 4
      %v509 = vshrl.u32 %v347, 16
      %v511 = vrot.slane %v509, 7
      %v512 = vshll.u32 %v347, 16
      %v514 = vor.u32 %v511, %v512
      %v515 = vsel %vm382, %v507, %v514
      %v516 = vrot.slane %v511, 4
      %v518 = vshrl.u32 %v348, 16
      %v520 = vrot.slane %v518, 7
      %v521 = vshll.u32 %v348, 16
      %v523 = vor.u32 %v520, %v521
      %v524 = vsel %vm382, %v516, %v523
      %v525 = vrot.slane %v520, 4
      %v527 = vshrl.u32 %v349, 16
      %v529 = vrot.slane %v527, 7
      %v530 = vshll.u32 %v349, 16
      %v532 = vor.u32 %v529, %v530
      %v533 = vsel %vm382, %v525, %v532
      %v534 = vrot.slane %v529, 4
      %v536 = vshrl.u32 %v350, 16
      %v538 = vrot.slane %v536, 7
      %v539 = vshll.u32 %v350, 16
      %v541 = vor.u32 %v538, %v539
      %v542 = vsel %vm382, %v534, %v541
      %v543 = vrot.slane %v538, 4
      %v545 = vshrl.u32 %v351, 16
      %v547 = vrot.slane %v545, 7
      %v548 = vshll.u32 %v351, 16
      %v550 = vor.u32 %v547, %v548
      %v551 = vsel %vm382, %v543, %v550
      %v552 = vrot.slane %v547, 4
      %v554 = vshrl.u32 %v352, 16
      %v556 = vrot.slane %v554, 7
      %v557 = vshll.u32 %v352, 16
      %v559 = vor.u32 %v556, %v557
      %v560 = vsel %vm382, %v552, %v559
      %v561 = vrot.slane %v556, 4
      %v563 = vshrl.u32 %v353, 16
      %v565 = vrot.slane %v563, 7
      %v566 = vshll.u32 %v353, 16
      %v568 = vor.u32 %v565, %v566
      %v569 = vsel %vm382, %v561, %v568
      %v570 = vrot.slane %v565, 4
      %v572 = vshrl.u32 %v354, 16
      %v574 = vrot.slane %v572, 7
      %v575 = vshll.u32 %v354, 16
      %v577 = vor.u32 %v574, %v575
      %v578 = vsel %vm382, %v570, %v577
      %v579 = vrot.slane %v574, 4
      %v581 = vshrl.u32 %v355, 16
      %v583 = vrot.slane %v581, 7
      %v584 = vshll.u32 %v355, 16
      %v586 = vor.u32 %v583, %v584
      %v587 = vsel %vm382, %v579, %v586
      %v588 = vrot.slane %v583, 4
      %v590 = vshrl.u32 %v356, 16
      %v592 = vrot.slane %v590, 7
      %v593 = vshll.u32 %v356, 16
      %v595 = vor.u32 %v592, %v593
      %v596 = vsel %vm382, %v588, %v595
      %v597 = vrot.slane %v592, 4
      %v599 = vshrl.u32 %v357, 16
      %v601 = vrot.slane %v599, 7
      %v602 = vshll.u32 %v357, 16
      %v604 = vor.u32 %v601, %v602
      %v605 = vsel %vm382, %v597, %v604
      %v606 = vrot.slane %v601, 4
      %v608 = vshrl.u32 %v358, 16
      %v610 = vrot.slane %v608, 7
      %v611 = vshll.u32 %v358, 16
      %v613 = vor.u32 %v610, %v611
      %v614 = vsel %vm382, %v606, %v613
      %v615 = vrot.slane %v610, 4
      %v617 = vshrl.u32 %v359, 16
      %v619 = vrot.slane %v617, 7
      %v620 = vshll.u32 %v359, 16
      %v622 = vor.u32 %v619, %v620
      %v623 = vsel %vm382, %v615, %v622
      %v624 = vrot.slane %v619, 4
      %v626 = vshrl.u32 %v360, 16
      %v628 = vrot.slane %v626, 7
      %v629 = vshll.u32 %v360, 16
      %v631 = vor.u32 %v628, %v629
      %v632 = vsel %vm382, %v624, %v631
      %v633 = vrot.slane %v628, 4
      %v635 = vshrl.u32 %v361, 16
      %v637 = vrot.slane %v635, 7
      %v638 = vshll.u32 %v361, 16
      %v640 = vor.u32 %v637, %v638
      %v641 = vsel %vm382, %v633, %v640
      %v642 = vrot.slane %v637, 4
      %v644 = vshrl.u32 %v362, 16
      %v646 = vrot.slane %v644, 7
      %v647 = vshll.u32 %v362, 16
      %v649 = vor.u32 %v646, %v647
      %v650 = vsel %vm382, %v642, %v649
      %v651 = vrot.slane %v646, 4
      %v653 = vshrl.u32 %v363, 16
      %v655 = vrot.slane %v653, 7
      %v656 = vshll.u32 %v363, 16
      %v658 = vor.u32 %v655, %v656
      %v659 = vsel %vm382, %v651, %v658
      %v660 = vrot.slane %v655, 4
      %v662 = vshrl.u32 %v364, 16
      %v664 = vrot.slane %v662, 7
      %v665 = vshll.u32 %v364, 16
      %v667 = vor.u32 %v664, %v665
      %v668 = vsel %vm382, %v660, %v667
      %v669 = vrot.slane %v664, 4
      %v671 = vshrl.u32 %v365, 16
      %v673 = vrot.slane %v671, 7
      %v674 = vshll.u32 %v365, 16
      %v676 = vor.u32 %v673, %v674
      %v677 = vsel %vm382, %v669, %v676
      %v678 = vrot.slane %v673, 4
      %v680 = vshrl.u32 %v366, 16
      %v682 = vrot.slane %v680, 7
      %v683 = vshll.u32 %v366, 16
      %v685 = vor.u32 %v682, %v683
      %v686 = vsel %vm382, %v678, %v685
      %v687 = vrot.slane %v682, 4
      %v689 = vshrl.u32 %v367, 16
      %v691 = vrot.slane %v689, 7
      %v692 = vshll.u32 %v367, 16
      %v694 = vor.u32 %v691, %v692
      %v695 = vsel %vm382, %v687, %v694
      %v696 = vrot.slane %v691, 4
      %v698 = vshrl.u32 %v368, 16
      %v700 = vrot.slane %v698, 7
      %v701 = vshll.u32 %v368, 16
      %v703 = vor.u32 %v700, %v701
      %v704 = vsel %vm382, %v696, %v703
      %v705 = vrot.slane %v700, 4
      %v707 = vshrl.u32 %v369, 16
      %v709 = vrot.slane %v707, 7
      %v710 = vshll.u32 %v369, 16
      %v712 = vor.u32 %v709, %v710
      %v713 = vsel %vm382, %v705, %v712
      %v714 = vrot.slane %v709, 4
      %v716 = vshrl.u32 %v370, 16
      %v718 = vrot.slane %v716, 7
      %v719 = vshll.u32 %v370, 16
      %v721 = vor.u32 %v718, %v719
      %v722 = vsel %vm382, %v714, %v721
      %v723 = vrot.slane %v718, 4
      %v725 = vshrl.u32 %v371, 16
      %v727 = vrot.slane %v725, 7
      %v728 = vshll.u32 %v371, 16
      %v730 = vor.u32 %v727, %v728
      %v731 = vsel %vm382, %v723, %v730
      %v732 = vrot.slane %v727, 4
      %v734 = vshrl.u32 %v372, 16
      %v736 = vrot.slane %v734, 7
      %v737 = vshll.u32 %v372, 16
      %v739 = vor.u32 %v736, %v737
      %v740 = vsel %vm382, %v732, %v739
      %v741 = vrot.slane %v736, 4
      %v743 = vshrl.u32 %v373, 16
      %v745 = vrot.slane %v743, 7
      %v746 = vshll.u32 %v373, 16
      %v748 = vor.u32 %v745, %v746
      %v749 = vsel %vm382, %v741, %v748
      %v750 = vrot.slane %v745, 4
      %v752 = vshll.u32 %v374, 16
      %v754 = vsel %vm382, %v750, %v752
      %v797 = vsel %vm379, %v376, %v389
      %v798 = vsel %vm379, %v334, %v398
      %v799 = vsel %vm379, %v335, %v407
      %v800 = vsel %vm379, %v336, %v416
      %v801 = vsel %vm379, %v337, %v425
      %v802 = vsel %vm379, %v338, %v434
      %v803 = vsel %vm379, %v339, %v443
      %v804 = vsel %vm379, %v340, %v452
      %v805 = vsel %vm379, %v341, %v461
      %v806 = vsel %vm379, %v342, %v470
      %v807 = vsel %vm379, %v343, %v479
      %v808 = vsel %vm379, %v344, %v488
      %v809 = vsel %vm379, %v345, %v497
      %v810 = vsel %vm379, %v346, %v506
      %v811 = vsel %vm379, %v347, %v515
      %v812 = vsel %vm379, %v348, %v524
      %v813 = vsel %vm379, %v349, %v533
      %v814 = vsel %vm379, %v350, %v542
      %v815 = vsel %vm379, %v351, %v551
      %v816 = vsel %vm379, %v352, %v560
      %v817 = vsel %vm379, %v353, %v569
      %v818 = vsel %vm379, %v354, %v578
      %v819 = vsel %vm379, %v355, %v587
      %v820 = vsel %vm379, %v356, %v596
      %v821 = vsel %vm379, %v357, %v605
      %v822 = vsel %vm379, %v358, %v614
      %v823 = vsel %vm379, %v359, %v623
      %v824 = vsel %vm379, %v360, %v632
      %v825 = vsel %vm379, %v361, %v641
      %v826 = vsel %vm379, %v362, %v650
      %v827 = vsel %vm379, %v363, %v659
      %v828 = vsel %vm379, %v364, %v668
      %v829 = vsel %vm379, %v365, %v677
      %v830 = vsel %vm379, %v366, %v686
      %v831 = vsel %vm379, %v367, %v695
      %v832 = vsel %vm379, %v368, %v704
      %v833 = vsel %vm379, %v369, %v713
      %v834 = vsel %vm379, %v370, %v722
      %v835 = vsel %vm379, %v371, %v731
      %v836 = vsel %vm379, %v372, %v740
      %v837 = vsel %vm379, %v373, %v749
      %v838 = vsel %vm379, %v374, %v754
      %vm839 = vcmp.ge.s32.totalorder %v283, 8
      %v840 = vld [vmem:[%s273 + $0xa4] sm:$0x3]
      %v841 = vsel %vm839, 1, 0
      %vm842 = vcmp.eq.s32.totalorder %v841, 1
      %vm843 = vmpackc.low %vm842, %vm842
      %v845 = vshll.u32 %v797, 16
      %v847 = vshrl.u32 %v797, 16
      %v849 = vrot.slane %v847, 7
      %v850 = vrot.slane %v849, 4
      %v852 = vshrl.u32 %v798, 16
      %v854 = vrot.slane %v852, 7
      %v855 = vshll.u32 %v798, 16
      %v857 = vor.u32 %v854, %v855
      %v858 = vsel %vm382, %v850, %v857
      %v859 = vrot.slane %v854, 4
      %v861 = vshrl.u32 %v799, 16
      %v863 = vrot.slane %v861, 7
      %v864 = vshll.u32 %v799, 16
      %v866 = vor.u32 %v863, %v864
      %v867 = vsel %vm382, %v859, %v866
      %v868 = vrot.slane %v863, 4
      %v870 = vshrl.u32 %v800, 16
      %v872 = vrot.slane %v870, 7
      %v873 = vshll.u32 %v800, 16
      %v875 = vor.u32 %v872, %v873
      %v876 = vsel %vm382, %v868, %v875
      %v877 = vrot.slane %v872, 4
      %v879 = vshrl.u32 %v801, 16
      %v881 = vrot.slane %v879, 7
      %v882 = vshll.u32 %v801, 16
      %v884 = vor.u32 %v881, %v882
      %v885 = vsel %vm382, %v877, %v884
      %v886 = vrot.slane %v881, 4
      %v888 = vshrl.u32 %v802, 16
      %v890 = vrot.slane %v888, 7
      %v891 = vshll.u32 %v802, 16
      %v893 = vor.u32 %v890, %v891
      %v894 = vsel %vm382, %v886, %v893
      %v895 = vrot.slane %v890, 4
      %v897 = vshrl.u32 %v803, 16
      %v899 = vrot.slane %v897, 7
      %v900 = vshll.u32 %v803, 16
      %v902 = vor.u32 %v899, %v900
      %v903 = vsel %vm382, %v895, %v902
      %v904 = vrot.slane %v899, 4
      %v906 = vshrl.u32 %v804, 16
      %v908 = vrot.slane %v906, 7
      %v909 = vshll.u32 %v804, 16
      %v911 = vor.u32 %v908, %v909
      %v912 = vsel %vm382, %v904, %v911
      %v913 = vrot.slane %v908, 4
      %v915 = vshrl.u32 %v805, 16
      %v917 = vrot.slane %v915, 7
      %v918 = vshll.u32 %v805, 16
      %v920 = vor.u32 %v917, %v918
      %v921 = vsel %vm382, %v913, %v920
      %v922 = vrot.slane %v917, 4
      %v924 = vshrl.u32 %v806, 16
      %v926 = vrot.slane %v924, 7
      %v927 = vshll.u32 %v806, 16
      %v929 = vor.u32 %v926, %v927
      %v930 = vsel %vm382, %v922, %v929
      %v931 = vrot.slane %v926, 4
      %v933 = vshrl.u32 %v807, 16
      %v935 = vrot.slane %v933, 7
      %v936 = vshll.u32 %v807, 16
      %v938 = vor.u32 %v935, %v936
      %v939 = vsel %vm382, %v931, %v938
      %v940 = vrot.slane %v935, 4
      %v942 = vshrl.u32 %v808, 16
      %v944 = vrot.slane %v942, 7
      %v945 = vshll.u32 %v808, 16
      %v947 = vor.u32 %v944, %v945
      %v948 = vsel %vm382, %v940, %v947
      %v949 = vrot.slane %v944, 4
      %v951 = vshrl.u32 %v809, 16
      %v953 = vrot.slane %v951, 7
      %v954 = vshll.u32 %v809, 16
      %v956 = vor.u32 %v953, %v954
      %v957 = vsel %vm382, %v949, %v956
      %v958 = vrot.slane %v953, 4
      %v960 = vshrl.u32 %v810, 16
      %v962 = vrot.slane %v960, 7
      %v963 = vshll.u32 %v810, 16
      %v965 = vor.u32 %v962, %v963
      %v966 = vsel %vm382, %v958, %v965
      %v967 = vrot.slane %v962, 4
      %v969 = vshrl.u32 %v811, 16
      %v971 = vrot.slane %v969, 7
      %v972 = vshll.u32 %v811, 16
      %v974 = vor.u32 %v971, %v972
      %v975 = vsel %vm382, %v967, %v974
      %v976 = vrot.slane %v971, 4
      %v978 = vshrl.u32 %v812, 16
      %v980 = vrot.slane %v978, 7
      %v981 = vshll.u32 %v812, 16
      %v983 = vor.u32 %v980, %v981
      %v984 = vsel %vm382, %v976, %v983
      %v985 = vrot.slane %v980, 4
      %v987 = vshrl.u32 %v813, 16
      %v989 = vrot.slane %v987, 7
      %v990 = vshll.u32 %v813, 16
      %v992 = vor.u32 %v989, %v990
      %v993 = vsel %vm382, %v985, %v992
      %v994 = vrot.slane %v989, 4
      %v996 = vshrl.u32 %v814, 16
      %v998 = vrot.slane %v996, 7
      %v999 = vshll.u32 %v814, 16
      %v1001 = vor.u32 %v998, %v999
      %v1002 = vsel %vm382, %v994, %v1001
      %v1003 = vrot.slane %v998, 4
      %v1005 = vshrl.u32 %v815, 16
      %v1007 = vrot.slane %v1005, 7
      %v1008 = vshll.u32 %v815, 16
      %v1010 = vor.u32 %v1007, %v1008
      %v1011 = vsel %vm382, %v1003, %v1010
      %v1012 = vrot.slane %v1007, 4
      %v1014 = vshrl.u32 %v816, 16
      %v1016 = vrot.slane %v1014, 7
      %v1017 = vshll.u32 %v816, 16
      %v1019 = vor.u32 %v1016, %v1017
      %v1020 = vsel %vm382, %v1012, %v1019
      %v1021 = vrot.slane %v1016, 4
      %v1023 = vshrl.u32 %v817, 16
      %v1025 = vrot.slane %v1023, 7
      %v1026 = vshll.u32 %v817, 16
      %v1028 = vor.u32 %v1025, %v1026
      %v1029 = vsel %vm382, %v1021, %v1028
      %v1030 = vrot.slane %v1025, 4
      %v1032 = vshrl.u32 %v818, 16
      %v1034 = vrot.slane %v1032, 7
      %v1035 = vshll.u32 %v818, 16
      %v1037 = vor.u32 %v1034, %v1035
      %v1038 = vsel %vm382, %v1030, %v1037
      %v1039 = vrot.slane %v1034, 4
      %v1041 = vshrl.u32 %v819, 16
      %v1043 = vrot.slane %v1041, 7
      %v1044 = vshll.u32 %v819, 16
      %v1046 = vor.u32 %v1043, %v1044
      %v1047 = vsel %vm382, %v1039, %v1046
      %v1048 = vrot.slane %v1043, 4
      %v1050 = vshrl.u32 %v820, 16
      %v1052 = vrot.slane %v1050, 7
      %v1053 = vshll.u32 %v820, 16
      %v1055 = vor.u32 %v1052, %v1053
      %v1056 = vsel %vm382, %v1048, %v1055
      %v1057 = vrot.slane %v1052, 4
      %v1059 = vshrl.u32 %v821, 16
      %v1061 = vrot.slane %v1059, 7
      %v1062 = vshll.u32 %v821, 16
      %v1064 = vor.u32 %v1061, %v1062
      %v1065 = vsel %vm382, %v1057, %v1064
      %v1066 = vrot.slane %v1061, 4
      %v1068 = vshrl.u32 %v822, 16
      %v1070 = vrot.slane %v1068, 7
      %v1071 = vshll.u32 %v822, 16
      %v1073 = vor.u32 %v1070, %v1071
      %v1074 = vsel %vm382, %v1066, %v1073
      %v1075 = vrot.slane %v1070, 4
      %v1077 = vshrl.u32 %v823, 16
      %v1079 = vrot.slane %v1077, 7
      %v1080 = vshll.u32 %v823, 16
      %v1082 = vor.u32 %v1079, %v1080
      %v1083 = vsel %vm382, %v1075, %v1082
      %v1084 = vrot.slane %v1079, 4
      %v1086 = vshrl.u32 %v824, 16
      %v1088 = vrot.slane %v1086, 7
      %v1089 = vshll.u32 %v824, 16
      %v1091 = vor.u32 %v1088, %v1089
      %v1092 = vsel %vm382, %v1084, %v1091
      %v1093 = vrot.slane %v1088, 4
      %v1095 = vshrl.u32 %v825, 16
      %v1097 = vrot.slane %v1095, 7
      %v1098 = vshll.u32 %v825, 16
      %v1100 = vor.u32 %v1097, %v1098
      %v1101 = vsel %vm382, %v1093, %v1100
      %v1102 = vrot.slane %v1097, 4
      %v1104 = vshrl.u32 %v826, 16
      %v1106 = vrot.slane %v1104, 7
      %v1107 = vshll.u32 %v826, 16
      %v1109 = vor.u32 %v1106, %v1107
      %v1110 = vsel %vm382, %v1102, %v1109
      %v1111 = vrot.slane %v1106, 4
      %v1113 = vshrl.u32 %v827, 16
      %v1115 = vrot.slane %v1113, 7
      %v1116 = vshll.u32 %v827, 16
      %v1118 = vor.u32 %v1115, %v1116
      %v1119 = vsel %vm382, %v1111, %v1118
      %v1120 = vrot.slane %v1115, 4
      %v1122 = vshrl.u32 %v828, 16
      %v1124 = vrot.slane %v1122, 7
      %v1125 = vshll.u32 %v828, 16
      %v1127 = vor.u32 %v1124, %v1125
      %v1128 = vsel %vm382, %v1120, %v1127
      %v1129 = vrot.slane %v1124, 4
      %v1131 = vshrl.u32 %v829, 16
      %v1133 = vrot.slane %v1131, 7
      %v1134 = vshll.u32 %v829, 16
      %v1136 = vor.u32 %v1133, %v1134
      %v1137 = vsel %vm382, %v1129, %v1136
      %v1138 = vrot.slane %v1133, 4
      %v1140 = vshrl.u32 %v830, 16
      %v1142 = vrot.slane %v1140, 7
      %v1143 = vshll.u32 %v830, 16
      %v1145 = vor.u32 %v1142, %v1143
      %v1146 = vsel %vm382, %v1138, %v1145
      %v1147 = vrot.slane %v1142, 4
      %v1149 = vshrl.u32 %v831, 16
      %v1151 = vrot.slane %v1149, 7
      %v1152 = vshll.u32 %v831, 16
      %v1154 = vor.u32 %v1151, %v1152
      %v1155 = vsel %vm382, %v1147, %v1154
      %v1156 = vrot.slane %v1151, 4
      %v1158 = vshrl.u32 %v832, 16
      %v1160 = vrot.slane %v1158, 7
      %v1161 = vshll.u32 %v832, 16
      %v1163 = vor.u32 %v1160, %v1161
      %v1164 = vsel %vm382, %v1156, %v1163
      %v1165 = vrot.slane %v1160, 4
      %v1167 = vshrl.u32 %v833, 16
      %v1169 = vrot.slane %v1167, 7
      %v1170 = vshll.u32 %v833, 16
      %v1172 = vor.u32 %v1169, %v1170
      %v1173 = vsel %vm382, %v1165, %v1172
      %v1174 = vrot.slane %v1169, 4
      %v1176 = vshrl.u32 %v834, 16
      %v1178 = vrot.slane %v1176, 7
      %v1179 = vshll.u32 %v834, 16
      %v1181 = vor.u32 %v1178, %v1179
      %v1182 = vsel %vm382, %v1174, %v1181
      %v1183 = vrot.slane %v1178, 4
      %v1185 = vshrl.u32 %v835, 16
      %v1187 = vrot.slane %v1185, 7
      %v1188 = vshll.u32 %v835, 16
      %v1190 = vor.u32 %v1187, %v1188
      %v1191 = vsel %vm382, %v1183, %v1190
      %v1192 = vrot.slane %v1187, 4
      %v1194 = vshrl.u32 %v836, 16
      %v1196 = vrot.slane %v1194, 7
      %v1197 = vshll.u32 %v836, 16
      %v1199 = vor.u32 %v1196, %v1197
      %v1200 = vsel %vm382, %v1192, %v1199
      %v1201 = vrot.slane %v1196, 4
      %v1203 = vshrl.u32 %v837, 16
      %v1205 = vrot.slane %v1203, 7
      %v1206 = vshll.u32 %v837, 16
      %v1208 = vor.u32 %v1205, %v1206
      %v1209 = vsel %vm382, %v1201, %v1208
      %v1210 = vrot.slane %v1205, 4
      %v1212 = vshrl.u32 %v838, 16
      %v1214 = vrot.slane %v1212, 7
      %v1215 = vshll.u32 %v838, 16
      %v1217 = vor.u32 %v1214, %v1215
      %v1218 = vsel %vm382, %v1210, %v1217
      %v1261 = vsel %vm843, %v376, %v845
      %v1262 = vsel %vm843, %v334, %v858
      %v1263 = vsel %vm843, %v335, %v867
      %v1264 = vsel %vm843, %v336, %v876
      %v1265 = vsel %vm843, %v337, %v885
      %v1266 = vsel %vm843, %v338, %v894
      %v1267 = vsel %vm843, %v339, %v903
      %v1268 = vsel %vm843, %v340, %v912
      %v1269 = vsel %vm843, %v341, %v921
      %v1270 = vsel %vm843, %v342, %v930
      %v1271 = vsel %vm843, %v343, %v939
      %v1272 = vsel %vm843, %v344, %v948
      %v1273 = vsel %vm843, %v345, %v957
      %v1274 = vsel %vm843, %v346, %v966
      %v1275 = vsel %vm843, %v347, %v975
      %v1276 = vsel %vm843, %v348, %v984
      %v1277 = vsel %vm843, %v349, %v993
      %v1278 = vsel %vm843, %v350, %v1002
      %v1279 = vsel %vm843, %v351, %v1011
      %v1280 = vsel %vm843, %v352, %v1020
      %v1281 = vsel %vm843, %v353, %v1029
      %v1282 = vsel %vm843, %v354, %v1038
      %v1283 = vsel %vm843, %v355, %v1047
      %v1284 = vsel %vm843, %v356, %v1056
      %v1285 = vsel %vm843, %v357, %v1065
      %v1286 = vsel %vm843, %v358, %v1074
      %v1287 = vsel %vm843, %v359, %v1083
      %v1288 = vsel %vm843, %v360, %v1092
      %v1289 = vsel %vm843, %v361, %v1101
      %v1290 = vsel %vm843, %v362, %v1110
      %v1291 = vsel %vm843, %v363, %v1119
      %v1292 = vsel %vm843, %v364, %v1128
      %v1293 = vsel %vm843, %v365, %v1137
      %v1294 = vsel %vm843, %v366, %v1146
      %v1295 = vsel %vm843, %v367, %v1155
      %v1296 = vsel %vm843, %v368, %v1164
      %v1297 = vsel %vm843, %v369, %v1173
      %v1298 = vsel %vm843, %v370, %v1182
      %v1299 = vsel %vm843, %v371, %v1191
      %v1300 = vsel %vm843, %v372, %v1200
      %v1301 = vsel %vm843, %v373, %v1209
      %v1302 = vsel %vm843, %v840, %v1218
      %vm1303 = vcmp.ge.s32.totalorder %v283, 12
      %v1304 = vld [vmem:[%s273 + $0x8] sm:$0x8]
      %v1305 = vld [vmem:[%s273 + $0xa4] sm:$0xf]
      %v1306 = vld [vmem:[%s273 + $0xa8] sm:$0xf]
      %v1307 = vld [vmem:[%s273 + $0xac] sm:$0x3]
      %v1308 = vsel %vm1303, 1, 0
      %vm1309 = vcmp.eq.s32.totalorder %v1308, 1
      %vm1310 = vmpackc.low %vm1309, %vm1309
      %v1311 = vsel %vm1310, %v1304, %v1261
      %v1312 = vsel %vm1310, %v336, %v1262
      %v1313 = vsel %vm1310, %v337, %v1263
      %v1314 = vsel %vm1310, %v338, %v1264
      %v1315 = vsel %vm1310, %v339, %v1265
      %v1316 = vsel %vm1310, %v340, %v1266
      %v1317 = vsel %vm1310, %v341, %v1267
      %v1318 = vsel %vm1310, %v342, %v1268
      %v1319 = vsel %vm1310, %v343, %v1269
      %v1320 = vsel %vm1310, %v344, %v1270
      %v1321 = vsel %vm1310, %v345, %v1271
      %v1322 = vsel %vm1310, %v346, %v1272
      %v1323 = vsel %vm1310, %v347, %v1273
      %v1324 = vsel %vm1310, %v348, %v1274
      %v1325 = vsel %vm1310, %v349, %v1275
      %v1326 = vsel %vm1310, %v350, %v1276
      %v1327 = vsel %vm1310, %v351, %v1277
      %v1328 = vsel %vm1310, %v352, %v1278
      %v1329 = vsel %vm1310, %v353, %v1279
      %v1330 = vsel %vm1310, %v354, %v1280
      %v1331 = vsel %vm1310, %v355, %v1281
      %v1332 = vsel %vm1310, %v356, %v1282
      %v1333 = vsel %vm1310, %v357, %v1283
      %v1334 = vsel %vm1310, %v358, %v1284
      %v1335 = vsel %vm1310, %v359, %v1285
      %v1336 = vsel %vm1310, %v360, %v1286
      %v1337 = vsel %vm1310, %v361, %v1287
      %v1338 = vsel %vm1310, %v362, %v1288
      %v1339 = vsel %vm1310, %v363, %v1289
      %v1340 = vsel %vm1310, %v364, %v1290
      %v1341 = vsel %vm1310, %v365, %v1291
      %v1342 = vsel %vm1310, %v366, %v1292
      %v1343 = vsel %vm1310, %v367, %v1293
      %v1344 = vsel %vm1310, %v368, %v1294
      %v1345 = vsel %vm1310, %v369, %v1295
      %v1346 = vsel %vm1310, %v370, %v1296
      %v1347 = vsel %vm1310, %v371, %v1297
      %v1348 = vsel %vm1310, %v372, %v1298
      %v1349 = vsel %vm1310, %v373, %v1299
      %v1350 = vsel %vm1310, %v1305, %v1300
      %v1351 = vsel %vm1310, %v1306, %v1301
      %v1352 = vsel %vm1310, %v1307, %v1302
      %vm1353 = vcmp.ge.s32.totalorder %v283, 16
      %v1354 = vsel %vm1353, 1, 0
      %vm1355 = vcmp.eq.s32.totalorder %v1354, 1
      %vm1356 = vmpackc.low %vm1355, %vm1355
      %v1358 = vshrl.u32 %v1311, 16
      %v1360 = vrot.slane %v1358, 7
      %v1361 = vrot.slane %v1360, 4
      %v1363 = vshrl.u32 %v1312, 16
      %v1365 = vrot.slane %v1363, 7
      %v1366 = vshll.u32 %v1312, 16
      %v1368 = vor.u32 %v1365, %v1366
      %v1369 = vsel %vm382, %v1361, %v1368
      %v1370 = vrot.slane %v1365, 4
      %v1372 = vshrl.u32 %v1313, 16
      %v1374 = vrot.slane %v1372, 7
      %v1375 = vshll.u32 %v1313, 16
      %v1377 = vor.u32 %v1374, %v1375
      %v1378 = vsel %vm382, %v1370, %v1377
      %v1379 = vrot.slane %v1374, 4
      %v1381 = vshrl.u32 %v1314, 16
      %v1383 = vrot.slane %v1381, 7
      %v1384 = vshll.u32 %v1314, 16
      %v1386 = vor.u32 %v1383, %v1384
      %v1387 = vsel %vm382, %v1379, %v1386
      %v1388 = vrot.slane %v1383, 4
      %v1390 = vshrl.u32 %v1315, 16
      %v1392 = vrot.slane %v1390, 7
      %v1393 = vshll.u32 %v1315, 16
      %v1395 = vor.u32 %v1392, %v1393
      %v1396 = vsel %vm382, %v1388, %v1395
      %v1397 = vrot.slane %v1392, 4
      %v1399 = vshrl.u32 %v1316, 16
      %v1401 = vrot.slane %v1399, 7
      %v1402 = vshll.u32 %v1316, 16
      %v1404 = vor.u32 %v1401, %v1402
      %v1405 = vsel %vm382, %v1397, %v1404
      %v1406 = vrot.slane %v1401, 4
      %v1408 = vshrl.u32 %v1317, 16
      %v1410 = vrot.slane %v1408, 7
      %v1411 = vshll.u32 %v1317, 16
      %v1413 = vor.u32 %v1410, %v1411
      %v1414 = vsel %vm382, %v1406, %v1413
      %v1415 = vrot.slane %v1410, 4
      %v1417 = vshrl.u32 %v1318, 16
      %v1419 = vrot.slane %v1417, 7
      %v1420 = vshll.u32 %v1318, 16
      %v1422 = vor.u32 %v1419, %v1420
      %v1423 = vsel %vm382, %v1415, %v1422
      %v1424 = vrot.slane %v1419, 4
      %v1426 = vshrl.u32 %v1319, 16
      %v1428 = vrot.slane %v1426, 7
      %v1429 = vshll.u32 %v1319, 16
      %v1431 = vor.u32 %v1428, %v1429
      %v1432 = vsel %vm382, %v1424, %v1431
      %v1433 = vrot.slane %v1428, 4
      %v1435 = vshrl.u32 %v1320, 16
      %v1437 = vrot.slane %v1435, 7
      %v1438 = vshll.u32 %v1320, 16
      %v1440 = vor.u32 %v1437, %v1438
      %v1441 = vsel %vm382, %v1433, %v1440
      %v1442 = vrot.slane %v1437, 4
      %v1444 = vshrl.u32 %v1321, 16
      %v1446 = vrot.slane %v1444, 7
      %v1447 = vshll.u32 %v1321, 16
      %v1449 = vor.u32 %v1446, %v1447
      %v1450 = vsel %vm382, %v1442, %v1449
      %v1451 = vrot.slane %v1446, 4
      %v1453 = vshrl.u32 %v1322, 16
      %v1455 = vrot.slane %v1453, 7
      %v1456 = vshll.u32 %v1322, 16
      %v1458 = vor.u32 %v1455, %v1456
      %v1459 = vsel %vm382, %v1451, %v1458
      %v1460 = vrot.slane %v1455, 4
      %v1462 = vshrl.u32 %v1323, 16
      %v1464 = vrot.slane %v1462, 7
      %v1465 = vshll.u32 %v1323, 16
      %v1467 = vor.u32 %v1464, %v1465
      %v1468 = vsel %vm382, %v1460, %v1467
      %v1469 = vrot.slane %v1464, 4
      %v1471 = vshrl.u32 %v1324, 16
      %v1473 = vrot.slane %v1471, 7
      %v1474 = vshll.u32 %v1324, 16
      %v1476 = vor.u32 %v1473, %v1474
      %v1477 = vsel %vm382, %v1469, %v1476
      %v1478 = vrot.slane %v1473, 4
      %v1480 = vshrl.u32 %v1325, 16
      %v1482 = vrot.slane %v1480, 7
      %v1483 = vshll.u32 %v1325, 16
      %v1485 = vor.u32 %v1482, %v1483
      %v1486 = vsel %vm382, %v1478, %v1485
      %v1487 = vrot.slane %v1482, 4
      %v1489 = vshrl.u32 %v1326, 16
      %v1491 = vrot.slane %v1489, 7
      %v1492 = vshll.u32 %v1326, 16
      %v1494 = vor.u32 %v1491, %v1492
      %v1495 = vsel %vm382, %v1487, %v1494
      %v1496 = vrot.slane %v1491, 4
      %v1498 = vshrl.u32 %v1327, 16
      %v1500 = vrot.slane %v1498, 7
      %v1501 = vshll.u32 %v1327, 16
      %v1503 = vor.u32 %v1500, %v1501
      %v1504 = vsel %vm382, %v1496, %v1503
      %v1505 = vrot.slane %v1500, 4
      %v1507 = vshrl.u32 %v1328, 16
      %v1509 = vrot.slane %v1507, 7
      %v1510 = vshll.u32 %v1328, 16
      %v1512 = vor.u32 %v1509, %v1510
      %v1513 = vsel %vm382, %v1505, %v1512
      %v1514 = vrot.slane %v1509, 4
      %v1516 = vshrl.u32 %v1329, 16
      %v1518 = vrot.slane %v1516, 7
      %v1519 = vshll.u32 %v1329, 16
      %v1521 = vor.u32 %v1518, %v1519
      %v1522 = vsel %vm382, %v1514, %v1521
      %v1523 = vrot.slane %v1518, 4
      %v1525 = vshrl.u32 %v1330, 16
      %v1527 = vrot.slane %v1525, 7
      %v1528 = vshll.u32 %v1330, 16
      %v1530 = vor.u32 %v1527, %v1528
      %v1531 = vsel %vm382, %v1523, %v1530
      %v1532 = vrot.slane %v1527, 4
      %v1534 = vshrl.u32 %v1331, 16
      %v1536 = vrot.slane %v1534, 7
      %v1537 = vshll.u32 %v1331, 16
      %v1539 = vor.u32 %v1536, %v1537
      %v1540 = vsel %vm382, %v1532, %v1539
      %v1541 = vrot.slane %v1536, 4
      %v1543 = vshrl.u32 %v1332, 16
      %v1545 = vrot.slane %v1543, 7
      %v1546 = vshll.u32 %v1332, 16
      %v1548 = vor.u32 %v1545, %v1546
      %v1549 = vsel %vm382, %v1541, %v1548
      %v1550 = vrot.slane %v1545, 4
      %v1552 = vshrl.u32 %v1333, 16
      %v1554 = vrot.slane %v1552, 7
      %v1555 = vshll.u32 %v1333, 16
      %v1557 = vor.u32 %v1554, %v1555
      %v1558 = vsel %vm382, %v1550, %v1557
      %v1559 = vrot.slane %v1554, 4
      %v1561 = vshrl.u32 %v1334, 16
      %v1563 = vrot.slane %v1561, 7
      %v1564 = vshll.u32 %v1334, 16
      %v1566 = vor.u32 %v1563, %v1564
      %v1567 = vsel %vm382, %v1559, %v1566
      %v1568 = vrot.slane %v1563, 4
      %v1570 = vshrl.u32 %v1335, 16
      %v1572 = vrot.slane %v1570, 7
      %v1573 = vshll.u32 %v1335, 16
      %v1575 = vor.u32 %v1572, %v1573
      %v1576 = vsel %vm382, %v1568, %v1575
      %v1577 = vrot.slane %v1572, 4
      %v1579 = vshrl.u32 %v1336, 16
      %v1581 = vrot.slane %v1579, 7
      %v1582 = vshll.u32 %v1336, 16
      %v1584 = vor.u32 %v1581, %v1582
      %v1585 = vsel %vm382, %v1577, %v1584
      %v1586 = vrot.slane %v1581, 4
      %v1588 = vshrl.u32 %v1337, 16
      %v1590 = vrot.slane %v1588, 7
      %v1591 = vshll.u32 %v1337, 16
      %v1593 = vor.u32 %v1590, %v1591
      %v1594 = vsel %vm382, %v1586, %v1593
      %v1595 = vrot.slane %v1590, 4
      %v1597 = vshrl.u32 %v1338, 16
      %v1599 = vrot.slane %v1597, 7
      %v1600 = vshll.u32 %v1338, 16
      %v1602 = vor.u32 %v1599, %v1600
      %v1603 = vsel %vm382, %v1595, %v1602
      %v1604 = vrot.slane %v1599, 4
      %v1606 = vshrl.u32 %v1339, 16
      %v1608 = vrot.slane %v1606, 7
      %v1609 = vshll.u32 %v1339, 16
      %v1611 = vor.u32 %v1608, %v1609
      %v1612 = vsel %vm382, %v1604, %v1611
      %v1613 = vrot.slane %v1608, 4
      %v1615 = vshrl.u32 %v1340, 16
      %v1617 = vrot.slane %v1615, 7
      %v1618 = vshll.u32 %v1340, 16
      %v1620 = vor.u32 %v1617, %v1618
      %v1621 = vsel %vm382, %v1613, %v1620
      %v1622 = vrot.slane %v1617, 4
      %v1624 = vshrl.u32 %v1341, 16
      %v1626 = vrot.slane %v1624, 7
      %v1627 = vshll.u32 %v1341, 16
      %v1629 = vor.u32 %v1626, %v1627
      %v1630 = vsel %vm382, %v1622, %v1629
      %v1631 = vrot.slane %v1626, 4
      %v1633 = vshrl.u32 %v1342, 16
      %v1635 = vrot.slane %v1633, 7
      %v1636 = vshll.u32 %v1342, 16
      %v1638 = vor.u32 %v1635, %v1636
      %v1639 = vsel %vm382, %v1631, %v1638
      %v1640 = vrot.slane %v1635, 4
      %v1642 = vshrl.u32 %v1343, 16
      %v1644 = vrot.slane %v1642, 7
      %v1645 = vshll.u32 %v1343, 16
      %v1647 = vor.u32 %v1644, %v1645
      %v1648 = vsel %vm382, %v1640, %v1647
      %v1649 = vrot.slane %v1644, 4
      %v1651 = vshrl.u32 %v1344, 16
      %v1653 = vrot.slane %v1651, 7
      %v1654 = vshll.u32 %v1344, 16
      %v1656 = vor.u32 %v1653, %v1654
      %v1657 = vsel %vm382, %v1649, %v1656
      %v1658 = vrot.slane %v1653, 4
      %v1660 = vshrl.u32 %v1345, 16
      %v1662 = vrot.slane %v1660, 7
      %v1663 = vshll.u32 %v1345, 16
      %v1665 = vor.u32 %v1662, %v1663
      %v1666 = vsel %vm382, %v1658, %v1665
      %v1667 = vrot.slane %v1662, 4
      %v1669 = vshrl.u32 %v1346, 16
      %v1671 = vrot.slane %v1669, 7
      %v1672 = vshll.u32 %v1346, 16
      %v1674 = vor.u32 %v1671, %v1672
      %v1675 = vsel %vm382, %v1667, %v1674
      %v1676 = vrot.slane %v1671, 4
      %v1678 = vshrl.u32 %v1347, 16
      %v1680 = vrot.slane %v1678, 7
      %v1681 = vshll.u32 %v1347, 16
      %v1683 = vor.u32 %v1680, %v1681
      %v1684 = vsel %vm382, %v1676, %v1683
      %v1685 = vrot.slane %v1680, 4
      %v1687 = vshrl.u32 %v1348, 16
      %v1689 = vrot.slane %v1687, 7
      %v1690 = vshll.u32 %v1348, 16
      %v1692 = vor.u32 %v1689, %v1690
      %v1693 = vsel %vm382, %v1685, %v1692
      %v1694 = vrot.slane %v1689, 4
      %v1696 = vshrl.u32 %v1349, 16
      %v1698 = vrot.slane %v1696, 7
      %v1699 = vshll.u32 %v1349, 16
      %v1701 = vor.u32 %v1698, %v1699
      %v1702 = vsel %vm382, %v1694, %v1701
      %v1703 = vrot.slane %v1698, 4
      %v1705 = vshrl.u32 %v1350, 16
      %v1707 = vrot.slane %v1705, 7
      %v1708 = vshll.u32 %v1350, 16
      %v1710 = vor.u32 %v1707, %v1708
      %v1711 = vsel %vm382, %v1703, %v1710
      %v1712 = vrot.slane %v1707, 4
      %v1714 = vshrl.u32 %v1351, 16
      %v1716 = vrot.slane %v1714, 7
      %v1717 = vshll.u32 %v1351, 16
      %v1719 = vor.u32 %v1716, %v1717
      %v1720 = vsel %vm382, %v1712, %v1719
      %v1721 = vrot.slane %v1716, 4
      %v1723 = vshrl.u32 %v1352, 16
      %v1725 = vrot.slane %v1723, 7
      %v1726 = vshll.u32 %v1352, 16
      %v1728 = vor.u32 %v1725, %v1726
      %v1729 = vsel %vm382, %v1721, %v1728
      %v1771 = vsel %vm1356, %v336, %v1369
      %v1772 = vsel %vm1356, %v337, %v1378
      %v1773 = vsel %vm1356, %v338, %v1387
      %v1774 = vsel %vm1356, %v339, %v1396
      %v1775 = vsel %vm1356, %v340, %v1405
      %v1776 = vsel %vm1356, %v341, %v1414
      %v1777 = vsel %vm1356, %v342, %v1423
      %v1778 = vsel %vm1356, %v343, %v1432
      %v1779 = vsel %vm1356, %v344, %v1441
      %v1780 = vsel %vm1356, %v345, %v1450
      %v1781 = vsel %vm1356, %v346, %v1459
      %v1782 = vsel %vm1356, %v347, %v1468
      %v1783 = vsel %vm1356, %v348, %v1477
      %v1784 = vsel %vm1356, %v349, %v1486
      %v1785 = vsel %vm1356, %v350, %v1495
      %v1786 = vsel %vm1356, %v351, %v1504
      %v1787 = vsel %vm1356, %v352, %v1513
      %v1788 = vsel %vm1356, %v353, %v1522
      %v1789 = vsel %vm1356, %v354, %v1531
      %v1790 = vsel %vm1356, %v355, %v1540
      %v1791 = vsel %vm1356, %v356, %v1549
      %v1792 = vsel %vm1356, %v357, %v1558
      %v1793 = vsel %vm1356, %v358, %v1567
      %v1794 = vsel %vm1356, %v359, %v1576
      %v1795 = vsel %vm1356, %v360, %v1585
      %v1796 = vsel %vm1356, %v361, %v1594
      %v1797 = vsel %vm1356, %v362, %v1603
      %v1798 = vsel %vm1356, %v363, %v1612
      %v1799 = vsel %vm1356, %v364, %v1621
      %v1800 = vsel %vm1356, %v365, %v1630
      %v1801 = vsel %vm1356, %v366, %v1639
      %v1802 = vsel %vm1356, %v367, %v1648
      %v1803 = vsel %vm1356, %v368, %v1657
      %v1804 = vsel %vm1356, %v369, %v1666
      %v1805 = vsel %vm1356, %v370, %v1675
      %v1806 = vsel %vm1356, %v371, %v1684
      %v1807 = vsel %vm1356, %v372, %v1693
      %v1808 = vsel %vm1356, %v373, %v1702
      %v1809 = vsel %vm1356, %v1305, %v1711
      %v1810 = vsel %vm1356, %v1306, %v1720
      %v1811 = vsel %vm1356, %v1307, %v1729
      %vm1812 = vcmp.ge.s32.totalorder %v283, 20
      %v1813 = vld [vmem:[%s273 + $0xac] sm:$0x7]
      %v1814 = vsel %vm1812, 1, 0
      %vm1815 = vcmp.eq.s32.totalorder %v1814, 1
      %vm1816 = vmpackc.low %vm1815, %vm1815
      %v1818 = vshrl.u32 %v1771, 16
      %v1820 = vrot.slane %v1818, 7
      %v1821 = vshll.u32 %v1771, 16
      %v1823 = vor.u32 %v1820, %v1821
      %v1824 = vrot.slane %v1820, 4
      %v1826 = vshrl.u32 %v1772, 16
      %v1828 = vrot.slane %v1826, 7
      %v1829 = vshll.u32 %v1772, 16
      %v1831 = vor.u32 %v1828, %v1829
      %v1832 = vsel %vm382, %v1824, %v1831
      %v1833 = vrot.slane %v1828, 4
      %v1835 = vshrl.u32 %v1773, 16
      %v1837 = vrot.slane %v1835, 7
      %v1838 = vshll.u32 %v1773, 16
      %v1840 = vor.u32 %v1837, %v1838
      %v1841 = vsel %vm382, %v1833, %v1840
      %v1842 = vrot.slane %v1837, 4
      %v1844 = vshrl.u32 %v1774, 16
      %v1846 = vrot.slane %v1844, 7
      %v1847 = vshll.u32 %v1774, 16
      %v1849 = vor.u32 %v1846, %v1847
      %v1850 = vsel %vm382, %v1842, %v1849
      %v1851 = vrot.slane %v1846, 4
      %v1853 = vshrl.u32 %v1775, 16
      %v1855 = vrot.slane %v1853, 7
      %v1856 = vshll.u32 %v1775, 16
      %v1858 = vor.u32 %v1855, %v1856
      %v1859 = vsel %vm382, %v1851, %v1858
      %v1860 = vrot.slane %v1855, 4
      %v1862 = vshrl.u32 %v1776, 16
      %v1864 = vrot.slane %v1862, 7
      %v1865 = vshll.u32 %v1776, 16
      %v1867 = vor.u32 %v1864, %v1865
      %v1868 = vsel %vm382, %v1860, %v1867
      %v1869 = vrot.slane %v1864, 4
      %v1871 = vshrl.u32 %v1777, 16
      %v1873 = vrot.slane %v1871, 7
      %v1874 = vshll.u32 %v1777, 16
      %v1876 = vor.u32 %v1873, %v1874
      %v1877 = vsel %vm382, %v1869, %v1876
      %v1878 = vrot.slane %v1873, 4
      %v1880 = vshrl.u32 %v1778, 16
      %v1882 = vrot.slane %v1880, 7
      %v1883 = vshll.u32 %v1778, 16
      %v1885 = vor.u32 %v1882, %v1883
      %v1886 = vsel %vm382, %v1878, %v1885
      %v1887 = vrot.slane %v1882, 4
      %v1889 = vshrl.u32 %v1779, 16
      %v1891 = vrot.slane %v1889, 7
      %v1892 = vshll.u32 %v1779, 16
      %v1894 = vor.u32 %v1891, %v1892
      %v1895 = vsel %vm382, %v1887, %v1894
      %v1896 = vrot.slane %v1891, 4
      %v1898 = vshrl.u32 %v1780, 16
      %v1900 = vrot.slane %v1898, 7
      %v1901 = vshll.u32 %v1780, 16
      %v1903 = vor.u32 %v1900, %v1901
      %v1904 = vsel %vm382, %v1896, %v1903
      %v1905 = vrot.slane %v1900, 4
      %v1907 = vshrl.u32 %v1781, 16
      %v1909 = vrot.slane %v1907, 7
      %v1910 = vshll.u32 %v1781, 16
      %v1912 = vor.u32 %v1909, %v1910
      %v1913 = vsel %vm382, %v1905, %v1912
      %v1914 = vrot.slane %v1909, 4
      %v1916 = vshrl.u32 %v1782, 16
      %v1918 = vrot.slane %v1916, 7
      %v1919 = vshll.u32 %v1782, 16
      %v1921 = vor.u32 %v1918, %v1919
      %v1922 = vsel %vm382, %v1914, %v1921
      %v1923 = vrot.slane %v1918, 4
      %v1925 = vshrl.u32 %v1783, 16
      %v1927 = vrot.slane %v1925, 7
      %v1928 = vshll.u32 %v1783, 16
      %v1930 = vor.u32 %v1927, %v1928
      %v1931 = vsel %vm382, %v1923, %v1930
      %v1932 = vrot.slane %v1927, 4
      %v1934 = vshrl.u32 %v1784, 16
      %v1936 = vrot.slane %v1934, 7
      %v1937 = vshll.u32 %v1784, 16
      %v1939 = vor.u32 %v1936, %v1937
      %v1940 = vsel %vm382, %v1932, %v1939
      %v1941 = vrot.slane %v1936, 4
      %v1943 = vshrl.u32 %v1785, 16
      %v1945 = vrot.slane %v1943, 7
      %v1946 = vshll.u32 %v1785, 16
      %v1948 = vor.u32 %v1945, %v1946
      %v1949 = vsel %vm382, %v1941, %v1948
      %v1950 = vrot.slane %v1945, 4
      %v1952 = vshrl.u32 %v1786, 16
      %v1954 = vrot.slane %v1952, 7
      %v1955 = vshll.u32 %v1786, 16
      %v1957 = vor.u32 %v1954, %v1955
      %v1958 = vsel %vm382, %v1950, %v1957
      %v1959 = vrot.slane %v1954, 4
      %v1961 = vshrl.u32 %v1787, 16
      %v1963 = vrot.slane %v1961, 7
      %v1964 = vshll.u32 %v1787, 16
      %v1966 = vor.u32 %v1963, %v1964
      %v1967 = vsel %vm382, %v1959, %v1966
      %v1968 = vrot.slane %v1963, 4
      %v1970 = vshrl.u32 %v1788, 16
      %v1972 = vrot.slane %v1970, 7
      %v1973 = vshll.u32 %v1788, 16
      %v1975 = vor.u32 %v1972, %v1973
      %v1976 = vsel %vm382, %v1968, %v1975
      %v1977 = vrot.slane %v1972, 4
      %v1979 = vshrl.u32 %v1789, 16
      %v1981 = vrot.slane %v1979, 7
      %v1982 = vshll.u32 %v1789, 16
      %v1984 = vor.u32 %v1981, %v1982
      %v1985 = vsel %vm382, %v1977, %v1984
      %v1986 = vrot.slane %v1981, 4
      %v1988 = vshrl.u32 %v1790, 16
      %v1990 = vrot.slane %v1988, 7
      %v1991 = vshll.u32 %v1790, 16
      %v1993 = vor.u32 %v1990, %v1991
      %v1994 = vsel %vm382, %v1986, %v1993
      %v1995 = vrot.slane %v1990, 4
      %v1997 = vshrl.u32 %v1791, 16
      %v1999 = vrot.slane %v1997, 7
      %v2000 = vshll.u32 %v1791, 16
      %v2002 = vor.u32 %v1999, %v2000
      %v2003 = vsel %vm382, %v1995, %v2002
      %v2004 = vrot.slane %v1999, 4
      %v2006 = vshrl.u32 %v1792, 16
      %v2008 = vrot.slane %v2006, 7
      %v2009 = vshll.u32 %v1792, 16
      %v2011 = vor.u32 %v2008, %v2009
      %v2012 = vsel %vm382, %v2004, %v2011
      %v2013 = vrot.slane %v2008, 4
      %v2015 = vshrl.u32 %v1793, 16
      %v2017 = vrot.slane %v2015, 7
      %v2018 = vshll.u32 %v1793, 16
      %v2020 = vor.u32 %v2017, %v2018
      %v2021 = vsel %vm382, %v2013, %v2020
      %v2022 = vrot.slane %v2017, 4
      %v2024 = vshrl.u32 %v1794, 16
      %v2026 = vrot.slane %v2024, 7
      %v2027 = vshll.u32 %v1794, 16
      %v2029 = vor.u32 %v2026, %v2027
      %v2030 = vsel %vm382, %v2022, %v2029
      %v2031 = vrot.slane %v2026, 4
      %v2033 = vshrl.u32 %v1795, 16
      %v2035 = vrot.slane %v2033, 7
      %v2036 = vshll.u32 %v1795, 16
      %v2038 = vor.u32 %v2035, %v2036
      %v2039 = vsel %vm382, %v2031, %v2038
      %v2040 = vrot.slane %v2035, 4
      %v2042 = vshrl.u32 %v1796, 16
      %v2044 = vrot.slane %v2042, 7
      %v2045 = vshll.u32 %v1796, 16
      %v2047 = vor.u32 %v2044, %v2045
      %v2048 = vsel %vm382, %v2040, %v2047
      %v2049 = vrot.slane %v2044, 4
      %v2051 = vshrl.u32 %v1797, 16
      %v2053 = vrot.slane %v2051, 7
      %v2054 = vshll.u32 %v1797, 16
      %v2056 = vor.u32 %v2053, %v2054
      %v2057 = vsel %vm382, %v2049, %v2056
      %v2058 = vrot.slane %v2053, 4
      %v2060 = vshrl.u32 %v1798, 16
      %v2062 = vrot.slane %v2060, 7
      %v2063 = vshll.u32 %v1798, 16
      %v2065 = vor.u32 %v2062, %v2063
      %v2066 = vsel %vm382, %v2058, %v2065
      %v2067 = vrot.slane %v2062, 4
      %v2069 = vshrl.u32 %v1799, 16
      %v2071 = vrot.slane %v2069, 7
      %v2072 = vshll.u32 %v1799, 16
      %v2074 = vor.u32 %v2071, %v2072
      %v2075 = vsel %vm382, %v2067, %v2074
      %v2076 = vrot.slane %v2071, 4
      %v2078 = vshrl.u32 %v1800, 16
      %v2080 = vrot.slane %v2078, 7
      %v2081 = vshll.u32 %v1800, 16
      %v2083 = vor.u32 %v2080, %v2081
      %v2084 = vsel %vm382, %v2076, %v2083
      %v2085 = vrot.slane %v2080, 4
      %v2087 = vshrl.u32 %v1801, 16
      %v2089 = vrot.slane %v2087, 7
      %v2090 = vshll.u32 %v1801, 16
      %v2092 = vor.u32 %v2089, %v2090
      %v2093 = vsel %vm382, %v2085, %v2092
      %v2094 = vrot.slane %v2089, 4
      %v2096 = vshrl.u32 %v1802, 16
      %v2098 = vrot.slane %v2096, 7
      %v2099 = vshll.u32 %v1802, 16
      %v2101 = vor.u32 %v2098, %v2099
      %v2102 = vsel %vm382, %v2094, %v2101
      %v2103 = vrot.slane %v2098, 4
      %v2105 = vshrl.u32 %v1803, 16
      %v2107 = vrot.slane %v2105, 7
      %v2108 = vshll.u32 %v1803, 16
      %v2110 = vor.u32 %v2107, %v2108
      %v2111 = vsel %vm382, %v2103, %v2110
      %v2112 = vrot.slane %v2107, 4
      %v2114 = vshrl.u32 %v1804, 16
      %v2116 = vrot.slane %v2114, 7
      %v2117 = vshll.u32 %v1804, 16
      %v2119 = vor.u32 %v2116, %v2117
      %v2120 = vsel %vm382, %v2112, %v2119
      %v2121 = vrot.slane %v2116, 4
      %v2123 = vshrl.u32 %v1805, 16
      %v2125 = vrot.slane %v2123, 7
      %v2126 = vshll.u32 %v1805, 16
      %v2128 = vor.u32 %v2125, %v2126
      %v2129 = vsel %vm382, %v2121, %v2128
      %v2130 = vrot.slane %v2125, 4
      %v2132 = vshrl.u32 %v1806, 16
      %v2134 = vrot.slane %v2132, 7
      %v2135 = vshll.u32 %v1806, 16
      %v2137 = vor.u32 %v2134, %v2135
      %v2138 = vsel %vm382, %v2130, %v2137
      %v2139 = vrot.slane %v2134, 4
      %v2141 = vshrl.u32 %v1807, 16
      %v2143 = vrot.slane %v2141, 7
      %v2144 = vshll.u32 %v1807, 16
      %v2146 = vor.u32 %v2143, %v2144
      %v2147 = vsel %vm382, %v2139, %v2146
      %v2148 = vrot.slane %v2143, 4
      %v2150 = vshrl.u32 %v1808, 16
      %v2152 = vrot.slane %v2150, 7
      %v2153 = vshll.u32 %v1808, 16
      %v2155 = vor.u32 %v2152, %v2153
      %v2156 = vsel %vm382, %v2148, %v2155
      %v2157 = vrot.slane %v2152, 4
      %v2159 = vshrl.u32 %v1809, 16
      %v2161 = vrot.slane %v2159, 7
      %v2162 = vshll.u32 %v1809, 16
      %v2164 = vor.u32 %v2161, %v2162
      %v2165 = vsel %vm382, %v2157, %v2164
      %v2166 = vrot.slane %v2161, 4
      %v2168 = vshrl.u32 %v1810, 16
      %v2170 = vrot.slane %v2168, 7
      %v2171 = vshll.u32 %v1810, 16
      %v2173 = vor.u32 %v2170, %v2171
      %v2174 = vsel %vm382, %v2166, %v2173
      %v2175 = vrot.slane %v2170, 4
      %v2177 = vshrl.u32 %v1811, 16
      %v2179 = vrot.slane %v2177, 7
      %v2180 = vshll.u32 %v1811, 16
      %v2182 = vor.u32 %v2179, %v2180
      %v2183 = vsel %vm382, %v2175, %v2182
      %v2225 = vsel %vm1816, %v336, %v1823
      %v2226 = vsel %vm1816, %v337, %v1832
      %v2227 = vsel %vm1816, %v338, %v1841
      %v2228 = vsel %vm1816, %v339, %v1850
      %v2229 = vsel %vm1816, %v340, %v1859
      %v2230 = vsel %vm1816, %v341, %v1868
      %v2231 = vsel %vm1816, %v342, %v1877
      %v2232 = vsel %vm1816, %v343, %v1886
      %v2233 = vsel %vm1816, %v344, %v1895
      %v2234 = vsel %vm1816, %v345, %v1904
      %v2235 = vsel %vm1816, %v346, %v1913
      %v2236 = vsel %vm1816, %v347, %v1922
      %v2237 = vsel %vm1816, %v348, %v1931
      %v2238 = vsel %vm1816, %v349, %v1940
      %v2239 = vsel %vm1816, %v350, %v1949
      %v2240 = vsel %vm1816, %v351, %v1958
      %v2241 = vsel %vm1816, %v352, %v1967
      %v2242 = vsel %vm1816, %v353, %v1976
      %v2243 = vsel %vm1816, %v354, %v1985
      %v2244 = vsel %vm1816, %v355, %v1994
      %v2245 = vsel %vm1816, %v356, %v2003
      %v2246 = vsel %vm1816, %v357, %v2012
      %v2247 = vsel %vm1816, %v358, %v2021
      %v2248 = vsel %vm1816, %v359, %v2030
      %v2249 = vsel %vm1816, %v360, %v2039
      %v2250 = vsel %vm1816, %v361, %v2048
      %v2251 = vsel %vm1816, %v362, %v2057
      %v2252 = vsel %vm1816, %v363, %v2066
      %v2253 = vsel %vm1816, %v364, %v2075
      %v2254 = vsel %vm1816, %v365, %v2084
      %v2255 = vsel %vm1816, %v366, %v2093
      %v2256 = vsel %vm1816, %v367, %v2102
      %v2257 = vsel %vm1816, %v368, %v2111
      %v2258 = vsel %vm1816, %v369, %v2120
      %v2259 = vsel %vm1816, %v370, %v2129
      %v2260 = vsel %vm1816, %v371, %v2138
      %v2261 = vsel %vm1816, %v372, %v2147
      %v2262 = vsel %vm1816, %v373, %v2156
      %v2263 = vsel %vm1816, %v1305, %v2165
      %v2264 = vsel %vm1816, %v1306, %v2174
      %v2265 = vsel %vm1816, %v1813, %v2183
      %vm2266 = vcmp.ge.s32.totalorder %v283, 24
      %v2267 = vld [vmem:[%s273 + $0xac] sm:$0xf]
      %v2268 = vld [vmem:[%s273 + $0xb0] sm:$0xf]
      %v2269 = vld [vmem:[%s273 + $0xb4] sm:$0x7]
      %v2270 = vsel %vm2266, 1, 0
      %vm2271 = vcmp.eq.s32.totalorder %v2270, 1
      %vm2272 = vmpackc.low %vm2271, %vm2271
      %v2273 = vsel %vm2272, %v338, %v2225
      %v2274 = vsel %vm2272, %v339, %v2226
      %v2275 = vsel %vm2272, %v340, %v2227
      %v2276 = vsel %vm2272, %v341, %v2228
      %v2277 = vsel %vm2272, %v342, %v2229
      %v2278 = vsel %vm2272, %v343, %v2230
      %v2279 = vsel %vm2272, %v344, %v2231
      %v2280 = vsel %vm2272, %v345, %v2232
      %v2281 = vsel %vm2272, %v346, %v2233
      %v2282 = vsel %vm2272, %v347, %v2234
      %v2283 = vsel %vm2272, %v348, %v2235
      %v2284 = vsel %vm2272, %v349, %v2236
      %v2285 = vsel %vm2272, %v350, %v2237
      %v2286 = vsel %vm2272, %v351, %v2238
      %v2287 = vsel %vm2272, %v352, %v2239
      %v2288 = vsel %vm2272, %v353, %v2240
      %v2289 = vsel %vm2272, %v354, %v2241
      %v2290 = vsel %vm2272, %v355, %v2242
      %v2291 = vsel %vm2272, %v356, %v2243
      %v2292 = vsel %vm2272, %v357, %v2244
      %v2293 = vsel %vm2272, %v358, %v2245
      %v2294 = vsel %vm2272, %v359, %v2246
      %v2295 = vsel %vm2272, %v360, %v2247
      %v2296 = vsel %vm2272, %v361, %v2248
      %v2297 = vsel %vm2272, %v362, %v2249
      %v2298 = vsel %vm2272, %v363, %v2250
      %v2299 = vsel %vm2272, %v364, %v2251
      %v2300 = vsel %vm2272, %v365, %v2252
      %v2301 = vsel %vm2272, %v366, %v2253
      %v2302 = vsel %vm2272, %v367, %v2254
      %v2303 = vsel %vm2272, %v368, %v2255
      %v2304 = vsel %vm2272, %v369, %v2256
      %v2305 = vsel %vm2272, %v370, %v2257
      %v2306 = vsel %vm2272, %v371, %v2258
      %v2307 = vsel %vm2272, %v372, %v2259
      %v2308 = vsel %vm2272, %v373, %v2260
      %v2309 = vsel %vm2272, %v1305, %v2261
      %v2310 = vsel %vm2272, %v1306, %v2262
      %v2311 = vsel %vm2272, %v2267, %v2263
      %v2312 = vsel %vm2272, %v2268, %v2264
      %v2313 = vsel %vm2272, %v2269, %v2265
      %vm2314 = vcmp.ge.s32.totalorder %v283, 28
      %v2315 = vld [vmem:[%s273 + $0x14] sm:$0xe]
      %v2316 = vsel %vm2314, 1, 0
      %vm2317 = vcmp.eq.s32.totalorder %v2316, 1
      %vm2318 = vmpackc.low %vm2317, %vm2317
      %v2320 = vshrl.u32 %v2273, 16
      %v2322 = vrot.slane %v2320, 7
      %v2323 = vshll.u32 %v2273, 16
      %v2325 = vor.u32 %v2322, %v2323
      %v2326 = vrot.slane %v2322, 4
      %v2328 = vshrl.u32 %v2274, 16
      %v2330 = vrot.slane %v2328, 7
      %v2331 = vshll.u32 %v2274, 16
      %v2333 = vor.u32 %v2330, %v2331
      %v2334 = vsel %vm382, %v2326, %v2333
      %v2335 = vrot.slane %v2330, 4
      %v2337 = vshrl.u32 %v2275, 16
      %v2339 = vrot.slane %v2337, 7
      %v2340 = vshll.u32 %v2275, 16
      %v2342 = vor.u32 %v2339, %v2340
      %v2343 = vsel %vm382, %v2335, %v2342
      %v2344 = vrot.slane %v2339, 4
      %v2346 = vshrl.u32 %v2276, 16
      %v2348 = vrot.slane %v2346, 7
      %v2349 = vshll.u32 %v2276, 16
      %v2351 = vor.u32 %v2348, %v2349
      %v2352 = vsel %vm382, %v2344, %v2351
      %v2353 = vrot.slane %v2348, 4
      %v2355 = vshrl.u32 %v2277, 16
      %v2357 = vrot.slane %v2355, 7
      %v2358 = vshll.u32 %v2277, 16
      %v2360 = vor.u32 %v2357, %v2358
      %v2361 = vsel %vm382, %v2353, %v2360
      %v2362 = vrot.slane %v2357, 4
      %v2364 = vshrl.u32 %v2278, 16
      %v2366 = vrot.slane %v2364, 7
      %v2367 = vshll.u32 %v2278, 16
      %v2369 = vor.u32 %v2366, %v2367
      %v2370 = vsel %vm382, %v2362, %v2369
      %v2371 = vrot.slane %v2366, 4
      %v2373 = vshrl.u32 %v2279, 16
      %v2375 = vrot.slane %v2373, 7
      %v2376 = vshll.u32 %v2279, 16
      %v2378 = vor.u32 %v2375, %v2376
      %v2379 = vsel %vm382, %v2371, %v2378
      %v2380 = vrot.slane %v2375, 4
      %v2382 = vshrl.u32 %v2280, 16
      %v2384 = vrot.slane %v2382, 7
      %v2385 = vshll.u32 %v2280, 16
      %v2387 = vor.u32 %v2384, %v2385
      %v2388 = vsel %vm382, %v2380, %v2387
      %v2389 = vrot.slane %v2384, 4
      %v2391 = vshrl.u32 %v2281, 16
      %v2393 = vrot.slane %v2391, 7
      %v2394 = vshll.u32 %v2281, 16
      %v2396 = vor.u32 %v2393, %v2394
      %v2397 = vsel %vm382, %v2389, %v2396
      %v2398 = vrot.slane %v2393, 4
      %v2400 = vshrl.u32 %v2282, 16
      %v2402 = vrot.slane %v2400, 7
      %v2403 = vshll.u32 %v2282, 16
      %v2405 = vor.u32 %v2402, %v2403
      %v2406 = vsel %vm382, %v2398, %v2405
      %v2407 = vrot.slane %v2402, 4
      %v2409 = vshrl.u32 %v2283, 16
      %v2411 = vrot.slane %v2409, 7
      %v2412 = vshll.u32 %v2283, 16
      %v2414 = vor.u32 %v2411, %v2412
      %v2415 = vsel %vm382, %v2407, %v2414
      %v2416 = vrot.slane %v2411, 4
      %v2418 = vshrl.u32 %v2284, 16
      %v2420 = vrot.slane %v2418, 7
      %v2421 = vshll.u32 %v2284, 16
      %v2423 = vor.u32 %v2420, %v2421
      %v2424 = vsel %vm382, %v2416, %v2423
      %v2425 = vrot.slane %v2420, 4
      %v2427 = vshrl.u32 %v2285, 16
      %v2429 = vrot.slane %v2427, 7
      %v2430 = vshll.u32 %v2285, 16
      %v2432 = vor.u32 %v2429, %v2430
      %v2433 = vsel %vm382, %v2425, %v2432
      %v2434 = vrot.slane %v2429, 4
      %v2436 = vshrl.u32 %v2286, 16
      %v2438 = vrot.slane %v2436, 7
      %v2439 = vshll.u32 %v2286, 16
      %v2441 = vor.u32 %v2438, %v2439
      %v2442 = vsel %vm382, %v2434, %v2441
      %v2443 = vrot.slane %v2438, 4
      %v2445 = vshrl.u32 %v2287, 16
      %v2447 = vrot.slane %v2445, 7
      %v2448 = vshll.u32 %v2287, 16
      %v2450 = vor.u32 %v2447, %v2448
      %v2451 = vsel %vm382, %v2443, %v2450
      %v2452 = vrot.slane %v2447, 4
      %v2454 = vshrl.u32 %v2288, 16
      %v2456 = vrot.slane %v2454, 7
      %v2457 = vshll.u32 %v2288, 16
      %v2459 = vor.u32 %v2456, %v2457
      %v2460 = vsel %vm382, %v2452, %v2459
      %v2461 = vrot.slane %v2456, 4
      %v2463 = vshrl.u32 %v2289, 16
      %v2465 = vrot.slane %v2463, 7
      %v2466 = vshll.u32 %v2289, 16
      %v2468 = vor.u32 %v2465, %v2466
      %v2469 = vsel %vm382, %v2461, %v2468
      %v2470 = vrot.slane %v2465, 4
      %v2472 = vshrl.u32 %v2290, 16
      %v2474 = vrot.slane %v2472, 7
      %v2475 = vshll.u32 %v2290, 16
      %v2477 = vor.u32 %v2474, %v2475
      %v2478 = vsel %vm382, %v2470, %v2477
      %v2479 = vrot.slane %v2474, 4
      %v2481 = vshrl.u32 %v2291, 16
      %v2483 = vrot.slane %v2481, 7
      %v2484 = vshll.u32 %v2291, 16
      %v2486 = vor.u32 %v2483, %v2484
      %v2487 = vsel %vm382, %v2479, %v2486
      %v2488 = vrot.slane %v2483, 4
      %v2490 = vshrl.u32 %v2292, 16
      %v2492 = vrot.slane %v2490, 7
      %v2493 = vshll.u32 %v2292, 16
      %v2495 = vor.u32 %v2492, %v2493
      %v2496 = vsel %vm382, %v2488, %v2495
      %v2497 = vrot.slane %v2492, 4
      %v2499 = vshrl.u32 %v2293, 16
      %v2501 = vrot.slane %v2499, 7
      %v2502 = vshll.u32 %v2293, 16
      %v2504 = vor.u32 %v2501, %v2502
      %v2505 = vsel %vm382, %v2497, %v2504
      %v2506 = vrot.slane %v2501, 4
      %v2508 = vshrl.u32 %v2294, 16
      %v2510 = vrot.slane %v2508, 7
      %v2511 = vshll.u32 %v2294, 16
      %v2513 = vor.u32 %v2510, %v2511
      %v2514 = vsel %vm382, %v2506, %v2513
      %v2515 = vrot.slane %v2510, 4
      %v2517 = vshrl.u32 %v2295, 16
      %v2519 = vrot.slane %v2517, 7
      %v2520 = vshll.u32 %v2295, 16
      %v2522 = vor.u32 %v2519, %v2520
      %v2523 = vsel %vm382, %v2515, %v2522
      %v2524 = vrot.slane %v2519, 4
      %v2526 = vshrl.u32 %v2296, 16
      %v2528 = vrot.slane %v2526, 7
      %v2529 = vshll.u32 %v2296, 16
      %v2531 = vor.u32 %v2528, %v2529
      %v2532 = vsel %vm382, %v2524, %v2531
      %v2533 = vrot.slane %v2528, 4
      %v2535 = vshrl.u32 %v2297, 16
      %v2537 = vrot.slane %v2535, 7
      %v2538 = vshll.u32 %v2297, 16
      %v2540 = vor.u32 %v2537, %v2538
      %v2541 = vsel %vm382, %v2533, %v2540
      %v2542 = vrot.slane %v2537, 4
      %v2544 = vshrl.u32 %v2298, 16
      %v2546 = vrot.slane %v2544, 7
      %v2547 = vshll.u32 %v2298, 16
      %v2549 = vor.u32 %v2546, %v2547
      %v2550 = vsel %vm382, %v2542, %v2549
      %v2551 = vrot.slane %v2546, 4
      %v2553 = vshrl.u32 %v2299, 16
      %v2555 = vrot.slane %v2553, 7
      %v2556 = vshll.u32 %v2299, 16
      %v2558 = vor.u32 %v2555, %v2556
      %v2559 = vsel %vm382, %v2551, %v2558
      %v2560 = vrot.slane %v2555, 4
      %v2562 = vshrl.u32 %v2300, 16
      %v2564 = vrot.slane %v2562, 7
      %v2565 = vshll.u32 %v2300, 16
      %v2567 = vor.u32 %v2564, %v2565
      %v2568 = vsel %vm382, %v2560, %v2567
      %v2569 = vrot.slane %v2564, 4
      %v2571 = vshrl.u32 %v2301, 16
      %v2573 = vrot.slane %v2571, 7
      %v2574 = vshll.u32 %v2301, 16
      %v2576 = vor.u32 %v2573, %v2574
      %v2577 = vsel %vm382, %v2569, %v2576
      %v2578 = vrot.slane %v2573, 4
      %v2580 = vshrl.u32 %v2302, 16
      %v2582 = vrot.slane %v2580, 7
      %v2583 = vshll.u32 %v2302, 16
      %v2585 = vor.u32 %v2582, %v2583
      %v2586 = vsel %vm382, %v2578, %v2585
      %v2587 = vrot.slane %v2582, 4
      %v2589 = vshrl.u32 %v2303, 16
      %v2591 = vrot.slane %v2589, 7
      %v2592 = vshll.u32 %v2303, 16
      %v2594 = vor.u32 %v2591, %v2592
      %v2595 = vsel %vm382, %v2587, %v2594
      %v2596 = vrot.slane %v2591, 4
      %v2598 = vshrl.u32 %v2304, 16
      %v2600 = vrot.slane %v2598, 7
      %v2601 = vshll.u32 %v2304, 16
      %v2603 = vor.u32 %v2600, %v2601
      %v2604 = vsel %vm382, %v2596, %v2603
      %v2605 = vrot.slane %v2600, 4
      %v2607 = vshrl.u32 %v2305, 16
      %v2609 = vrot.slane %v2607, 7
      %v2610 = vshll.u32 %v2305, 16
      %v2612 = vor.u32 %v2609, %v2610
      %v2613 = vsel %vm382, %v2605, %v2612
      %v2614 = vrot.slane %v2609, 4
      %v2616 = vshrl.u32 %v2306, 16
      %v2618 = vrot.slane %v2616, 7
      %v2619 = vshll.u32 %v2306, 16
      %v2621 = vor.u32 %v2618, %v2619
      %v2622 = vsel %vm382, %v2614, %v2621
      %v2623 = vrot.slane %v2618, 4
      %v2625 = vshrl.u32 %v2307, 16
      %v2627 = vrot.slane %v2625, 7
      %v2628 = vshll.u32 %v2307, 16
      %v2630 = vor.u32 %v2627, %v2628
      %v2631 = vsel %vm382, %v2623, %v2630
      %v2632 = vrot.slane %v2627, 4
      %v2634 = vshrl.u32 %v2308, 16
      %v2636 = vrot.slane %v2634, 7
      %v2637 = vshll.u32 %v2308, 16
      %v2639 = vor.u32 %v2636, %v2637
      %v2640 = vsel %vm382, %v2632, %v2639
      %v2641 = vrot.slane %v2636, 4
      %v2643 = vshrl.u32 %v2309, 16
      %v2645 = vrot.slane %v2643, 7
      %v2646 = vshll.u32 %v2309, 16
      %v2648 = vor.u32 %v2645, %v2646
      %v2649 = vsel %vm382, %v2641, %v2648
      %v2650 = vrot.slane %v2645, 4
      %v2652 = vshrl.u32 %v2310, 16
      %v2654 = vrot.slane %v2652, 7
      %v2655 = vshll.u32 %v2310, 16
      %v2657 = vor.u32 %v2654, %v2655
      %v2658 = vsel %vm382, %v2650, %v2657
      %v2659 = vrot.slane %v2654, 4
      %v2661 = vshrl.u32 %v2311, 16
      %v2663 = vrot.slane %v2661, 7
      %v2664 = vshll.u32 %v2311, 16
      %v2666 = vor.u32 %v2663, %v2664
      %v2667 = vsel %vm382, %v2659, %v2666
      %v2668 = vrot.slane %v2663, 4
      %v2670 = vshrl.u32 %v2312, 16
      %v2672 = vrot.slane %v2670, 7
      %v2673 = vshll.u32 %v2312, 16
      %v2675 = vor.u32 %v2672, %v2673
      %v2676 = vsel %vm382, %v2668, %v2675
      %v2677 = vrot.slane %v2672, 4
      %v2679 = vshrl.u32 %v2313, 16
      %v2681 = vrot.slane %v2679, 7
      %v2682 = vshll.u32 %v2313, 16
      %v2684 = vor.u32 %v2681, %v2682
      %v2685 = vsel %vm382, %v2677, %v2684
      %v2727 = vsel %vm2318, %v2315, %v2325
      %v2728 = vsel %vm2318, %v339, %v2334
      %v2729 = vsel %vm2318, %v340, %v2343
      %v2730 = vsel %vm2318, %v341, %v2352
      %v2731 = vsel %vm2318, %v342, %v2361
      %v2732 = vsel %vm2318, %v343, %v2370
      %v2733 = vsel %vm2318, %v344, %v2379
      %v2734 = vsel %vm2318, %v345, %v2388
      %v2735 = vsel %vm2318, %v346, %v2397
      %v2736 = vsel %vm2318, %v347, %v2406
      %v2737 = vsel %vm2318, %v348, %v2415
      %v2738 = vsel %vm2318, %v349, %v2424
      %v2739 = vsel %vm2318, %v350, %v2433
      %v2740 = vsel %vm2318, %v351, %v2442
      %v2741 = vsel %vm2318, %v352, %v2451
      %v2742 = vsel %vm2318, %v353, %v2460
      %v2743 = vsel %vm2318, %v354, %v2469
      %v2744 = vsel %vm2318, %v355, %v2478
      %v2745 = vsel %vm2318, %v356, %v2487
      %v2746 = vsel %vm2318, %v357, %v2496
      %v2747 = vsel %vm2318, %v358, %v2505
      %v2748 = vsel %vm2318, %v359, %v2514
      %v2749 = vsel %vm2318, %v360, %v2523
      %v2750 = vsel %vm2318, %v361, %v2532
      %v2751 = vsel %vm2318, %v362, %v2541
      %v2752 = vsel %vm2318, %v363, %v2550
      %v2753 = vsel %vm2318, %v364, %v2559
      %v2754 = vsel %vm2318, %v365, %v2568
      %v2755 = vsel %vm2318, %v366, %v2577
      %v2756 = vsel %vm2318, %v367, %v2586
      %v2757 = vsel %vm2318, %v368, %v2595
      %v2758 = vsel %vm2318, %v369, %v2604
      %v2759 = vsel %vm2318, %v370, %v2613
      %v2760 = vsel %vm2318, %v371, %v2622
      %v2761 = vsel %vm2318, %v372, %v2631
      %v2762 = vsel %vm2318, %v373, %v2640
      %v2763 = vsel %vm2318, %v1305, %v2649
      %v2764 = vsel %vm2318, %v1306, %v2658
      %v2765 = vsel %vm2318, %v2267, %v2667
      %v2766 = vsel %vm2318, %v2268, %v2676
      %v2767 = vsel %vm2318, %v2269, %v2685
      %vm2768 = vcmp.ge.s32.totalorder %v283, 32
      %v2769 = vld [vmem:[%s273 + $0xb4] sm:$0xf]
      %v2770 = vsel %vm2768, 1, 0
      %vm2771 = vcmp.eq.s32.totalorder %v2770, 1
      %vm2772 = vmpackc.low %vm2771, %vm2771
      %v2774 = vshrl.u32 %v2727, 16
      %v2776 = vrot.slane %v2774, 7
      %v2777 = vshll.u32 %v2727, 16
      %v2779 = vor.u32 %v2776, %v2777
      %v2780 = vrot.slane %v2776, 4
      %v2782 = vshrl.u32 %v2728, 16
      %v2784 = vrot.slane %v2782, 7
      %v2785 = vshll.u32 %v2728, 16
      %v2787 = vor.u32 %v2784, %v2785
      %v2788 = vsel %vm382, %v2780, %v2787
      %v2789 = vrot.slane %v2784, 4
      %v2791 = vshrl.u32 %v2729, 16
      %v2793 = vrot.slane %v2791, 7
      %v2794 = vshll.u32 %v2729, 16
      %v2796 = vor.u32 %v2793, %v2794
      %v2797 = vsel %vm382, %v2789, %v2796
      %v2798 = vrot.slane %v2793, 4
      %v2800 = vshrl.u32 %v2730, 16
      %v2802 = vrot.slane %v2800, 7
      %v2803 = vshll.u32 %v2730, 16
      %v2805 = vor.u32 %v2802, %v2803
      %v2806 = vsel %vm382, %v2798, %v2805
      %v2807 = vrot.slane %v2802, 4
      %v2809 = vshrl.u32 %v2731, 16
      %v2811 = vrot.slane %v2809, 7
      %v2812 = vshll.u32 %v2731, 16
      %v2814 = vor.u32 %v2811, %v2812
      %v2815 = vsel %vm382, %v2807, %v2814
      %v2816 = vrot.slane %v2811, 4
      %v2818 = vshrl.u32 %v2732, 16
      %v2820 = vrot.slane %v2818, 7
      %v2821 = vshll.u32 %v2732, 16
      %v2823 = vor.u32 %v2820, %v2821
      %v2824 = vsel %vm382, %v2816, %v2823
      %v2825 = vrot.slane %v2820, 4
      %v2827 = vshrl.u32 %v2733, 16
      %v2829 = vrot.slane %v2827, 7
      %v2830 = vshll.u32 %v2733, 16
      %v2832 = vor.u32 %v2829, %v2830
      %v2833 = vsel %vm382, %v2825, %v2832
      %v2834 = vrot.slane %v2829, 4
      %v2836 = vshrl.u32 %v2734, 16
      %v2838 = vrot.slane %v2836, 7
      %v2839 = vshll.u32 %v2734, 16
      %v2841 = vor.u32 %v2838, %v2839
      %v2842 = vsel %vm382, %v2834, %v2841
      %v2843 = vrot.slane %v2838, 4
      %v2845 = vshrl.u32 %v2735, 16
      %v2847 = vrot.slane %v2845, 7
      %v2848 = vshll.u32 %v2735, 16
      %v2850 = vor.u32 %v2847, %v2848
      %v2851 = vsel %vm382, %v2843, %v2850
      %v2852 = vrot.slane %v2847, 4
      %v2854 = vshrl.u32 %v2736, 16
      %v2856 = vrot.slane %v2854, 7
      %v2857 = vshll.u32 %v2736, 16
      %v2859 = vor.u32 %v2856, %v2857
      %v2860 = vsel %vm382, %v2852, %v2859
      %v2861 = vrot.slane %v2856, 4
      %v2863 = vshrl.u32 %v2737, 16
      %v2865 = vrot.slane %v2863, 7
      %v2866 = vshll.u32 %v2737, 16
      %v2868 = vor.u32 %v2865, %v2866
      %v2869 = vsel %vm382, %v2861, %v2868
      %v2870 = vrot.slane %v2865, 4
      %v2872 = vshrl.u32 %v2738, 16
      %v2874 = vrot.slane %v2872, 7
      %v2875 = vshll.u32 %v2738, 16
      %v2877 = vor.u32 %v2874, %v2875
      %v2878 = vsel %vm382, %v2870, %v2877
      %v2879 = vrot.slane %v2874, 4
      %v2881 = vshrl.u32 %v2739, 16
      %v2883 = vrot.slane %v2881, 7
      %v2884 = vshll.u32 %v2739, 16
      %v2886 = vor.u32 %v2883, %v2884
      %v2887 = vsel %vm382, %v2879, %v2886
      %v2888 = vrot.slane %v2883, 4
      %v2890 = vshrl.u32 %v2740, 16
      %v2892 = vrot.slane %v2890, 7
      %v2893 = vshll.u32 %v2740, 16
      %v2895 = vor.u32 %v2892, %v2893
      %v2896 = vsel %vm382, %v2888, %v2895
      %v2897 = vrot.slane %v2892, 4
      %v2899 = vshrl.u32 %v2741, 16
      %v2901 = vrot.slane %v2899, 7
      %v2902 = vshll.u32 %v2741, 16
      %v2904 = vor.u32 %v2901, %v2902
      %v2905 = vsel %vm382, %v2897, %v2904
      %v2906 = vrot.slane %v2901, 4
      %v2908 = vshrl.u32 %v2742, 16
      %v2910 = vrot.slane %v2908, 7
      %v2911 = vshll.u32 %v2742, 16
      %v2913 = vor.u32 %v2910, %v2911
      %v2914 = vsel %vm382, %v2906, %v2913
      %v2915 = vrot.slane %v2910, 4
      %v2917 = vshrl.u32 %v2743, 16
      %v2919 = vrot.slane %v2917, 7
      %v2920 = vshll.u32 %v2743, 16
      %v2922 = vor.u32 %v2919, %v2920
      %v2923 = vsel %vm382, %v2915, %v2922
      %v2924 = vrot.slane %v2919, 4
      %v2926 = vshrl.u32 %v2744, 16
      %v2928 = vrot.slane %v2926, 7
      %v2929 = vshll.u32 %v2744, 16
      %v2931 = vor.u32 %v2928, %v2929
      %v2932 = vsel %vm382, %v2924, %v2931
      %v2933 = vrot.slane %v2928, 4
      %v2935 = vshrl.u32 %v2745, 16
      %v2937 = vrot.slane %v2935, 7
      %v2938 = vshll.u32 %v2745, 16
      %v2940 = vor.u32 %v2937, %v2938
      %v2941 = vsel %vm382, %v2933, %v2940
      %v2942 = vrot.slane %v2937, 4
      %v2944 = vshrl.u32 %v2746, 16
      %v2946 = vrot.slane %v2944, 7
      %v2947 = vshll.u32 %v2746, 16
      %v2949 = vor.u32 %v2946, %v2947
      %v2950 = vsel %vm382, %v2942, %v2949
      %v2951 = vrot.slane %v2946, 4
      %v2953 = vshrl.u32 %v2747, 16
      %v2955 = vrot.slane %v2953, 7
      %v2956 = vshll.u32 %v2747, 16
      %v2958 = vor.u32 %v2955, %v2956
      %v2959 = vsel %vm382, %v2951, %v2958
      %v2960 = vrot.slane %v2955, 4
      %v2962 = vshrl.u32 %v2748, 16
      %v2964 = vrot.slane %v2962, 7
      %v2965 = vshll.u32 %v2748, 16
      %v2967 = vor.u32 %v2964, %v2965
      %v2968 = vsel %vm382, %v2960, %v2967
      %v2969 = vrot.slane %v2964, 4
      %v2971 = vshrl.u32 %v2749, 16
      %v2973 = vrot.slane %v2971, 7
      %v2974 = vshll.u32 %v2749, 16
      %v2976 = vor.u32 %v2973, %v2974
      %v2977 = vsel %vm382, %v2969, %v2976
      %v2978 = vrot.slane %v2973, 4
      %v2980 = vshrl.u32 %v2750, 16
      %v2982 = vrot.slane %v2980, 7
      %v2983 = vshll.u32 %v2750, 16
      %v2985 = vor.u32 %v2982, %v2983
      %v2986 = vsel %vm382, %v2978, %v2985
      %v2987 = vrot.slane %v2982, 4
      %v2989 = vshrl.u32 %v2751, 16
      %v2991 = vrot.slane %v2989, 7
      %v2992 = vshll.u32 %v2751, 16
      %v2994 = vor.u32 %v2991, %v2992
      %v2995 = vsel %vm382, %v2987, %v2994
      %v2996 = vrot.slane %v2991, 4
      %v2998 = vshrl.u32 %v2752, 16
      %v3000 = vrot.slane %v2998, 7
      %v3001 = vshll.u32 %v2752, 16
      %v3003 = vor.u32 %v3000, %v3001
      %v3004 = vsel %vm382, %v2996, %v3003
      %v3005 = vrot.slane %v3000, 4
      %v3007 = vshrl.u32 %v2753, 16
      %v3009 = vrot.slane %v3007, 7
      %v3010 = vshll.u32 %v2753, 16
      %v3012 = vor.u32 %v3009, %v3010
      %v3013 = vsel %vm382, %v3005, %v3012
      %v3014 = vrot.slane %v3009, 4
      %v3016 = vshrl.u32 %v2754, 16
      %v3018 = vrot.slane %v3016, 7
      %v3019 = vshll.u32 %v2754, 16
      %v3021 = vor.u32 %v3018, %v3019
      %v3022 = vsel %vm382, %v3014, %v3021
      %v3023 = vrot.slane %v3018, 4
      %v3025 = vshrl.u32 %v2755, 16
      %v3027 = vrot.slane %v3025, 7
      %v3028 = vshll.u32 %v2755, 16
      %v3030 = vor.u32 %v3027, %v3028
      %v3031 = vsel %vm382, %v3023, %v3030
      %v3032 = vrot.slane %v3027, 4
      %v3034 = vshrl.u32 %v2756, 16
      %v3036 = vrot.slane %v3034, 7
      %v3037 = vshll.u32 %v2756, 16
      %v3039 = vor.u32 %v3036, %v3037
      %v3040 = vsel %vm382, %v3032, %v3039
      %v3041 = vrot.slane %v3036, 4
      %v3043 = vshrl.u32 %v2757, 16
      %v3045 = vrot.slane %v3043, 7
      %v3046 = vshll.u32 %v2757, 16
      %v3048 = vor.u32 %v3045, %v3046
      %v3049 = vsel %vm382, %v3041, %v3048
      %v3050 = vrot.slane %v3045, 4
      %v3052 = vshrl.u32 %v2758, 16
      %v3054 = vrot.slane %v3052, 7
      %v3055 = vshll.u32 %v2758, 16
      %v3057 = vor.u32 %v3054, %v3055
      %v3058 = vsel %vm382, %v3050, %v3057
      %v3059 = vrot.slane %v3054, 4
      %v3061 = vshrl.u32 %v2759, 16
      %v3063 = vrot.slane %v3061, 7
      %v3064 = vshll.u32 %v2759, 16
      %v3066 = vor.u32 %v3063, %v3064
      %v3067 = vsel %vm382, %v3059, %v3066
      %v3068 = vrot.slane %v3063, 4
      %v3070 = vshrl.u32 %v2760, 16
      %v3072 = vrot.slane %v3070, 7
      %v3073 = vshll.u32 %v2760, 16
      %v3075 = vor.u32 %v3072, %v3073
      %v3076 = vsel %vm382, %v3068, %v3075
      %v3077 = vrot.slane %v3072, 4
      %v3079 = vshrl.u32 %v2761, 16
      %v3081 = vrot.slane %v3079, 7
      %v3082 = vshll.u32 %v2761, 16
      %v3084 = vor.u32 %v3081, %v3082
      %v3085 = vsel %vm382, %v3077, %v3084
      %v3086 = vrot.slane %v3081, 4
      %v3088 = vshrl.u32 %v2762, 16
      %v3090 = vrot.slane %v3088, 7
      %v3091 = vshll.u32 %v2762, 16
      %v3093 = vor.u32 %v3090, %v3091
      %v3094 = vsel %vm382, %v3086, %v3093
      %v3095 = vrot.slane %v3090, 4
      %v3097 = vshrl.u32 %v2763, 16
      %v3099 = vrot.slane %v3097, 7
      %v3100 = vshll.u32 %v2763, 16
      %v3102 = vor.u32 %v3099, %v3100
      %v3103 = vsel %vm382, %v3095, %v3102
      %v3104 = vrot.slane %v3099, 4
      %v3106 = vshrl.u32 %v2764, 16
      %v3108 = vrot.slane %v3106, 7
      %v3109 = vshll.u32 %v2764, 16
      %v3111 = vor.u32 %v3108, %v3109
      %v3112 = vsel %vm382, %v3104, %v3111
      %v3113 = vrot.slane %v3108, 4
      %v3115 = vshrl.u32 %v2765, 16
      %v3117 = vrot.slane %v3115, 7
      %v3118 = vshll.u32 %v2765, 16
      %v3120 = vor.u32 %v3117, %v3118
      %v3121 = vsel %vm382, %v3113, %v3120
      %v3122 = vrot.slane %v3117, 4
      %v3124 = vshrl.u32 %v2766, 16
      %v3126 = vrot.slane %v3124, 7
      %v3127 = vshll.u32 %v2766, 16
      %v3129 = vor.u32 %v3126, %v3127
      %v3130 = vsel %vm382, %v3122, %v3129
      %v3131 = vrot.slane %v3126, 4
      %v3133 = vshrl.u32 %v2767, 16
      %v3135 = vrot.slane %v3133, 7
      %v3136 = vshll.u32 %v2767, 16
      %v3138 = vor.u32 %v3135, %v3136
      %v3139 = vsel %vm382, %v3131, %v3138
      %v3181 = vsel %vm2772, %v2315, %v2779
      %v3182 = vsel %vm2772, %v339, %v2788
      %v3183 = vsel %vm2772, %v340, %v2797
      %v3184 = vsel %vm2772, %v341, %v2806
      %v3185 = vsel %vm2772, %v342, %v2815
      %v3186 = vsel %vm2772, %v343, %v2824
      %v3187 = vsel %vm2772, %v344, %v2833
      %v3188 = vsel %vm2772, %v345, %v2842
      %v3189 = vsel %vm2772, %v346, %v2851
      %v3190 = vsel %vm2772, %v347, %v2860
      %v3191 = vsel %vm2772, %v348, %v2869
      %v3192 = vsel %vm2772, %v349, %v2878
      %v3193 = vsel %vm2772, %v350, %v2887
      %v3194 = vsel %vm2772, %v351, %v2896
      %v3195 = vsel %vm2772, %v352, %v2905
      %v3196 = vsel %vm2772, %v353, %v2914
      %v3197 = vsel %vm2772, %v354, %v2923
      %v3198 = vsel %vm2772, %v355, %v2932
      %v3199 = vsel %vm2772, %v356, %v2941
      %v3200 = vsel %vm2772, %v357, %v2950
      %v3201 = vsel %vm2772, %v358, %v2959
      %v3202 = vsel %vm2772, %v359, %v2968
      %v3203 = vsel %vm2772, %v360, %v2977
      %v3204 = vsel %vm2772, %v361, %v2986
      %v3205 = vsel %vm2772, %v362, %v2995
      %v3206 = vsel %vm2772, %v363, %v3004
      %v3207 = vsel %vm2772, %v364, %v3013
      %v3208 = vsel %vm2772, %v365, %v3022
      %v3209 = vsel %vm2772, %v366, %v3031
      %v3210 = vsel %vm2772, %v367, %v3040
      %v3211 = vsel %vm2772, %v368, %v3049
      %v3212 = vsel %vm2772, %v369, %v3058
      %v3213 = vsel %vm2772, %v370, %v3067
      %v3214 = vsel %vm2772, %v371, %v3076
      %v3215 = vsel %vm2772, %v372, %v3085
      %v3216 = vsel %vm2772, %v373, %v3094
      %v3217 = vsel %vm2772, %v1305, %v3103
      %v3218 = vsel %vm2772, %v1306, %v3112
      %v3219 = vsel %vm2772, %v2267, %v3121
      %v3220 = vsel %vm2772, %v2268, %v3130
      %v3221 = vsel %vm2772, %v2769, %v3139
      %v3222 = vld [vmem:[%s1] sm:$0xf]
      %v3223 = vld [vmem:[%s1 + $0x4] sm:$0xf]
      %v3224 = vld [vmem:[%s1 + $0x8] sm:$0xf]
      %v3225 = vld [vmem:[%s1 + $0xc] sm:$0xf]
      %v3226 = vld [vmem:[%s1 + $0x10] sm:$0xf]
      %v3227 = vld [vmem:[%s1 + $0x14] sm:$0xf]
      %v3228 = vld [vmem:[%s1 + $0x18] sm:$0xf]
      %v3229 = vld [vmem:[%s1 + $0x1c] sm:$0xf]
      %v3230 = vld [vmem:[%s1 + $0x20] sm:$0xf]
      %v3231 = vld [vmem:[%s1 + $0x24] sm:$0xf]
      %v3232 = vld [vmem:[%s1 + $0x28] sm:$0xf]
      %v3233 = vld [vmem:[%s1 + $0x2c] sm:$0xf]
      %v3234 = vld [vmem:[%s1 + $0x30] sm:$0xf]
      %v3235 = vld [vmem:[%s1 + $0x34] sm:$0xf]
      %v3236 = vld [vmem:[%s1 + $0x38] sm:$0xf]
      %v3237 = vld [vmem:[%s1 + $0x3c] sm:$0xf]
      %v3238 = vlaneseq
      %v3239 = vshrl.u32 %v3238, 7
      %v3240 = vsub.s32 0, %v3239
      %v3241 = vrot.slane %v325, %v3240
      %v3283 = vunpack.c.l.b16 %v3181
      %v3284 = vunpack.c.l.b16 %v3182
      %v3285 = vunpack.c.l.b16 %v3183
      %v3286 = vunpack.c.l.b16 %v3184
      %v3287 = vunpack.c.l.b16 %v3185
      %v3288 = vunpack.c.l.b16 %v3186
      %v3289 = vunpack.c.l.b16 %v3187
      %v3290 = vunpack.c.l.b16 %v3188
      %v3291 = vunpack.c.l.b16 %v3189
      %v3292 = vunpack.c.l.b16 %v3190
      %v3293 = vunpack.c.l.b16 %v3191
      %v3294 = vunpack.c.l.b16 %v3192
      %v3295 = vunpack.c.l.b16 %v3193
      %v3296 = vunpack.c.l.b16 %v3194
      %v3297 = vunpack.c.l.b16 %v3195
      %v3298 = vunpack.c.l.b16 %v3196
      %v3299 = vunpack.c.l.b16 %v3197
      %v3300 = vunpack.c.l.b16 %v3198
      %v3301 = vunpack.c.l.b16 %v3199
      %v3302 = vunpack.c.l.b16 %v3200
      %v3303 = vunpack.c.l.b16 %v3201
      %v3304 = vunpack.c.l.b16 %v3202
      %v3305 = vunpack.c.l.b16 %v3203
      %v3306 = vunpack.c.l.b16 %v3204
      %v3307 = vunpack.c.l.b16 %v3205
      %v3308 = vunpack.c.l.b16 %v3206
      %v3309 = vunpack.c.l.b16 %v3207
      %v3310 = vunpack.c.l.b16 %v3208
      %v3311 = vunpack.c.l.b16 %v3209
      %v3312 = vunpack.c.l.b16 %v3210
      %v3313 = vunpack.c.l.b16 %v3211
      %v3314 = vunpack.c.l.b16 %v3212
      %v3315 = vunpack.c.l.b16 %v3213
      %v3316 = vunpack.c.l.b16 %v3214
      %v3317 = vunpack.c.l.b16 %v3215
      %v3318 = vunpack.c.l.b16 %v3216
      %v3319 = vunpack.c.l.b16 %v3217
      %v3320 = vunpack.c.l.b16 %v3218
      %v3321 = vunpack.c.l.b16 %v3219
      %v3322 = vunpack.c.l.b16 %v3220
      %v3323 = vunpack.c.l.b16 %v3221
      %v3324 = vpack.c.b16 %v3284, %v3283
      %v3325 = vpack.c.b16 %v3286, %v3285
      %v3326 = vpack.c.b16 %v3288, %v3287
      %v3327 = vpack.c.b16 %v3290, %v3289
      %v3328 = vpack.c.b16 %v3292, %v3291
      %v3329 = vpack.c.b16 %v3294, %v3293
      %v3330 = vpack.c.b16 %v3296, %v3295
      %v3331 = vpack.c.b16 %v3298, %v3297
      %v3332 = vpack.c.b16 %v3300, %v3299
      %v3333 = vpack.c.b16 %v3302, %v3301
      %v3334 = vpack.c.b16 %v3304, %v3303
      %v3335 = vpack.c.b16 %v3306, %v3305
      %v3336 = vpack.c.b16 %v3308, %v3307
      %v3337 = vpack.c.b16 %v3310, %v3309
      %v3338 = vpack.c.b16 %v3312, %v3311
      %v3339 = vpack.c.b16 %v3314, %v3313
      %v3340 = vpack.c.b16 %v3316, %v3315
      %v3341 = vpack.c.b16 %v3318, %v3317
      %v3342 = vpack.c.b16 %v3320, %v3319
      %v3343 = vpack.c.b16 %v3322, %v3321
      %v3344 = vpack.c.b16 %v3323, %v3323
      %vm3345 = vsmask.f32 6400
      %v3347 = vshrl.u32 %v3324, 16
      %v3349 = vrot.slane %v3347, 1
      %v3350 = vshll.u32 %v3324, 16
      %v3352 = vrot.slane %v3350, 2
      %v3353 = vor.u32 %v3349, %v3352
      %v3355 = vshrl.u32 %v3325, 16
      %v3357 = vrot.slane %v3355, 1
      %v3358 = vshll.u32 %v3325, 16
      %v3360 = vrot.slane %v3358, 2
      %v3361 = vor.u32 %v3357, %v3360
      %v3362 = vsel %vm3345, %v3353, %v3361
      %v3364 = vshrl.u32 %v3326, 16
      %v3366 = vrot.slane %v3364, 1
      %v3367 = vshll.u32 %v3326, 16
      %v3369 = vrot.slane %v3367, 2
      %v3370 = vor.u32 %v3366, %v3369
      %v3371 = vsel %vm3345, %v3361, %v3370
      %v3373 = vshrl.u32 %v3327, 16
      %v3375 = vrot.slane %v3373, 1
      %v3376 = vshll.u32 %v3327, 16
      %v3378 = vrot.slane %v3376, 2
      %v3379 = vor.u32 %v3375, %v3378
      %v3380 = vsel %vm3345, %v3370, %v3379
      %v3382 = vshrl.u32 %v3328, 16
      %v3384 = vrot.slane %v3382, 1
      %v3385 = vshll.u32 %v3328, 16
      %v3387 = vrot.slane %v3385, 2
      %v3388 = vor.u32 %v3384, %v3387
      %v3389 = vsel %vm3345, %v3379, %v3388
      %v3391 = vshrl.u32 %v3329, 16
      %v3393 = vrot.slane %v3391, 1
      %v3394 = vshll.u32 %v3329, 16
      %v3396 = vrot.slane %v3394, 2
      %v3397 = vor.u32 %v3393, %v3396
      %v3398 = vsel %vm3345, %v3388, %v3397
      %v3400 = vshrl.u32 %v3330, 16
      %v3402 = vrot.slane %v3400, 1
      %v3403 = vshll.u32 %v3330, 16
      %v3405 = vrot.slane %v3403, 2
      %v3406 = vor.u32 %v3402, %v3405
      %v3407 = vsel %vm3345, %v3397, %v3406
      %v3409 = vshrl.u32 %v3331, 16
      %v3411 = vrot.slane %v3409, 1
      %v3412 = vshll.u32 %v3331, 16
      %v3414 = vrot.slane %v3412, 2
      %v3415 = vor.u32 %v3411, %v3414
      %v3416 = vsel %vm3345, %v3406, %v3415
      %v3418 = vshrl.u32 %v3332, 16
      %v3420 = vrot.slane %v3418, 1
      %v3421 = vshll.u32 %v3332, 16
      %v3423 = vrot.slane %v3421, 2
      %v3424 = vor.u32 %v3420, %v3423
      %v3425 = vsel %vm3345, %v3415, %v3424
      %v3427 = vshrl.u32 %v3333, 16
      %v3429 = vrot.slane %v3427, 1
      %v3430 = vshll.u32 %v3333, 16
      %v3432 = vrot.slane %v3430, 2
      %v3433 = vor.u32 %v3429, %v3432
      %v3434 = vsel %vm3345, %v3424, %v3433
      %v3436 = vshrl.u32 %v3334, 16
      %v3438 = vrot.slane %v3436, 1
      %v3439 = vshll.u32 %v3334, 16
      %v3441 = vrot.slane %v3439, 2
      %v3442 = vor.u32 %v3438, %v3441
      %v3443 = vsel %vm3345, %v3433, %v3442
      %v3445 = vshrl.u32 %v3335, 16
      %v3447 = vrot.slane %v3445, 1
      %v3448 = vshll.u32 %v3335, 16
      %v3450 = vrot.slane %v3448, 2
      %v3451 = vor.u32 %v3447, %v3450
      %v3452 = vsel %vm3345, %v3442, %v3451
      %v3454 = vshrl.u32 %v3336, 16
      %v3456 = vrot.slane %v3454, 1
      %v3457 = vshll.u32 %v3336, 16
      %v3459 = vrot.slane %v3457, 2
      %v3460 = vor.u32 %v3456, %v3459
      %v3461 = vsel %vm3345, %v3451, %v3460
      %v3463 = vshrl.u32 %v3337, 16
      %v3465 = vrot.slane %v3463, 1
      %v3466 = vshll.u32 %v3337, 16
      %v3468 = vrot.slane %v3466, 2
      %v3469 = vor.u32 %v3465, %v3468
      %v3470 = vsel %vm3345, %v3460, %v3469
      %v3472 = vshrl.u32 %v3338, 16
      %v3474 = vrot.slane %v3472, 1
      %v3475 = vshll.u32 %v3338, 16
      %v3477 = vrot.slane %v3475, 2
      %v3478 = vor.u32 %v3474, %v3477
      %v3479 = vsel %vm3345, %v3469, %v3478
      %v3481 = vshrl.u32 %v3339, 16
      %v3483 = vrot.slane %v3481, 1
      %v3484 = vshll.u32 %v3339, 16
      %v3486 = vrot.slane %v3484, 2
      %v3487 = vor.u32 %v3483, %v3486
      %v3488 = vsel %vm3345, %v3478, %v3487
      %v3490 = vshrl.u32 %v3340, 16
      %v3492 = vrot.slane %v3490, 1
      %v3493 = vshll.u32 %v3340, 16
      %v3495 = vrot.slane %v3493, 2
      %v3496 = vor.u32 %v3492, %v3495
      %v3497 = vsel %vm3345, %v3487, %v3496
      %v3499 = vshrl.u32 %v3341, 16
      %v3501 = vrot.slane %v3499, 1
      %v3502 = vshll.u32 %v3341, 16
      %v3504 = vrot.slane %v3502, 2
      %v3505 = vor.u32 %v3501, %v3504
      %v3506 = vsel %vm3345, %v3496, %v3505
      %v3508 = vshrl.u32 %v3342, 16
      %v3510 = vrot.slane %v3508, 1
      %v3511 = vshll.u32 %v3342, 16
      %v3513 = vrot.slane %v3511, 2
      %v3514 = vor.u32 %v3510, %v3513
      %v3515 = vsel %vm3345, %v3505, %v3514
      %v3517 = vshrl.u32 %v3343, 16
      %v3519 = vrot.slane %v3517, 1
      %v3520 = vshll.u32 %v3343, 16
      %v3522 = vrot.slane %v3520, 2
      %v3523 = vor.u32 %v3519, %v3522
      %v3524 = vsel %vm3345, %v3514, %v3523
      %v3526 = vshrl.u32 %v3344, 16
      %v3528 = vrot.slane %v3526, 1
      %v3529 = vshll.u32 %v3344, 16
      %v3531 = vrot.slane %v3529, 2
      %v3532 = vor.u32 %v3528, %v3531
      %v3533 = vsel %vm3345, %v3523, %v3532
      %v3571 = vunpack.c.l.b16 %v3222
      %v3572 = vunpack.c.l.b16 %v3223
      %v3573 = vunpack.c.l.b16 %v3224
      %v3574 = vunpack.c.l.b16 %v3225
      %v3575 = vunpack.c.l.b16 %v3226
      %v3576 = vunpack.c.l.b16 %v3227
      %v3577 = vunpack.c.l.b16 %v3228
      %v3578 = vunpack.c.l.b16 %v3229
      %v3579 = vunpack.c.l.b16 %v3230
      %v3580 = vunpack.c.l.b16 %v3231
      %v3581 = vunpack.c.l.b16 %v3232
      %v3582 = vunpack.c.l.b16 %v3233
      %v3583 = vunpack.c.l.b16 %v3234
      %v3584 = vunpack.c.l.b16 %v3235
      %v3585 = vunpack.c.l.b16 %v3236
      %v3586 = vunpack.c.l.b16 %v3237
      %v3587 = vpack.c.b16 %v3572, %v3571
      %v3588 = vpack.c.b16 %v3574, %v3573
      %v3589 = vpack.c.b16 %v3576, %v3575
      %v3590 = vpack.c.b16 %v3578, %v3577
      %v3591 = vpack.c.b16 %v3580, %v3579
      %v3592 = vpack.c.b16 %v3582, %v3581
      %v3593 = vpack.c.b16 %v3584, %v3583
      %v3594 = vpack.c.b16 %v3586, %v3585
      %3603 = vmatprep.subr.bf16.mxu0 0
      %3604 = vmatpush1.bf16.msra.mxu0 %v3594
      %3605 = vmatprep.subr.bf16.mxu0 0
      %3606 = vmatpush1.bf16.msra.mxu0 %v3593
      %3607 = vmatprep.subr.bf16.mxu0 0
      %3608 = vmatpush1.bf16.msra.mxu0 %v3592
      %3609 = vmatprep.subr.bf16.mxu0 0
      %3610 = vmatpush1.bf16.msra.mxu0 %v3591
      %3611 = vmatprep.subr.bf16.mxu0 0
      %3612 = vmatpush1.bf16.msra.mxu0 %v3590
      %3613 = vmatprep.subr.bf16.mxu0 0
      %3614 = vmatpush1.bf16.msra.mxu0 %v3589
      %3615 = vmatprep.subr.bf16.mxu0 0
      %3616 = vmatpush1.bf16.msra.mxu0 %v3588
      %3617 = vmatprep.subr.bf16.mxu0 0
      %3618 = vmatpush1.bf16.msra.mxu0 %v3587
      %3619 = vmatprep.subr.bf16.mxu0 0
      %3620 = vmatpush2.bf16.msra.mxu0 0
      %3621 = vmatprep.subr.bf16.mxu0 0
      %3622 = vmatpush2.bf16.msra.mxu0 0
      %3623 = vmatprep.subr.bf16.mxu0 0
      %3624 = vmatpush2.bf16.msra.mxu0 0
      %3625 = vmatprep.subr.bf16.mxu0 0
      %3626 = vmatpush2.bf16.msra.mxu0 0
      %3627 = vmatprep.subr.bf16.mxu0 0
      %3628 = vmatpush2.bf16.msra.mxu0 0
      %3629 = vmatprep.subr.bf16.mxu0 0
      %3630 = vmatpush2.bf16.msra.mxu0 0
      %3631 = vmatprep.subr.bf16.mxu0 0
      %3632 = vmatpush2.bf16.msra.mxu0 0
      %3633 = vmatprep.subr.bf16.mxu0 0
      %3634 = vmatpush2.bf16.msra.mxu0 0
      %3635 = vmatprep.mubr.bf16.mxu0 0
      %3636 = vmatmul.mubr.bf16.gmra.mxu0 %v3362
      %v3637 = vpop.f32.mrf.mxu0
      %v3638 = vadd.f32 %v3241, %v3637
      %v3639 = vpop.f32.mrf.mxu0
      %v3640 = vpop.f32.mrf.mxu0
      %v3641 = vadd.f32 %v3241, %v3640
      %v3642 = vpop.f32.mrf.mxu0
      %3643 = vmatprep.mubr.bf16.mxu0 0
      %3644 = vmatmul.mubr.bf16.gmra.mxu0 %v3371
      %v3645 = vpop.f32.mrf.mxu0
      %v3646 = vadd.f32 %v3241, %v3645
      %v3647 = vpop.f32.mrf.mxu0
      %v3648 = vpop.f32.mrf.mxu0
      %v3649 = vadd.f32 %v3241, %v3648
      %v3650 = vpop.f32.mrf.mxu0
      %3651 = vmatprep.mubr.bf16.mxu0 0
      %3652 = vmatmul.mubr.bf16.gmra.mxu0 %v3380
      %v3653 = vpop.f32.mrf.mxu0
      %v3654 = vadd.f32 %v3241, %v3653
      %v3655 = vpop.f32.mrf.mxu0
      %v3656 = vpop.f32.mrf.mxu0
      %v3657 = vadd.f32 %v3241, %v3656
      %v3658 = vpop.f32.mrf.mxu0
      %3659 = vmatprep.mubr.bf16.mxu0 0
      %3660 = vmatmul.mubr.bf16.gmra.mxu0 %v3389
      %v3661 = vpop.f32.mrf.mxu0
      %v3662 = vadd.f32 %v3241, %v3661
      %v3663 = vpop.f32.mrf.mxu0
      %v3664 = vpop.f32.mrf.mxu0
      %v3665 = vadd.f32 %v3241, %v3664
      %v3666 = vpop.f32.mrf.mxu0
      %3667 = vmatprep.mubr.bf16.mxu0 0
      %3668 = vmatmul.mubr.bf16.gmra.mxu0 %v3398
      %v3669 = vpop.f32.mrf.mxu0
      %v3670 = vadd.f32 %v3241, %v3669
      %v3671 = vpop.f32.mrf.mxu0
      %v3672 = vpop.f32.mrf.mxu0
      %v3673 = vadd.f32 %v3241, %v3672
      %v3674 = vpop.f32.mrf.mxu0
      %3675 = vmatprep.mubr.bf16.mxu0 0
      %3676 = vmatmul.mubr.bf16.gmra.mxu0 %v3407
      %v3677 = vpop.f32.mrf.mxu0
      %v3678 = vadd.f32 %v3241, %v3677
      %v3679 = vpop.f32.mrf.mxu0
      %v3680 = vpop.f32.mrf.mxu0
      %v3681 = vadd.f32 %v3241, %v3680
      %v3682 = vpop.f32.mrf.mxu0
      %3683 = vmatprep.mubr.bf16.mxu0 0
      %3684 = vmatmul.mubr.bf16.gmra.mxu0 %v3416
      %v3685 = vpop.f32.mrf.mxu0
      %v3686 = vadd.f32 %v3241, %v3685
      %v3687 = vpop.f32.mrf.mxu0
      %v3688 = vpop.f32.mrf.mxu0
      %v3689 = vadd.f32 %v3241, %v3688
      %v3690 = vpop.f32.mrf.mxu0
      %3691 = vmatprep.mubr.bf16.mxu0 0
      %3692 = vmatmul.mubr.bf16.gmra.mxu0 %v3425
      %v3693 = vpop.f32.mrf.mxu0
      %v3694 = vadd.f32 %v3241, %v3693
      %v3695 = vpop.f32.mrf.mxu0
      %v3696 = vpop.f32.mrf.mxu0
      %v3697 = vadd.f32 %v3241, %v3696
      %v3698 = vpop.f32.mrf.mxu0
      %3699 = vmatprep.mubr.bf16.mxu0 0
      %3700 = vmatmul.mubr.bf16.gmra.mxu0 %v3434
      %v3701 = vpop.f32.mrf.mxu0
      %v3702 = vadd.f32 %v3241, %v3701
      %v3703 = vpop.f32.mrf.mxu0
      %v3704 = vpop.f32.mrf.mxu0
      %v3705 = vadd.f32 %v3241, %v3704
      %v3706 = vpop.f32.mrf.mxu0
      %3707 = vmatprep.mubr.bf16.mxu0 0
      %3708 = vmatmul.mubr.bf16.gmra.mxu0 %v3443
      %v3709 = vpop.f32.mrf.mxu0
      %v3710 = vadd.f32 %v3241, %v3709
      %v3711 = vpop.f32.mrf.mxu0
      %v3712 = vpop.f32.mrf.mxu0
      %v3713 = vadd.f32 %v3241, %v3712
      %v3714 = vpop.f32.mrf.mxu0
      %3715 = vmatprep.mubr.bf16.mxu0 0
      %3716 = vmatmul.mubr.bf16.gmra.mxu0 %v3452
      %v3717 = vpop.f32.mrf.mxu0
      %v3718 = vadd.f32 %v3241, %v3717
      %v3719 = vpop.f32.mrf.mxu0
      %v3720 = vpop.f32.mrf.mxu0
      %v3721 = vadd.f32 %v3241, %v3720
      %v3722 = vpop.f32.mrf.mxu0
      %3723 = vmatprep.mubr.bf16.mxu0 0
      %3724 = vmatmul.mubr.bf16.gmra.mxu0 %v3461
      %v3725 = vpop.f32.mrf.mxu0
      %v3726 = vadd.f32 %v3241, %v3725
      %v3727 = vpop.f32.mrf.mxu0
      %v3728 = vpop.f32.mrf.mxu0
      %v3729 = vadd.f32 %v3241, %v3728
      %v3730 = vpop.f32.mrf.mxu0
      %3731 = vmatprep.mubr.bf16.mxu0 0
      %3732 = vmatmul.mubr.bf16.gmra.mxu0 %v3470
      %v3733 = vpop.f32.mrf.mxu0
      %v3734 = vadd.f32 %v3241, %v3733
      %v3735 = vpop.f32.mrf.mxu0
      %v3736 = vpop.f32.mrf.mxu0
      %v3737 = vadd.f32 %v3241, %v3736
      %v3738 = vpop.f32.mrf.mxu0
      %3739 = vmatprep.mubr.bf16.mxu0 0
      %3740 = vmatmul.mubr.bf16.gmra.mxu0 %v3479
      %v3741 = vpop.f32.mrf.mxu0
      %v3742 = vadd.f32 %v3241, %v3741
      %v3743 = vpop.f32.mrf.mxu0
      %v3744 = vpop.f32.mrf.mxu0
      %v3745 = vadd.f32 %v3241, %v3744
      %v3746 = vpop.f32.mrf.mxu0
      %3747 = vmatprep.mubr.bf16.mxu0 0
      %3748 = vmatmul.mubr.bf16.gmra.mxu0 %v3488
      %v3749 = vpop.f32.mrf.mxu0
      %v3750 = vadd.f32 %v3241, %v3749
      %v3751 = vpop.f32.mrf.mxu0
      %v3752 = vpop.f32.mrf.mxu0
      %v3753 = vadd.f32 %v3241, %v3752
      %v3754 = vpop.f32.mrf.mxu0
      %3755 = vmatprep.mubr.bf16.mxu0 0
      %3756 = vmatmul.mubr.bf16.gmra.mxu0 %v3497
      %v3757 = vpop.f32.mrf.mxu0
      %v3758 = vadd.f32 %v3241, %v3757
      %v3759 = vpop.f32.mrf.mxu0
      %v3760 = vpop.f32.mrf.mxu0
      %v3761 = vadd.f32 %v3241, %v3760
      %v3762 = vpop.f32.mrf.mxu0
      %3763 = vmatprep.mubr.bf16.mxu0 0
      %3764 = vmatmul.mubr.bf16.gmra.mxu0 %v3506
      %v3765 = vpop.f32.mrf.mxu0
      %v3766 = vadd.f32 %v3241, %v3765
      %v3767 = vpop.f32.mrf.mxu0
      %v3768 = vpop.f32.mrf.mxu0
      %v3769 = vadd.f32 %v3241, %v3768
      %v3770 = vpop.f32.mrf.mxu0
      %3771 = vmatprep.mubr.bf16.mxu0 0
      %3772 = vmatmul.mubr.bf16.gmra.mxu0 %v3515
      %v3773 = vpop.f32.mrf.mxu0
      %v3774 = vadd.f32 %v3241, %v3773
      %v3775 = vpop.f32.mrf.mxu0
      %v3776 = vpop.f32.mrf.mxu0
      %v3777 = vadd.f32 %v3241, %v3776
      %v3778 = vpop.f32.mrf.mxu0
      %3779 = vmatprep.mubr.bf16.mxu0 0
      %3780 = vmatmul.mubr.bf16.gmra.mxu0 %v3524
      %v3781 = vpop.f32.mrf.mxu0
      %v3782 = vadd.f32 %v3241, %v3781
      %v3783 = vpop.f32.mrf.mxu0
      %v3784 = vpop.f32.mrf.mxu0
      %v3785 = vadd.f32 %v3241, %v3784
      %v3786 = vpop.f32.mrf.mxu0
      %3787 = vmatprep.mubr.bf16.mxu0 0
      %3788 = vmatmul.mubr.bf16.gmra.mxu0 %v3533
      %v3789 = vpop.f32.mrf.mxu0
      %v3790 = vadd.f32 %v3241, %v3789
      %v3791 = vpop.f32.mrf.mxu0
      %v3792 = vpop.f32.mrf.mxu0
      %v3793 = vadd.f32 %v3241, %v3792
      %v3794 = vpop.f32.mrf.mxu0
      %3795 = vmatprep.mubr.bf16.mxu0 0
      %3796 = vmatmul.mubr.bf16.gmra.mxu0 %v3532
      %v3797 = vpop.f32.mrf.mxu0
      %v3798 = vadd.f32 %v3241, %v3797
      %v3799 = vpop.f32.mrf.mxu0
      %v3800 = vpop.f32.mrf.mxu0
      %v3801 = vpop.f32.mrf.mxu0
      %3802 = vdwg.mxu0
      %3804 = vset.pattern.permute.xlu0 0
      %3805 = vperm.xlu0 %3804, %v284
      %v3806 = vpop.permute.xlu0 %3805
      %3809 = vset.pattern.permute.xlu0 0
      %3810 = vperm.xlu0 %3809, %v285
      %v3811 = vpop.permute.xlu0 %3810
      %3814 = vset.pattern.permute.xlu0 0
      %3815 = vperm.xlu0 %3814, %v286
      %v3816 = vpop.permute.xlu0 %3815
      %3819 = vset.pattern.permute.xlu0 0
      %3820 = vperm.xlu0 %3819, %v287
      %v3821 = vpop.permute.xlu0 %3820
      %3824 = vset.pattern.permute.xlu0 0
      %3825 = vperm.xlu0 %3824, %v288
      %v3826 = vpop.permute.xlu0 %3825
      %3829 = vset.pattern.permute.xlu0 0
      %3830 = vperm.xlu0 %3829, %v289
      %v3831 = vpop.permute.xlu0 %3830
      %3834 = vset.pattern.permute.xlu0 0
      %3835 = vperm.xlu0 %3834, %v290
      %v3836 = vpop.permute.xlu0 %3835
      %3839 = vset.pattern.permute.xlu0 0
      %3840 = vperm.xlu0 %3839, %v291
      %v3841 = vpop.permute.xlu0 %3840
      %3844 = vset.pattern.permute.xlu0 0
      %3845 = vperm.xlu0 %3844, %v292
      %v3846 = vpop.permute.xlu0 %3845
      %3849 = vset.pattern.permute.xlu0 0
      %3850 = vperm.xlu0 %3849, %v293
      %v3851 = vpop.permute.xlu0 %3850
      %3854 = vset.pattern.permute.xlu0 0
      %3855 = vperm.xlu0 %3854, %v294
      %v3856 = vpop.permute.xlu0 %3855
      %3859 = vset.pattern.permute.xlu0 0
      %3860 = vperm.xlu0 %3859, %v295
      %v3861 = vpop.permute.xlu0 %3860
      %3864 = vset.pattern.permute.xlu0 0
      %3865 = vperm.xlu0 %3864, %v296
      %v3866 = vpop.permute.xlu0 %3865
      %3869 = vset.pattern.permute.xlu0 0
      %3870 = vperm.xlu0 %3869, %v297
      %v3871 = vpop.permute.xlu0 %3870
      %3874 = vset.pattern.permute.xlu0 0
      %3875 = vperm.xlu0 %3874, %v298
      %v3876 = vpop.permute.xlu0 %3875
      %3879 = vset.pattern.permute.xlu0 0
      %3880 = vperm.xlu0 %3879, %v299
      %v3881 = vpop.permute.xlu0 %3880
      %3884 = vset.pattern.permute.xlu0 0
      %3885 = vperm.xlu0 %3884, %v300
      %v3886 = vpop.permute.xlu0 %3885
      %3889 = vset.pattern.permute.xlu0 0
      %3890 = vperm.xlu0 %3889, %v301
      %v3891 = vpop.permute.xlu0 %3890
      %3894 = vset.pattern.permute.xlu0 0
      %3895 = vperm.xlu0 %3894, %v302
      %v3896 = vpop.permute.xlu0 %3895
      %3899 = vset.pattern.permute.xlu0 0
      %3900 = vperm.xlu0 %3899, %v303
      %v3901 = vpop.permute.xlu0 %3900
      %3904 = vset.pattern.permute.xlu0 0
      %3905 = vperm.xlu0 %3904, %v304
      %v3906 = vpop.permute.xlu0 %3905
      %3909 = vset.pattern.permute.xlu0 0
      %3910 = vperm.xlu0 %3909, %v305
      %v3911 = vpop.permute.xlu0 %3910
      %3914 = vset.pattern.permute.xlu0 0
      %3915 = vperm.xlu0 %3914, %v306
      %v3916 = vpop.permute.xlu0 %3915
      %3919 = vset.pattern.permute.xlu0 0
      %3920 = vperm.xlu0 %3919, %v307
      %v3921 = vpop.permute.xlu0 %3920
      %3924 = vset.pattern.permute.xlu0 0
      %3925 = vperm.xlu0 %3924, %v308
      %v3926 = vpop.permute.xlu0 %3925
      %3929 = vset.pattern.permute.xlu0 0
      %3930 = vperm.xlu0 %3929, %v309
      %v3931 = vpop.permute.xlu0 %3930
      %3934 = vset.pattern.permute.xlu0 0
      %3935 = vperm.xlu0 %3934, %v310
      %v3936 = vpop.permute.xlu0 %3935
      %3939 = vset.pattern.permute.xlu0 0
      %3940 = vperm.xlu0 %3939, %v311
      %v3941 = vpop.permute.xlu0 %3940
      %3944 = vset.pattern.permute.xlu0 0
      %3945 = vperm.xlu0 %3944, %v312
      %v3946 = vpop.permute.xlu0 %3945
      %3949 = vset.pattern.permute.xlu0 0
      %3950 = vperm.xlu0 %3949, %v313
      %v3951 = vpop.permute.xlu0 %3950
      %3954 = vset.pattern.permute.xlu0 0
      %3955 = vperm.xlu0 %3954, %v314
      %v3956 = vpop.permute.xlu0 %3955
      %3959 = vset.pattern.permute.xlu0 0
      %3960 = vperm.xlu0 %3959, %v315
      %v3961 = vpop.permute.xlu0 %3960
      %3964 = vset.pattern.permute.xlu0 0
      %3965 = vperm.xlu0 %3964, %v316
      %v3966 = vpop.permute.xlu0 %3965
      %3969 = vset.pattern.permute.xlu0 0
      %3970 = vperm.xlu0 %3969, %v317
      %v3971 = vpop.permute.xlu0 %3970
      %3974 = vset.pattern.permute.xlu0 0
      %3975 = vperm.xlu0 %3974, %v318
      %v3976 = vpop.permute.xlu0 %3975
      %3979 = vset.pattern.permute.xlu0 0
      %3980 = vperm.xlu0 %3979, %v319
      %v3981 = vpop.permute.xlu0 %3980
      %3984 = vset.pattern.permute.xlu0 0
      %3985 = vperm.xlu0 %3984, %v320
      %v3986 = vpop.permute.xlu0 %3985
      %3989 = vset.pattern.permute.xlu0 0
      %3990 = vperm.xlu0 %3989, %v321
      %v3991 = vpop.permute.xlu0 %3990
      %3994 = vset.pattern.permute.xlu0 0
      %3995 = vperm.xlu0 %3994, %v322
      %v3996 = vpop.permute.xlu0 %3995
      %3999 = vset.pattern.permute.xlu0 0
      %4000 = vperm.xlu0 %3999, %v323
      %v4001 = vpop.permute.xlu0 %4000
      %4004 = vset.pattern.permute.xlu0 0
      %4005 = vperm.xlu0 %4004, %v324
      %v4006 = vpop.permute.xlu0 %4005
      %v4008 = vmul.f32 %v3638, %v3806
      %v4009 = vmul.f32 %v3641, %v3811
      %v4010 = vmul.f32 %v3646, %v3816
      %v4011 = vmul.f32 %v3649, %v3821
      %v4012 = vmul.f32 %v3654, %v3826
      %v4013 = vmul.f32 %v3657, %v3831
      %v4014 = vmul.f32 %v3662, %v3836
      %v4015 = vmul.f32 %v3665, %v3841
      %v4016 = vmul.f32 %v3670, %v3846
      %v4017 = vmul.f32 %v3673, %v3851
      %v4018 = vmul.f32 %v3678, %v3856
      %v4019 = vmul.f32 %v3681, %v3861
      %v4020 = vmul.f32 %v3686, %v3866
      %v4021 = vmul.f32 %v3689, %v3871
      %v4022 = vmul.f32 %v3694, %v3876
      %v4023 = vmul.f32 %v3697, %v3881
      %v4024 = vmul.f32 %v3702, %v3886
      %v4025 = vmul.f32 %v3705, %v3891
      %v4026 = vmul.f32 %v3710, %v3896
      %v4027 = vmul.f32 %v3713, %v3901
      %v4028 = vmul.f32 %v3718, %v3906
      %v4029 = vmul.f32 %v3721, %v3911
      %v4030 = vmul.f32 %v3726, %v3916
      %v4031 = vmul.f32 %v3729, %v3921
      %v4032 = vmul.f32 %v3734, %v3926
      %v4033 = vmul.f32 %v3737, %v3931
      %v4034 = vmul.f32 %v3742, %v3936
      %v4035 = vmul.f32 %v3745, %v3941
      %v4036 = vmul.f32 %v3750, %v3946
      %v4037 = vmul.f32 %v3753, %v3951
      %v4038 = vmul.f32 %v3758, %v3956
      %v4039 = vmul.f32 %v3761, %v3961
      %v4040 = vmul.f32 %v3766, %v3966
      %v4041 = vmul.f32 %v3769, %v3971
      %v4042 = vmul.f32 %v3774, %v3976
      %v4043 = vmul.f32 %v3777, %v3981
      %v4044 = vmul.f32 %v3782, %v3986
      %v4045 = vmul.f32 %v3785, %v3991
      %v4046 = vmul.f32 %v3790, %v3996
      %v4047 = vmul.f32 %v3793, %v4001
      %v4048 = vmul.f32 %v3798, %v4006
      %v4049 = vpack.c.bf16 %v4009, %v4008
      %v4050 = vpack.c.bf16 %v4011, %v4010
      %v4051 = vpack.c.bf16 %v4013, %v4012
      %v4052 = vpack.c.bf16 %v4015, %v4014
      %v4053 = vpack.c.bf16 %v4017, %v4016
      %v4054 = vpack.c.bf16 %v4019, %v4018
      %v4055 = vpack.c.bf16 %v4021, %v4020
      %v4056 = vpack.c.bf16 %v4023, %v4022
      %v4057 = vpack.c.bf16 %v4025, %v4024
      %v4058 = vpack.c.bf16 %v4027, %v4026
      %v4059 = vpack.c.bf16 %v4029, %v4028
      %v4060 = vpack.c.bf16 %v4031, %v4030
      %v4061 = vpack.c.bf16 %v4033, %v4032
      %v4062 = vpack.c.bf16 %v4035, %v4034
      %v4063 = vpack.c.bf16 %v4037, %v4036
      %v4064 = vpack.c.bf16 %v4039, %v4038
      %v4065 = vpack.c.bf16 %v4041, %v4040
      %v4066 = vpack.c.bf16 %v4043, %v4042
      %v4067 = vpack.c.bf16 %v4045, %v4044
      %v4068 = vpack.c.bf16 %v4047, %v4046
      %v4069 = vpack.c.bf16 %v4048, %v4048
      %v4091 = vunpack.c.l.b16 %v4049
      %v4092 = vunpack.c.h.b16 %v4049
      %v4093 = vunpack.c.l.b16 %v4050
      %v4094 = vunpack.c.h.b16 %v4050
      %v4095 = vunpack.c.l.b16 %v4051
      %v4096 = vunpack.c.h.b16 %v4051
      %v4097 = vunpack.c.l.b16 %v4052
      %v4098 = vunpack.c.h.b16 %v4052
      %v4099 = vunpack.c.l.b16 %v4053
      %v4100 = vunpack.c.h.b16 %v4053
      %v4101 = vunpack.c.l.b16 %v4054
      %v4102 = vunpack.c.h.b16 %v4054
      %v4103 = vunpack.c.l.b16 %v4055
      %v4104 = vunpack.c.h.b16 %v4055
      %v4105 = vunpack.c.l.b16 %v4056
      %v4106 = vunpack.c.h.b16 %v4056
      %v4107 = vunpack.c.l.b16 %v4057
      %v4108 = vunpack.c.h.b16 %v4057
      %v4109 = vunpack.c.l.b16 %v4058
      %v4110 = vunpack.c.h.b16 %v4058
      %v4111 = vunpack.c.l.b16 %v4059
      %v4112 = vunpack.c.h.b16 %v4059
      %v4113 = vunpack.c.l.b16 %v4060
      %v4114 = vunpack.c.h.b16 %v4060
      %v4115 = vunpack.c.l.b16 %v4061
      %v4116 = vunpack.c.h.b16 %v4061
      %v4117 = vunpack.c.l.b16 %v4062
      %v4118 = vunpack.c.h.b16 %v4062
      %v4119 = vunpack.c.l.b16 %v4063
      %v4120 = vunpack.c.h.b16 %v4063
      %v4121 = vunpack.c.l.b16 %v4064
      %v4122 = vunpack.c.h.b16 %v4064
      %v4123 = vunpack.c.l.b16 %v4065
      %v4124 = vunpack.c.h.b16 %v4065
      %v4125 = vunpack.c.l.b16 %v4066
      %v4126 = vunpack.c.h.b16 %v4066
      %v4127 = vunpack.c.l.b16 %v4067
      %v4128 = vunpack.c.h.b16 %v4067
      %v4129 = vunpack.c.l.b16 %v4068
      %v4130 = vunpack.c.h.b16 %v4068
      %v4131 = vunpack.c.l.b16 %v4069
      %v4132 = vpack.c.b16 %v4091, %v4091
      %v4133 = vpack.c.b16 %v4092, %v4092
      %v4134 = vpack.c.b16 %v4093, %v4093
      %v4135 = vpack.c.b16 %v4094, %v4094
      %v4136 = vpack.c.b16 %v4095, %v4095
      %v4137 = vpack.c.b16 %v4096, %v4096
      %v4138 = vpack.c.b16 %v4097, %v4097
      %v4139 = vpack.c.b16 %v4098, %v4098
      %v4140 = vpack.c.b16 %v4099, %v4099
      %v4141 = vpack.c.b16 %v4100, %v4100
      %v4142 = vpack.c.b16 %v4101, %v4101
      %v4143 = vpack.c.b16 %v4102, %v4102
      %v4144 = vpack.c.b16 %v4103, %v4103
      %v4145 = vpack.c.b16 %v4104, %v4104
      %v4146 = vpack.c.b16 %v4105, %v4105
      %v4147 = vpack.c.b16 %v4106, %v4106
      %v4148 = vpack.c.b16 %v4107, %v4107
      %v4149 = vpack.c.b16 %v4108, %v4108
      %v4150 = vpack.c.b16 %v4109, %v4109
      %v4151 = vpack.c.b16 %v4110, %v4110
      %v4152 = vpack.c.b16 %v4111, %v4111
      %v4153 = vpack.c.b16 %v4112, %v4112
      %v4154 = vpack.c.b16 %v4113, %v4113
      %v4155 = vpack.c.b16 %v4114, %v4114
      %v4156 = vpack.c.b16 %v4115, %v4115
      %v4157 = vpack.c.b16 %v4116, %v4116
      %v4158 = vpack.c.b16 %v4117, %v4117
      %v4159 = vpack.c.b16 %v4118, %v4118
      %v4160 = vpack.c.b16 %v4119, %v4119
      %v4161 = vpack.c.b16 %v4120, %v4120
      %v4162 = vpack.c.b16 %v4121, %v4121
      %v4163 = vpack.c.b16 %v4122, %v4122
      %v4164 = vpack.c.b16 %v4123, %v4123
      %v4165 = vpack.c.b16 %v4124, %v4124
      %v4166 = vpack.c.b16 %v4125, %v4125
      %v4167 = vpack.c.b16 %v4126, %v4126
      %v4168 = vpack.c.b16 %v4127, %v4127
      %v4169 = vpack.c.b16 %v4128, %v4128
      %v4170 = vpack.c.b16 %v4129, %v4129
      %v4171 = vpack.c.b16 %v4130, %v4130
      %v4172 = vpack.c.b16 %v4131, %v4131
      %4214 = vst [vmem:[#allocation2 + $0xc] sm:$0xf] %v4132
      %4215 = vst [vmem:[#allocation2 + $0x10] sm:$0xf] %v4133
      %4216 = vst [vmem:[#allocation2 + $0x14] sm:$0xf] %v4134
      %4217 = vst [vmem:[#allocation2 + $0x18] sm:$0xf] %v4135
      %4218 = vst [vmem:[#allocation2 + $0x1c] sm:$0xf] %v4136
      %4219 = vst [vmem:[#allocation2 + $0x20] sm:$0xf] %v4137
      %4220 = vst [vmem:[#allocation2 + $0x24] sm:$0xf] %v4138
      %4221 = vst [vmem:[#allocation2 + $0x28] sm:$0xf] %v4139
      %4222 = vst [vmem:[#allocation2 + $0x2c] sm:$0xf] %v4140
      %4223 = vst [vmem:[#allocation2 + $0x30] sm:$0xf] %v4141
      %4224 = vst [vmem:[#allocation2 + $0x34] sm:$0xf] %v4142
      %4225 = vst [vmem:[#allocation2 + $0x38] sm:$0xf] %v4143
      %4226 = vst [vmem:[#allocation2 + $0x3c] sm:$0xf] %v4144
      %4227 = vst [vmem:[#allocation2 + $0x40] sm:$0xf] %v4145
      %4228 = vst [vmem:[#allocation2 + $0x44] sm:$0xf] %v4146
      %4229 = vst [vmem:[#allocation2 + $0x48] sm:$0xf] %v4147
      %4230 = vst [vmem:[#allocation2 + $0x4c] sm:$0xf] %v4148
      %4231 = vst [vmem:[#allocation2 + $0x50] sm:$0xf] %v4149
      %4232 = vst [vmem:[#allocation2 + $0x54] sm:$0xf] %v4150
      %4233 = vst [vmem:[#allocation2 + $0x58] sm:$0xf] %v4151
      %4234 = vst [vmem:[#allocation2 + $0x5c] sm:$0xf] %v4152
      %4235 = vst [vmem:[#allocation2 + $0x60] sm:$0xf] %v4153
      %4236 = vst [vmem:[#allocation2 + $0x64] sm:$0xf] %v4154
      %4237 = vst [vmem:[#allocation2 + $0x68] sm:$0xf] %v4155
      %4238 = vst [vmem:[#allocation2 + $0x6c] sm:$0xf] %v4156
      %4239 = vst [vmem:[#allocation2 + $0x70] sm:$0xf] %v4157
      %4240 = vst [vmem:[#allocation2 + $0x74] sm:$0xf] %v4158
      %4241 = vst [vmem:[#allocation2 + $0x78] sm:$0xf] %v4159
      %4242 = vst [vmem:[#allocation2 + $0x7c] sm:$0xf] %v4160
      %4243 = vst [vmem:[#allocation2 + $0x80] sm:$0xf] %v4161
      %4244 = vst [vmem:[#allocation2 + $0x84] sm:$0xf] %v4162
      %4245 = vst [vmem:[#allocation2 + $0x88] sm:$0xf] %v4163
      %4246 = vst [vmem:[#allocation2 + $0x8c] sm:$0xf] %v4164
      %4247 = vst [vmem:[#allocation2 + $0x90] sm:$0xf] %v4165
      %4248 = vst [vmem:[#allocation2 + $0x94] sm:$0xf] %v4166
      %4249 = vst [vmem:[#allocation2 + $0x98] sm:$0xf] %v4167
      %4250 = vst [vmem:[#allocation2 + $0x9c] sm:$0xf] %v4168
      %4251 = vst [vmem:[#allocation2 + $0xa0] sm:$0xf] %v4169
      %4252 = vst [vmem:[#allocation2 + $0xa4] sm:$0xf] %v4170
      %4253 = vst [vmem:[#allocation2 + $0xa8] sm:$0xf] %v4171
      %4254 = vst [vmem:[#allocation2 + $0xac] sm:$0x3] %v4172
      %v4255 = vld [vmem:[#allocation2] sm:$0xc]
      %v4256 = vld [vmem:[#allocation2 + $0x4] sm:$0xf]
      %v4257 = vld [vmem:[#allocation2 + $0x8] sm:$0xf]
      %v4258 = vld [vmem:[#allocation2 + $0xc] sm:$0xf]
      %v4259 = vld [vmem:[#allocation2 + $0x10] sm:$0xf]
      %v4260 = vld [vmem:[#allocation2 + $0x14] sm:$0xf]
      %v4261 = vld [vmem:[#allocation2 + $0x18] sm:$0xf]
      %v4262 = vld [vmem:[#allocation2 + $0x1c] sm:$0xf]
      %v4263 = vld [vmem:[#allocation2 + $0x20] sm:$0xf]
      %v4264 = vld [vmem:[#allocation2 + $0x24] sm:$0xf]
      %v4265 = vld [vmem:[#allocation2 + $0x28] sm:$0xf]
      %v4266 = vld [vmem:[#allocation2 + $0x2c] sm:$0xf]
      %v4267 = vld [vmem:[#allocation2 + $0x30] sm:$0xf]
      %v4268 = vld [vmem:[#allocation2 + $0x34] sm:$0xf]
      %v4269 = vld [vmem:[#allocation2 + $0x38] sm:$0xf]
      %v4270 = vld [vmem:[#allocation2 + $0x3c] sm:$0xf]
      %v4271 = vld [vmem:[#allocation2 + $0x40] sm:$0xf]
      %v4272 = vld [vmem:[#allocation2 + $0x44] sm:$0xf]
      %v4273 = vld [vmem:[#allocation2 + $0x48] sm:$0xf]
      %v4274 = vld [vmem:[#allocation2 + $0x4c] sm:$0xf]
      %v4275 = vld [vmem:[#allocation2 + $0x50] sm:$0xf]
      %v4276 = vld [vmem:[#allocation2 + $0x54] sm:$0xf]
      %v4277 = vld [vmem:[#allocation2 + $0x58] sm:$0xf]
      %v4278 = vld [vmem:[#allocation2 + $0x5c] sm:$0xf]
      %v4279 = vld [vmem:[#allocation2 + $0x60] sm:$0xf]
      %v4280 = vld [vmem:[#allocation2 + $0x64] sm:$0xf]
      %v4281 = vld [vmem:[#allocation2 + $0x68] sm:$0xf]
      %v4282 = vld [vmem:[#allocation2 + $0x6c] sm:$0xf]
      %v4283 = vld [vmem:[#allocation2 + $0x70] sm:$0xf]
      %v4284 = vld [vmem:[#allocation2 + $0x74] sm:$0xf]
      %v4285 = vld [vmem:[#allocation2 + $0x78] sm:$0xf]
      %v4286 = vld [vmem:[#allocation2 + $0x7c] sm:$0xf]
      %v4287 = vld [vmem:[#allocation2 + $0x80] sm:$0xf]
      %v4288 = vld [vmem:[#allocation2 + $0x84] sm:$0xf]
      %v4289 = vld [vmem:[#allocation2 + $0x88] sm:$0xf]
      %v4290 = vld [vmem:[#allocation2 + $0x8c] sm:$0xf]
      %v4291 = vld [vmem:[#allocation2 + $0x90] sm:$0xf]
      %v4292 = vld [vmem:[#allocation2 + $0x94] sm:$0xf]
      %v4293 = vld [vmem:[#allocation2 + $0x98] sm:$0xf]
      %v4294 = vld [vmem:[#allocation2 + $0x9c] sm:$0xf]
      %v4295 = vld [vmem:[#allocation2 + $0xa0] sm:$0xf]
      %v4296 = vld [vmem:[#allocation2 + $0xa4] sm:$0x1]
      %v4297 = vld [vmem:[#allocation2] sm:$0x8]
      %v4299 = vshrl.u32 %v4255, 16
      %v4301 = vrot.slane %v4299, 7
      %v4302 = vshll.u32 %v4255, 16
      %v4304 = vor.u32 %v4301, %v4302
      %v4305 = vrot.slane %v4301, 4
      %v4307 = vshrl.u32 %v4256, 16
      %v4309 = vrot.slane %v4307, 7
      %v4310 = vshll.u32 %v4256, 16
      %v4312 = vor.u32 %v4309, %v4310
      %v4313 = vsel %vm382, %v4305, %v4312
      %v4314 = vrot.slane %v4309, 4
      %v4316 = vshrl.u32 %v4257, 16
      %v4318 = vrot.slane %v4316, 7
      %v4319 = vshll.u32 %v4257, 16
      %v4321 = vor.u32 %v4318, %v4319
      %v4322 = vsel %vm382, %v4314, %v4321
      %v4323 = vrot.slane %v4318, 4
      %v4325 = vshrl.u32 %v4258, 16
      %v4327 = vrot.slane %v4325, 7
      %v4328 = vshll.u32 %v4258, 16
      %v4330 = vor.u32 %v4327, %v4328
      %v4331 = vsel %vm382, %v4323, %v4330
      %v4332 = vrot.slane %v4327, 4
      %v4334 = vshrl.u32 %v4259, 16
      %v4336 = vrot.slane %v4334, 7
      %v4337 = vshll.u32 %v4259, 16
      %v4339 = vor.u32 %v4336, %v4337
      %v4340 = vsel %vm382, %v4332, %v4339
      %v4341 = vrot.slane %v4336, 4
      %v4343 = vshrl.u32 %v4260, 16
      %v4345 = vrot.slane %v4343, 7
      %v4346 = vshll.u32 %v4260, 16
      %v4348 = vor.u32 %v4345, %v4346
      %v4349 = vsel %vm382, %v4341, %v4348
      %v4350 = vrot.slane %v4345, 4
      %v4352 = vshrl.u32 %v4261, 16
      %v4354 = vrot.slane %v4352, 7
      %v4355 = vshll.u32 %v4261, 16
      %v4357 = vor.u32 %v4354, %v4355
      %v4358 = vsel %vm382, %v4350, %v4357
      %v4359 = vrot.slane %v4354, 4
      %v4361 = vshrl.u32 %v4262, 16
      %v4363 = vrot.slane %v4361, 7
      %v4364 = vshll.u32 %v4262, 16
      %v4366 = vor.u32 %v4363, %v4364
      %v4367 = vsel %vm382, %v4359, %v4366
      %v4368 = vrot.slane %v4363, 4
      %v4370 = vshrl.u32 %v4263, 16
      %v4372 = vrot.slane %v4370, 7
      %v4373 = vshll.u32 %v4263, 16
      %v4375 = vor.u32 %v4372, %v4373
      %v4376 = vsel %vm382, %v4368, %v4375
      %v4377 = vrot.slane %v4372, 4
      %v4379 = vshrl.u32 %v4264, 16
      %v4381 = vrot.slane %v4379, 7
      %v4382 = vshll.u32 %v4264, 16
      %v4384 = vor.u32 %v4381, %v4382
      %v4385 = vsel %vm382, %v4377, %v4384
      %v4386 = vrot.slane %v4381, 4
      %v4388 = vshrl.u32 %v4265, 16
      %v4390 = vrot.slane %v4388, 7
      %v4391 = vshll.u32 %v4265, 16
      %v4393 = vor.u32 %v4390, %v4391
      %v4394 = vsel %vm382, %v4386, %v4393
      %v4395 = vrot.slane %v4390, 4
      %v4397 = vshrl.u32 %v4266, 16
      %v4399 = vrot.slane %v4397, 7
      %v4400 = vshll.u32 %v4266, 16
      %v4402 = vor.u32 %v4399, %v4400
      %v4403 = vsel %vm382, %v4395, %v4402
      %v4404 = vrot.slane %v4399, 4
      %v4406 = vshrl.u32 %v4267, 16
      %v4408 = vrot.slane %v4406, 7
      %v4409 = vshll.u32 %v4267, 16
      %v4411 = vor.u32 %v4408, %v4409
      %v4412 = vsel %vm382, %v4404, %v4411
      %v4413 = vrot.slane %v4408, 4
      %v4415 = vshrl.u32 %v4268, 16
      %v4417 = vrot.slane %v4415, 7
      %v4418 = vshll.u32 %v4268, 16
      %v4420 = vor.u32 %v4417, %v4418
      %v4421 = vsel %vm382, %v4413, %v4420
      %v4422 = vrot.slane %v4417, 4
      %v4424 = vshrl.u32 %v4269, 16
      %v4426 = vrot.slane %v4424, 7
      %v4427 = vshll.u32 %v4269, 16
      %v4429 = vor.u32 %v4426, %v4427
      %v4430 = vsel %vm382, %v4422, %v4429
      %v4431 = vrot.slane %v4426, 4
      %v4433 = vshrl.u32 %v4270, 16
      %v4435 = vrot.slane %v4433, 7
      %v4436 = vshll.u32 %v4270, 16
      %v4438 = vor.u32 %v4435, %v4436
      %v4439 = vsel %vm382, %v4431, %v4438
      %v4440 = vrot.slane %v4435, 4
      %v4442 = vshrl.u32 %v4271, 16
      %v4444 = vrot.slane %v4442, 7
      %v4445 = vshll.u32 %v4271, 16
      %v4447 = vor.u32 %v4444, %v4445
      %v4448 = vsel %vm382, %v4440, %v4447
      %v4449 = vrot.slane %v4444, 4
      %v4451 = vshrl.u32 %v4272, 16
      %v4453 = vrot.slane %v4451, 7
      %v4454 = vshll.u32 %v4272, 16
      %v4456 = vor.u32 %v4453, %v4454
      %v4457 = vsel %vm382, %v4449, %v4456
      %v4458 = vrot.slane %v4453, 4
      %v4460 = vshrl.u32 %v4273, 16
      %v4462 = vrot.slane %v4460, 7
      %v4463 = vshll.u32 %v4273, 16
      %v4465 = vor.u32 %v4462, %v4463
      %v4466 = vsel %vm382, %v4458, %v4465
      %v4467 = vrot.slane %v4462, 4
      %v4469 = vshrl.u32 %v4274, 16
      %v4471 = vrot.slane %v4469, 7
      %v4472 = vshll.u32 %v4274, 16
      %v4474 = vor.u32 %v4471, %v4472
      %v4475 = vsel %vm382, %v4467, %v4474
      %v4476 = vrot.slane %v4471, 4
      %v4478 = vshrl.u32 %v4275, 16
      %v4480 = vrot.slane %v4478, 7
      %v4481 = vshll.u32 %v4275, 16
      %v4483 = vor.u32 %v4480, %v4481
      %v4484 = vsel %vm382, %v4476, %v4483
      %v4485 = vrot.slane %v4480, 4
      %v4487 = vshrl.u32 %v4276, 16
      %v4489 = vrot.slane %v4487, 7
      %v4490 = vshll.u32 %v4276, 16
      %v4492 = vor.u32 %v4489, %v4490
      %v4493 = vsel %vm382, %v4485, %v4492
      %v4494 = vrot.slane %v4489, 4
      %v4496 = vshrl.u32 %v4277, 16
      %v4498 = vrot.slane %v4496, 7
      %v4499 = vshll.u32 %v4277, 16
      %v4501 = vor.u32 %v4498, %v4499
      %v4502 = vsel %vm382, %v4494, %v4501
      %v4503 = vrot.slane %v4498, 4
      %v4505 = vshrl.u32 %v4278, 16
      %v4507 = vrot.slane %v4505, 7
      %v4508 = vshll.u32 %v4278, 16
      %v4510 = vor.u32 %v4507, %v4508
      %v4511 = vsel %vm382, %v4503, %v4510
      %v4512 = vrot.slane %v4507, 4
      %v4514 = vshrl.u32 %v4279, 16
      %v4516 = vrot.slane %v4514, 7
      %v4517 = vshll.u32 %v4279, 16
      %v4519 = vor.u32 %v4516, %v4517
      %v4520 = vsel %vm382, %v4512, %v4519
      %v4521 = vrot.slane %v4516, 4
      %v4523 = vshrl.u32 %v4280, 16
      %v4525 = vrot.slane %v4523, 7
      %v4526 = vshll.u32 %v4280, 16
      %v4528 = vor.u32 %v4525, %v4526
      %v4529 = vsel %vm382, %v4521, %v4528
      %v4530 = vrot.slane %v4525, 4
      %v4532 = vshrl.u32 %v4281, 16
      %v4534 = vrot.slane %v4532, 7
      %v4535 = vshll.u32 %v4281, 16
      %v4537 = vor.u32 %v4534, %v4535
      %v4538 = vsel %vm382, %v4530, %v4537
      %v4539 = vrot.slane %v4534, 4
      %v4541 = vshrl.u32 %v4282, 16
      %v4543 = vrot.slane %v4541, 7
      %v4544 = vshll.u32 %v4282, 16
      %v4546 = vor.u32 %v4543, %v4544
      %v4547 = vsel %vm382, %v4539, %v4546
      %v4548 = vrot.slane %v4543, 4
      %v4550 = vshrl.u32 %v4283, 16
      %v4552 = vrot.slane %v4550, 7
      %v4553 = vshll.u32 %v4283, 16
      %v4555 = vor.u32 %v4552, %v4553
      %v4556 = vsel %vm382, %v4548, %v4555
      %v4557 = vrot.slane %v4552, 4
      %v4559 = vshrl.u32 %v4284, 16
      %v4561 = vrot.slane %v4559, 7
      %v4562 = vshll.u32 %v4284, 16
      %v4564 = vor.u32 %v4561, %v4562
      %v4565 = vsel %vm382, %v4557, %v4564
      %v4566 = vrot.slane %v4561, 4
      %v4568 = vshrl.u32 %v4285, 16
      %v4570 = vrot.slane %v4568, 7
      %v4571 = vshll.u32 %v4285, 16
      %v4573 = vor.u32 %v4570, %v4571
      %v4574 = vsel %vm382, %v4566, %v4573
      %v4575 = vrot.slane %v4570, 4
      %v4577 = vshrl.u32 %v4286, 16
      %v4579 = vrot.slane %v4577, 7
      %v4580 = vshll.u32 %v4286, 16
      %v4582 = vor.u32 %v4579, %v4580
      %v4583 = vsel %vm382, %v4575, %v4582
      %v4584 = vrot.slane %v4579, 4
      %v4586 = vshrl.u32 %v4287, 16
      %v4588 = vrot.slane %v4586, 7
      %v4589 = vshll.u32 %v4287, 16
      %v4591 = vor.u32 %v4588, %v4589
      %v4592 = vsel %vm382, %v4584, %v4591
      %v4593 = vrot.slane %v4588, 4
      %v4595 = vshrl.u32 %v4288, 16
      %v4597 = vrot.slane %v4595, 7
      %v4598 = vshll.u32 %v4288, 16
      %v4600 = vor.u32 %v4597, %v4598
      %v4601 = vsel %vm382, %v4593, %v4600
      %v4602 = vrot.slane %v4597, 4
      %v4604 = vshrl.u32 %v4289, 16
      %v4606 = vrot.slane %v4604, 7
      %v4607 = vshll.u32 %v4289, 16
      %v4609 = vor.u32 %v4606, %v4607
      %v4610 = vsel %vm382, %v4602, %v4609
      %v4611 = vrot.slane %v4606, 4
      %v4613 = vshrl.u32 %v4290, 16
      %v4615 = vrot.slane %v4613, 7
      %v4616 = vshll.u32 %v4290, 16
      %v4618 = vor.u32 %v4615, %v4616
      %v4619 = vsel %vm382, %v4611, %v4618
      %v4620 = vrot.slane %v4615, 4
      %v4622 = vshrl.u32 %v4291, 16
      %v4624 = vrot.slane %v4622, 7
      %v4625 = vshll.u32 %v4291, 16
      %v4627 = vor.u32 %v4624, %v4625
      %v4628 = vsel %vm382, %v4620, %v4627
      %v4629 = vrot.slane %v4624, 4
      %v4631 = vshrl.u32 %v4292, 16
      %v4633 = vrot.slane %v4631, 7
      %v4634 = vshll.u32 %v4292, 16
      %v4636 = vor.u32 %v4633, %v4634
      %v4637 = vsel %vm382, %v4629, %v4636
      %v4638 = vrot.slane %v4633, 4
      %v4640 = vshrl.u32 %v4293, 16
      %v4642 = vrot.slane %v4640, 7
      %v4643 = vshll.u32 %v4293, 16
      %v4645 = vor.u32 %v4642, %v4643
      %v4646 = vsel %vm382, %v4638, %v4645
      %v4647 = vrot.slane %v4642, 4
      %v4649 = vshrl.u32 %v4294, 16
      %v4651 = vrot.slane %v4649, 7
      %v4652 = vshll.u32 %v4294, 16
      %v4654 = vor.u32 %v4651, %v4652
      %v4655 = vsel %vm382, %v4647, %v4654
      %v4656 = vrot.slane %v4651, 4
      %v4658 = vshrl.u32 %v4295, 16
      %v4660 = vrot.slane %v4658, 7
      %v4661 = vshll.u32 %v4295, 16
      %v4663 = vor.u32 %v4660, %v4661
      %v4664 = vsel %vm382, %v4656, %v4663
      %v4665 = vrot.slane %v4660, 4
      %v4667 = vshll.u32 %v4296, 16
      %v4669 = vsel %vm382, %v4665, %v4667
      %v4712 = vsel %vm843, %v4297, %v4304
      %v4713 = vsel %vm843, %v4256, %v4313
      %v4714 = vsel %vm843, %v4257, %v4322
      %v4715 = vsel %vm843, %v4258, %v4331
      %v4716 = vsel %vm843, %v4259, %v4340
      %v4717 = vsel %vm843, %v4260, %v4349
      %v4718 = vsel %vm843, %v4261, %v4358
      %v4719 = vsel %vm843, %v4262, %v4367
      %v4720 = vsel %vm843, %v4263, %v4376
      %v4721 = vsel %vm843, %v4264, %v4385
      %v4722 = vsel %vm843, %v4265, %v4394
      %v4723 = vsel %vm843, %v4266, %v4403
      %v4724 = vsel %vm843, %v4267, %v4412
      %v4725 = vsel %vm843, %v4268, %v4421
      %v4726 = vsel %vm843, %v4269, %v4430
      %v4727 = vsel %vm843, %v4270, %v4439
      %v4728 = vsel %vm843, %v4271, %v4448
      %v4729 = vsel %vm843, %v4272, %v4457
      %v4730 = vsel %vm843, %v4273, %v4466
      %v4731 = vsel %vm843, %v4274, %v4475
      %v4732 = vsel %vm843, %v4275, %v4484
      %v4733 = vsel %vm843, %v4276, %v4493
      %v4734 = vsel %vm843, %v4277, %v4502
      %v4735 = vsel %vm843, %v4278, %v4511
      %v4736 = vsel %vm843, %v4279, %v4520
      %v4737 = vsel %vm843, %v4280, %v4529
      %v4738 = vsel %vm843, %v4281, %v4538
      %v4739 = vsel %vm843, %v4282, %v4547
      %v4740 = vsel %vm843, %v4283, %v4556
      %v4741 = vsel %vm843, %v4284, %v4565
      %v4742 = vsel %vm843, %v4285, %v4574
      %v4743 = vsel %vm843, %v4286, %v4583
      %v4744 = vsel %vm843, %v4287, %v4592
      %v4745 = vsel %vm843, %v4288, %v4601
      %v4746 = vsel %vm843, %v4289, %v4610
      %v4747 = vsel %vm843, %v4290, %v4619
      %v4748 = vsel %vm843, %v4291, %v4628
      %v4749 = vsel %vm843, %v4292, %v4637
      %v4750 = vsel %vm843, %v4293, %v4646
      %v4751 = vsel %vm843, %v4294, %v4655
      %v4752 = vsel %vm843, %v4295, %v4664
      %v4753 = vsel %vm843, %v4296, %v4669
      %v4754 = vld [vmem:[#allocation2 + $0xa4] sm:$0x3]
      %v4756 = vshll.u32 %v4712, 16
      %v4758 = vshrl.u32 %v4712, 16
      %v4760 = vrot.slane %v4758, 7
      %v4761 = vrot.slane %v4760, 4
      %v4763 = vshrl.u32 %v4713, 16
      %v4765 = vrot.slane %v4763, 7
      %v4766 = vshll.u32 %v4713, 16
      %v4768 = vor.u32 %v4765, %v4766
      %v4769 = vsel %vm382, %v4761, %v4768
      %v4770 = vrot.slane %v4765, 4
      %v4772 = vshrl.u32 %v4714, 16
      %v4774 = vrot.slane %v4772, 7
      %v4775 = vshll.u32 %v4714, 16
      %v4777 = vor.u32 %v4774, %v4775
      %v4778 = vsel %vm382, %v4770, %v4777
      %v4779 = vrot.slane %v4774, 4
      %v4781 = vshrl.u32 %v4715, 16
      %v4783 = vrot.slane %v4781, 7
      %v4784 = vshll.u32 %v4715, 16
      %v4786 = vor.u32 %v4783, %v4784
      %v4787 = vsel %vm382, %v4779, %v4786
      %v4788 = vrot.slane %v4783, 4
      %v4790 = vshrl.u32 %v4716, 16
      %v4792 = vrot.slane %v4790, 7
      %v4793 = vshll.u32 %v4716, 16
      %v4795 = vor.u32 %v4792, %v4793
      %v4796 = vsel %vm382, %v4788, %v4795
      %v4797 = vrot.slane %v4792, 4
      %v4799 = vshrl.u32 %v4717, 16
      %v4801 = vrot.slane %v4799, 7
      %v4802 = vshll.u32 %v4717, 16
      %v4804 = vor.u32 %v4801, %v4802
      %v4805 = vsel %vm382, %v4797, %v4804
      %v4806 = vrot.slane %v4801, 4
      %v4808 = vshrl.u32 %v4718, 16
      %v4810 = vrot.slane %v4808, 7
      %v4811 = vshll.u32 %v4718, 16
      %v4813 = vor.u32 %v4810, %v4811
      %v4814 = vsel %vm382, %v4806, %v4813
      %v4815 = vrot.slane %v4810, 4
      %v4817 = vshrl.u32 %v4719, 16
      %v4819 = vrot.slane %v4817, 7
      %v4820 = vshll.u32 %v4719, 16
      %v4822 = vor.u32 %v4819, %v4820
      %v4823 = vsel %vm382, %v4815, %v4822
      %v4824 = vrot.slane %v4819, 4
      %v4826 = vshrl.u32 %v4720, 16
      %v4828 = vrot.slane %v4826, 7
      %v4829 = vshll.u32 %v4720, 16
      %v4831 = vor.u32 %v4828, %v4829
      %v4832 = vsel %vm382, %v4824, %v4831
      %v4833 = vrot.slane %v4828, 4
      %v4835 = vshrl.u32 %v4721, 16
      %v4837 = vrot.slane %v4835, 7
      %v4838 = vshll.u32 %v4721, 16
      %v4840 = vor.u32 %v4837, %v4838
      %v4841 = vsel %vm382, %v4833, %v4840
      %v4842 = vrot.slane %v4837, 4
      %v4844 = vshrl.u32 %v4722, 16
      %v4846 = vrot.slane %v4844, 7
      %v4847 = vshll.u32 %v4722, 16
      %v4849 = vor.u32 %v4846, %v4847
      %v4850 = vsel %vm382, %v4842, %v4849
      %v4851 = vrot.slane %v4846, 4
      %v4853 = vshrl.u32 %v4723, 16
      %v4855 = vrot.slane %v4853, 7
      %v4856 = vshll.u32 %v4723, 16
      %v4858 = vor.u32 %v4855, %v4856
      %v4859 = vsel %vm382, %v4851, %v4858
      %v4860 = vrot.slane %v4855, 4
      %v4862 = vshrl.u32 %v4724, 16
      %v4864 = vrot.slane %v4862, 7
      %v4865 = vshll.u32 %v4724, 16
      %v4867 = vor.u32 %v4864, %v4865
      %v4868 = vsel %vm382, %v4860, %v4867
      %v4869 = vrot.slane %v4864, 4
      %v4871 = vshrl.u32 %v4725, 16
      %v4873 = vrot.slane %v4871, 7
      %v4874 = vshll.u32 %v4725, 16
      %v4876 = vor.u32 %v4873, %v4874
      %v4877 = vsel %vm382, %v4869, %v4876
      %v4878 = vrot.slane %v4873, 4
      %v4880 = vshrl.u32 %v4726, 16
      %v4882 = vrot.slane %v4880, 7
      %v4883 = vshll.u32 %v4726, 16
      %v4885 = vor.u32 %v4882, %v4883
      %v4886 = vsel %vm382, %v4878, %v4885
      %v4887 = vrot.slane %v4882, 4
      %v4889 = vshrl.u32 %v4727, 16
      %v4891 = vrot.slane %v4889, 7
      %v4892 = vshll.u32 %v4727, 16
      %v4894 = vor.u32 %v4891, %v4892
      %v4895 = vsel %vm382, %v4887, %v4894
      %v4896 = vrot.slane %v4891, 4
      %v4898 = vshrl.u32 %v4728, 16
      %v4900 = vrot.slane %v4898, 7
      %v4901 = vshll.u32 %v4728, 16
      %v4903 = vor.u32 %v4900, %v4901
      %v4904 = vsel %vm382, %v4896, %v4903
      %v4905 = vrot.slane %v4900, 4
      %v4907 = vshrl.u32 %v4729, 16
      %v4909 = vrot.slane %v4907, 7
      %v4910 = vshll.u32 %v4729, 16
      %v4912 = vor.u32 %v4909, %v4910
      %v4913 = vsel %vm382, %v4905, %v4912
      %v4914 = vrot.slane %v4909, 4
      %v4916 = vshrl.u32 %v4730, 16
      %v4918 = vrot.slane %v4916, 7
      %v4919 = vshll.u32 %v4730, 16
      %v4921 = vor.u32 %v4918, %v4919
      %v4922 = vsel %vm382, %v4914, %v4921
      %v4923 = vrot.slane %v4918, 4
      %v4925 = vshrl.u32 %v4731, 16
      %v4927 = vrot.slane %v4925, 7
      %v4928 = vshll.u32 %v4731, 16
      %v4930 = vor.u32 %v4927, %v4928
      %v4931 = vsel %vm382, %v4923, %v4930
      %v4932 = vrot.slane %v4927, 4
      %v4934 = vshrl.u32 %v4732, 16
      %v4936 = vrot.slane %v4934, 7
      %v4937 = vshll.u32 %v4732, 16
      %v4939 = vor.u32 %v4936, %v4937
      %v4940 = vsel %vm382, %v4932, %v4939
      %v4941 = vrot.slane %v4936, 4
      %v4943 = vshrl.u32 %v4733, 16
      %v4945 = vrot.slane %v4943, 7
      %v4946 = vshll.u32 %v4733, 16
      %v4948 = vor.u32 %v4945, %v4946
      %v4949 = vsel %vm382, %v4941, %v4948
      %v4950 = vrot.slane %v4945, 4
      %v4952 = vshrl.u32 %v4734, 16
      %v4954 = vrot.slane %v4952, 7
      %v4955 = vshll.u32 %v4734, 16
      %v4957 = vor.u32 %v4954, %v4955
      %v4958 = vsel %vm382, %v4950, %v4957
      %v4959 = vrot.slane %v4954, 4
      %v4961 = vshrl.u32 %v4735, 16
      %v4963 = vrot.slane %v4961, 7
      %v4964 = vshll.u32 %v4735, 16
      %v4966 = vor.u32 %v4963, %v4964
      %v4967 = vsel %vm382, %v4959, %v4966
      %v4968 = vrot.slane %v4963, 4
      %v4970 = vshrl.u32 %v4736, 16
      %v4972 = vrot.slane %v4970, 7
      %v4973 = vshll.u32 %v4736, 16
      %v4975 = vor.u32 %v4972, %v4973
      %v4976 = vsel %vm382, %v4968, %v4975
      %v4977 = vrot.slane %v4972, 4
      %v4979 = vshrl.u32 %v4737, 16
      %v4981 = vrot.slane %v4979, 7
      %v4982 = vshll.u32 %v4737, 16
      %v4984 = vor.u32 %v4981, %v4982
      %v4985 = vsel %vm382, %v4977, %v4984
      %v4986 = vrot.slane %v4981, 4
      %v4988 = vshrl.u32 %v4738, 16
      %v4990 = vrot.slane %v4988, 7
      %v4991 = vshll.u32 %v4738, 16
      %v4993 = vor.u32 %v4990, %v4991
      %v4994 = vsel %vm382, %v4986, %v4993
      %v4995 = vrot.slane %v4990, 4
      %v4997 = vshrl.u32 %v4739, 16
      %v4999 = vrot.slane %v4997, 7
      %v5000 = vshll.u32 %v4739, 16
      %v5002 = vor.u32 %v4999, %v5000
      %v5003 = vsel %vm382, %v4995, %v5002
      %v5004 = vrot.slane %v4999, 4
      %v5006 = vshrl.u32 %v4740, 16
      %v5008 = vrot.slane %v5006, 7
      %v5009 = vshll.u32 %v4740, 16
      %v5011 = vor.u32 %v5008, %v5009
      %v5012 = vsel %vm382, %v5004, %v5011
      %v5013 = vrot.slane %v5008, 4
      %v5015 = vshrl.u32 %v4741, 16
      %v5017 = vrot.slane %v5015, 7
      %v5018 = vshll.u32 %v4741, 16
      %v5020 = vor.u32 %v5017, %v5018
      %v5021 = vsel %vm382, %v5013, %v5020
      %v5022 = vrot.slane %v5017, 4
      %v5024 = vshrl.u32 %v4742, 16
      %v5026 = vrot.slane %v5024, 7
      %v5027 = vshll.u32 %v4742, 16
      %v5029 = vor.u32 %v5026, %v5027
      %v5030 = vsel %vm382, %v5022, %v5029
      %v5031 = vrot.slane %v5026, 4
      %v5033 = vshrl.u32 %v4743, 16
      %v5035 = vrot.slane %v5033, 7
      %v5036 = vshll.u32 %v4743, 16
      %v5038 = vor.u32 %v5035, %v5036
      %v5039 = vsel %vm382, %v5031, %v5038
      %v5040 = vrot.slane %v5035, 4
      %v5042 = vshrl.u32 %v4744, 16
      %v5044 = vrot.slane %v5042, 7
      %v5045 = vshll.u32 %v4744, 16
      %v5047 = vor.u32 %v5044, %v5045
      %v5048 = vsel %vm382, %v5040, %v5047
      %v5049 = vrot.slane %v5044, 4
      %v5051 = vshrl.u32 %v4745, 16
      %v5053 = vrot.slane %v5051, 7
      %v5054 = vshll.u32 %v4745, 16
      %v5056 = vor.u32 %v5053, %v5054
      %v5057 = vsel %vm382, %v5049, %v5056
      %v5058 = vrot.slane %v5053, 4
      %v5060 = vshrl.u32 %v4746, 16
      %v5062 = vrot.slane %v5060, 7
      %v5063 = vshll.u32 %v4746, 16
      %v5065 = vor.u32 %v5062, %v5063
      %v5066 = vsel %vm382, %v5058, %v5065
      %v5067 = vrot.slane %v5062, 4
      %v5069 = vshrl.u32 %v4747, 16
      %v5071 = vrot.slane %v5069, 7
      %v5072 = vshll.u32 %v4747, 16
      %v5074 = vor.u32 %v5071, %v5072
      %v5075 = vsel %vm382, %v5067, %v5074
      %v5076 = vrot.slane %v5071, 4
      %v5078 = vshrl.u32 %v4748, 16
      %v5080 = vrot.slane %v5078, 7
      %v5081 = vshll.u32 %v4748, 16
      %v5083 = vor.u32 %v5080, %v5081
      %v5084 = vsel %vm382, %v5076, %v5083
      %v5085 = vrot.slane %v5080, 4
      %v5087 = vshrl.u32 %v4749, 16
      %v5089 = vrot.slane %v5087, 7
      %v5090 = vshll.u32 %v4749, 16
      %v5092 = vor.u32 %v5089, %v5090
      %v5093 = vsel %vm382, %v5085, %v5092
      %v5094 = vrot.slane %v5089, 4
      %v5096 = vshrl.u32 %v4750, 16
      %v5098 = vrot.slane %v5096, 7
      %v5099 = vshll.u32 %v4750, 16
      %v5101 = vor.u32 %v5098, %v5099
      %v5102 = vsel %vm382, %v5094, %v5101
      %v5103 = vrot.slane %v5098, 4
      %v5105 = vshrl.u32 %v4751, 16
      %v5107 = vrot.slane %v5105, 7
      %v5108 = vshll.u32 %v4751, 16
      %v5110 = vor.u32 %v5107, %v5108
      %v5111 = vsel %vm382, %v5103, %v5110
      %v5112 = vrot.slane %v5107, 4
      %v5114 = vshrl.u32 %v4752, 16
      %v5116 = vrot.slane %v5114, 7
      %v5117 = vshll.u32 %v4752, 16
      %v5119 = vor.u32 %v5116, %v5117
      %v5120 = vsel %vm382, %v5112, %v5119
      %v5121 = vrot.slane %v5116, 4
      %v5123 = vshrl.u32 %v4753, 16
      %v5125 = vrot.slane %v5123, 7
      %v5126 = vshll.u32 %v4753, 16
      %v5128 = vor.u32 %v5125, %v5126
      %v5129 = vsel %vm382, %v5121, %v5128
      %v5172 = vsel %vm1356, %v4297, %v4756
      %v5173 = vsel %vm1356, %v4256, %v4769
      %v5174 = vsel %vm1356, %v4257, %v4778
      %v5175 = vsel %vm1356, %v4258, %v4787
      %v5176 = vsel %vm1356, %v4259, %v4796
      %v5177 = vsel %vm1356, %v4260, %v4805
      %v5178 = vsel %vm1356, %v4261, %v4814
      %v5179 = vsel %vm1356, %v4262, %v4823
      %v5180 = vsel %vm1356, %v4263, %v4832
      %v5181 = vsel %vm1356, %v4264, %v4841
      %v5182 = vsel %vm1356, %v4265, %v4850
      %v5183 = vsel %vm1356, %v4266, %v4859
      %v5184 = vsel %vm1356, %v4267, %v4868
      %v5185 = vsel %vm1356, %v4268, %v4877
      %v5186 = vsel %vm1356, %v4269, %v4886
      %v5187 = vsel %vm1356, %v4270, %v4895
      %v5188 = vsel %vm1356, %v4271, %v4904
      %v5189 = vsel %vm1356, %v4272, %v4913
      %v5190 = vsel %vm1356, %v4273, %v4922
      %v5191 = vsel %vm1356, %v4274, %v4931
      %v5192 = vsel %vm1356, %v4275, %v4940
      %v5193 = vsel %vm1356, %v4276, %v4949
      %v5194 = vsel %vm1356, %v4277, %v4958
      %v5195 = vsel %vm1356, %v4278, %v4967
      %v5196 = vsel %vm1356, %v4279, %v4976
      %v5197 = vsel %vm1356, %v4280, %v4985
      %v5198 = vsel %vm1356, %v4281, %v4994
      %v5199 = vsel %vm1356, %v4282, %v5003
      %v5200 = vsel %vm1356, %v4283, %v5012
      %v5201 = vsel %vm1356, %v4284, %v5021
      %v5202 = vsel %vm1356, %v4285, %v5030
      %v5203 = vsel %vm1356, %v4286, %v5039
      %v5204 = vsel %vm1356, %v4287, %v5048
      %v5205 = vsel %vm1356, %v4288, %v5057
      %v5206 = vsel %vm1356, %v4289, %v5066
      %v5207 = vsel %vm1356, %v4290, %v5075
      %v5208 = vsel %vm1356, %v4291, %v5084
      %v5209 = vsel %vm1356, %v4292, %v5093
      %v5210 = vsel %vm1356, %v4293, %v5102
      %v5211 = vsel %vm1356, %v4294, %v5111
      %v5212 = vsel %vm1356, %v4295, %v5120
      %v5213 = vsel %vm1356, %v4754, %v5129
      %v5214 = vld [vmem:[#allocation2 + $0x8] sm:$0x8]
      %v5215 = vld [vmem:[#allocation2 + $0xa4] sm:$0xf]
      %v5216 = vld [vmem:[#allocation2 + $0xa8] sm:$0xf]
      %v5217 = vld [vmem:[#allocation2 + $0xac] sm:$0x3]
      %v5218 = vsel %vm2272, %v5214, %v5172
      %v5219 = vsel %vm2272, %v4258, %v5173
      %v5220 = vsel %vm2272, %v4259, %v5174
      %v5221 = vsel %vm2272, %v4260, %v5175
      %v5222 = vsel %vm2272, %v4261, %v5176
      %v5223 = vsel %vm2272, %v4262, %v5177
      %v5224 = vsel %vm2272, %v4263, %v5178
      %v5225 = vsel %vm2272, %v4264, %v5179
      %v5226 = vsel %vm2272, %v4265, %v5180
      %v5227 = vsel %vm2272, %v4266, %v5181
      %v5228 = vsel %vm2272, %v4267, %v5182
      %v5229 = vsel %vm2272, %v4268, %v5183
      %v5230 = vsel %vm2272, %v4269, %v5184
      %v5231 = vsel %vm2272, %v4270, %v5185
      %v5232 = vsel %vm2272, %v4271, %v5186
      %v5233 = vsel %vm2272, %v4272, %v5187
      %v5234 = vsel %vm2272, %v4273, %v5188
      %v5235 = vsel %vm2272, %v4274, %v5189
      %v5236 = vsel %vm2272, %v4275, %v5190
      %v5237 = vsel %vm2272, %v4276, %v5191
      %v5238 = vsel %vm2272, %v4277, %v5192
      %v5239 = vsel %vm2272, %v4278, %v5193
      %v5240 = vsel %vm2272, %v4279, %v5194
      %v5241 = vsel %vm2272, %v4280, %v5195
      %v5242 = vsel %vm2272, %v4281, %v5196
      %v5243 = vsel %vm2272, %v4282, %v5197
      %v5244 = vsel %vm2272, %v4283, %v5198
      %v5245 = vsel %vm2272, %v4284, %v5199
      %v5246 = vsel %vm2272, %v4285, %v5200
      %v5247 = vsel %vm2272, %v4286, %v5201
      %v5248 = vsel %vm2272, %v4287, %v5202
      %v5249 = vsel %vm2272, %v4288, %v5203
      %v5250 = vsel %vm2272, %v4289, %v5204
      %v5251 = vsel %vm2272, %v4290, %v5205
      %v5252 = vsel %vm2272, %v4291, %v5206
      %v5253 = vsel %vm2272, %v4292, %v5207
      %v5254 = vsel %vm2272, %v4293, %v5208
      %v5255 = vsel %vm2272, %v4294, %v5209
      %v5256 = vsel %vm2272, %v4295, %v5210
      %v5257 = vsel %vm2272, %v5215, %v5211
      %v5258 = vsel %vm2272, %v5216, %v5212
      %v5259 = vsel %vm2272, %v5217, %v5213
      %v5261 = vshrl.u32 %v5218, 16
      %v5263 = vrot.slane %v5261, 7
      %v5264 = vrot.slane %v5263, 4
      %v5266 = vshrl.u32 %v5219, 16
      %v5268 = vrot.slane %v5266, 7
      %v5269 = vshll.u32 %v5219, 16
      %v5271 = vor.u32 %v5268, %v5269
      %v5272 = vsel %vm382, %v5264, %v5271
      %v5273 = vrot.slane %v5268, 4
      %v5275 = vshrl.u32 %v5220, 16
      %v5277 = vrot.slane %v5275, 7
      %v5278 = vshll.u32 %v5220, 16
      %v5280 = vor.u32 %v5277, %v5278
      %v5281 = vsel %vm382, %v5273, %v5280
      %v5282 = vrot.slane %v5277, 4
      %v5284 = vshrl.u32 %v5221, 16
      %v5286 = vrot.slane %v5284, 7
      %v5287 = vshll.u32 %v5221, 16
      %v5289 = vor.u32 %v5286, %v5287
      %v5290 = vsel %vm382, %v5282, %v5289
      %v5291 = vrot.slane %v5286, 4
      %v5293 = vshrl.u32 %v5222, 16
      %v5295 = vrot.slane %v5293, 7
      %v5296 = vshll.u32 %v5222, 16
      %v5298 = vor.u32 %v5295, %v5296
      %v5299 = vsel %vm382, %v5291, %v5298
      %v5300 = vrot.slane %v5295, 4
      %v5302 = vshrl.u32 %v5223, 16
      %v5304 = vrot.slane %v5302, 7
      %v5305 = vshll.u32 %v5223, 16
      %v5307 = vor.u32 %v5304, %v5305
      %v5308 = vsel %vm382, %v5300, %v5307
      %v5309 = vrot.slane %v5304, 4
      %v5311 = vshrl.u32 %v5224, 16
      %v5313 = vrot.slane %v5311, 7
      %v5314 = vshll.u32 %v5224, 16
      %v5316 = vor.u32 %v5313, %v5314
      %v5317 = vsel %vm382, %v5309, %v5316
      %v5318 = vrot.slane %v5313, 4
      %v5320 = vshrl.u32 %v5225, 16
      %v5322 = vrot.slane %v5320, 7
      %v5323 = vshll.u32 %v5225, 16
      %v5325 = vor.u32 %v5322, %v5323
      %v5326 = vsel %vm382, %v5318, %v5325
      %v5327 = vrot.slane %v5322, 4
      %v5329 = vshrl.u32 %v5226, 16
      %v5331 = vrot.slane %v5329, 7
      %v5332 = vshll.u32 %v5226, 16
      %v5334 = vor.u32 %v5331, %v5332
      %v5335 = vsel %vm382, %v5327, %v5334
      %v5336 = vrot.slane %v5331, 4
      %v5338 = vshrl.u32 %v5227, 16
      %v5340 = vrot.slane %v5338, 7
      %v5341 = vshll.u32 %v5227, 16
      %v5343 = vor.u32 %v5340, %v5341
      %v5344 = vsel %vm382, %v5336, %v5343
      %v5345 = vrot.slane %v5340, 4
      %v5347 = vshrl.u32 %v5228, 16
      %v5349 = vrot.slane %v5347, 7
      %v5350 = vshll.u32 %v5228, 16
      %v5352 = vor.u32 %v5349, %v5350
      %v5353 = vsel %vm382, %v5345, %v5352
      %v5354 = vrot.slane %v5349, 4
      %v5356 = vshrl.u32 %v5229, 16
      %v5358 = vrot.slane %v5356, 7
      %v5359 = vshll.u32 %v5229, 16
      %v5361 = vor.u32 %v5358, %v5359
      %v5362 = vsel %vm382, %v5354, %v5361
      %v5363 = vrot.slane %v5358, 4
      %v5365 = vshrl.u32 %v5230, 16
      %v5367 = vrot.slane %v5365, 7
      %v5368 = vshll.u32 %v5230, 16
      %v5370 = vor.u32 %v5367, %v5368
      %v5371 = vsel %vm382, %v5363, %v5370
      %v5372 = vrot.slane %v5367, 4
      %v5374 = vshrl.u32 %v5231, 16
      %v5376 = vrot.slane %v5374, 7
      %v5377 = vshll.u32 %v5231, 16
      %v5379 = vor.u32 %v5376, %v5377
      %v5380 = vsel %vm382, %v5372, %v5379
      %v5381 = vrot.slane %v5376, 4
      %v5383 = vshrl.u32 %v5232, 16
      %v5385 = vrot.slane %v5383, 7
      %v5386 = vshll.u32 %v5232, 16
      %v5388 = vor.u32 %v5385, %v5386
      %v5389 = vsel %vm382, %v5381, %v5388
      %v5390 = vrot.slane %v5385, 4
      %v5392 = vshrl.u32 %v5233, 16
      %v5394 = vrot.slane %v5392, 7
      %v5395 = vshll.u32 %v5233, 16
      %v5397 = vor.u32 %v5394, %v5395
      %v5398 = vsel %vm382, %v5390, %v5397
      %v5399 = vrot.slane %v5394, 4
      %v5401 = vshrl.u32 %v5234, 16
      %v5403 = vrot.slane %v5401, 7
      %v5404 = vshll.u32 %v5234, 16
      %v5406 = vor.u32 %v5403, %v5404
      %v5407 = vsel %vm382, %v5399, %v5406
      %v5408 = vrot.slane %v5403, 4
      %v5410 = vshrl.u32 %v5235, 16
      %v5412 = vrot.slane %v5410, 7
      %v5413 = vshll.u32 %v5235, 16
      %v5415 = vor.u32 %v5412, %v5413
      %v5416 = vsel %vm382, %v5408, %v5415
      %v5417 = vrot.slane %v5412, 4
      %v5419 = vshrl.u32 %v5236, 16
      %v5421 = vrot.slane %v5419, 7
      %v5422 = vshll.u32 %v5236, 16
      %v5424 = vor.u32 %v5421, %v5422
      %v5425 = vsel %vm382, %v5417, %v5424
      %v5426 = vrot.slane %v5421, 4
      %v5428 = vshrl.u32 %v5237, 16
      %v5430 = vrot.slane %v5428, 7
      %v5431 = vshll.u32 %v5237, 16
      %v5433 = vor.u32 %v5430, %v5431
      %v5434 = vsel %vm382, %v5426, %v5433
      %v5435 = vrot.slane %v5430, 4
      %v5437 = vshrl.u32 %v5238, 16
      %v5439 = vrot.slane %v5437, 7
      %v5440 = vshll.u32 %v5238, 16
      %v5442 = vor.u32 %v5439, %v5440
      %v5443 = vsel %vm382, %v5435, %v5442
      %v5444 = vrot.slane %v5439, 4
      %v5446 = vshrl.u32 %v5239, 16
      %v5448 = vrot.slane %v5446, 7
      %v5449 = vshll.u32 %v5239, 16
      %v5451 = vor.u32 %v5448, %v5449
      %v5452 = vsel %vm382, %v5444, %v5451
      %v5453 = vrot.slane %v5448, 4
      %v5455 = vshrl.u32 %v5240, 16
      %v5457 = vrot.slane %v5455, 7
      %v5458 = vshll.u32 %v5240, 16
      %v5460 = vor.u32 %v5457, %v5458
      %v5461 = vsel %vm382, %v5453, %v5460
      %v5462 = vrot.slane %v5457, 4
      %v5464 = vshrl.u32 %v5241, 16
      %v5466 = vrot.slane %v5464, 7
      %v5467 = vshll.u32 %v5241, 16
      %v5469 = vor.u32 %v5466, %v5467
      %v5470 = vsel %vm382, %v5462, %v5469
      %v5471 = vrot.slane %v5466, 4
      %v5473 = vshrl.u32 %v5242, 16
      %v5475 = vrot.slane %v5473, 7
      %v5476 = vshll.u32 %v5242, 16
      %v5478 = vor.u32 %v5475, %v5476
      %v5479 = vsel %vm382, %v5471, %v5478
      %v5480 = vrot.slane %v5475, 4
      %v5482 = vshrl.u32 %v5243, 16
      %v5484 = vrot.slane %v5482, 7
      %v5485 = vshll.u32 %v5243, 16
      %v5487 = vor.u32 %v5484, %v5485
      %v5488 = vsel %vm382, %v5480, %v5487
      %v5489 = vrot.slane %v5484, 4
      %v5491 = vshrl.u32 %v5244, 16
      %v5493 = vrot.slane %v5491, 7
      %v5494 = vshll.u32 %v5244, 16
      %v5496 = vor.u32 %v5493, %v5494
      %v5497 = vsel %vm382, %v5489, %v5496
      %v5498 = vrot.slane %v5493, 4
      %v5500 = vshrl.u32 %v5245, 16
      %v5502 = vrot.slane %v5500, 7
      %v5503 = vshll.u32 %v5245, 16
      %v5505 = vor.u32 %v5502, %v5503
      %v5506 = vsel %vm382, %v5498, %v5505
      %v5507 = vrot.slane %v5502, 4
      %v5509 = vshrl.u32 %v5246, 16
      %v5511 = vrot.slane %v5509, 7
      %v5512 = vshll.u32 %v5246, 16
      %v5514 = vor.u32 %v5511, %v5512
      %v5515 = vsel %vm382, %v5507, %v5514
      %v5516 = vrot.slane %v5511, 4
      %v5518 = vshrl.u32 %v5247, 16
      %v5520 = vrot.slane %v5518, 7
      %v5521 = vshll.u32 %v5247, 16
      %v5523 = vor.u32 %v5520, %v5521
      %v5524 = vsel %vm382, %v5516, %v5523
      %v5525 = vrot.slane %v5520, 4
      %v5527 = vshrl.u32 %v5248, 16
      %v5529 = vrot.slane %v5527, 7
      %v5530 = vshll.u32 %v5248, 16
      %v5532 = vor.u32 %v5529, %v5530
      %v5533 = vsel %vm382, %v5525, %v5532
      %v5534 = vrot.slane %v5529, 4
      %v5536 = vshrl.u32 %v5249, 16
      %v5538 = vrot.slane %v5536, 7
      %v5539 = vshll.u32 %v5249, 16
      %v5541 = vor.u32 %v5538, %v5539
      %v5542 = vsel %vm382, %v5534, %v5541
      %v5543 = vrot.slane %v5538, 4
      %v5545 = vshrl.u32 %v5250, 16
      %v5547 = vrot.slane %v5545, 7
      %v5548 = vshll.u32 %v5250, 16
      %v5550 = vor.u32 %v5547, %v5548
      %v5551 = vsel %vm382, %v5543, %v5550
      %v5552 = vrot.slane %v5547, 4
      %v5554 = vshrl.u32 %v5251, 16
      %v5556 = vrot.slane %v5554, 7
      %v5557 = vshll.u32 %v5251, 16
      %v5559 = vor.u32 %v5556, %v5557
      %v5560 = vsel %vm382, %v5552, %v5559
      %v5561 = vrot.slane %v5556, 4
      %v5563 = vshrl.u32 %v5252, 16
      %v5565 = vrot.slane %v5563, 7
      %v5566 = vshll.u32 %v5252, 16
      %v5568 = vor.u32 %v5565, %v5566
      %v5569 = vsel %vm382, %v5561, %v5568
      %v5570 = vrot.slane %v5565, 4
      %v5572 = vshrl.u32 %v5253, 16
      %v5574 = vrot.slane %v5572, 7
      %v5575 = vshll.u32 %v5253, 16
      %v5577 = vor.u32 %v5574, %v5575
      %v5578 = vsel %vm382, %v5570, %v5577
      %v5579 = vrot.slane %v5574, 4
      %v5581 = vshrl.u32 %v5254, 16
      %v5583 = vrot.slane %v5581, 7
      %v5584 = vshll.u32 %v5254, 16
      %v5586 = vor.u32 %v5583, %v5584
      %v5587 = vsel %vm382, %v5579, %v5586
      %v5588 = vrot.slane %v5583, 4
      %v5590 = vshrl.u32 %v5255, 16
      %v5592 = vrot.slane %v5590, 7
      %v5593 = vshll.u32 %v5255, 16
      %v5595 = vor.u32 %v5592, %v5593
      %v5596 = vsel %vm382, %v5588, %v5595
      %v5597 = vrot.slane %v5592, 4
      %v5599 = vshrl.u32 %v5256, 16
      %v5601 = vrot.slane %v5599, 7
      %v5602 = vshll.u32 %v5256, 16
      %v5604 = vor.u32 %v5601, %v5602
      %v5605 = vsel %vm382, %v5597, %v5604
      %v5606 = vrot.slane %v5601, 4
      %v5608 = vshrl.u32 %v5257, 16
      %v5610 = vrot.slane %v5608, 7
      %v5611 = vshll.u32 %v5257, 16
      %v5613 = vor.u32 %v5610, %v5611
      %v5614 = vsel %vm382, %v5606, %v5613
      %v5615 = vrot.slane %v5610, 4
      %v5617 = vshrl.u32 %v5258, 16
      %v5619 = vrot.slane %v5617, 7
      %v5620 = vshll.u32 %v5258, 16
      %v5622 = vor.u32 %v5619, %v5620
      %v5623 = vsel %vm382, %v5615, %v5622
      %v5624 = vrot.slane %v5619, 4
      %v5626 = vshrl.u32 %v5259, 16
      %v5628 = vrot.slane %v5626, 7
      %v5629 = vshll.u32 %v5259, 16
      %v5631 = vor.u32 %v5628, %v5629
      %v5632 = vsel %vm382, %v5624, %v5631
      %v5674 = vsel %vm2772, %v4258, %v5272
      %v5675 = vsel %vm2772, %v4259, %v5281
      %v5676 = vsel %vm2772, %v4260, %v5290
      %v5677 = vsel %vm2772, %v4261, %v5299
      %v5678 = vsel %vm2772, %v4262, %v5308
      %v5679 = vsel %vm2772, %v4263, %v5317
      %v5680 = vsel %vm2772, %v4264, %v5326
      %v5681 = vsel %vm2772, %v4265, %v5335
      %v5682 = vsel %vm2772, %v4266, %v5344
      %v5683 = vsel %vm2772, %v4267, %v5353
      %v5684 = vsel %vm2772, %v4268, %v5362
      %v5685 = vsel %vm2772, %v4269, %v5371
      %v5686 = vsel %vm2772, %v4270, %v5380
      %v5687 = vsel %vm2772, %v4271, %v5389
      %v5688 = vsel %vm2772, %v4272, %v5398
      %v5689 = vsel %vm2772, %v4273, %v5407
      %v5690 = vsel %vm2772, %v4274, %v5416
      %v5691 = vsel %vm2772, %v4275, %v5425
      %v5692 = vsel %vm2772, %v4276, %v5434
      %v5693 = vsel %vm2772, %v4277, %v5443
      %v5694 = vsel %vm2772, %v4278, %v5452
      %v5695 = vsel %vm2772, %v4279, %v5461
      %v5696 = vsel %vm2772, %v4280, %v5470
      %v5697 = vsel %vm2772, %v4281, %v5479
      %v5698 = vsel %vm2772, %v4282, %v5488
      %v5699 = vsel %vm2772, %v4283, %v5497
      %v5700 = vsel %vm2772, %v4284, %v5506
      %v5701 = vsel %vm2772, %v4285, %v5515
      %v5702 = vsel %vm2772, %v4286, %v5524
      %v5703 = vsel %vm2772, %v4287, %v5533
      %v5704 = vsel %vm2772, %v4288, %v5542
      %v5705 = vsel %vm2772, %v4289, %v5551
      %v5706 = vsel %vm2772, %v4290, %v5560
      %v5707 = vsel %vm2772, %v4291, %v5569
      %v5708 = vsel %vm2772, %v4292, %v5578
      %v5709 = vsel %vm2772, %v4293, %v5587
      %v5710 = vsel %vm2772, %v4294, %v5596
      %v5711 = vsel %vm2772, %v4295, %v5605
      %v5712 = vsel %vm2772, %v5215, %v5614
      %v5713 = vsel %vm2772, %v5216, %v5623
      %v5714 = vsel %vm2772, %v5217, %v5632
      %vm5715 = vcmp.ge.s32.totalorder %v283, 40
      %v5716 = vld [vmem:[#allocation2 + $0xac] sm:$0x7]
      %v5717 = vsel %vm5715, 1, 0
      %vm5718 = vcmp.eq.s32.totalorder %v5717, 1
      %vm5719 = vmpackc.low %vm5718, %vm5718
      %v5721 = vshrl.u32 %v5674, 16
      %v5723 = vrot.slane %v5721, 7
      %v5724 = vshll.u32 %v5674, 16
      %v5726 = vor.u32 %v5723, %v5724
      %v5727 = vrot.slane %v5723, 4
      %v5729 = vshrl.u32 %v5675, 16
      %v5731 = vrot.slane %v5729, 7
      %v5732 = vshll.u32 %v5675, 16
      %v5734 = vor.u32 %v5731, %v5732
      %v5735 = vsel %vm382, %v5727, %v5734
      %v5736 = vrot.slane %v5731, 4
      %v5738 = vshrl.u32 %v5676, 16
      %v5740 = vrot.slane %v5738, 7
      %v5741 = vshll.u32 %v5676, 16
      %v5743 = vor.u32 %v5740, %v5741
      %v5744 = vsel %vm382, %v5736, %v5743
      %v5745 = vrot.slane %v5740, 4
      %v5747 = vshrl.u32 %v5677, 16
      %v5749 = vrot.slane %v5747, 7
      %v5750 = vshll.u32 %v5677, 16
      %v5752 = vor.u32 %v5749, %v5750
      %v5753 = vsel %vm382, %v5745, %v5752
      %v5754 = vrot.slane %v5749, 4
      %v5756 = vshrl.u32 %v5678, 16
      %v5758 = vrot.slane %v5756, 7
      %v5759 = vshll.u32 %v5678, 16
      %v5761 = vor.u32 %v5758, %v5759
      %v5762 = vsel %vm382, %v5754, %v5761
      %v5763 = vrot.slane %v5758, 4
      %v5765 = vshrl.u32 %v5679, 16
      %v5767 = vrot.slane %v5765, 7
      %v5768 = vshll.u32 %v5679, 16
      %v5770 = vor.u32 %v5767, %v5768
      %v5771 = vsel %vm382, %v5763, %v5770
      %v5772 = vrot.slane %v5767, 4
      %v5774 = vshrl.u32 %v5680, 16
      %v5776 = vrot.slane %v5774, 7
      %v5777 = vshll.u32 %v5680, 16
      %v5779 = vor.u32 %v5776, %v5777
      %v5780 = vsel %vm382, %v5772, %v5779
      %v5781 = vrot.slane %v5776, 4
      %v5783 = vshrl.u32 %v5681, 16
      %v5785 = vrot.slane %v5783, 7
      %v5786 = vshll.u32 %v5681, 16
      %v5788 = vor.u32 %v5785, %v5786
      %v5789 = vsel %vm382, %v5781, %v5788
      %v5790 = vrot.slane %v5785, 4
      %v5792 = vshrl.u32 %v5682, 16
      %v5794 = vrot.slane %v5792, 7
      %v5795 = vshll.u32 %v5682, 16
      %v5797 = vor.u32 %v5794, %v5795
      %v5798 = vsel %vm382, %v5790, %v5797
      %v5799 = vrot.slane %v5794, 4
      %v5801 = vshrl.u32 %v5683, 16
      %v5803 = vrot.slane %v5801, 7
      %v5804 = vshll.u32 %v5683, 16
      %v5806 = vor.u32 %v5803, %v5804
      %v5807 = vsel %vm382, %v5799, %v5806
      %v5808 = vrot.slane %v5803, 4
      %v5810 = vshrl.u32 %v5684, 16
      %v5812 = vrot.slane %v5810, 7
      %v5813 = vshll.u32 %v5684, 16
      %v5815 = vor.u32 %v5812, %v5813
      %v5816 = vsel %vm382, %v5808, %v5815
      %v5817 = vrot.slane %v5812, 4
      %v5819 = vshrl.u32 %v5685, 16
      %v5821 = vrot.slane %v5819, 7
      %v5822 = vshll.u32 %v5685, 16
      %v5824 = vor.u32 %v5821, %v5822
      %v5825 = vsel %vm382, %v5817, %v5824
      %v5826 = vrot.slane %v5821, 4
      %v5828 = vshrl.u32 %v5686, 16
      %v5830 = vrot.slane %v5828, 7
      %v5831 = vshll.u32 %v5686, 16
      %v5833 = vor.u32 %v5830, %v5831
      %v5834 = vsel %vm382, %v5826, %v5833
      %v5835 = vrot.slane %v5830, 4
      %v5837 = vshrl.u32 %v5687, 16
      %v5839 = vrot.slane %v5837, 7
      %v5840 = vshll.u32 %v5687, 16
      %v5842 = vor.u32 %v5839, %v5840
      %v5843 = vsel %vm382, %v5835, %v5842
      %v5844 = vrot.slane %v5839, 4
      %v5846 = vshrl.u32 %v5688, 16
      %v5848 = vrot.slane %v5846, 7
      %v5849 = vshll.u32 %v5688, 16
      %v5851 = vor.u32 %v5848, %v5849
      %v5852 = vsel %vm382, %v5844, %v5851
      %v5853 = vrot.slane %v5848, 4
      %v5855 = vshrl.u32 %v5689, 16
      %v5857 = vrot.slane %v5855, 7
      %v5858 = vshll.u32 %v5689, 16
      %v5860 = vor.u32 %v5857, %v5858
      %v5861 = vsel %vm382, %v5853, %v5860
      %v5862 = vrot.slane %v5857, 4
      %v5864 = vshrl.u32 %v5690, 16
      %v5866 = vrot.slane %v5864, 7
      %v5867 = vshll.u32 %v5690, 16
      %v5869 = vor.u32 %v5866, %v5867
      %v5870 = vsel %vm382, %v5862, %v5869
      %v5871 = vrot.slane %v5866, 4
      %v5873 = vshrl.u32 %v5691, 16
      %v5875 = vrot.slane %v5873, 7
      %v5876 = vshll.u32 %v5691, 16
      %v5878 = vor.u32 %v5875, %v5876
      %v5879 = vsel %vm382, %v5871, %v5878
      %v5880 = vrot.slane %v5875, 4
      %v5882 = vshrl.u32 %v5692, 16
      %v5884 = vrot.slane %v5882, 7
      %v5885 = vshll.u32 %v5692, 16
      %v5887 = vor.u32 %v5884, %v5885
      %v5888 = vsel %vm382, %v5880, %v5887
      %v5889 = vrot.slane %v5884, 4
      %v5891 = vshrl.u32 %v5693, 16
      %v5893 = vrot.slane %v5891, 7
      %v5894 = vshll.u32 %v5693, 16
      %v5896 = vor.u32 %v5893, %v5894
      %v5897 = vsel %vm382, %v5889, %v5896
      %v5898 = vrot.slane %v5893, 4
      %v5900 = vshrl.u32 %v5694, 16
      %v5902 = vrot.slane %v5900, 7
      %v5903 = vshll.u32 %v5694, 16
      %v5905 = vor.u32 %v5902, %v5903
      %v5906 = vsel %vm382, %v5898, %v5905
      %v5907 = vrot.slane %v5902, 4
      %v5909 = vshrl.u32 %v5695, 16
      %v5911 = vrot.slane %v5909, 7
      %v5912 = vshll.u32 %v5695, 16
      %v5914 = vor.u32 %v5911, %v5912
      %v5915 = vsel %vm382, %v5907, %v5914
      %v5916 = vrot.slane %v5911, 4
      %v5918 = vshrl.u32 %v5696, 16
      %v5920 = vrot.slane %v5918, 7
      %v5921 = vshll.u32 %v5696, 16
      %v5923 = vor.u32 %v5920, %v5921
      %v5924 = vsel %vm382, %v5916, %v5923
      %v5925 = vrot.slane %v5920, 4
      %v5927 = vshrl.u32 %v5697, 16
      %v5929 = vrot.slane %v5927, 7
      %v5930 = vshll.u32 %v5697, 16
      %v5932 = vor.u32 %v5929, %v5930
      %v5933 = vsel %vm382, %v5925, %v5932
      %v5934 = vrot.slane %v5929, 4
      %v5936 = vshrl.u32 %v5698, 16
      %v5938 = vrot.slane %v5936, 7
      %v5939 = vshll.u32 %v5698, 16
      %v5941 = vor.u32 %v5938, %v5939
      %v5942 = vsel %vm382, %v5934, %v5941
      %v5943 = vrot.slane %v5938, 4
      %v5945 = vshrl.u32 %v5699, 16
      %v5947 = vrot.slane %v5945, 7
      %v5948 = vshll.u32 %v5699, 16
      %v5950 = vor.u32 %v5947, %v5948
      %v5951 = vsel %vm382, %v5943, %v5950
      %v5952 = vrot.slane %v5947, 4
      %v5954 = vshrl.u32 %v5700, 16
      %v5956 = vrot.slane %v5954, 7
      %v5957 = vshll.u32 %v5700, 16
      %v5959 = vor.u32 %v5956, %v5957
      %v5960 = vsel %vm382, %v5952, %v5959
      %v5961 = vrot.slane %v5956, 4
      %v5963 = vshrl.u32 %v5701, 16
      %v5965 = vrot.slane %v5963, 7
      %v5966 = vshll.u32 %v5701, 16
      %v5968 = vor.u32 %v5965, %v5966
      %v5969 = vsel %vm382, %v5961, %v5968
      %v5970 = vrot.slane %v5965, 4
      %v5972 = vshrl.u32 %v5702, 16
      %v5974 = vrot.slane %v5972, 7
      %v5975 = vshll.u32 %v5702, 16
      %v5977 = vor.u32 %v5974, %v5975
      %v5978 = vsel %vm382, %v5970, %v5977
      %v5979 = vrot.slane %v5974, 4
      %v5981 = vshrl.u32 %v5703, 16
      %v5983 = vrot.slane %v5981, 7
      %v5984 = vshll.u32 %v5703, 16
      %v5986 = vor.u32 %v5983, %v5984
      %v5987 = vsel %vm382, %v5979, %v5986
      %v5988 = vrot.slane %v5983, 4
      %v5990 = vshrl.u32 %v5704, 16
      %v5992 = vrot.slane %v5990, 7
      %v5993 = vshll.u32 %v5704, 16
      %v5995 = vor.u32 %v5992, %v5993
      %v5996 = vsel %vm382, %v5988, %v5995
      %v5997 = vrot.slane %v5992, 4
      %v5999 = vshrl.u32 %v5705, 16
      %v6001 = vrot.slane %v5999, 7
      %v6002 = vshll.u32 %v5705, 16
      %v6004 = vor.u32 %v6001, %v6002
      %v6005 = vsel %vm382, %v5997, %v6004
      %v6006 = vrot.slane %v6001, 4
      %v6008 = vshrl.u32 %v5706, 16
      %v6010 = vrot.slane %v6008, 7
      %v6011 = vshll.u32 %v5706, 16
      %v6013 = vor.u32 %v6010, %v6011
      %v6014 = vsel %vm382, %v6006, %v6013
      %v6015 = vrot.slane %v6010, 4
      %v6017 = vshrl.u32 %v5707, 16
      %v6019 = vrot.slane %v6017, 7
      %v6020 = vshll.u32 %v5707, 16
      %v6022 = vor.u32 %v6019, %v6020
      %v6023 = vsel %vm382, %v6015, %v6022
      %v6024 = vrot.slane %v6019, 4
      %v6026 = vshrl.u32 %v5708, 16
      %v6028 = vrot.slane %v6026, 7
      %v6029 = vshll.u32 %v5708, 16
      %v6031 = vor.u32 %v6028, %v6029
      %v6032 = vsel %vm382, %v6024, %v6031
      %v6033 = vrot.slane %v6028, 4
      %v6035 = vshrl.u32 %v5709, 16
      %v6037 = vrot.slane %v6035, 7
      %v6038 = vshll.u32 %v5709, 16
      %v6040 = vor.u32 %v6037, %v6038
      %v6041 = vsel %vm382, %v6033, %v6040
      %v6042 = vrot.slane %v6037, 4
      %v6044 = vshrl.u32 %v5710, 16
      %v6046 = vrot.slane %v6044, 7
      %v6047 = vshll.u32 %v5710, 16
      %v6049 = vor.u32 %v6046, %v6047
      %v6050 = vsel %vm382, %v6042, %v6049
      %v6051 = vrot.slane %v6046, 4
      %v6053 = vshrl.u32 %v5711, 16
      %v6055 = vrot.slane %v6053, 7
      %v6056 = vshll.u32 %v5711, 16
      %v6058 = vor.u32 %v6055, %v6056
      %v6059 = vsel %vm382, %v6051, %v6058
      %v6060 = vrot.slane %v6055, 4
      %v6062 = vshrl.u32 %v5712, 16
      %v6064 = vrot.slane %v6062, 7
      %v6065 = vshll.u32 %v5712, 16
      %v6067 = vor.u32 %v6064, %v6065
      %v6068 = vsel %vm382, %v6060, %v6067
      %v6069 = vrot.slane %v6064, 4
      %v6071 = vshrl.u32 %v5713, 16
      %v6073 = vrot.slane %v6071, 7
      %v6074 = vshll.u32 %v5713, 16
      %v6076 = vor.u32 %v6073, %v6074
      %v6077 = vsel %vm382, %v6069, %v6076
      %v6078 = vrot.slane %v6073, 4
      %v6080 = vshrl.u32 %v5714, 16
      %v6082 = vrot.slane %v6080, 7
      %v6083 = vshll.u32 %v5714, 16
      %v6085 = vor.u32 %v6082, %v6083
      %v6086 = vsel %vm382, %v6078, %v6085
      %v6128 = vsel %vm5719, %v4258, %v5726
      %v6129 = vsel %vm5719, %v4259, %v5735
      %v6130 = vsel %vm5719, %v4260, %v5744
      %v6131 = vsel %vm5719, %v4261, %v5753
      %v6132 = vsel %vm5719, %v4262, %v5762
      %v6133 = vsel %vm5719, %v4263, %v5771
      %v6134 = vsel %vm5719, %v4264, %v5780
      %v6135 = vsel %vm5719, %v4265, %v5789
      %v6136 = vsel %vm5719, %v4266, %v5798
      %v6137 = vsel %vm5719, %v4267, %v5807
      %v6138 = vsel %vm5719, %v4268, %v5816
      %v6139 = vsel %vm5719, %v4269, %v5825
      %v6140 = vsel %vm5719, %v4270, %v5834
      %v6141 = vsel %vm5719, %v4271, %v5843
      %v6142 = vsel %vm5719, %v4272, %v5852
      %v6143 = vsel %vm5719, %v4273, %v5861
      %v6144 = vsel %vm5719, %v4274, %v5870
      %v6145 = vsel %vm5719, %v4275, %v5879
      %v6146 = vsel %vm5719, %v4276, %v5888
      %v6147 = vsel %vm5719, %v4277, %v5897
      %v6148 = vsel %vm5719, %v4278, %v5906
      %v6149 = vsel %vm5719, %v4279, %v5915
      %v6150 = vsel %vm5719, %v4280, %v5924
      %v6151 = vsel %vm5719, %v4281, %v5933
      %v6152 = vsel %vm5719, %v4282, %v5942
      %v6153 = vsel %vm5719, %v4283, %v5951
      %v6154 = vsel %vm5719, %v4284, %v5960
      %v6155 = vsel %vm5719, %v4285, %v5969
      %v6156 = vsel %vm5719, %v4286, %v5978
      %v6157 = vsel %vm5719, %v4287, %v5987
      %v6158 = vsel %vm5719, %v4288, %v5996
      %v6159 = vsel %vm5719, %v4289, %v6005
      %v6160 = vsel %vm5719, %v4290, %v6014
      %v6161 = vsel %vm5719, %v4291, %v6023
      %v6162 = vsel %vm5719, %v4292, %v6032
      %v6163 = vsel %vm5719, %v4293, %v6041
      %v6164 = vsel %vm5719, %v4294, %v6050
      %v6165 = vsel %vm5719, %v4295, %v6059
      %v6166 = vsel %vm5719, %v5215, %v6068
      %v6167 = vsel %vm5719, %v5216, %v6077
      %v6168 = vsel %vm5719, %v5716, %v6086
      %vm6169 = vcmp.ge.s32.totalorder %v283, 48
      %v6170 = vld [vmem:[#allocation2 + $0xac] sm:$0xf]
      %v6171 = vld [vmem:[#allocation2 + $0xb0] sm:$0xf]
      %v6172 = vld [vmem:[#allocation2 + $0xb4] sm:$0x7]
      %v6173 = vsel %vm6169, 1, 0
      %vm6174 = vcmp.eq.s32.totalorder %v6173, 1
      %vm6175 = vmpackc.low %vm6174, %vm6174
      %v6176 = vsel %vm6175, %v4260, %v6128
      %v6177 = vsel %vm6175, %v4261, %v6129
      %v6178 = vsel %vm6175, %v4262, %v6130
      %v6179 = vsel %vm6175, %v4263, %v6131
      %v6180 = vsel %vm6175, %v4264, %v6132
      %v6181 = vsel %vm6175, %v4265, %v6133
      %v6182 = vsel %vm6175, %v4266, %v6134
      %v6183 = vsel %vm6175, %v4267, %v6135
      %v6184 = vsel %vm6175, %v4268, %v6136
      %v6185 = vsel %vm6175, %v4269, %v6137
      %v6186 = vsel %vm6175, %v4270, %v6138
      %v6187 = vsel %vm6175, %v4271, %v6139
      %v6188 = vsel %vm6175, %v4272, %v6140
      %v6189 = vsel %vm6175, %v4273, %v6141
      %v6190 = vsel %vm6175, %v4274, %v6142
      %v6191 = vsel %vm6175, %v4275, %v6143
      %v6192 = vsel %vm6175, %v4276, %v6144
      %v6193 = vsel %vm6175, %v4277, %v6145
      %v6194 = vsel %vm6175, %v4278, %v6146
      %v6195 = vsel %vm6175, %v4279, %v6147
      %v6196 = vsel %vm6175, %v4280, %v6148
      %v6197 = vsel %vm6175, %v4281, %v6149
      %v6198 = vsel %vm6175, %v4282, %v6150
      %v6199 = vsel %vm6175, %v4283, %v6151
      %v6200 = vsel %vm6175, %v4284, %v6152
      %v6201 = vsel %vm6175, %v4285, %v6153
      %v6202 = vsel %vm6175, %v4286, %v6154
      %v6203 = vsel %vm6175, %v4287, %v6155
      %v6204 = vsel %vm6175, %v4288, %v6156
      %v6205 = vsel %vm6175, %v4289, %v6157
      %v6206 = vsel %vm6175, %v4290, %v6158
      %v6207 = vsel %vm6175, %v4291, %v6159
      %v6208 = vsel %vm6175, %v4292, %v6160
      %v6209 = vsel %vm6175, %v4293, %v6161
      %v6210 = vsel %vm6175, %v4294, %v6162
      %v6211 = vsel %vm6175, %v4295, %v6163
      %v6212 = vsel %vm6175, %v5215, %v6164
      %v6213 = vsel %vm6175, %v5216, %v6165
      %v6214 = vsel %vm6175, %v6170, %v6166
      %v6215 = vsel %vm6175, %v6171, %v6167
      %v6216 = vsel %vm6175, %v6172, %v6168
      %vm6217 = vcmp.ge.s32.totalorder %v283, 56
      %v6218 = vld [vmem:[#allocation2 + $0x14] sm:$0xe]
      %v6219 = vsel %vm6217, 1, 0
      %vm6220 = vcmp.eq.s32.totalorder %v6219, 1
      %vm6221 = vmpackc.low %vm6220, %vm6220
      %v6223 = vshrl.u32 %v6176, 16
      %v6225 = vrot.slane %v6223, 7
      %v6226 = vshll.u32 %v6176, 16
      %v6228 = vor.u32 %v6225, %v6226
      %v6229 = vrot.slane %v6225, 4
      %v6231 = vshrl.u32 %v6177, 16
      %v6233 = vrot.slane %v6231, 7
      %v6234 = vshll.u32 %v6177, 16
      %v6236 = vor.u32 %v6233, %v6234
      %v6237 = vsel %vm382, %v6229, %v6236
      %v6238 = vrot.slane %v6233, 4
      %v6240 = vshrl.u32 %v6178, 16
      %v6242 = vrot.slane %v6240, 7
      %v6243 = vshll.u32 %v6178, 16
      %v6245 = vor.u32 %v6242, %v6243
      %v6246 = vsel %vm382, %v6238, %v6245
      %v6247 = vrot.slane %v6242, 4
      %v6249 = vshrl.u32 %v6179, 16
      %v6251 = vrot.slane %v6249, 7
      %v6252 = vshll.u32 %v6179, 16
      %v6254 = vor.u32 %v6251, %v6252
      %v6255 = vsel %vm382, %v6247, %v6254
      %v6256 = vrot.slane %v6251, 4
      %v6258 = vshrl.u32 %v6180, 16
      %v6260 = vrot.slane %v6258, 7
      %v6261 = vshll.u32 %v6180, 16
      %v6263 = vor.u32 %v6260, %v6261
      %v6264 = vsel %vm382, %v6256, %v6263
      %v6265 = vrot.slane %v6260, 4
      %v6267 = vshrl.u32 %v6181, 16
      %v6269 = vrot.slane %v6267, 7
      %v6270 = vshll.u32 %v6181, 16
      %v6272 = vor.u32 %v6269, %v6270
      %v6273 = vsel %vm382, %v6265, %v6272
      %v6274 = vrot.slane %v6269, 4
      %v6276 = vshrl.u32 %v6182, 16
      %v6278 = vrot.slane %v6276, 7
      %v6279 = vshll.u32 %v6182, 16
      %v6281 = vor.u32 %v6278, %v6279
      %v6282 = vsel %vm382, %v6274, %v6281
      %v6283 = vrot.slane %v6278, 4
      %v6285 = vshrl.u32 %v6183, 16
      %v6287 = vrot.slane %v6285, 7
      %v6288 = vshll.u32 %v6183, 16
      %v6290 = vor.u32 %v6287, %v6288
      %v6291 = vsel %vm382, %v6283, %v6290
      %v6292 = vrot.slane %v6287, 4
      %v6294 = vshrl.u32 %v6184, 16
      %v6296 = vrot.slane %v6294, 7
      %v6297 = vshll.u32 %v6184, 16
      %v6299 = vor.u32 %v6296, %v6297
      %v6300 = vsel %vm382, %v6292, %v6299
      %v6301 = vrot.slane %v6296, 4
      %v6303 = vshrl.u32 %v6185, 16
      %v6305 = vrot.slane %v6303, 7
      %v6306 = vshll.u32 %v6185, 16
      %v6308 = vor.u32 %v6305, %v6306
      %v6309 = vsel %vm382, %v6301, %v6308
      %v6310 = vrot.slane %v6305, 4
      %v6312 = vshrl.u32 %v6186, 16
      %v6314 = vrot.slane %v6312, 7
      %v6315 = vshll.u32 %v6186, 16
      %v6317 = vor.u32 %v6314, %v6315
      %v6318 = vsel %vm382, %v6310, %v6317
      %v6319 = vrot.slane %v6314, 4
      %v6321 = vshrl.u32 %v6187, 16
      %v6323 = vrot.slane %v6321, 7
      %v6324 = vshll.u32 %v6187, 16
      %v6326 = vor.u32 %v6323, %v6324
      %v6327 = vsel %vm382, %v6319, %v6326
      %v6328 = vrot.slane %v6323, 4
      %v6330 = vshrl.u32 %v6188, 16
      %v6332 = vrot.slane %v6330, 7
      %v6333 = vshll.u32 %v6188, 16
      %v6335 = vor.u32 %v6332, %v6333
      %v6336 = vsel %vm382, %v6328, %v6335
      %v6337 = vrot.slane %v6332, 4
      %v6339 = vshrl.u32 %v6189, 16
      %v6341 = vrot.slane %v6339, 7
      %v6342 = vshll.u32 %v6189, 16
      %v6344 = vor.u32 %v6341, %v6342
      %v6345 = vsel %vm382, %v6337, %v6344
      %v6346 = vrot.slane %v6341, 4
      %v6348 = vshrl.u32 %v6190, 16
      %v6350 = vrot.slane %v6348, 7
      %v6351 = vshll.u32 %v6190, 16
      %v6353 = vor.u32 %v6350, %v6351
      %v6354 = vsel %vm382, %v6346, %v6353
      %v6355 = vrot.slane %v6350, 4
      %v6357 = vshrl.u32 %v6191, 16
      %v6359 = vrot.slane %v6357, 7
      %v6360 = vshll.u32 %v6191, 16
      %v6362 = vor.u32 %v6359, %v6360
      %v6363 = vsel %vm382, %v6355, %v6362
      %v6364 = vrot.slane %v6359, 4
      %v6366 = vshrl.u32 %v6192, 16
      %v6368 = vrot.slane %v6366, 7
      %v6369 = vshll.u32 %v6192, 16
      %v6371 = vor.u32 %v6368, %v6369
      %v6372 = vsel %vm382, %v6364, %v6371
      %v6373 = vrot.slane %v6368, 4
      %v6375 = vshrl.u32 %v6193, 16
      %v6377 = vrot.slane %v6375, 7
      %v6378 = vshll.u32 %v6193, 16
      %v6380 = vor.u32 %v6377, %v6378
      %v6381 = vsel %vm382, %v6373, %v6380
      %v6382 = vrot.slane %v6377, 4
      %v6384 = vshrl.u32 %v6194, 16
      %v6386 = vrot.slane %v6384, 7
      %v6387 = vshll.u32 %v6194, 16
      %v6389 = vor.u32 %v6386, %v6387
      %v6390 = vsel %vm382, %v6382, %v6389
      %v6391 = vrot.slane %v6386, 4
      %v6393 = vshrl.u32 %v6195, 16
      %v6395 = vrot.slane %v6393, 7
      %v6396 = vshll.u32 %v6195, 16
      %v6398 = vor.u32 %v6395, %v6396
      %v6399 = vsel %vm382, %v6391, %v6398
      %v6400 = vrot.slane %v6395, 4
      %v6402 = vshrl.u32 %v6196, 16
      %v6404 = vrot.slane %v6402, 7
      %v6405 = vshll.u32 %v6196, 16
      %v6407 = vor.u32 %v6404, %v6405
      %v6408 = vsel %vm382, %v6400, %v6407
      %v6409 = vrot.slane %v6404, 4
      %v6411 = vshrl.u32 %v6197, 16
      %v6413 = vrot.slane %v6411, 7
      %v6414 = vshll.u32 %v6197, 16
      %v6416 = vor.u32 %v6413, %v6414
      %v6417 = vsel %vm382, %v6409, %v6416
      %v6418 = vrot.slane %v6413, 4
      %v6420 = vshrl.u32 %v6198, 16
      %v6422 = vrot.slane %v6420, 7
      %v6423 = vshll.u32 %v6198, 16
      %v6425 = vor.u32 %v6422, %v6423
      %v6426 = vsel %vm382, %v6418, %v6425
      %v6427 = vrot.slane %v6422, 4
      %v6429 = vshrl.u32 %v6199, 16
      %v6431 = vrot.slane %v6429, 7
      %v6432 = vshll.u32 %v6199, 16
      %v6434 = vor.u32 %v6431, %v6432
      %v6435 = vsel %vm382, %v6427, %v6434
      %v6436 = vrot.slane %v6431, 4
      %v6438 = vshrl.u32 %v6200, 16
      %v6440 = vrot.slane %v6438, 7
      %v6441 = vshll.u32 %v6200, 16
      %v6443 = vor.u32 %v6440, %v6441
      %v6444 = vsel %vm382, %v6436, %v6443
      %v6445 = vrot.slane %v6440, 4
      %v6447 = vshrl.u32 %v6201, 16
      %v6449 = vrot.slane %v6447, 7
      %v6450 = vshll.u32 %v6201, 16
      %v6452 = vor.u32 %v6449, %v6450
      %v6453 = vsel %vm382, %v6445, %v6452
      %v6454 = vrot.slane %v6449, 4
      %v6456 = vshrl.u32 %v6202, 16
      %v6458 = vrot.slane %v6456, 7
      %v6459 = vshll.u32 %v6202, 16
      %v6461 = vor.u32 %v6458, %v6459
      %v6462 = vsel %vm382, %v6454, %v6461
      %v6463 = vrot.slane %v6458, 4
      %v6465 = vshrl.u32 %v6203, 16
      %v6467 = vrot.slane %v6465, 7
      %v6468 = vshll.u32 %v6203, 16
      %v6470 = vor.u32 %v6467, %v6468
      %v6471 = vsel %vm382, %v6463, %v6470
      %v6472 = vrot.slane %v6467, 4
      %v6474 = vshrl.u32 %v6204, 16
      %v6476 = vrot.slane %v6474, 7
      %v6477 = vshll.u32 %v6204, 16
      %v6479 = vor.u32 %v6476, %v6477
      %v6480 = vsel %vm382, %v6472, %v6479
      %v6481 = vrot.slane %v6476, 4
      %v6483 = vshrl.u32 %v6205, 16
      %v6485 = vrot.slane %v6483, 7
      %v6486 = vshll.u32 %v6205, 16
      %v6488 = vor.u32 %v6485, %v6486
      %v6489 = vsel %vm382, %v6481, %v6488
      %v6490 = vrot.slane %v6485, 4
      %v6492 = vshrl.u32 %v6206, 16
      %v6494 = vrot.slane %v6492, 7
      %v6495 = vshll.u32 %v6206, 16
      %v6497 = vor.u32 %v6494, %v6495
      %v6498 = vsel %vm382, %v6490, %v6497
      %v6499 = vrot.slane %v6494, 4
      %v6501 = vshrl.u32 %v6207, 16
      %v6503 = vrot.slane %v6501, 7
      %v6504 = vshll.u32 %v6207, 16
      %v6506 = vor.u32 %v6503, %v6504
      %v6507 = vsel %vm382, %v6499, %v6506
      %v6508 = vrot.slane %v6503, 4
      %v6510 = vshrl.u32 %v6208, 16
      %v6512 = vrot.slane %v6510, 7
      %v6513 = vshll.u32 %v6208, 16
      %v6515 = vor.u32 %v6512, %v6513
      %v6516 = vsel %vm382, %v6508, %v6515
      %v6517 = vrot.slane %v6512, 4
      %v6519 = vshrl.u32 %v6209, 16
      %v6521 = vrot.slane %v6519, 7
      %v6522 = vshll.u32 %v6209, 16
      %v6524 = vor.u32 %v6521, %v6522
      %v6525 = vsel %vm382, %v6517, %v6524
      %v6526 = vrot.slane %v6521, 4
      %v6528 = vshrl.u32 %v6210, 16
      %v6530 = vrot.slane %v6528, 7
      %v6531 = vshll.u32 %v6210, 16
      %v6533 = vor.u32 %v6530, %v6531
      %v6534 = vsel %vm382, %v6526, %v6533
      %v6535 = vrot.slane %v6530, 4
      %v6537 = vshrl.u32 %v6211, 16
      %v6539 = vrot.slane %v6537, 7
      %v6540 = vshll.u32 %v6211, 16
      %v6542 = vor.u32 %v6539, %v6540
      %v6543 = vsel %vm382, %v6535, %v6542
      %v6544 = vrot.slane %v6539, 4
      %v6546 = vshrl.u32 %v6212, 16
      %v6548 = vrot.slane %v6546, 7
      %v6549 = vshll.u32 %v6212, 16
      %v6551 = vor.u32 %v6548, %v6549
      %v6552 = vsel %vm382, %v6544, %v6551
      %v6553 = vrot.slane %v6548, 4
      %v6555 = vshrl.u32 %v6213, 16
      %v6557 = vrot.slane %v6555, 7
      %v6558 = vshll.u32 %v6213, 16
      %v6560 = vor.u32 %v6557, %v6558
      %v6561 = vsel %vm382, %v6553, %v6560
      %v6562 = vrot.slane %v6557, 4
      %v6564 = vshrl.u32 %v6214, 16
      %v6566 = vrot.slane %v6564, 7
      %v6567 = vshll.u32 %v6214, 16
      %v6569 = vor.u32 %v6566, %v6567
      %v6570 = vsel %vm382, %v6562, %v6569
      %v6571 = vrot.slane %v6566, 4
      %v6573 = vshrl.u32 %v6215, 16
      %v6575 = vrot.slane %v6573, 7
      %v6576 = vshll.u32 %v6215, 16
      %v6578 = vor.u32 %v6575, %v6576
      %v6579 = vsel %vm382, %v6571, %v6578
      %v6580 = vrot.slane %v6575, 4
      %v6582 = vshrl.u32 %v6216, 16
      %v6584 = vrot.slane %v6582, 7
      %v6585 = vshll.u32 %v6216, 16
      %v6587 = vor.u32 %v6584, %v6585
      %v6588 = vsel %vm382, %v6580, %v6587
      %v6630 = vsel %vm6221, %v6218, %v6228
      %v6631 = vsel %vm6221, %v4261, %v6237
      %v6632 = vsel %vm6221, %v4262, %v6246
      %v6633 = vsel %vm6221, %v4263, %v6255
      %v6634 = vsel %vm6221, %v4264, %v6264
      %v6635 = vsel %vm6221, %v4265, %v6273
      %v6636 = vsel %vm6221, %v4266, %v6282
      %v6637 = vsel %vm6221, %v4267, %v6291
      %v6638 = vsel %vm6221, %v4268, %v6300
      %v6639 = vsel %vm6221, %v4269, %v6309
      %v6640 = vsel %vm6221, %v4270, %v6318
      %v6641 = vsel %vm6221, %v4271, %v6327
      %v6642 = vsel %vm6221, %v4272, %v6336
      %v6643 = vsel %vm6221, %v4273, %v6345
      %v6644 = vsel %vm6221, %v4274, %v6354
      %v6645 = vsel %vm6221, %v4275, %v6363
      %v6646 = vsel %vm6221, %v4276, %v6372
      %v6647 = vsel %vm6221, %v4277, %v6381
      %v6648 = vsel %vm6221, %v4278, %v6390
      %v6649 = vsel %vm6221, %v4279, %v6399
      %v6650 = vsel %vm6221, %v4280, %v6408
      %v6651 = vsel %vm6221, %v4281, %v6417
      %v6652 = vsel %vm6221, %v4282, %v6426
      %v6653 = vsel %vm6221, %v4283, %v6435
      %v6654 = vsel %vm6221, %v4284, %v6444
      %v6655 = vsel %vm6221, %v4285, %v6453
      %v6656 = vsel %vm6221, %v4286, %v6462
      %v6657 = vsel %vm6221, %v4287, %v6471
      %v6658 = vsel %vm6221, %v4288, %v6480
      %v6659 = vsel %vm6221, %v4289, %v6489
      %v6660 = vsel %vm6221, %v4290, %v6498
      %v6661 = vsel %vm6221, %v4291, %v6507
      %v6662 = vsel %vm6221, %v4292, %v6516
      %v6663 = vsel %vm6221, %v4293, %v6525
      %v6664 = vsel %vm6221, %v4294, %v6534
      %v6665 = vsel %vm6221, %v4295, %v6543
      %v6666 = vsel %vm6221, %v5215, %v6552
      %v6667 = vsel %vm6221, %v5216, %v6561
      %v6668 = vsel %vm6221, %v6170, %v6570
      %v6669 = vsel %vm6221, %v6171, %v6579
      %v6670 = vsel %vm6221, %v6172, %v6588
      %vm6671 = vcmp.ge.s32.totalorder %v283, 64
      %v6672 = vld [vmem:[#allocation2 + $0xb4] sm:$0xf]
      %v6673 = vsel %vm6671, 1, 0
      %vm6674 = vcmp.eq.s32.totalorder %v6673, 1
      %vm6675 = vmpackc.low %vm6674, %vm6674
      %v6677 = vshrl.u32 %v6630, 16
      %v6679 = vrot.slane %v6677, 7
      %v6680 = vshll.u32 %v6630, 16
      %v6682 = vor.u32 %v6679, %v6680
      %v6683 = vrot.slane %v6679, 4
      %v6685 = vshrl.u32 %v6631, 16
      %v6687 = vrot.slane %v6685, 7
      %v6688 = vshll.u32 %v6631, 16
      %v6690 = vor.u32 %v6687, %v6688
      %v6691 = vsel %vm382, %v6683, %v6690
      %v6692 = vrot.slane %v6687, 4
      %v6694 = vshrl.u32 %v6632, 16
      %v6696 = vrot.slane %v6694, 7
      %v6697 = vshll.u32 %v6632, 16
      %v6699 = vor.u32 %v6696, %v6697
      %v6700 = vsel %vm382, %v6692, %v6699
      %v6701 = vrot.slane %v6696, 4
      %v6703 = vshrl.u32 %v6633, 16
      %v6705 = vrot.slane %v6703, 7
      %v6706 = vshll.u32 %v6633, 16
      %v6708 = vor.u32 %v6705, %v6706
      %v6709 = vsel %vm382, %v6701, %v6708
      %v6710 = vrot.slane %v6705, 4
      %v6712 = vshrl.u32 %v6634, 16
      %v6714 = vrot.slane %v6712, 7
      %v6715 = vshll.u32 %v6634, 16
      %v6717 = vor.u32 %v6714, %v6715
      %v6718 = vsel %vm382, %v6710, %v6717
      %v6719 = vrot.slane %v6714, 4
      %v6721 = vshrl.u32 %v6635, 16
      %v6723 = vrot.slane %v6721, 7
      %v6724 = vshll.u32 %v6635, 16
      %v6726 = vor.u32 %v6723, %v6724
      %v6727 = vsel %vm382, %v6719, %v6726
      %v6728 = vrot.slane %v6723, 4
      %v6730 = vshrl.u32 %v6636, 16
      %v6732 = vrot.slane %v6730, 7
      %v6733 = vshll.u32 %v6636, 16
      %v6735 = vor.u32 %v6732, %v6733
      %v6736 = vsel %vm382, %v6728, %v6735
      %v6737 = vrot.slane %v6732, 4
      %v6739 = vshrl.u32 %v6637, 16
      %v6741 = vrot.slane %v6739, 7
      %v6742 = vshll.u32 %v6637, 16
      %v6744 = vor.u32 %v6741, %v6742
      %v6745 = vsel %vm382, %v6737, %v6744
      %v6746 = vrot.slane %v6741, 4
      %v6748 = vshrl.u32 %v6638, 16
      %v6750 = vrot.slane %v6748, 7
      %v6751 = vshll.u32 %v6638, 16
      %v6753 = vor.u32 %v6750, %v6751
      %v6754 = vsel %vm382, %v6746, %v6753
      %v6755 = vrot.slane %v6750, 4
      %v6757 = vshrl.u32 %v6639, 16
      %v6759 = vrot.slane %v6757, 7
      %v6760 = vshll.u32 %v6639, 16
      %v6762 = vor.u32 %v6759, %v6760
      %v6763 = vsel %vm382, %v6755, %v6762
      %v6764 = vrot.slane %v6759, 4
      %v6766 = vshrl.u32 %v6640, 16
      %v6768 = vrot.slane %v6766, 7
      %v6769 = vshll.u32 %v6640, 16
      %v6771 = vor.u32 %v6768, %v6769
      %v6772 = vsel %vm382, %v6764, %v6771
      %v6773 = vrot.slane %v6768, 4
      %v6775 = vshrl.u32 %v6641, 16
      %v6777 = vrot.slane %v6775, 7
      %v6778 = vshll.u32 %v6641, 16
      %v6780 = vor.u32 %v6777, %v6778
      %v6781 = vsel %vm382, %v6773, %v6780
      %v6782 = vrot.slane %v6777, 4
      %v6784 = vshrl.u32 %v6642, 16
      %v6786 = vrot.slane %v6784, 7
      %v6787 = vshll.u32 %v6642, 16
      %v6789 = vor.u32 %v6786, %v6787
      %v6790 = vsel %vm382, %v6782, %v6789
      %v6791 = vrot.slane %v6786, 4
      %v6793 = vshrl.u32 %v6643, 16
      %v6795 = vrot.slane %v6793, 7
      %v6796 = vshll.u32 %v6643, 16
      %v6798 = vor.u32 %v6795, %v6796
      %v6799 = vsel %vm382, %v6791, %v6798
      %v6800 = vrot.slane %v6795, 4
      %v6802 = vshrl.u32 %v6644, 16
      %v6804 = vrot.slane %v6802, 7
      %v6805 = vshll.u32 %v6644, 16
      %v6807 = vor.u32 %v6804, %v6805
      %v6808 = vsel %vm382, %v6800, %v6807
      %v6809 = vrot.slane %v6804, 4
      %v6811 = vshrl.u32 %v6645, 16
      %v6813 = vrot.slane %v6811, 7
      %v6814 = vshll.u32 %v6645, 16
      %v6816 = vor.u32 %v6813, %v6814
      %v6817 = vsel %vm382, %v6809, %v6816
      %v6818 = vrot.slane %v6813, 4
      %v6820 = vshrl.u32 %v6646, 16
      %v6822 = vrot.slane %v6820, 7
      %v6823 = vshll.u32 %v6646, 16
      %v6825 = vor.u32 %v6822, %v6823
      %v6826 = vsel %vm382, %v6818, %v6825
      %v6827 = vrot.slane %v6822, 4
      %v6829 = vshrl.u32 %v6647, 16
      %v6831 = vrot.slane %v6829, 7
      %v6832 = vshll.u32 %v6647, 16
      %v6834 = vor.u32 %v6831, %v6832
      %v6835 = vsel %vm382, %v6827, %v6834
      %v6836 = vrot.slane %v6831, 4
      %v6838 = vshrl.u32 %v6648, 16
      %v6840 = vrot.slane %v6838, 7
      %v6841 = vshll.u32 %v6648, 16
      %v6843 = vor.u32 %v6840, %v6841
      %v6844 = vsel %vm382, %v6836, %v6843
      %v6845 = vrot.slane %v6840, 4
      %v6847 = vshrl.u32 %v6649, 16
      %v6849 = vrot.slane %v6847, 7
      %v6850 = vshll.u32 %v6649, 16
      %v6852 = vor.u32 %v6849, %v6850
      %v6853 = vsel %vm382, %v6845, %v6852
      %v6854 = vrot.slane %v6849, 4
      %v6856 = vshrl.u32 %v6650, 16
      %v6858 = vrot.slane %v6856, 7
      %v6859 = vshll.u32 %v6650, 16
      %v6861 = vor.u32 %v6858, %v6859
      %v6862 = vsel %vm382, %v6854, %v6861
      %v6863 = vrot.slane %v6858, 4
      %v6865 = vshrl.u32 %v6651, 16
      %v6867 = vrot.slane %v6865, 7
      %v6868 = vshll.u32 %v6651, 16
      %v6870 = vor.u32 %v6867, %v6868
      %v6871 = vsel %vm382, %v6863, %v6870
      %v6872 = vrot.slane %v6867, 4
      %v6874 = vshrl.u32 %v6652, 16
      %v6876 = vrot.slane %v6874, 7
      %v6877 = vshll.u32 %v6652, 16
      %v6879 = vor.u32 %v6876, %v6877
      %v6880 = vsel %vm382, %v6872, %v6879
      %v6881 = vrot.slane %v6876, 4
      %v6883 = vshrl.u32 %v6653, 16
      %v6885 = vrot.slane %v6883, 7
      %v6886 = vshll.u32 %v6653, 16
      %v6888 = vor.u32 %v6885, %v6886
      %v6889 = vsel %vm382, %v6881, %v6888
      %v6890 = vrot.slane %v6885, 4
      %v6892 = vshrl.u32 %v6654, 16
      %v6894 = vrot.slane %v6892, 7
      %v6895 = vshll.u32 %v6654, 16
      %v6897 = vor.u32 %v6894, %v6895
      %v6898 = vsel %vm382, %v6890, %v6897
      %v6899 = vrot.slane %v6894, 4
      %v6901 = vshrl.u32 %v6655, 16
      %v6903 = vrot.slane %v6901, 7
      %v6904 = vshll.u32 %v6655, 16
      %v6906 = vor.u32 %v6903, %v6904
      %v6907 = vsel %vm382, %v6899, %v6906
      %v6908 = vrot.slane %v6903, 4
      %v6910 = vshrl.u32 %v6656, 16
      %v6912 = vrot.slane %v6910, 7
      %v6913 = vshll.u32 %v6656, 16
      %v6915 = vor.u32 %v6912, %v6913
      %v6916 = vsel %vm382, %v6908, %v6915
      %v6917 = vrot.slane %v6912, 4
      %v6919 = vshrl.u32 %v6657, 16
      %v6921 = vrot.slane %v6919, 7
      %v6922 = vshll.u32 %v6657, 16
      %v6924 = vor.u32 %v6921, %v6922
      %v6925 = vsel %vm382, %v6917, %v6924
      %v6926 = vrot.slane %v6921, 4
      %v6928 = vshrl.u32 %v6658, 16
      %v6930 = vrot.slane %v6928, 7
      %v6931 = vshll.u32 %v6658, 16
      %v6933 = vor.u32 %v6930, %v6931
      %v6934 = vsel %vm382, %v6926, %v6933
      %v6935 = vrot.slane %v6930, 4
      %v6937 = vshrl.u32 %v6659, 16
      %v6939 = vrot.slane %v6937, 7
      %v6940 = vshll.u32 %v6659, 16
      %v6942 = vor.u32 %v6939, %v6940
      %v6943 = vsel %vm382, %v6935, %v6942
      %v6944 = vrot.slane %v6939, 4
      %v6946 = vshrl.u32 %v6660, 16
      %v6948 = vrot.slane %v6946, 7
      %v6949 = vshll.u32 %v6660, 16
      %v6951 = vor.u32 %v6948, %v6949
      %v6952 = vsel %vm382, %v6944, %v6951
      %v6953 = vrot.slane %v6948, 4
      %v6955 = vshrl.u32 %v6661, 16
      %v6957 = vrot.slane %v6955, 7
      %v6958 = vshll.u32 %v6661, 16
      %v6960 = vor.u32 %v6957, %v6958
      %v6961 = vsel %vm382, %v6953, %v6960
      %v6962 = vrot.slane %v6957, 4
      %v6964 = vshrl.u32 %v6662, 16
      %v6966 = vrot.slane %v6964, 7
      %v6967 = vshll.u32 %v6662, 16
      %v6969 = vor.u32 %v6966, %v6967
      %v6970 = vsel %vm382, %v6962, %v6969
      %v6971 = vrot.slane %v6966, 4
      %v6973 = vshrl.u32 %v6663, 16
      %v6975 = vrot.slane %v6973, 7
      %v6976 = vshll.u32 %v6663, 16
      %v6978 = vor.u32 %v6975, %v6976
      %v6979 = vsel %vm382, %v6971, %v6978
      %v6980 = vrot.slane %v6975, 4
      %v6982 = vshrl.u32 %v6664, 16
      %v6984 = vrot.slane %v6982, 7
      %v6985 = vshll.u32 %v6664, 16
      %v6987 = vor.u32 %v6984, %v6985
      %v6988 = vsel %vm382, %v6980, %v6987
      %v6989 = vrot.slane %v6984, 4
      %v6991 = vshrl.u32 %v6665, 16
      %v6993 = vrot.slane %v6991, 7
      %v6994 = vshll.u32 %v6665, 16
      %v6996 = vor.u32 %v6993, %v6994
      %v6997 = vsel %vm382, %v6989, %v6996
      %v6998 = vrot.slane %v6993, 4
      %v7000 = vshrl.u32 %v6666, 16
      %v7002 = vrot.slane %v7000, 7
      %v7003 = vshll.u32 %v6666, 16
      %v7005 = vor.u32 %v7002, %v7003
      %v7006 = vsel %vm382, %v6998, %v7005
      %v7007 = vrot.slane %v7002, 4
      %v7009 = vshrl.u32 %v6667, 16
      %v7011 = vrot.slane %v7009, 7
      %v7012 = vshll.u32 %v6667, 16
      %v7014 = vor.u32 %v7011, %v7012
      %v7015 = vsel %vm382, %v7007, %v7014
      %v7016 = vrot.slane %v7011, 4
      %v7018 = vshrl.u32 %v6668, 16
      %v7020 = vrot.slane %v7018, 7
      %v7021 = vshll.u32 %v6668, 16
      %v7023 = vor.u32 %v7020, %v7021
      %v7024 = vsel %vm382, %v7016, %v7023
      %v7025 = vrot.slane %v7020, 4
      %v7027 = vshrl.u32 %v6669, 16
      %v7029 = vrot.slane %v7027, 7
      %v7030 = vshll.u32 %v6669, 16
      %v7032 = vor.u32 %v7029, %v7030
      %v7033 = vsel %vm382, %v7025, %v7032
      %v7034 = vrot.slane %v7029, 4
      %v7036 = vshrl.u32 %v6670, 16
      %v7038 = vrot.slane %v7036, 7
      %v7039 = vshll.u32 %v6670, 16
      %v7041 = vor.u32 %v7038, %v7039
      %v7042 = vsel %vm382, %v7034, %v7041
      %v7084 = vsel %vm6675, %v6218, %v6682
      %v7085 = vsel %vm6675, %v4261, %v6691
      %v7086 = vsel %vm6675, %v4262, %v6700
      %v7087 = vsel %vm6675, %v4263, %v6709
      %v7088 = vsel %vm6675, %v4264, %v6718
      %v7089 = vsel %vm6675, %v4265, %v6727
      %v7090 = vsel %vm6675, %v4266, %v6736
      %v7091 = vsel %vm6675, %v4267, %v6745
      %v7092 = vsel %vm6675, %v4268, %v6754
      %v7093 = vsel %vm6675, %v4269, %v6763
      %v7094 = vsel %vm6675, %v4270, %v6772
      %v7095 = vsel %vm6675, %v4271, %v6781
      %v7096 = vsel %vm6675, %v4272, %v6790
      %v7097 = vsel %vm6675, %v4273, %v6799
      %v7098 = vsel %vm6675, %v4274, %v6808
      %v7099 = vsel %vm6675, %v4275, %v6817
      %v7100 = vsel %vm6675, %v4276, %v6826
      %v7101 = vsel %vm6675, %v4277, %v6835
      %v7102 = vsel %vm6675, %v4278, %v6844
      %v7103 = vsel %vm6675, %v4279, %v6853
      %v7104 = vsel %vm6675, %v4280, %v6862
      %v7105 = vsel %vm6675, %v4281, %v6871
      %v7106 = vsel %vm6675, %v4282, %v6880
      %v7107 = vsel %vm6675, %v4283, %v6889
      %v7108 = vsel %vm6675, %v4284, %v6898
      %v7109 = vsel %vm6675, %v4285, %v6907
      %v7110 = vsel %vm6675, %v4286, %v6916
      %v7111 = vsel %vm6675, %v4287, %v6925
      %v7112 = vsel %vm6675, %v4288, %v6934
      %v7113 = vsel %vm6675, %v4289, %v6943
      %v7114 = vsel %vm6675, %v4290, %v6952
      %v7115 = vsel %vm6675, %v4291, %v6961
      %v7116 = vsel %vm6675, %v4292, %v6970
      %v7117 = vsel %vm6675, %v4293, %v6979
      %v7118 = vsel %vm6675, %v4294, %v6988
      %v7119 = vsel %vm6675, %v4295, %v6997
      %v7120 = vsel %vm6675, %v5215, %v7006
      %v7121 = vsel %vm6675, %v5216, %v7015
      %v7122 = vsel %vm6675, %v6170, %v7024
      %v7123 = vsel %vm6675, %v6171, %v7033
      %v7124 = vsel %vm6675, %v6672, %v7042
      %v7125 = vld [vmem:[%s2] sm:$0xf]
      %v7126 = vld [vmem:[%s2 + $0x4] sm:$0xf]
      %v7127 = vld [vmem:[%s2 + $0x8] sm:$0xf]
      %v7128 = vld [vmem:[%s2 + $0xc] sm:$0xf]
      %v7129 = vld [vmem:[%s2 + $0x10] sm:$0xf]
      %v7130 = vld [vmem:[%s2 + $0x14] sm:$0xf]
      %v7131 = vld [vmem:[%s2 + $0x18] sm:$0xf]
      %v7132 = vld [vmem:[%s2 + $0x1c] sm:$0xf]
      %v7133 = vld [vmem:[%s2 + $0x20] sm:$0xf]
      %v7134 = vld [vmem:[%s2 + $0x24] sm:$0xf]
      %v7135 = vld [vmem:[%s2 + $0x28] sm:$0xf]
      %v7136 = vld [vmem:[%s2 + $0x2c] sm:$0xf]
      %v7137 = vld [vmem:[%s2 + $0x30] sm:$0xf]
      %v7138 = vld [vmem:[%s2 + $0x34] sm:$0xf]
      %v7139 = vld [vmem:[%s2 + $0x38] sm:$0xf]
      %v7140 = vld [vmem:[%s2 + $0x3c] sm:$0xf]
      %v7141 = vlaneseq
      %v7142 = vshrl.u32 %v7141, 7
      %v7143 = vsub.s32 1, %v7142
      %v7144 = vrot.slane %v325, %v7143
      %v7186 = vunpack.c.l.b16 %v7084
      %v7187 = vunpack.c.l.b16 %v7085
      %v7188 = vunpack.c.l.b16 %v7086
      %v7189 = vunpack.c.l.b16 %v7087
      %v7190 = vunpack.c.l.b16 %v7088
      %v7191 = vunpack.c.l.b16 %v7089
      %v7192 = vunpack.c.l.b16 %v7090
      %v7193 = vunpack.c.l.b16 %v7091
      %v7194 = vunpack.c.l.b16 %v7092
      %v7195 = vunpack.c.l.b16 %v7093
      %v7196 = vunpack.c.l.b16 %v7094
      %v7197 = vunpack.c.l.b16 %v7095
      %v7198 = vunpack.c.l.b16 %v7096
      %v7199 = vunpack.c.l.b16 %v7097
      %v7200 = vunpack.c.l.b16 %v7098
      %v7201 = vunpack.c.l.b16 %v7099
      %v7202 = vunpack.c.l.b16 %v7100
      %v7203 = vunpack.c.l.b16 %v7101
      %v7204 = vunpack.c.l.b16 %v7102
      %v7205 = vunpack.c.l.b16 %v7103
      %v7206 = vunpack.c.l.b16 %v7104
      %v7207 = vunpack.c.l.b16 %v7105
      %v7208 = vunpack.c.l.b16 %v7106
      %v7209 = vunpack.c.l.b16 %v7107
      %v7210 = vunpack.c.l.b16 %v7108
      %v7211 = vunpack.c.l.b16 %v7109
      %v7212 = vunpack.c.l.b16 %v7110
      %v7213 = vunpack.c.l.b16 %v7111
      %v7214 = vunpack.c.l.b16 %v7112
      %v7215 = vunpack.c.l.b16 %v7113
      %v7216 = vunpack.c.l.b16 %v7114
      %v7217 = vunpack.c.l.b16 %v7115
      %v7218 = vunpack.c.l.b16 %v7116
      %v7219 = vunpack.c.l.b16 %v7117
      %v7220 = vunpack.c.l.b16 %v7118
      %v7221 = vunpack.c.l.b16 %v7119
      %v7222 = vunpack.c.l.b16 %v7120
      %v7223 = vunpack.c.l.b16 %v7121
      %v7224 = vunpack.c.l.b16 %v7122
      %v7225 = vunpack.c.l.b16 %v7123
      %v7226 = vunpack.c.l.b16 %v7124
      %v7227 = vpack.c.b16 %v7187, %v7186
      %v7228 = vpack.c.b16 %v7189, %v7188
      %v7229 = vpack.c.b16 %v7191, %v7190
      %v7230 = vpack.c.b16 %v7193, %v7192
      %v7231 = vpack.c.b16 %v7195, %v7194
      %v7232 = vpack.c.b16 %v7197, %v7196
      %v7233 = vpack.c.b16 %v7199, %v7198
      %v7234 = vpack.c.b16 %v7201, %v7200
      %v7235 = vpack.c.b16 %v7203, %v7202
      %v7236 = vpack.c.b16 %v7205, %v7204
      %v7237 = vpack.c.b16 %v7207, %v7206
      %v7238 = vpack.c.b16 %v7209, %v7208
      %v7239 = vpack.c.b16 %v7211, %v7210
      %v7240 = vpack.c.b16 %v7213, %v7212
      %v7241 = vpack.c.b16 %v7215, %v7214
      %v7242 = vpack.c.b16 %v7217, %v7216
      %v7243 = vpack.c.b16 %v7219, %v7218
      %v7244 = vpack.c.b16 %v7221, %v7220
      %v7245 = vpack.c.b16 %v7223, %v7222
      %v7246 = vpack.c.b16 %v7225, %v7224
      %v7247 = vpack.c.b16 %v7226, %v7226
      %v7249 = vshrl.u32 %v7227, 16
      %v7251 = vrot.slane %v7249, 1
      %v7252 = vshll.u32 %v7227, 16
      %v7254 = vrot.slane %v7252, 2
      %v7255 = vor.u32 %v7251, %v7254
      %v7257 = vshrl.u32 %v7228, 16
      %v7259 = vrot.slane %v7257, 1
      %v7260 = vshll.u32 %v7228, 16
      %v7262 = vrot.slane %v7260, 2
      %v7263 = vor.u32 %v7259, %v7262
      %v7264 = vsel %vm3345, %v7255, %v7263
      %v7266 = vshrl.u32 %v7229, 16
      %v7268 = vrot.slane %v7266, 1
      %v7269 = vshll.u32 %v7229, 16
      %v7271 = vrot.slane %v7269, 2
      %v7272 = vor.u32 %v7268, %v7271
      %v7273 = vsel %vm3345, %v7263, %v7272
      %v7275 = vshrl.u32 %v7230, 16
      %v7277 = vrot.slane %v7275, 1
      %v7278 = vshll.u32 %v7230, 16
      %v7280 = vrot.slane %v7278, 2
      %v7281 = vor.u32 %v7277, %v7280
      %v7282 = vsel %vm3345, %v7272, %v7281
      %v7284 = vshrl.u32 %v7231, 16
      %v7286 = vrot.slane %v7284, 1
      %v7287 = vshll.u32 %v7231, 16
      %v7289 = vrot.slane %v7287, 2
      %v7290 = vor.u32 %v7286, %v7289
      %v7291 = vsel %vm3345, %v7281, %v7290
      %v7293 = vshrl.u32 %v7232, 16
      %v7295 = vrot.slane %v7293, 1
      %v7296 = vshll.u32 %v7232, 16
      %v7298 = vrot.slane %v7296, 2
      %v7299 = vor.u32 %v7295, %v7298
      %v7300 = vsel %vm3345, %v7290, %v7299
      %v7302 = vshrl.u32 %v7233, 16
      %v7304 = vrot.slane %v7302, 1
      %v7305 = vshll.u32 %v7233, 16
      %v7307 = vrot.slane %v7305, 2
      %v7308 = vor.u32 %v7304, %v7307
      %v7309 = vsel %vm3345, %v7299, %v7308
      %v7311 = vshrl.u32 %v7234, 16
      %v7313 = vrot.slane %v7311, 1
      %v7314 = vshll.u32 %v7234, 16
      %v7316 = vrot.slane %v7314, 2
      %v7317 = vor.u32 %v7313, %v7316
      %v7318 = vsel %vm3345, %v7308, %v7317
      %v7320 = vshrl.u32 %v7235, 16
      %v7322 = vrot.slane %v7320, 1
      %v7323 = vshll.u32 %v7235, 16
      %v7325 = vrot.slane %v7323, 2
      %v7326 = vor.u32 %v7322, %v7325
      %v7327 = vsel %vm3345, %v7317, %v7326
      %v7329 = vshrl.u32 %v7236, 16
      %v7331 = vrot.slane %v7329, 1
      %v7332 = vshll.u32 %v7236, 16
      %v7334 = vrot.slane %v7332, 2
      %v7335 = vor.u32 %v7331, %v7334
      %v7336 = vsel %vm3345, %v7326, %v7335
      %v7338 = vshrl.u32 %v7237, 16
      %v7340 = vrot.slane %v7338, 1
      %v7341 = vshll.u32 %v7237, 16
      %v7343 = vrot.slane %v7341, 2
      %v7344 = vor.u32 %v7340, %v7343
      %v7345 = vsel %vm3345, %v7335, %v7344
      %v7347 = vshrl.u32 %v7238, 16
      %v7349 = vrot.slane %v7347, 1
      %v7350 = vshll.u32 %v7238, 16
      %v7352 = vrot.slane %v7350, 2
      %v7353 = vor.u32 %v7349, %v7352
      %v7354 = vsel %vm3345, %v7344, %v7353
      %v7356 = vshrl.u32 %v7239, 16
      %v7358 = vrot.slane %v7356, 1
      %v7359 = vshll.u32 %v7239, 16
      %v7361 = vrot.slane %v7359, 2
      %v7362 = vor.u32 %v7358, %v7361
      %v7363 = vsel %vm3345, %v7353, %v7362
      %v7365 = vshrl.u32 %v7240, 16
      %v7367 = vrot.slane %v7365, 1
      %v7368 = vshll.u32 %v7240, 16
      %v7370 = vrot.slane %v7368, 2
      %v7371 = vor.u32 %v7367, %v7370
      %v7372 = vsel %vm3345, %v7362, %v7371
      %v7374 = vshrl.u32 %v7241, 16
      %v7376 = vrot.slane %v7374, 1
      %v7377 = vshll.u32 %v7241, 16
      %v7379 = vrot.slane %v7377, 2
      %v7380 = vor.u32 %v7376, %v7379
      %v7381 = vsel %vm3345, %v7371, %v7380
      %v7383 = vshrl.u32 %v7242, 16
      %v7385 = vrot.slane %v7383, 1
      %v7386 = vshll.u32 %v7242, 16
      %v7388 = vrot.slane %v7386, 2
      %v7389 = vor.u32 %v7385, %v7388
      %v7390 = vsel %vm3345, %v7380, %v7389
      %v7392 = vshrl.u32 %v7243, 16
      %v7394 = vrot.slane %v7392, 1
      %v7395 = vshll.u32 %v7243, 16
      %v7397 = vrot.slane %v7395, 2
      %v7398 = vor.u32 %v7394, %v7397
      %v7399 = vsel %vm3345, %v7389, %v7398
      %v7401 = vshrl.u32 %v7244, 16
      %v7403 = vrot.slane %v7401, 1
      %v7404 = vshll.u32 %v7244, 16
      %v7406 = vrot.slane %v7404, 2
      %v7407 = vor.u32 %v7403, %v7406
      %v7408 = vsel %vm3345, %v7398, %v7407
      %v7410 = vshrl.u32 %v7245, 16
      %v7412 = vrot.slane %v7410, 1
      %v7413 = vshll.u32 %v7245, 16
      %v7415 = vrot.slane %v7413, 2
      %v7416 = vor.u32 %v7412, %v7415
      %v7417 = vsel %vm3345, %v7407, %v7416
      %v7419 = vshrl.u32 %v7246, 16
      %v7421 = vrot.slane %v7419, 1
      %v7422 = vshll.u32 %v7246, 16
      %v7424 = vrot.slane %v7422, 2
      %v7425 = vor.u32 %v7421, %v7424
      %v7426 = vsel %vm3345, %v7416, %v7425
      %v7428 = vshrl.u32 %v7247, 16
      %v7430 = vrot.slane %v7428, 1
      %v7431 = vshll.u32 %v7247, 16
      %v7433 = vrot.slane %v7431, 2
      %v7434 = vor.u32 %v7430, %v7433
      %v7435 = vsel %vm3345, %v7425, %v7434
      %v7473 = vunpack.c.l.b16 %v7125
      %v7474 = vunpack.c.l.b16 %v7126
      %v7475 = vunpack.c.l.b16 %v7127
      %v7476 = vunpack.c.l.b16 %v7128
      %v7477 = vunpack.c.l.b16 %v7129
      %v7478 = vunpack.c.l.b16 %v7130
      %v7479 = vunpack.c.l.b16 %v7131
      %v7480 = vunpack.c.l.b16 %v7132
      %v7481 = vunpack.c.l.b16 %v7133
      %v7482 = vunpack.c.l.b16 %v7134
      %v7483 = vunpack.c.l.b16 %v7135
      %v7484 = vunpack.c.l.b16 %v7136
      %v7485 = vunpack.c.l.b16 %v7137
      %v7486 = vunpack.c.l.b16 %v7138
      %v7487 = vunpack.c.l.b16 %v7139
      %v7488 = vunpack.c.l.b16 %v7140
      %v7489 = vpack.c.b16 %v7474, %v7473
      %v7490 = vpack.c.b16 %v7476, %v7475
      %v7491 = vpack.c.b16 %v7478, %v7477
      %v7492 = vpack.c.b16 %v7480, %v7479
      %v7493 = vpack.c.b16 %v7482, %v7481
      %v7494 = vpack.c.b16 %v7484, %v7483
      %v7495 = vpack.c.b16 %v7486, %v7485
      %v7496 = vpack.c.b16 %v7488, %v7487
      %7505 = vmatprep.subr.bf16.mxu0 0
      %7506 = vmatpush1.bf16.msra.mxu0 %v7496
      %7507 = vmatprep.subr.bf16.mxu0 0
      %7508 = vmatpush1.bf16.msra.mxu0 %v7495
      %7509 = vmatprep.subr.bf16.mxu0 0
      %7510 = vmatpush1.bf16.msra.mxu0 %v7494
      %7511 = vmatprep.subr.bf16.mxu0 0
      %7512 = vmatpush1.bf16.msra.mxu0 %v7493
      %7513 = vmatprep.subr.bf16.mxu0 0
      %7514 = vmatpush1.bf16.msra.mxu0 %v7492
      %7515 = vmatprep.subr.bf16.mxu0 0
      %7516 = vmatpush1.bf16.msra.mxu0 %v7491
      %7517 = vmatprep.subr.bf16.mxu0 0
      %7518 = vmatpush1.bf16.msra.mxu0 %v7490
      %7519 = vmatprep.subr.bf16.mxu0 0
      %7520 = vmatpush1.bf16.msra.mxu0 %v7489
      %7521 = vmatprep.subr.bf16.mxu0 0
      %7522 = vmatpush2.bf16.msra.mxu0 0
      %7523 = vmatprep.subr.bf16.mxu0 0
      %7524 = vmatpush2.bf16.msra.mxu0 0
      %7525 = vmatprep.subr.bf16.mxu0 0
      %7526 = vmatpush2.bf16.msra.mxu0 0
      %7527 = vmatprep.subr.bf16.mxu0 0
      %7528 = vmatpush2.bf16.msra.mxu0 0
      %7529 = vmatprep.subr.bf16.mxu0 0
      %7530 = vmatpush2.bf16.msra.mxu0 0
      %7531 = vmatprep.subr.bf16.mxu0 0
      %7532 = vmatpush2.bf16.msra.mxu0 0
      %7533 = vmatprep.subr.bf16.mxu0 0
      %7534 = vmatpush2.bf16.msra.mxu0 0
      %7535 = vmatprep.subr.bf16.mxu0 0
      %7536 = vmatpush2.bf16.msra.mxu0 0
      %7537 = vmatprep.mubr.bf16.mxu0 0
      %7538 = vmatmul.mubr.bf16.gmra.mxu0 %v7264
      %v7539 = vpop.f32.mrf.mxu0
      %v7540 = vadd.f32 %v7144, %v7539
      %v7541 = vpop.f32.mrf.mxu0
      %v7542 = vpop.f32.mrf.mxu0
      %v7543 = vadd.f32 %v7144, %v7542
      %v7544 = vpop.f32.mrf.mxu0
      %7545 = vmatprep.mubr.bf16.mxu0 0
      %7546 = vmatmul.mubr.bf16.gmra.mxu0 %v7273
      %v7547 = vpop.f32.mrf.mxu0
      %v7548 = vadd.f32 %v7144, %v7547
      %v7549 = vpop.f32.mrf.mxu0
      %v7550 = vpop.f32.mrf.mxu0
      %v7551 = vadd.f32 %v7144, %v7550
      %v7552 = vpop.f32.mrf.mxu0
      %7553 = vmatprep.mubr.bf16.mxu0 0
      %7554 = vmatmul.mubr.bf16.gmra.mxu0 %v7282
      %v7555 = vpop.f32.mrf.mxu0
      %v7556 = vadd.f32 %v7144, %v7555
      %v7557 = vpop.f32.mrf.mxu0
      %v7558 = vpop.f32.mrf.mxu0
      %v7559 = vadd.f32 %v7144, %v7558
      %v7560 = vpop.f32.mrf.mxu0
      %7561 = vmatprep.mubr.bf16.mxu0 0
      %7562 = vmatmul.mubr.bf16.gmra.mxu0 %v7291
      %v7563 = vpop.f32.mrf.mxu0
      %v7564 = vadd.f32 %v7144, %v7563
      %v7565 = vpop.f32.mrf.mxu0
      %v7566 = vpop.f32.mrf.mxu0
      %v7567 = vadd.f32 %v7144, %v7566
      %v7568 = vpop.f32.mrf.mxu0
      %7569 = vmatprep.mubr.bf16.mxu0 0
      %7570 = vmatmul.mubr.bf16.gmra.mxu0 %v7300
      %v7571 = vpop.f32.mrf.mxu0
      %v7572 = vadd.f32 %v7144, %v7571
      %v7573 = vpop.f32.mrf.mxu0
      %v7574 = vpop.f32.mrf.mxu0
      %v7575 = vadd.f32 %v7144, %v7574
      %v7576 = vpop.f32.mrf.mxu0
      %7577 = vmatprep.mubr.bf16.mxu0 0
      %7578 = vmatmul.mubr.bf16.gmra.mxu0 %v7309
      %v7579 = vpop.f32.mrf.mxu0
      %v7580 = vadd.f32 %v7144, %v7579
      %v7581 = vpop.f32.mrf.mxu0
      %v7582 = vpop.f32.mrf.mxu0
      %v7583 = vadd.f32 %v7144, %v7582
      %v7584 = vpop.f32.mrf.mxu0
      %7585 = vmatprep.mubr.bf16.mxu0 0
      %7586 = vmatmul.mubr.bf16.gmra.mxu0 %v7318
      %v7587 = vpop.f32.mrf.mxu0
      %v7588 = vadd.f32 %v7144, %v7587
      %v7589 = vpop.f32.mrf.mxu0
      %v7590 = vpop.f32.mrf.mxu0
      %v7591 = vadd.f32 %v7144, %v7590
      %v7592 = vpop.f32.mrf.mxu0
      %7593 = vmatprep.mubr.bf16.mxu0 0
      %7594 = vmatmul.mubr.bf16.gmra.mxu0 %v7327
      %v7595 = vpop.f32.mrf.mxu0
      %v7596 = vadd.f32 %v7144, %v7595
      %v7597 = vpop.f32.mrf.mxu0
      %v7598 = vpop.f32.mrf.mxu0
      %v7599 = vadd.f32 %v7144, %v7598
      %v7600 = vpop.f32.mrf.mxu0
      %7601 = vmatprep.mubr.bf16.mxu0 0
      %7602 = vmatmul.mubr.bf16.gmra.mxu0 %v7336
      %v7603 = vpop.f32.mrf.mxu0
      %v7604 = vadd.f32 %v7144, %v7603
      %v7605 = vpop.f32.mrf.mxu0
      %v7606 = vpop.f32.mrf.mxu0
      %v7607 = vadd.f32 %v7144, %v7606
      %v7608 = vpop.f32.mrf.mxu0
      %7609 = vmatprep.mubr.bf16.mxu0 0
      %7610 = vmatmul.mubr.bf16.gmra.mxu0 %v7345
      %v7611 = vpop.f32.mrf.mxu0
      %v7612 = vadd.f32 %v7144, %v7611
      %v7613 = vpop.f32.mrf.mxu0
      %v7614 = vpop.f32.mrf.mxu0
      %v7615 = vadd.f32 %v7144, %v7614
      %v7616 = vpop.f32.mrf.mxu0
      %7617 = vmatprep.mubr.bf16.mxu0 0
      %7618 = vmatmul.mubr.bf16.gmra.mxu0 %v7354
      %v7619 = vpop.f32.mrf.mxu0
      %v7620 = vadd.f32 %v7144, %v7619
      %v7621 = vpop.f32.mrf.mxu0
      %v7622 = vpop.f32.mrf.mxu0
      %v7623 = vadd.f32 %v7144, %v7622
      %v7624 = vpop.f32.mrf.mxu0
      %7625 = vmatprep.mubr.bf16.mxu0 0
      %7626 = vmatmul.mubr.bf16.gmra.mxu0 %v7363
      %v7627 = vpop.f32.mrf.mxu0
      %v7628 = vadd.f32 %v7144, %v7627
      %v7629 = vpop.f32.mrf.mxu0
      %v7630 = vpop.f32.mrf.mxu0
      %v7631 = vadd.f32 %v7144, %v7630
      %v7632 = vpop.f32.mrf.mxu0
      %7633 = vmatprep.mubr.bf16.mxu0 0
      %7634 = vmatmul.mubr.bf16.gmra.mxu0 %v7372
      %v7635 = vpop.f32.mrf.mxu0
      %v7636 = vadd.f32 %v7144, %v7635
      %v7637 = vpop.f32.mrf.mxu0
      %v7638 = vpop.f32.mrf.mxu0
      %v7639 = vadd.f32 %v7144, %v7638
      %v7640 = vpop.f32.mrf.mxu0
      %7641 = vmatprep.mubr.bf16.mxu0 0
      %7642 = vmatmul.mubr.bf16.gmra.mxu0 %v7381
      %v7643 = vpop.f32.mrf.mxu0
      %v7644 = vadd.f32 %v7144, %v7643
      %v7645 = vpop.f32.mrf.mxu0
      %v7646 = vpop.f32.mrf.mxu0
      %v7647 = vadd.f32 %v7144, %v7646
      %v7648 = vpop.f32.mrf.mxu0
      %7649 = vmatprep.mubr.bf16.mxu0 0
      %7650 = vmatmul.mubr.bf16.gmra.mxu0 %v7390
      %v7651 = vpop.f32.mrf.mxu0
      %v7652 = vadd.f32 %v7144, %v7651
      %v7653 = vpop.f32.mrf.mxu0
      %v7654 = vpop.f32.mrf.mxu0
      %v7655 = vadd.f32 %v7144, %v7654
      %v7656 = vpop.f32.mrf.mxu0
      %7657 = vmatprep.mubr.bf16.mxu0 0
      %7658 = vmatmul.mubr.bf16.gmra.mxu0 %v7399
      %v7659 = vpop.f32.mrf.mxu0
      %v7660 = vadd.f32 %v7144, %v7659
      %v7661 = vpop.f32.mrf.mxu0
      %v7662 = vpop.f32.mrf.mxu0
      %v7663 = vadd.f32 %v7144, %v7662
      %v7664 = vpop.f32.mrf.mxu0
      %7665 = vmatprep.mubr.bf16.mxu0 0
      %7666 = vmatmul.mubr.bf16.gmra.mxu0 %v7408
      %v7667 = vpop.f32.mrf.mxu0
      %v7668 = vadd.f32 %v7144, %v7667
      %v7669 = vpop.f32.mrf.mxu0
      %v7670 = vpop.f32.mrf.mxu0
      %v7671 = vadd.f32 %v7144, %v7670
      %v7672 = vpop.f32.mrf.mxu0
      %7673 = vmatprep.mubr.bf16.mxu0 0
      %7674 = vmatmul.mubr.bf16.gmra.mxu0 %v7417
      %v7675 = vpop.f32.mrf.mxu0
      %v7676 = vadd.f32 %v7144, %v7675
      %v7677 = vpop.f32.mrf.mxu0
      %v7678 = vpop.f32.mrf.mxu0
      %v7679 = vadd.f32 %v7144, %v7678
      %v7680 = vpop.f32.mrf.mxu0
      %7681 = vmatprep.mubr.bf16.mxu0 0
      %7682 = vmatmul.mubr.bf16.gmra.mxu0 %v7426
      %v7683 = vpop.f32.mrf.mxu0
      %v7684 = vadd.f32 %v7144, %v7683
      %v7685 = vpop.f32.mrf.mxu0
      %v7686 = vpop.f32.mrf.mxu0
      %v7687 = vadd.f32 %v7144, %v7686
      %v7688 = vpop.f32.mrf.mxu0
      %7689 = vmatprep.mubr.bf16.mxu0 0
      %7690 = vmatmul.mubr.bf16.gmra.mxu0 %v7435
      %v7691 = vpop.f32.mrf.mxu0
      %v7692 = vadd.f32 %v7144, %v7691
      %v7693 = vpop.f32.mrf.mxu0
      %v7694 = vpop.f32.mrf.mxu0
      %v7695 = vadd.f32 %v7144, %v7694
      %v7696 = vpop.f32.mrf.mxu0
      %7697 = vmatprep.mubr.bf16.mxu0 0
      %7698 = vmatmul.mubr.bf16.gmra.mxu0 %v7434
      %v7699 = vpop.f32.mrf.mxu0
      %v7700 = vadd.f32 %v7144, %v7699
      %v7701 = vpop.f32.mrf.mxu0
      %v7702 = vpop.f32.mrf.mxu0
      %v7703 = vpop.f32.mrf.mxu0
      %7704 = vdwg.mxu0
      %v7705 = vmul.f32 %v7540, %v3806
      %v7706 = vmul.f32 %v7543, %v3811
      %v7707 = vmul.f32 %v7548, %v3816
      %v7708 = vmul.f32 %v7551, %v3821
      %v7709 = vmul.f32 %v7556, %v3826
      %v7710 = vmul.f32 %v7559, %v3831
      %v7711 = vmul.f32 %v7564, %v3836
      %v7712 = vmul.f32 %v7567, %v3841
      %v7713 = vmul.f32 %v7572, %v3846
      %v7714 = vmul.f32 %v7575, %v3851
      %v7715 = vmul.f32 %v7580, %v3856
      %v7716 = vmul.f32 %v7583, %v3861
      %v7717 = vmul.f32 %v7588, %v3866
      %v7718 = vmul.f32 %v7591, %v3871
      %v7719 = vmul.f32 %v7596, %v3876
      %v7720 = vmul.f32 %v7599, %v3881
      %v7721 = vmul.f32 %v7604, %v3886
      %v7722 = vmul.f32 %v7607, %v3891
      %v7723 = vmul.f32 %v7612, %v3896
      %v7724 = vmul.f32 %v7615, %v3901
      %v7725 = vmul.f32 %v7620, %v3906
      %v7726 = vmul.f32 %v7623, %v3911
      %v7727 = vmul.f32 %v7628, %v3916
      %v7728 = vmul.f32 %v7631, %v3921
      %v7729 = vmul.f32 %v7636, %v3926
      %v7730 = vmul.f32 %v7639, %v3931
      %v7731 = vmul.f32 %v7644, %v3936
      %v7732 = vmul.f32 %v7647, %v3941
      %v7733 = vmul.f32 %v7652, %v3946
      %v7734 = vmul.f32 %v7655, %v3951
      %v7735 = vmul.f32 %v7660, %v3956
      %v7736 = vmul.f32 %v7663, %v3961
      %v7737 = vmul.f32 %v7668, %v3966
      %v7738 = vmul.f32 %v7671, %v3971
      %v7739 = vmul.f32 %v7676, %v3976
      %v7740 = vmul.f32 %v7679, %v3981
      %v7741 = vmul.f32 %v7684, %v3986
      %v7742 = vmul.f32 %v7687, %v3991
      %v7743 = vmul.f32 %v7692, %v3996
      %v7744 = vmul.f32 %v7695, %v4001
      %v7745 = vmul.f32 %v7700, %v4006
      %v7746 = vpack.c.bf16 %v7706, %v7705
      %v7747 = vpack.c.bf16 %v7708, %v7707
      %v7748 = vpack.c.bf16 %v7710, %v7709
      %v7749 = vpack.c.bf16 %v7712, %v7711
      %v7750 = vpack.c.bf16 %v7714, %v7713
      %v7751 = vpack.c.bf16 %v7716, %v7715
      %v7752 = vpack.c.bf16 %v7718, %v7717
      %v7753 = vpack.c.bf16 %v7720, %v7719
      %v7754 = vpack.c.bf16 %v7722, %v7721
      %v7755 = vpack.c.bf16 %v7724, %v7723
      %v7756 = vpack.c.bf16 %v7726, %v7725
      %v7757 = vpack.c.bf16 %v7728, %v7727
      %v7758 = vpack.c.bf16 %v7730, %v7729
      %v7759 = vpack.c.bf16 %v7732, %v7731
      %v7760 = vpack.c.bf16 %v7734, %v7733
      %v7761 = vpack.c.bf16 %v7736, %v7735
      %v7762 = vpack.c.bf16 %v7738, %v7737
      %v7763 = vpack.c.bf16 %v7740, %v7739
      %v7764 = vpack.c.bf16 %v7742, %v7741
      %v7765 = vpack.c.bf16 %v7744, %v7743
      %v7766 = vpack.c.bf16 %v7745, %v7745
      %v7788 = vunpack.c.l.b16 %v7746
      %v7789 = vunpack.c.h.b16 %v7746
      %v7790 = vunpack.c.l.b16 %v7747
      %v7791 = vunpack.c.h.b16 %v7747
      %v7792 = vunpack.c.l.b16 %v7748
      %v7793 = vunpack.c.h.b16 %v7748
      %v7794 = vunpack.c.l.b16 %v7749
      %v7795 = vunpack.c.h.b16 %v7749
      %v7796 = vunpack.c.l.b16 %v7750
      %v7797 = vunpack.c.h.b16 %v7750
      %v7798 = vunpack.c.l.b16 %v7751
      %v7799 = vunpack.c.h.b16 %v7751
      %v7800 = vunpack.c.l.b16 %v7752
      %v7801 = vunpack.c.h.b16 %v7752
      %v7802 = vunpack.c.l.b16 %v7753
      %v7803 = vunpack.c.h.b16 %v7753
      %v7804 = vunpack.c.l.b16 %v7754
      %v7805 = vunpack.c.h.b16 %v7754
      %v7806 = vunpack.c.l.b16 %v7755
      %v7807 = vunpack.c.h.b16 %v7755
      %v7808 = vunpack.c.l.b16 %v7756
      %v7809 = vunpack.c.h.b16 %v7756
      %v7810 = vunpack.c.l.b16 %v7757
      %v7811 = vunpack.c.h.b16 %v7757
      %v7812 = vunpack.c.l.b16 %v7758
      %v7813 = vunpack.c.h.b16 %v7758
      %v7814 = vunpack.c.l.b16 %v7759
      %v7815 = vunpack.c.h.b16 %v7759
      %v7816 = vunpack.c.l.b16 %v7760
      %v7817 = vunpack.c.h.b16 %v7760
      %v7818 = vunpack.c.l.b16 %v7761
      %v7819 = vunpack.c.h.b16 %v7761
      %v7820 = vunpack.c.l.b16 %v7762
      %v7821 = vunpack.c.h.b16 %v7762
      %v7822 = vunpack.c.l.b16 %v7763
      %v7823 = vunpack.c.h.b16 %v7763
      %v7824 = vunpack.c.l.b16 %v7764
      %v7825 = vunpack.c.h.b16 %v7764
      %v7826 = vunpack.c.l.b16 %v7765
      %v7827 = vunpack.c.h.b16 %v7765
      %v7828 = vunpack.c.l.b16 %v7766
      %v7829 = vpack.c.b16 %v7788, %v7788
      %v7830 = vpack.c.b16 %v7789, %v7789
      %v7831 = vpack.c.b16 %v7790, %v7790
      %v7832 = vpack.c.b16 %v7791, %v7791
      %v7833 = vpack.c.b16 %v7792, %v7792
      %v7834 = vpack.c.b16 %v7793, %v7793
      %v7835 = vpack.c.b16 %v7794, %v7794
      %v7836 = vpack.c.b16 %v7795, %v7795
      %v7837 = vpack.c.b16 %v7796, %v7796
      %v7838 = vpack.c.b16 %v7797, %v7797
      %v7839 = vpack.c.b16 %v7798, %v7798
      %v7840 = vpack.c.b16 %v7799, %v7799
      %v7841 = vpack.c.b16 %v7800, %v7800
      %v7842 = vpack.c.b16 %v7801, %v7801
      %v7843 = vpack.c.b16 %v7802, %v7802
      %v7844 = vpack.c.b16 %v7803, %v7803
      %v7845 = vpack.c.b16 %v7804, %v7804
      %v7846 = vpack.c.b16 %v7805, %v7805
      %v7847 = vpack.c.b16 %v7806, %v7806
      %v7848 = vpack.c.b16 %v7807, %v7807
      %v7849 = vpack.c.b16 %v7808, %v7808
      %v7850 = vpack.c.b16 %v7809, %v7809
      %v7851 = vpack.c.b16 %v7810, %v7810
      %v7852 = vpack.c.b16 %v7811, %v7811
      %v7853 = vpack.c.b16 %v7812, %v7812
      %v7854 = vpack.c.b16 %v7813, %v7813
      %v7855 = vpack.c.b16 %v7814, %v7814
      %v7856 = vpack.c.b16 %v7815, %v7815
      %v7857 = vpack.c.b16 %v7816, %v7816
      %v7858 = vpack.c.b16 %v7817, %v7817
      %v7859 = vpack.c.b16 %v7818, %v7818
      %v7860 = vpack.c.b16 %v7819, %v7819
      %v7861 = vpack.c.b16 %v7820, %v7820
      %v7862 = vpack.c.b16 %v7821, %v7821
      %v7863 = vpack.c.b16 %v7822, %v7822
      %v7864 = vpack.c.b16 %v7823, %v7823
      %v7865 = vpack.c.b16 %v7824, %v7824
      %v7866 = vpack.c.b16 %v7825, %v7825
      %v7867 = vpack.c.b16 %v7826, %v7826
      %v7868 = vpack.c.b16 %v7827, %v7827
      %v7869 = vpack.c.b16 %v7828, %v7828
      %7911 = vst [vmem:[#allocation2 + $0xc] sm:$0xf] %v7829
      %7912 = vst [vmem:[#allocation2 + $0x10] sm:$0xf] %v7830
      %7913 = vst [vmem:[#allocation2 + $0x14] sm:$0xf] %v7831
      %7914 = vst [vmem:[#allocation2 + $0x18] sm:$0xf] %v7832
      %7915 = vst [vmem:[#allocation2 + $0x1c] sm:$0xf] %v7833
      %7916 = vst [vmem:[#allocation2 + $0x20] sm:$0xf] %v7834
      %7917 = vst [vmem:[#allocation2 + $0x24] sm:$0xf] %v7835
      %7918 = vst [vmem:[#allocation2 + $0x28] sm:$0xf] %v7836
      %7919 = vst [vmem:[#allocation2 + $0x2c] sm:$0xf] %v7837
      %7920 = vst [vmem:[#allocation2 + $0x30] sm:$0xf] %v7838
      %7921 = vst [vmem:[#allocation2 + $0x34] sm:$0xf] %v7839
      %7922 = vst [vmem:[#allocation2 + $0x38] sm:$0xf] %v7840
      %7923 = vst [vmem:[#allocation2 + $0x3c] sm:$0xf] %v7841
      %7924 = vst [vmem:[#allocation2 + $0x40] sm:$0xf] %v7842
      %7925 = vst [vmem:[#allocation2 + $0x44] sm:$0xf] %v7843
      %7926 = vst [vmem:[#allocation2 + $0x48] sm:$0xf] %v7844
      %7927 = vst [vmem:[#allocation2 + $0x4c] sm:$0xf] %v7845
      %7928 = vst [vmem:[#allocation2 + $0x50] sm:$0xf] %v7846
      %7929 = vst [vmem:[#allocation2 + $0x54] sm:$0xf] %v7847
      %7930 = vst [vmem:[#allocation2 + $0x58] sm:$0xf] %v7848
      %7931 = vst [vmem:[#allocation2 + $0x5c] sm:$0xf] %v7849
      %7932 = vst [vmem:[#allocation2 + $0x60] sm:$0xf] %v7850
      %7933 = vst [vmem:[#allocation2 + $0x64] sm:$0xf] %v7851
      %7934 = vst [vmem:[#allocation2 + $0x68] sm:$0xf] %v7852
      %7935 = vst [vmem:[#allocation2 + $0x6c] sm:$0xf] %v7853
      %7936 = vst [vmem:[#allocation2 + $0x70] sm:$0xf] %v7854
      %7937 = vst [vmem:[#allocation2 + $0x74] sm:$0xf] %v7855
      %7938 = vst [vmem:[#allocation2 + $0x78] sm:$0xf] %v7856
      %7939 = vst [vmem:[#allocation2 + $0x7c] sm:$0xf] %v7857
      %7940 = vst [vmem:[#allocation2 + $0x80] sm:$0xf] %v7858
      %7941 = vst [vmem:[#allocation2 + $0x84] sm:$0xf] %v7859
      %7942 = vst [vmem:[#allocation2 + $0x88] sm:$0xf] %v7860
      %7943 = vst [vmem:[#allocation2 + $0x8c] sm:$0xf] %v7861
      %7944 = vst [vmem:[#allocation2 + $0x90] sm:$0xf] %v7862
      %7945 = vst [vmem:[#allocation2 + $0x94] sm:$0xf] %v7863
      %7946 = vst [vmem:[#allocation2 + $0x98] sm:$0xf] %v7864
      %7947 = vst [vmem:[#allocation2 + $0x9c] sm:$0xf] %v7865
      %7948 = vst [vmem:[#allocation2 + $0xa0] sm:$0xf] %v7866
      %7949 = vst [vmem:[#allocation2 + $0xa4] sm:$0xf] %v7867
      %7950 = vst [vmem:[#allocation2 + $0xa8] sm:$0xf] %v7868
      %7951 = vst [vmem:[#allocation2 + $0xac] sm:$0x3] %v7869
      %v7952 = vld [vmem:[#allocation2] sm:$0xc]
      %v7953 = vld [vmem:[#allocation2 + $0x4] sm:$0xf]
      %v7954 = vld [vmem:[#allocation2 + $0x8] sm:$0xf]
      %v7955 = vld [vmem:[#allocation2 + $0xc] sm:$0xf]
      %v7956 = vld [vmem:[#allocation2 + $0x10] sm:$0xf]
      %v7957 = vld [vmem:[#allocation2 + $0x14] sm:$0xf]
      %v7958 = vld [vmem:[#allocation2 + $0x18] sm:$0xf]
      %v7959 = vld [vmem:[#allocation2 + $0x1c] sm:$0xf]
      %v7960 = vld [vmem:[#allocation2 + $0x20] sm:$0xf]
      %v7961 = vld [vmem:[#allocation2 + $0x24] sm:$0xf]
      %v7962 = vld [vmem:[#allocation2 + $0x28] sm:$0xf]
      %v7963 = vld [vmem:[#allocation2 + $0x2c] sm:$0xf]
      %v7964 = vld [vmem:[#allocation2 + $0x30] sm:$0xf]
      %v7965 = vld [vmem:[#allocation2 + $0x34] sm:$0xf]
      %v7966 = vld [vmem:[#allocation2 + $0x38] sm:$0xf]
      %v7967 = vld [vmem:[#allocation2 + $0x3c] sm:$0xf]
      %v7968 = vld [vmem:[#allocation2 + $0x40] sm:$0xf]
      %v7969 = vld [vmem:[#allocation2 + $0x44] sm:$0xf]
      %v7970 = vld [vmem:[#allocation2 + $0x48] sm:$0xf]
      %v7971 = vld [vmem:[#allocation2 + $0x4c] sm:$0xf]
      %v7972 = vld [vmem:[#allocation2 + $0x50] sm:$0xf]
      %v7973 = vld [vmem:[#allocation2 + $0x54] sm:$0xf]
      %v7974 = vld [vmem:[#allocation2 + $0x58] sm:$0xf]
      %v7975 = vld [vmem:[#allocation2 + $0x5c] sm:$0xf]
      %v7976 = vld [vmem:[#allocation2 + $0x60] sm:$0xf]
      %v7977 = vld [vmem:[#allocation2 + $0x64] sm:$0xf]
      %v7978 = vld [vmem:[#allocation2 + $0x68] sm:$0xf]
      %v7979 = vld [vmem:[#allocation2 + $0x6c] sm:$0xf]
      %v7980 = vld [vmem:[#allocation2 + $0x70] sm:$0xf]
      %v7981 = vld [vmem:[#allocation2 + $0x74] sm:$0xf]
      %v7982 = vld [vmem:[#allocation2 + $0x78] sm:$0xf]
      %v7983 = vld [vmem:[#allocation2 + $0x7c] sm:$0xf]
      %v7984 = vld [vmem:[#allocation2 + $0x80] sm:$0xf]
      %v7985 = vld [vmem:[#allocation2 + $0x84] sm:$0xf]
      %v7986 = vld [vmem:[#allocation2 + $0x88] sm:$0xf]
      %v7987 = vld [vmem:[#allocation2 + $0x8c] sm:$0xf]
      %v7988 = vld [vmem:[#allocation2 + $0x90] sm:$0xf]
      %v7989 = vld [vmem:[#allocation2 + $0x94] sm:$0xf]
      %v7990 = vld [vmem:[#allocation2 + $0x98] sm:$0xf]
      %v7991 = vld [vmem:[#allocation2 + $0x9c] sm:$0xf]
      %v7992 = vld [vmem:[#allocation2 + $0xa0] sm:$0xf]
      %v7993 = vld [vmem:[#allocation2 + $0xa4] sm:$0x1]
      %v7994 = vld [vmem:[#allocation2] sm:$0x8]
      %v7996 = vshrl.u32 %v7952, 16
      %v7998 = vrot.slane %v7996, 7
      %v7999 = vshll.u32 %v7952, 16
      %v8001 = vor.u32 %v7998, %v7999
      %v8002 = vrot.slane %v7998, 4
      %v8004 = vshrl.u32 %v7953, 16
      %v8006 = vrot.slane %v8004, 7
      %v8007 = vshll.u32 %v7953, 16
      %v8009 = vor.u32 %v8006, %v8007
      %v8010 = vsel %vm382, %v8002, %v8009
      %v8011 = vrot.slane %v8006, 4
      %v8013 = vshrl.u32 %v7954, 16
      %v8015 = vrot.slane %v8013, 7
      %v8016 = vshll.u32 %v7954, 16
      %v8018 = vor.u32 %v8015, %v8016
      %v8019 = vsel %vm382, %v8011, %v8018
      %v8020 = vrot.slane %v8015, 4
      %v8022 = vshrl.u32 %v7955, 16
      %v8024 = vrot.slane %v8022, 7
      %v8025 = vshll.u32 %v7955, 16
      %v8027 = vor.u32 %v8024, %v8025
      %v8028 = vsel %vm382, %v8020, %v8027
      %v8029 = vrot.slane %v8024, 4
      %v8031 = vshrl.u32 %v7956, 16
      %v8033 = vrot.slane %v8031, 7
      %v8034 = vshll.u32 %v7956, 16
      %v8036 = vor.u32 %v8033, %v8034
      %v8037 = vsel %vm382, %v8029, %v8036
      %v8038 = vrot.slane %v8033, 4
      %v8040 = vshrl.u32 %v7957, 16
      %v8042 = vrot.slane %v8040, 7
      %v8043 = vshll.u32 %v7957, 16
      %v8045 = vor.u32 %v8042, %v8043
      %v8046 = vsel %vm382, %v8038, %v8045
      %v8047 = vrot.slane %v8042, 4
      %v8049 = vshrl.u32 %v7958, 16
      %v8051 = vrot.slane %v8049, 7
      %v8052 = vshll.u32 %v7958, 16
      %v8054 = vor.u32 %v8051, %v8052
      %v8055 = vsel %vm382, %v8047, %v8054
      %v8056 = vrot.slane %v8051, 4
      %v8058 = vshrl.u32 %v7959, 16
      %v8060 = vrot.slane %v8058, 7
      %v8061 = vshll.u32 %v7959, 16
      %v8063 = vor.u32 %v8060, %v8061
      %v8064 = vsel %vm382, %v8056, %v8063
      %v8065 = vrot.slane %v8060, 4
      %v8067 = vshrl.u32 %v7960, 16
      %v8069 = vrot.slane %v8067, 7
      %v8070 = vshll.u32 %v7960, 16
      %v8072 = vor.u32 %v8069, %v8070
      %v8073 = vsel %vm382, %v8065, %v8072
      %v8074 = vrot.slane %v8069, 4
      %v8076 = vshrl.u32 %v7961, 16
      %v8078 = vrot.slane %v8076, 7
      %v8079 = vshll.u32 %v7961, 16
      %v8081 = vor.u32 %v8078, %v8079
      %v8082 = vsel %vm382, %v8074, %v8081
      %v8083 = vrot.slane %v8078, 4
      %v8085 = vshrl.u32 %v7962, 16
      %v8087 = vrot.slane %v8085, 7
      %v8088 = vshll.u32 %v7962, 16
      %v8090 = vor.u32 %v8087, %v8088
      %v8091 = vsel %vm382, %v8083, %v8090
      %v8092 = vrot.slane %v8087, 4
      %v8094 = vshrl.u32 %v7963, 16
      %v8096 = vrot.slane %v8094, 7
      %v8097 = vshll.u32 %v7963, 16
      %v8099 = vor.u32 %v8096, %v8097
      %v8100 = vsel %vm382, %v8092, %v8099
      %v8101 = vrot.slane %v8096, 4
      %v8103 = vshrl.u32 %v7964, 16
      %v8105 = vrot.slane %v8103, 7
      %v8106 = vshll.u32 %v7964, 16
      %v8108 = vor.u32 %v8105, %v8106
      %v8109 = vsel %vm382, %v8101, %v8108
      %v8110 = vrot.slane %v8105, 4
      %v8112 = vshrl.u32 %v7965, 16
      %v8114 = vrot.slane %v8112, 7
      %v8115 = vshll.u32 %v7965, 16
      %v8117 = vor.u32 %v8114, %v8115
      %v8118 = vsel %vm382, %v8110, %v8117
      %v8119 = vrot.slane %v8114, 4
      %v8121 = vshrl.u32 %v7966, 16
      %v8123 = vrot.slane %v8121, 7
      %v8124 = vshll.u32 %v7966, 16
      %v8126 = vor.u32 %v8123, %v8124
      %v8127 = vsel %vm382, %v8119, %v8126
      %v8128 = vrot.slane %v8123, 4
      %v8130 = vshrl.u32 %v7967, 16
      %v8132 = vrot.slane %v8130, 7
      %v8133 = vshll.u32 %v7967, 16
      %v8135 = vor.u32 %v8132, %v8133
      %v8136 = vsel %vm382, %v8128, %v8135
      %v8137 = vrot.slane %v8132, 4
      %v8139 = vshrl.u32 %v7968, 16
      %v8141 = vrot.slane %v8139, 7
      %v8142 = vshll.u32 %v7968, 16
      %v8144 = vor.u32 %v8141, %v8142
      %v8145 = vsel %vm382, %v8137, %v8144
      %v8146 = vrot.slane %v8141, 4
      %v8148 = vshrl.u32 %v7969, 16
      %v8150 = vrot.slane %v8148, 7
      %v8151 = vshll.u32 %v7969, 16
      %v8153 = vor.u32 %v8150, %v8151
      %v8154 = vsel %vm382, %v8146, %v8153
      %v8155 = vrot.slane %v8150, 4
      %v8157 = vshrl.u32 %v7970, 16
      %v8159 = vrot.slane %v8157, 7
      %v8160 = vshll.u32 %v7970, 16
      %v8162 = vor.u32 %v8159, %v8160
      %v8163 = vsel %vm382, %v8155, %v8162
      %v8164 = vrot.slane %v8159, 4
      %v8166 = vshrl.u32 %v7971, 16
      %v8168 = vrot.slane %v8166, 7
      %v8169 = vshll.u32 %v7971, 16
      %v8171 = vor.u32 %v8168, %v8169
      %v8172 = vsel %vm382, %v8164, %v8171
      %v8173 = vrot.slane %v8168, 4
      %v8175 = vshrl.u32 %v7972, 16
      %v8177 = vrot.slane %v8175, 7
      %v8178 = vshll.u32 %v7972, 16
      %v8180 = vor.u32 %v8177, %v8178
      %v8181 = vsel %vm382, %v8173, %v8180
      %v8182 = vrot.slane %v8177, 4
      %v8184 = vshrl.u32 %v7973, 16
      %v8186 = vrot.slane %v8184, 7
      %v8187 = vshll.u32 %v7973, 16
      %v8189 = vor.u32 %v8186, %v8187
      %v8190 = vsel %vm382, %v8182, %v8189
      %v8191 = vrot.slane %v8186, 4
      %v8193 = vshrl.u32 %v7974, 16
      %v8195 = vrot.slane %v8193, 7
      %v8196 = vshll.u32 %v7974, 16
      %v8198 = vor.u32 %v8195, %v8196
      %v8199 = vsel %vm382, %v8191, %v8198
      %v8200 = vrot.slane %v8195, 4
      %v8202 = vshrl.u32 %v7975, 16
      %v8204 = vrot.slane %v8202, 7
      %v8205 = vshll.u32 %v7975, 16
      %v8207 = vor.u32 %v8204, %v8205
      %v8208 = vsel %vm382, %v8200, %v8207
      %v8209 = vrot.slane %v8204, 4
      %v8211 = vshrl.u32 %v7976, 16
      %v8213 = vrot.slane %v8211, 7
      %v8214 = vshll.u32 %v7976, 16
      %v8216 = vor.u32 %v8213, %v8214
      %v8217 = vsel %vm382, %v8209, %v8216
      %v8218 = vrot.slane %v8213, 4
      %v8220 = vshrl.u32 %v7977, 16
      %v8222 = vrot.slane %v8220, 7
      %v8223 = vshll.u32 %v7977, 16
      %v8225 = vor.u32 %v8222, %v8223
      %v8226 = vsel %vm382, %v8218, %v8225
      %v8227 = vrot.slane %v8222, 4
      %v8229 = vshrl.u32 %v7978, 16
      %v8231 = vrot.slane %v8229, 7
      %v8232 = vshll.u32 %v7978, 16
      %v8234 = vor.u32 %v8231, %v8232
      %v8235 = vsel %vm382, %v8227, %v8234
      %v8236 = vrot.slane %v8231, 4
      %v8238 = vshrl.u32 %v7979, 16
      %v8240 = vrot.slane %v8238, 7
      %v8241 = vshll.u32 %v7979, 16
      %v8243 = vor.u32 %v8240, %v8241
      %v8244 = vsel %vm382, %v8236, %v8243
      %v8245 = vrot.slane %v8240, 4
      %v8247 = vshrl.u32 %v7980, 16
      %v8249 = vrot.slane %v8247, 7
      %v8250 = vshll.u32 %v7980, 16
      %v8252 = vor.u32 %v8249, %v8250
      %v8253 = vsel %vm382, %v8245, %v8252
      %v8254 = vrot.slane %v8249, 4
      %v8256 = vshrl.u32 %v7981, 16
      %v8258 = vrot.slane %v8256, 7
      %v8259 = vshll.u32 %v7981, 16
      %v8261 = vor.u32 %v8258, %v8259
      %v8262 = vsel %vm382, %v8254, %v8261
      %v8263 = vrot.slane %v8258, 4
      %v8265 = vshrl.u32 %v7982, 16
      %v8267 = vrot.slane %v8265, 7
      %v8268 = vshll.u32 %v7982, 16
      %v8270 = vor.u32 %v8267, %v8268
      %v8271 = vsel %vm382, %v8263, %v8270
      %v8272 = vrot.slane %v8267, 4
      %v8274 = vshrl.u32 %v7983, 16
      %v8276 = vrot.slane %v8274, 7
      %v8277 = vshll.u32 %v7983, 16
      %v8279 = vor.u32 %v8276, %v8277
      %v8280 = vsel %vm382, %v8272, %v8279
      %v8281 = vrot.slane %v8276, 4
      %v8283 = vshrl.u32 %v7984, 16
      %v8285 = vrot.slane %v8283, 7
      %v8286 = vshll.u32 %v7984, 16
      %v8288 = vor.u32 %v8285, %v8286
      %v8289 = vsel %vm382, %v8281, %v8288
      %v8290 = vrot.slane %v8285, 4
      %v8292 = vshrl.u32 %v7985, 16
      %v8294 = vrot.slane %v8292, 7
      %v8295 = vshll.u32 %v7985, 16
      %v8297 = vor.u32 %v8294, %v8295
      %v8298 = vsel %vm382, %v8290, %v8297
      %v8299 = vrot.slane %v8294, 4
      %v8301 = vshrl.u32 %v7986, 16
      %v8303 = vrot.slane %v8301, 7
      %v8304 = vshll.u32 %v7986, 16
      %v8306 = vor.u32 %v8303, %v8304
      %v8307 = vsel %vm382, %v8299, %v8306
      %v8308 = vrot.slane %v8303, 4
      %v8310 = vshrl.u32 %v7987, 16
      %v8312 = vrot.slane %v8310, 7
      %v8313 = vshll.u32 %v7987, 16
      %v8315 = vor.u32 %v8312, %v8313
      %v8316 = vsel %vm382, %v8308, %v8315
      %v8317 = vrot.slane %v8312, 4
      %v8319 = vshrl.u32 %v7988, 16
      %v8321 = vrot.slane %v8319, 7
      %v8322 = vshll.u32 %v7988, 16
      %v8324 = vor.u32 %v8321, %v8322
      %v8325 = vsel %vm382, %v8317, %v8324
      %v8326 = vrot.slane %v8321, 4
      %v8328 = vshrl.u32 %v7989, 16
      %v8330 = vrot.slane %v8328, 7
      %v8331 = vshll.u32 %v7989, 16
      %v8333 = vor.u32 %v8330, %v8331
      %v8334 = vsel %vm382, %v8326, %v8333
      %v8335 = vrot.slane %v8330, 4
      %v8337 = vshrl.u32 %v7990, 16
      %v8339 = vrot.slane %v8337, 7
      %v8340 = vshll.u32 %v7990, 16
      %v8342 = vor.u32 %v8339, %v8340
      %v8343 = vsel %vm382, %v8335, %v8342
      %v8344 = vrot.slane %v8339, 4
      %v8346 = vshrl.u32 %v7991, 16
      %v8348 = vrot.slane %v8346, 7
      %v8349 = vshll.u32 %v7991, 16
      %v8351 = vor.u32 %v8348, %v8349
      %v8352 = vsel %vm382, %v8344, %v8351
      %v8353 = vrot.slane %v8348, 4
      %v8355 = vshrl.u32 %v7992, 16
      %v8357 = vrot.slane %v8355, 7
      %v8358 = vshll.u32 %v7992, 16
      %v8360 = vor.u32 %v8357, %v8358
      %v8361 = vsel %vm382, %v8353, %v8360
      %v8362 = vrot.slane %v8357, 4
      %v8364 = vshll.u32 %v7993, 16
      %v8366 = vsel %vm382, %v8362, %v8364
      %v8409 = vsel %vm843, %v7994, %v8001
      %v8410 = vsel %vm843, %v7953, %v8010
      %v8411 = vsel %vm843, %v7954, %v8019
      %v8412 = vsel %vm843, %v7955, %v8028
      %v8413 = vsel %vm843, %v7956, %v8037
      %v8414 = vsel %vm843, %v7957, %v8046
      %v8415 = vsel %vm843, %v7958, %v8055
      %v8416 = vsel %vm843, %v7959, %v8064
      %v8417 = vsel %vm843, %v7960, %v8073
      %v8418 = vsel %vm843, %v7961, %v8082
      %v8419 = vsel %vm843, %v7962, %v8091
      %v8420 = vsel %vm843, %v7963, %v8100
      %v8421 = vsel %vm843, %v7964, %v8109
      %v8422 = vsel %vm843, %v7965, %v8118
      %v8423 = vsel %vm843, %v7966, %v8127
      %v8424 = vsel %vm843, %v7967, %v8136
      %v8425 = vsel %vm843, %v7968, %v8145
      %v8426 = vsel %vm843, %v7969, %v8154
      %v8427 = vsel %vm843, %v7970, %v8163
      %v8428 = vsel %vm843, %v7971, %v8172
      %v8429 = vsel %vm843, %v7972, %v8181
      %v8430 = vsel %vm843, %v7973, %v8190
      %v8431 = vsel %vm843, %v7974, %v8199
      %v8432 = vsel %vm843, %v7975, %v8208
      %v8433 = vsel %vm843, %v7976, %v8217
      %v8434 = vsel %vm843, %v7977, %v8226
      %v8435 = vsel %vm843, %v7978, %v8235
      %v8436 = vsel %vm843, %v7979, %v8244
      %v8437 = vsel %vm843, %v7980, %v8253
      %v8438 = vsel %vm843, %v7981, %v8262
      %v8439 = vsel %vm843, %v7982, %v8271
      %v8440 = vsel %vm843, %v7983, %v8280
      %v8441 = vsel %vm843, %v7984, %v8289
      %v8442 = vsel %vm843, %v7985, %v8298
      %v8443 = vsel %vm843, %v7986, %v8307
      %v8444 = vsel %vm843, %v7987, %v8316
      %v8445 = vsel %vm843, %v7988, %v8325
      %v8446 = vsel %vm843, %v7989, %v8334
      %v8447 = vsel %vm843, %v7990, %v8343
      %v8448 = vsel %vm843, %v7991, %v8352
      %v8449 = vsel %vm843, %v7992, %v8361
      %v8450 = vsel %vm843, %v7993, %v8366
      %v8451 = vld [vmem:[#allocation2 + $0xa4] sm:$0x3]
      %v8453 = vshll.u32 %v8409, 16
      %v8455 = vshrl.u32 %v8409, 16
      %v8457 = vrot.slane %v8455, 7
      %v8458 = vrot.slane %v8457, 4
      %v8460 = vshrl.u32 %v8410, 16
      %v8462 = vrot.slane %v8460, 7
      %v8463 = vshll.u32 %v8410, 16
      %v8465 = vor.u32 %v8462, %v8463
      %v8466 = vsel %vm382, %v8458, %v8465
      %v8467 = vrot.slane %v8462, 4
      %v8469 = vshrl.u32 %v8411, 16
      %v8471 = vrot.slane %v8469, 7
      %v8472 = vshll.u32 %v8411, 16
      %v8474 = vor.u32 %v8471, %v8472
      %v8475 = vsel %vm382, %v8467, %v8474
      %v8476 = vrot.slane %v8471, 4
      %v8478 = vshrl.u32 %v8412, 16
      %v8480 = vrot.slane %v8478, 7
      %v8481 = vshll.u32 %v8412, 16
      %v8483 = vor.u32 %v8480, %v8481
      %v8484 = vsel %vm382, %v8476, %v8483
      %v8485 = vrot.slane %v8480, 4
      %v8487 = vshrl.u32 %v8413, 16
      %v8489 = vrot.slane %v8487, 7
      %v8490 = vshll.u32 %v8413, 16
      %v8492 = vor.u32 %v8489, %v8490
      %v8493 = vsel %vm382, %v8485, %v8492
      %v8494 = vrot.slane %v8489, 4
      %v8496 = vshrl.u32 %v8414, 16
      %v8498 = vrot.slane %v8496, 7
      %v8499 = vshll.u32 %v8414, 16
      %v8501 = vor.u32 %v8498, %v8499
      %v8502 = vsel %vm382, %v8494, %v8501
      %v8503 = vrot.slane %v8498, 4
      %v8505 = vshrl.u32 %v8415, 16
      %v8507 = vrot.slane %v8505, 7
      %v8508 = vshll.u32 %v8415, 16
      %v8510 = vor.u32 %v8507, %v8508
      %v8511 = vsel %vm382, %v8503, %v8510
      %v8512 = vrot.slane %v8507, 4
      %v8514 = vshrl.u32 %v8416, 16
      %v8516 = vrot.slane %v8514, 7
      %v8517 = vshll.u32 %v8416, 16
      %v8519 = vor.u32 %v8516, %v8517
      %v8520 = vsel %vm382, %v8512, %v8519
      %v8521 = vrot.slane %v8516, 4
      %v8523 = vshrl.u32 %v8417, 16
      %v8525 = vrot.slane %v8523, 7
      %v8526 = vshll.u32 %v8417, 16
      %v8528 = vor.u32 %v8525, %v8526
      %v8529 = vsel %vm382, %v8521, %v8528
      %v8530 = vrot.slane %v8525, 4
      %v8532 = vshrl.u32 %v8418, 16
      %v8534 = vrot.slane %v8532, 7
      %v8535 = vshll.u32 %v8418, 16
      %v8537 = vor.u32 %v8534, %v8535
      %v8538 = vsel %vm382, %v8530, %v8537
      %v8539 = vrot.slane %v8534, 4
      %v8541 = vshrl.u32 %v8419, 16
      %v8543 = vrot.slane %v8541, 7
      %v8544 = vshll.u32 %v8419, 16
      %v8546 = vor.u32 %v8543, %v8544
      %v8547 = vsel %vm382, %v8539, %v8546
      %v8548 = vrot.slane %v8543, 4
      %v8550 = vshrl.u32 %v8420, 16
      %v8552 = vrot.slane %v8550, 7
      %v8553 = vshll.u32 %v8420, 16
      %v8555 = vor.u32 %v8552, %v8553
      %v8556 = vsel %vm382, %v8548, %v8555
      %v8557 = vrot.slane %v8552, 4
      %v8559 = vshrl.u32 %v8421, 16
      %v8561 = vrot.slane %v8559, 7
      %v8562 = vshll.u32 %v8421, 16
      %v8564 = vor.u32 %v8561, %v8562
      %v8565 = vsel %vm382, %v8557, %v8564
      %v8566 = vrot.slane %v8561, 4
      %v8568 = vshrl.u32 %v8422, 16
      %v8570 = vrot.slane %v8568, 7
      %v8571 = vshll.u32 %v8422, 16
      %v8573 = vor.u32 %v8570, %v8571
      %v8574 = vsel %vm382, %v8566, %v8573
      %v8575 = vrot.slane %v8570, 4
      %v8577 = vshrl.u32 %v8423, 16
      %v8579 = vrot.slane %v8577, 7
      %v8580 = vshll.u32 %v8423, 16
      %v8582 = vor.u32 %v8579, %v8580
      %v8583 = vsel %vm382, %v8575, %v8582
      %v8584 = vrot.slane %v8579, 4
      %v8586 = vshrl.u32 %v8424, 16
      %v8588 = vrot.slane %v8586, 7
      %v8589 = vshll.u32 %v8424, 16
      %v8591 = vor.u32 %v8588, %v8589
      %v8592 = vsel %vm382, %v8584, %v8591
      %v8593 = vrot.slane %v8588, 4
      %v8595 = vshrl.u32 %v8425, 16
      %v8597 = vrot.slane %v8595, 7
      %v8598 = vshll.u32 %v8425, 16
      %v8600 = vor.u32 %v8597, %v8598
      %v8601 = vsel %vm382, %v8593, %v8600
      %v8602 = vrot.slane %v8597, 4
      %v8604 = vshrl.u32 %v8426, 16
      %v8606 = vrot.slane %v8604, 7
      %v8607 = vshll.u32 %v8426, 16
      %v8609 = vor.u32 %v8606, %v8607
      %v8610 = vsel %vm382, %v8602, %v8609
      %v8611 = vrot.slane %v8606, 4
      %v8613 = vshrl.u32 %v8427, 16
      %v8615 = vrot.slane %v8613, 7
      %v8616 = vshll.u32 %v8427, 16
      %v8618 = vor.u32 %v8615, %v8616
      %v8619 = vsel %vm382, %v8611, %v8618
      %v8620 = vrot.slane %v8615, 4
      %v8622 = vshrl.u32 %v8428, 16
      %v8624 = vrot.slane %v8622, 7
      %v8625 = vshll.u32 %v8428, 16
      %v8627 = vor.u32 %v8624, %v8625
      %v8628 = vsel %vm382, %v8620, %v8627
      %v8629 = vrot.slane %v8624, 4
      %v8631 = vshrl.u32 %v8429, 16
      %v8633 = vrot.slane %v8631, 7
      %v8634 = vshll.u32 %v8429, 16
      %v8636 = vor.u32 %v8633, %v8634
      %v8637 = vsel %vm382, %v8629, %v8636
      %v8638 = vrot.slane %v8633, 4
      %v8640 = vshrl.u32 %v8430, 16
      %v8642 = vrot.slane %v8640, 7
      %v8643 = vshll.u32 %v8430, 16
      %v8645 = vor.u32 %v8642, %v8643
      %v8646 = vsel %vm382, %v8638, %v8645
      %v8647 = vrot.slane %v8642, 4
      %v8649 = vshrl.u32 %v8431, 16
      %v8651 = vrot.slane %v8649, 7
      %v8652 = vshll.u32 %v8431, 16
      %v8654 = vor.u32 %v8651, %v8652
      %v8655 = vsel %vm382, %v8647, %v8654
      %v8656 = vrot.slane %v8651, 4
      %v8658 = vshrl.u32 %v8432, 16
      %v8660 = vrot.slane %v8658, 7
      %v8661 = vshll.u32 %v8432, 16
      %v8663 = vor.u32 %v8660, %v8661
      %v8664 = vsel %vm382, %v8656, %v8663
      %v8665 = vrot.slane %v8660, 4
      %v8667 = vshrl.u32 %v8433, 16
      %v8669 = vrot.slane %v8667, 7
      %v8670 = vshll.u32 %v8433, 16
      %v8672 = vor.u32 %v8669, %v8670
      %v8673 = vsel %vm382, %v8665, %v8672
      %v8674 = vrot.slane %v8669, 4
      %v8676 = vshrl.u32 %v8434, 16
      %v8678 = vrot.slane %v8676, 7
      %v8679 = vshll.u32 %v8434, 16
      %v8681 = vor.u32 %v8678, %v8679
      %v8682 = vsel %vm382, %v8674, %v8681
      %v8683 = vrot.slane %v8678, 4
      %v8685 = vshrl.u32 %v8435, 16
      %v8687 = vrot.slane %v8685, 7
      %v8688 = vshll.u32 %v8435, 16
      %v8690 = vor.u32 %v8687, %v8688
      %v8691 = vsel %vm382, %v8683, %v8690
      %v8692 = vrot.slane %v8687, 4
      %v8694 = vshrl.u32 %v8436, 16
      %v8696 = vrot.slane %v8694, 7
      %v8697 = vshll.u32 %v8436, 16
      %v8699 = vor.u32 %v8696, %v8697
      %v8700 = vsel %vm382, %v8692, %v8699
      %v8701 = vrot.slane %v8696, 4
      %v8703 = vshrl.u32 %v8437, 16
      %v8705 = vrot.slane %v8703, 7
      %v8706 = vshll.u32 %v8437, 16
      %v8708 = vor.u32 %v8705, %v8706
      %v8709 = vsel %vm382, %v8701, %v8708
      %v8710 = vrot.slane %v8705, 4
      %v8712 = vshrl.u32 %v8438, 16
      %v8714 = vrot.slane %v8712, 7
      %v8715 = vshll.u32 %v8438, 16
      %v8717 = vor.u32 %v8714, %v8715
      %v8718 = vsel %vm382, %v8710, %v8717
      %v8719 = vrot.slane %v8714, 4
      %v8721 = vshrl.u32 %v8439, 16
      %v8723 = vrot.slane %v8721, 7
      %v8724 = vshll.u32 %v8439, 16
      %v8726 = vor.u32 %v8723, %v8724
      %v8727 = vsel %vm382, %v8719, %v8726
      %v8728 = vrot.slane %v8723, 4
      %v8730 = vshrl.u32 %v8440, 16
      %v8732 = vrot.slane %v8730, 7
      %v8733 = vshll.u32 %v8440, 16
      %v8735 = vor.u32 %v8732, %v8733
      %v8736 = vsel %vm382, %v8728, %v8735
      %v8737 = vrot.slane %v8732, 4
      %v8739 = vshrl.u32 %v8441, 16
      %v8741 = vrot.slane %v8739, 7
      %v8742 = vshll.u32 %v8441, 16
      %v8744 = vor.u32 %v8741, %v8742
      %v8745 = vsel %vm382, %v8737, %v8744
      %v8746 = vrot.slane %v8741, 4
      %v8748 = vshrl.u32 %v8442, 16
      %v8750 = vrot.slane %v8748, 7
      %v8751 = vshll.u32 %v8442, 16
      %v8753 = vor.u32 %v8750, %v8751
      %v8754 = vsel %vm382, %v8746, %v8753
      %v8755 = vrot.slane %v8750, 4
      %v8757 = vshrl.u32 %v8443, 16
      %v8759 = vrot.slane %v8757, 7
      %v8760 = vshll.u32 %v8443, 16
      %v8762 = vor.u32 %v8759, %v8760
      %v8763 = vsel %vm382, %v8755, %v8762
      %v8764 = vrot.slane %v8759, 4
      %v8766 = vshrl.u32 %v8444, 16
      %v8768 = vrot.slane %v8766, 7
      %v8769 = vshll.u32 %v8444, 16
      %v8771 = vor.u32 %v8768, %v8769
      %v8772 = vsel %vm382, %v8764, %v8771
      %v8773 = vrot.slane %v8768, 4
      %v8775 = vshrl.u32 %v8445, 16
      %v8777 = vrot.slane %v8775, 7
      %v8778 = vshll.u32 %v8445, 16
      %v8780 = vor.u32 %v8777, %v8778
      %v8781 = vsel %vm382, %v8773, %v8780
      %v8782 = vrot.slane %v8777, 4
      %v8784 = vshrl.u32 %v8446, 16
      %v8786 = vrot.slane %v8784, 7
      %v8787 = vshll.u32 %v8446, 16
      %v8789 = vor.u32 %v8786, %v8787
      %v8790 = vsel %vm382, %v8782, %v8789
      %v8791 = vrot.slane %v8786, 4
      %v8793 = vshrl.u32 %v8447, 16
      %v8795 = vrot.slane %v8793, 7
      %v8796 = vshll.u32 %v8447, 16
      %v8798 = vor.u32 %v8795, %v8796
      %v8799 = vsel %vm382, %v8791, %v8798
      %v8800 = vrot.slane %v8795, 4
      %v8802 = vshrl.u32 %v8448, 16
      %v8804 = vrot.slane %v8802, 7
      %v8805 = vshll.u32 %v8448, 16
      %v8807 = vor.u32 %v8804, %v8805
      %v8808 = vsel %vm382, %v8800, %v8807
      %v8809 = vrot.slane %v8804, 4
      %v8811 = vshrl.u32 %v8449, 16
      %v8813 = vrot.slane %v8811, 7
      %v8814 = vshll.u32 %v8449, 16
      %v8816 = vor.u32 %v8813, %v8814
      %v8817 = vsel %vm382, %v8809, %v8816
      %v8818 = vrot.slane %v8813, 4
      %v8820 = vshrl.u32 %v8450, 16
      %v8822 = vrot.slane %v8820, 7
      %v8823 = vshll.u32 %v8450, 16
      %v8825 = vor.u32 %v8822, %v8823
      %v8826 = vsel %vm382, %v8818, %v8825
      %v8869 = vsel %vm1356, %v7994, %v8453
      %v8870 = vsel %vm1356, %v7953, %v8466
      %v8871 = vsel %vm1356, %v7954, %v8475
      %v8872 = vsel %vm1356, %v7955, %v8484
      %v8873 = vsel %vm1356, %v7956, %v8493
      %v8874 = vsel %vm1356, %v7957, %v8502
      %v8875 = vsel %vm1356, %v7958, %v8511
      %v8876 = vsel %vm1356, %v7959, %v8520
      %v8877 = vsel %vm1356, %v7960, %v8529
      %v8878 = vsel %vm1356, %v7961, %v8538
      %v8879 = vsel %vm1356, %v7962, %v8547
      %v8880 = vsel %vm1356, %v7963, %v8556
      %v8881 = vsel %vm1356, %v7964, %v8565
      %v8882 = vsel %vm1356, %v7965, %v8574
      %v8883 = vsel %vm1356, %v7966, %v8583
      %v8884 = vsel %vm1356, %v7967, %v8592
      %v8885 = vsel %vm1356, %v7968, %v8601
      %v8886 = vsel %vm1356, %v7969, %v8610
      %v8887 = vsel %vm1356, %v7970, %v8619
      %v8888 = vsel %vm1356, %v7971, %v8628
      %v8889 = vsel %vm1356, %v7972, %v8637
      %v8890 = vsel %vm1356, %v7973, %v8646
      %v8891 = vsel %vm1356, %v7974, %v8655
      %v8892 = vsel %vm1356, %v7975, %v8664
      %v8893 = vsel %vm1356, %v7976, %v8673
      %v8894 = vsel %vm1356, %v7977, %v8682
      %v8895 = vsel %vm1356, %v7978, %v8691
      %v8896 = vsel %vm1356, %v7979, %v8700
      %v8897 = vsel %vm1356, %v7980, %v8709
      %v8898 = vsel %vm1356, %v7981, %v8718
      %v8899 = vsel %vm1356, %v7982, %v8727
      %v8900 = vsel %vm1356, %v7983, %v8736
      %v8901 = vsel %vm1356, %v7984, %v8745
      %v8902 = vsel %vm1356, %v7985, %v8754
      %v8903 = vsel %vm1356, %v7986, %v8763
      %v8904 = vsel %vm1356, %v7987, %v8772
      %v8905 = vsel %vm1356, %v7988, %v8781
      %v8906 = vsel %vm1356, %v7989, %v8790
      %v8907 = vsel %vm1356, %v7990, %v8799
      %v8908 = vsel %vm1356, %v7991, %v8808
      %v8909 = vsel %vm1356, %v7992, %v8817
      %v8910 = vsel %vm1356, %v8451, %v8826
      %v8911 = vld [vmem:[#allocation2 + $0x8] sm:$0x8]
      %v8912 = vld [vmem:[#allocation2 + $0xa4] sm:$0xf]
      %v8913 = vld [vmem:[#allocation2 + $0xa8] sm:$0xf]
      %v8914 = vld [vmem:[#allocation2 + $0xac] sm:$0x3]
      %v8915 = vsel %vm2272, %v8911, %v8869
      %v8916 = vsel %vm2272, %v7955, %v8870
      %v8917 = vsel %vm2272, %v7956, %v8871
      %v8918 = vsel %vm2272, %v7957, %v8872
      %v8919 = vsel %vm2272, %v7958, %v8873
      %v8920 = vsel %vm2272, %v7959, %v8874
      %v8921 = vsel %vm2272, %v7960, %v8875
      %v8922 = vsel %vm2272, %v7961, %v8876
      %v8923 = vsel %vm2272, %v7962, %v8877
      %v8924 = vsel %vm2272, %v7963, %v8878
      %v8925 = vsel %vm2272, %v7964, %v8879
      %v8926 = vsel %vm2272, %v7965, %v8880
      %v8927 = vsel %vm2272, %v7966, %v8881
      %v8928 = vsel %vm2272, %v7967, %v8882
      %v8929 = vsel %vm2272, %v7968, %v8883
      %v8930 = vsel %vm2272, %v7969, %v8884
      %v8931 = vsel %vm2272, %v7970, %v8885
      %v8932 = vsel %vm2272, %v7971, %v8886
      %v8933 = vsel %vm2272, %v7972, %v8887
      %v8934 = vsel %vm2272, %v7973, %v8888
      %v8935 = vsel %vm2272, %v7974, %v8889
      %v8936 = vsel %vm2272, %v7975, %v8890
      %v8937 = vsel %vm2272, %v7976, %v8891
      %v8938 = vsel %vm2272, %v7977, %v8892
      %v8939 = vsel %vm2272, %v7978, %v8893
      %v8940 = vsel %vm2272, %v7979, %v8894
      %v8941 = vsel %vm2272, %v7980, %v8895
      %v8942 = vsel %vm2272, %v7981, %v8896
      %v8943 = vsel %vm2272, %v7982, %v8897
      %v8944 = vsel %vm2272, %v7983, %v8898
      %v8945 = vsel %vm2272, %v7984, %v8899
      %v8946 = vsel %vm2272, %v7985, %v8900
      %v8947 = vsel %vm2272, %v7986, %v8901
      %v8948 = vsel %vm2272, %v7987, %v8902
      %v8949 = vsel %vm2272, %v7988, %v8903
      %v8950 = vsel %vm2272, %v7989, %v8904
      %v8951 = vsel %vm2272, %v7990, %v8905
      %v8952 = vsel %vm2272, %v7991, %v8906
      %v8953 = vsel %vm2272, %v7992, %v8907
      %v8954 = vsel %vm2272, %v8912, %v8908
      %v8955 = vsel %vm2272, %v8913, %v8909
      %v8956 = vsel %vm2272, %v8914, %v8910
      %v8958 = vshrl.u32 %v8915, 16
      %v8960 = vrot.slane %v8958, 7
      %v8961 = vrot.slane %v8960, 4
      %v8963 = vshrl.u32 %v8916, 16
      %v8965 = vrot.slane %v8963, 7
      %v8966 = vshll.u32 %v8916, 16
      %v8968 = vor.u32 %v8965, %v8966
      %v8969 = vsel %vm382, %v8961, %v8968
      %v8970 = vrot.slane %v8965, 4
      %v8972 = vshrl.u32 %v8917, 16
      %v8974 = vrot.slane %v8972, 7
      %v8975 = vshll.u32 %v8917, 16
      %v8977 = vor.u32 %v8974, %v8975
      %v8978 = vsel %vm382, %v8970, %v8977
      %v8979 = vrot.slane %v8974, 4
      %v8981 = vshrl.u32 %v8918, 16
      %v8983 = vrot.slane %v8981, 7
      %v8984 = vshll.u32 %v8918, 16
      %v8986 = vor.u32 %v8983, %v8984
      %v8987 = vsel %vm382, %v8979, %v8986
      %v8988 = vrot.slane %v8983, 4
      %v8990 = vshrl.u32 %v8919, 16
      %v8992 = vrot.slane %v8990, 7
      %v8993 = vshll.u32 %v8919, 16
      %v8995 = vor.u32 %v8992, %v8993
      %v8996 = vsel %vm382, %v8988, %v8995
      %v8997 = vrot.slane %v8992, 4
      %v8999 = vshrl.u32 %v8920, 16
      %v9001 = vrot.slane %v8999, 7
      %v9002 = vshll.u32 %v8920, 16
      %v9004 = vor.u32 %v9001, %v9002
      %v9005 = vsel %vm382, %v8997, %v9004
      %v9006 = vrot.slane %v9001, 4
      %v9008 = vshrl.u32 %v8921, 16
      %v9010 = vrot.slane %v9008, 7
      %v9011 = vshll.u32 %v8921, 16
      %v9013 = vor.u32 %v9010, %v9011
      %v9014 = vsel %vm382, %v9006, %v9013
      %v9015 = vrot.slane %v9010, 4
      %v9017 = vshrl.u32 %v8922, 16
      %v9019 = vrot.slane %v9017, 7
      %v9020 = vshll.u32 %v8922, 16
      %v9022 = vor.u32 %v9019, %v9020
      %v9023 = vsel %vm382, %v9015, %v9022
      %v9024 = vrot.slane %v9019, 4
      %v9026 = vshrl.u32 %v8923, 16
      %v9028 = vrot.slane %v9026, 7
      %v9029 = vshll.u32 %v8923, 16
      %v9031 = vor.u32 %v9028, %v9029
      %v9032 = vsel %vm382, %v9024, %v9031
      %v9033 = vrot.slane %v9028, 4
      %v9035 = vshrl.u32 %v8924, 16
      %v9037 = vrot.slane %v9035, 7
      %v9038 = vshll.u32 %v8924, 16
      %v9040 = vor.u32 %v9037, %v9038
      %v9041 = vsel %vm382, %v9033, %v9040
      %v9042 = vrot.slane %v9037, 4
      %v9044 = vshrl.u32 %v8925, 16
      %v9046 = vrot.slane %v9044, 7
      %v9047 = vshll.u32 %v8925, 16
      %v9049 = vor.u32 %v9046, %v9047
      %v9050 = vsel %vm382, %v9042, %v9049
      %v9051 = vrot.slane %v9046, 4
      %v9053 = vshrl.u32 %v8926, 16
      %v9055 = vrot.slane %v9053, 7
      %v9056 = vshll.u32 %v8926, 16
      %v9058 = vor.u32 %v9055, %v9056
      %v9059 = vsel %vm382, %v9051, %v9058
      %v9060 = vrot.slane %v9055, 4
      %v9062 = vshrl.u32 %v8927, 16
      %v9064 = vrot.slane %v9062, 7
      %v9065 = vshll.u32 %v8927, 16
      %v9067 = vor.u32 %v9064, %v9065
      %v9068 = vsel %vm382, %v9060, %v9067
      %v9069 = vrot.slane %v9064, 4
      %v9071 = vshrl.u32 %v8928, 16
      %v9073 = vrot.slane %v9071, 7
      %v9074 = vshll.u32 %v8928, 16
      %v9076 = vor.u32 %v9073, %v9074
      %v9077 = vsel %vm382, %v9069, %v9076
      %v9078 = vrot.slane %v9073, 4
      %v9080 = vshrl.u32 %v8929, 16
      %v9082 = vrot.slane %v9080, 7
      %v9083 = vshll.u32 %v8929, 16
      %v9085 = vor.u32 %v9082, %v9083
      %v9086 = vsel %vm382, %v9078, %v9085
      %v9087 = vrot.slane %v9082, 4
      %v9089 = vshrl.u32 %v8930, 16
      %v9091 = vrot.slane %v9089, 7
      %v9092 = vshll.u32 %v8930, 16
      %v9094 = vor.u32 %v9091, %v9092
      %v9095 = vsel %vm382, %v9087, %v9094
      %v9096 = vrot.slane %v9091, 4
      %v9098 = vshrl.u32 %v8931, 16
      %v9100 = vrot.slane %v9098, 7
      %v9101 = vshll.u32 %v8931, 16
      %v9103 = vor.u32 %v9100, %v9101
      %v9104 = vsel %vm382, %v9096, %v9103
      %v9105 = vrot.slane %v9100, 4
      %v9107 = vshrl.u32 %v8932, 16
      %v9109 = vrot.slane %v9107, 7
      %v9110 = vshll.u32 %v8932, 16
      %v9112 = vor.u32 %v9109, %v9110
      %v9113 = vsel %vm382, %v9105, %v9112
      %v9114 = vrot.slane %v9109, 4
      %v9116 = vshrl.u32 %v8933, 16
      %v9118 = vrot.slane %v9116, 7
      %v9119 = vshll.u32 %v8933, 16
      %v9121 = vor.u32 %v9118, %v9119
      %v9122 = vsel %vm382, %v9114, %v9121
      %v9123 = vrot.slane %v9118, 4
      %v9125 = vshrl.u32 %v8934, 16
      %v9127 = vrot.slane %v9125, 7
      %v9128 = vshll.u32 %v8934, 16
      %v9130 = vor.u32 %v9127, %v9128
      %v9131 = vsel %vm382, %v9123, %v9130
      %v9132 = vrot.slane %v9127, 4
      %v9134 = vshrl.u32 %v8935, 16
      %v9136 = vrot.slane %v9134, 7
      %v9137 = vshll.u32 %v8935, 16
      %v9139 = vor.u32 %v9136, %v9137
      %v9140 = vsel %vm382, %v9132, %v9139
      %v9141 = vrot.slane %v9136, 4
      %v9143 = vshrl.u32 %v8936, 16
      %v9145 = vrot.slane %v9143, 7
      %v9146 = vshll.u32 %v8936, 16
      %v9148 = vor.u32 %v9145, %v9146
      %v9149 = vsel %vm382, %v9141, %v9148
      %v9150 = vrot.slane %v9145, 4
      %v9152 = vshrl.u32 %v8937, 16
      %v9154 = vrot.slane %v9152, 7
      %v9155 = vshll.u32 %v8937, 16
      %v9157 = vor.u32 %v9154, %v9155
      %v9158 = vsel %vm382, %v9150, %v9157
      %v9159 = vrot.slane %v9154, 4
      %v9161 = vshrl.u32 %v8938, 16
      %v9163 = vrot.slane %v9161, 7
      %v9164 = vshll.u32 %v8938, 16
      %v9166 = vor.u32 %v9163, %v9164
      %v9167 = vsel %vm382, %v9159, %v9166
      %v9168 = vrot.slane %v9163, 4
      %v9170 = vshrl.u32 %v8939, 16
      %v9172 = vrot.slane %v9170, 7
      %v9173 = vshll.u32 %v8939, 16
      %v9175 = vor.u32 %v9172, %v9173
      %v9176 = vsel %vm382, %v9168, %v9175
      %v9177 = vrot.slane %v9172, 4
      %v9179 = vshrl.u32 %v8940, 16
      %v9181 = vrot.slane %v9179, 7
      %v9182 = vshll.u32 %v8940, 16
      %v9184 = vor.u32 %v9181, %v9182
      %v9185 = vsel %vm382, %v9177, %v9184
      %v9186 = vrot.slane %v9181, 4
      %v9188 = vshrl.u32 %v8941, 16
      %v9190 = vrot.slane %v9188, 7
      %v9191 = vshll.u32 %v8941, 16
      %v9193 = vor.u32 %v9190, %v9191
      %v9194 = vsel %vm382, %v9186, %v9193
      %v9195 = vrot.slane %v9190, 4
      %v9197 = vshrl.u32 %v8942, 16
      %v9199 = vrot.slane %v9197, 7
      %v9200 = vshll.u32 %v8942, 16
      %v9202 = vor.u32 %v9199, %v9200
      %v9203 = vsel %vm382, %v9195, %v9202
      %v9204 = vrot.slane %v9199, 4
      %v9206 = vshrl.u32 %v8943, 16
      %v9208 = vrot.slane %v9206, 7
      %v9209 = vshll.u32 %v8943, 16
      %v9211 = vor.u32 %v9208, %v9209
      %v9212 = vsel %vm382, %v9204, %v9211
      %v9213 = vrot.slane %v9208, 4
      %v9215 = vshrl.u32 %v8944, 16
      %v9217 = vrot.slane %v9215, 7
      %v9218 = vshll.u32 %v8944, 16
      %v9220 = vor.u32 %v9217, %v9218
      %v9221 = vsel %vm382, %v9213, %v9220
      %v9222 = vrot.slane %v9217, 4
      %v9224 = vshrl.u32 %v8945, 16
      %v9226 = vrot.slane %v9224, 7
      %v9227 = vshll.u32 %v8945, 16
      %v9229 = vor.u32 %v9226, %v9227
      %v9230 = vsel %vm382, %v9222, %v9229
      %v9231 = vrot.slane %v9226, 4
      %v9233 = vshrl.u32 %v8946, 16
      %v9235 = vrot.slane %v9233, 7
      %v9236 = vshll.u32 %v8946, 16
      %v9238 = vor.u32 %v9235, %v9236
      %v9239 = vsel %vm382, %v9231, %v9238
      %v9240 = vrot.slane %v9235, 4
      %v9242 = vshrl.u32 %v8947, 16
      %v9244 = vrot.slane %v9242, 7
      %v9245 = vshll.u32 %v8947, 16
      %v9247 = vor.u32 %v9244, %v9245
      %v9248 = vsel %vm382, %v9240, %v9247
      %v9249 = vrot.slane %v9244, 4
      %v9251 = vshrl.u32 %v8948, 16
      %v9253 = vrot.slane %v9251, 7
      %v9254 = vshll.u32 %v8948, 16
      %v9256 = vor.u32 %v9253, %v9254
      %v9257 = vsel %vm382, %v9249, %v9256
      %v9258 = vrot.slane %v9253, 4
      %v9260 = vshrl.u32 %v8949, 16
      %v9262 = vrot.slane %v9260, 7
      %v9263 = vshll.u32 %v8949, 16
      %v9265 = vor.u32 %v9262, %v9263
      %v9266 = vsel %vm382, %v9258, %v9265
      %v9267 = vrot.slane %v9262, 4
      %v9269 = vshrl.u32 %v8950, 16
      %v9271 = vrot.slane %v9269, 7
      %v9272 = vshll.u32 %v8950, 16
      %v9274 = vor.u32 %v9271, %v9272
      %v9275 = vsel %vm382, %v9267, %v9274
      %v9276 = vrot.slane %v9271, 4
      %v9278 = vshrl.u32 %v8951, 16
      %v9280 = vrot.slane %v9278, 7
      %v9281 = vshll.u32 %v8951, 16
      %v9283 = vor.u32 %v9280, %v9281
      %v9284 = vsel %vm382, %v9276, %v9283
      %v9285 = vrot.slane %v9280, 4
      %v9287 = vshrl.u32 %v8952, 16
      %v9289 = vrot.slane %v9287, 7
      %v9290 = vshll.u32 %v8952, 16
      %v9292 = vor.u32 %v9289, %v9290
      %v9293 = vsel %vm382, %v9285, %v9292
      %v9294 = vrot.slane %v9289, 4
      %v9296 = vshrl.u32 %v8953, 16
      %v9298 = vrot.slane %v9296, 7
      %v9299 = vshll.u32 %v8953, 16
      %v9301 = vor.u32 %v9298, %v9299
      %v9302 = vsel %vm382, %v9294, %v9301
      %v9303 = vrot.slane %v9298, 4
      %v9305 = vshrl.u32 %v8954, 16
      %v9307 = vrot.slane %v9305, 7
      %v9308 = vshll.u32 %v8954, 16
      %v9310 = vor.u32 %v9307, %v9308
      %v9311 = vsel %vm382, %v9303, %v9310
      %v9312 = vrot.slane %v9307, 4
      %v9314 = vshrl.u32 %v8955, 16
      %v9316 = vrot.slane %v9314, 7
      %v9317 = vshll.u32 %v8955, 16
      %v9319 = vor.u32 %v9316, %v9317
      %v9320 = vsel %vm382, %v9312, %v9319
      %v9321 = vrot.slane %v9316, 4
      %v9323 = vshrl.u32 %v8956, 16
      %v9325 = vrot.slane %v9323, 7
      %v9326 = vshll.u32 %v8956, 16
      %v9328 = vor.u32 %v9325, %v9326
      %v9329 = vsel %vm382, %v9321, %v9328
      %v9371 = vsel %vm2772, %v7955, %v8969
      %v9372 = vsel %vm2772, %v7956, %v8978
      %v9373 = vsel %vm2772, %v7957, %v8987
      %v9374 = vsel %vm2772, %v7958, %v8996
      %v9375 = vsel %vm2772, %v7959, %v9005
      %v9376 = vsel %vm2772, %v7960, %v9014
      %v9377 = vsel %vm2772, %v7961, %v9023
      %v9378 = vsel %vm2772, %v7962, %v9032
      %v9379 = vsel %vm2772, %v7963, %v9041
      %v9380 = vsel %vm2772, %v7964, %v9050
      %v9381 = vsel %vm2772, %v7965, %v9059
      %v9382 = vsel %vm2772, %v7966, %v9068
      %v9383 = vsel %vm2772, %v7967, %v9077
      %v9384 = vsel %vm2772, %v7968, %v9086
      %v9385 = vsel %vm2772, %v7969, %v9095
      %v9386 = vsel %vm2772, %v7970, %v9104
      %v9387 = vsel %vm2772, %v7971, %v9113
      %v9388 = vsel %vm2772, %v7972, %v9122
      %v9389 = vsel %vm2772, %v7973, %v9131
      %v9390 = vsel %vm2772, %v7974, %v9140
      %v9391 = vsel %vm2772, %v7975, %v9149
      %v9392 = vsel %vm2772, %v7976, %v9158
      %v9393 = vsel %vm2772, %v7977, %v9167
      %v9394 = vsel %vm2772, %v7978, %v9176
      %v9395 = vsel %vm2772, %v7979, %v9185
      %v9396 = vsel %vm2772, %v7980, %v9194
      %v9397 = vsel %vm2772, %v7981, %v9203
      %v9398 = vsel %vm2772, %v7982, %v9212
      %v9399 = vsel %vm2772, %v7983, %v9221
      %v9400 = vsel %vm2772, %v7984, %v9230
      %v9401 = vsel %vm2772, %v7985, %v9239
      %v9402 = vsel %vm2772, %v7986, %v9248
      %v9403 = vsel %vm2772, %v7987, %v9257
      %v9404 = vsel %vm2772, %v7988, %v9266
      %v9405 = vsel %vm2772, %v7989, %v9275
      %v9406 = vsel %vm2772, %v7990, %v9284
      %v9407 = vsel %vm2772, %v7991, %v9293
      %v9408 = vsel %vm2772, %v7992, %v9302
      %v9409 = vsel %vm2772, %v8912, %v9311
      %v9410 = vsel %vm2772, %v8913, %v9320
      %v9411 = vsel %vm2772, %v8914, %v9329
      %v9412 = vld [vmem:[#allocation2 + $0xac] sm:$0x7]
      %v9414 = vshrl.u32 %v9371, 16
      %v9416 = vrot.slane %v9414, 7
      %v9417 = vshll.u32 %v9371, 16
      %v9419 = vor.u32 %v9416, %v9417
      %v9420 = vrot.slane %v9416, 4
      %v9422 = vshrl.u32 %v9372, 16
      %v9424 = vrot.slane %v9422, 7
      %v9425 = vshll.u32 %v9372, 16
      %v9427 = vor.u32 %v9424, %v9425
      %v9428 = vsel %vm382, %v9420, %v9427
      %v9429 = vrot.slane %v9424, 4
      %v9431 = vshrl.u32 %v9373, 16
      %v9433 = vrot.slane %v9431, 7
      %v9434 = vshll.u32 %v9373, 16
      %v9436 = vor.u32 %v9433, %v9434
      %v9437 = vsel %vm382, %v9429, %v9436
      %v9438 = vrot.slane %v9433, 4
      %v9440 = vshrl.u32 %v9374, 16
      %v9442 = vrot.slane %v9440, 7
      %v9443 = vshll.u32 %v9374, 16
      %v9445 = vor.u32 %v9442, %v9443
      %v9446 = vsel %vm382, %v9438, %v9445
      %v9447 = vrot.slane %v9442, 4
      %v9449 = vshrl.u32 %v9375, 16
      %v9451 = vrot.slane %v9449, 7
      %v9452 = vshll.u32 %v9375, 16
      %v9454 = vor.u32 %v9451, %v9452
      %v9455 = vsel %vm382, %v9447, %v9454
      %v9456 = vrot.slane %v9451, 4
      %v9458 = vshrl.u32 %v9376, 16
      %v9460 = vrot.slane %v9458, 7
      %v9461 = vshll.u32 %v9376, 16
      %v9463 = vor.u32 %v9460, %v9461
      %v9464 = vsel %vm382, %v9456, %v9463
      %v9465 = vrot.slane %v9460, 4
      %v9467 = vshrl.u32 %v9377, 16
      %v9469 = vrot.slane %v9467, 7
      %v9470 = vshll.u32 %v9377, 16
      %v9472 = vor.u32 %v9469, %v9470
      %v9473 = vsel %vm382, %v9465, %v9472
      %v9474 = vrot.slane %v9469, 4
      %v9476 = vshrl.u32 %v9378, 16
      %v9478 = vrot.slane %v9476, 7
      %v9479 = vshll.u32 %v9378, 16
      %v9481 = vor.u32 %v9478, %v9479
      %v9482 = vsel %vm382, %v9474, %v9481
      %v9483 = vrot.slane %v9478, 4
      %v9485 = vshrl.u32 %v9379, 16
      %v9487 = vrot.slane %v9485, 7
      %v9488 = vshll.u32 %v9379, 16
      %v9490 = vor.u32 %v9487, %v9488
      %v9491 = vsel %vm382, %v9483, %v9490
      %v9492 = vrot.slane %v9487, 4
      %v9494 = vshrl.u32 %v9380, 16
      %v9496 = vrot.slane %v9494, 7
      %v9497 = vshll.u32 %v9380, 16
      %v9499 = vor.u32 %v9496, %v9497
      %v9500 = vsel %vm382, %v9492, %v9499
      %v9501 = vrot.slane %v9496, 4
      %v9503 = vshrl.u32 %v9381, 16
      %v9505 = vrot.slane %v9503, 7
      %v9506 = vshll.u32 %v9381, 16
      %v9508 = vor.u32 %v9505, %v9506
      %v9509 = vsel %vm382, %v9501, %v9508
      %v9510 = vrot.slane %v9505, 4
      %v9512 = vshrl.u32 %v9382, 16
      %v9514 = vrot.slane %v9512, 7
      %v9515 = vshll.u32 %v9382, 16
      %v9517 = vor.u32 %v9514, %v9515
      %v9518 = vsel %vm382, %v9510, %v9517
      %v9519 = vrot.slane %v9514, 4
      %v9521 = vshrl.u32 %v9383, 16
      %v9523 = vrot.slane %v9521, 7
      %v9524 = vshll.u32 %v9383, 16
      %v9526 = vor.u32 %v9523, %v9524
      %v9527 = vsel %vm382, %v9519, %v9526
      %v9528 = vrot.slane %v9523, 4
      %v9530 = vshrl.u32 %v9384, 16
      %v9532 = vrot.slane %v9530, 7
      %v9533 = vshll.u32 %v9384, 16
      %v9535 = vor.u32 %v9532, %v9533
      %v9536 = vsel %vm382, %v9528, %v9535
      %v9537 = vrot.slane %v9532, 4
      %v9539 = vshrl.u32 %v9385, 16
      %v9541 = vrot.slane %v9539, 7
      %v9542 = vshll.u32 %v9385, 16
      %v9544 = vor.u32 %v9541, %v9542
      %v9545 = vsel %vm382, %v9537, %v9544
      %v9546 = vrot.slane %v9541, 4
      %v9548 = vshrl.u32 %v9386, 16
      %v9550 = vrot.slane %v9548, 7
      %v9551 = vshll.u32 %v9386, 16
      %v9553 = vor.u32 %v9550, %v9551
      %v9554 = vsel %vm382, %v9546, %v9553
      %v9555 = vrot.slane %v9550, 4
      %v9557 = vshrl.u32 %v9387, 16
      %v9559 = vrot.slane %v9557, 7
      %v9560 = vshll.u32 %v9387, 16
      %v9562 = vor.u32 %v9559, %v9560
      %v9563 = vsel %vm382, %v9555, %v9562
      %v9564 = vrot.slane %v9559, 4
      %v9566 = vshrl.u32 %v9388, 16
      %v9568 = vrot.slane %v9566, 7
      %v9569 = vshll.u32 %v9388, 16
      %v9571 = vor.u32 %v9568, %v9569
      %v9572 = vsel %vm382, %v9564, %v9571
      %v9573 = vrot.slane %v9568, 4
      %v9575 = vshrl.u32 %v9389, 16
      %v9577 = vrot.slane %v9575, 7
      %v9578 = vshll.u32 %v9389, 16
      %v9580 = vor.u32 %v9577, %v9578
      %v9581 = vsel %vm382, %v9573, %v9580
      %v9582 = vrot.slane %v9577, 4
      %v9584 = vshrl.u32 %v9390, 16
      %v9586 = vrot.slane %v9584, 7
      %v9587 = vshll.u32 %v9390, 16
      %v9589 = vor.u32 %v9586, %v9587
      %v9590 = vsel %vm382, %v9582, %v9589
      %v9591 = vrot.slane %v9586, 4
      %v9593 = vshrl.u32 %v9391, 16
      %v9595 = vrot.slane %v9593, 7
      %v9596 = vshll.u32 %v9391, 16
      %v9598 = vor.u32 %v9595, %v9596
      %v9599 = vsel %vm382, %v9591, %v9598
      %v9600 = vrot.slane %v9595, 4
      %v9602 = vshrl.u32 %v9392, 16
      %v9604 = vrot.slane %v9602, 7
      %v9605 = vshll.u32 %v9392, 16
      %v9607 = vor.u32 %v9604, %v9605
      %v9608 = vsel %vm382, %v9600, %v9607
      %v9609 = vrot.slane %v9604, 4
      %v9611 = vshrl.u32 %v9393, 16
      %v9613 = vrot.slane %v9611, 7
      %v9614 = vshll.u32 %v9393, 16
      %v9616 = vor.u32 %v9613, %v9614
      %v9617 = vsel %vm382, %v9609, %v9616
      %v9618 = vrot.slane %v9613, 4
      %v9620 = vshrl.u32 %v9394, 16
      %v9622 = vrot.slane %v9620, 7
      %v9623 = vshll.u32 %v9394, 16
      %v9625 = vor.u32 %v9622, %v9623
      %v9626 = vsel %vm382, %v9618, %v9625
      %v9627 = vrot.slane %v9622, 4
      %v9629 = vshrl.u32 %v9395, 16
      %v9631 = vrot.slane %v9629, 7
      %v9632 = vshll.u32 %v9395, 16
      %v9634 = vor.u32 %v9631, %v9632
      %v9635 = vsel %vm382, %v9627, %v9634
      %v9636 = vrot.slane %v9631, 4
      %v9638 = vshrl.u32 %v9396, 16
      %v9640 = vrot.slane %v9638, 7
      %v9641 = vshll.u32 %v9396, 16
      %v9643 = vor.u32 %v9640, %v9641
      %v9644 = vsel %vm382, %v9636, %v9643
      %v9645 = vrot.slane %v9640, 4
      %v9647 = vshrl.u32 %v9397, 16
      %v9649 = vrot.slane %v9647, 7
      %v9650 = vshll.u32 %v9397, 16
      %v9652 = vor.u32 %v9649, %v9650
      %v9653 = vsel %vm382, %v9645, %v9652
      %v9654 = vrot.slane %v9649, 4
      %v9656 = vshrl.u32 %v9398, 16
      %v9658 = vrot.slane %v9656, 7
      %v9659 = vshll.u32 %v9398, 16
      %v9661 = vor.u32 %v9658, %v9659
      %v9662 = vsel %vm382, %v9654, %v9661
      %v9663 = vrot.slane %v9658, 4
      %v9665 = vshrl.u32 %v9399, 16
      %v9667 = vrot.slane %v9665, 7
      %v9668 = vshll.u32 %v9399, 16
      %v9670 = vor.u32 %v9667, %v9668
      %v9671 = vsel %vm382, %v9663, %v9670
      %v9672 = vrot.slane %v9667, 4
      %v9674 = vshrl.u32 %v9400, 16
      %v9676 = vrot.slane %v9674, 7
      %v9677 = vshll.u32 %v9400, 16
      %v9679 = vor.u32 %v9676, %v9677
      %v9680 = vsel %vm382, %v9672, %v9679
      %v9681 = vrot.slane %v9676, 4
      %v9683 = vshrl.u32 %v9401, 16
      %v9685 = vrot.slane %v9683, 7
      %v9686 = vshll.u32 %v9401, 16
      %v9688 = vor.u32 %v9685, %v9686
      %v9689 = vsel %vm382, %v9681, %v9688
      %v9690 = vrot.slane %v9685, 4
      %v9692 = vshrl.u32 %v9402, 16
      %v9694 = vrot.slane %v9692, 7
      %v9695 = vshll.u32 %v9402, 16
      %v9697 = vor.u32 %v9694, %v9695
      %v9698 = vsel %vm382, %v9690, %v9697
      %v9699 = vrot.slane %v9694, 4
      %v9701 = vshrl.u32 %v9403, 16
      %v9703 = vrot.slane %v9701, 7
      %v9704 = vshll.u32 %v9403, 16
      %v9706 = vor.u32 %v9703, %v9704
      %v9707 = vsel %vm382, %v9699, %v9706
      %v9708 = vrot.slane %v9703, 4
      %v9710 = vshrl.u32 %v9404, 16
      %v9712 = vrot.slane %v9710, 7
      %v9713 = vshll.u32 %v9404, 16
      %v9715 = vor.u32 %v9712, %v9713
      %v9716 = vsel %vm382, %v9708, %v9715
      %v9717 = vrot.slane %v9712, 4
      %v9719 = vshrl.u32 %v9405, 16
      %v9721 = vrot.slane %v9719, 7
      %v9722 = vshll.u32 %v9405, 16
      %v9724 = vor.u32 %v9721, %v9722
      %v9725 = vsel %vm382, %v9717, %v9724
      %v9726 = vrot.slane %v9721, 4
      %v9728 = vshrl.u32 %v9406, 16
      %v9730 = vrot.slane %v9728, 7
      %v9731 = vshll.u32 %v9406, 16
      %v9733 = vor.u32 %v9730, %v9731
      %v9734 = vsel %vm382, %v9726, %v9733
      %v9735 = vrot.slane %v9730, 4
      %v9737 = vshrl.u32 %v9407, 16
      %v9739 = vrot.slane %v9737, 7
      %v9740 = vshll.u32 %v9407, 16
      %v9742 = vor.u32 %v9739, %v9740
      %v9743 = vsel %vm382, %v9735, %v9742
      %v9744 = vrot.slane %v9739, 4
      %v9746 = vshrl.u32 %v9408, 16
      %v9748 = vrot.slane %v9746, 7
      %v9749 = vshll.u32 %v9408, 16
      %v9751 = vor.u32 %v9748, %v9749
      %v9752 = vsel %vm382, %v9744, %v9751
      %v9753 = vrot.slane %v9748, 4
      %v9755 = vshrl.u32 %v9409, 16
      %v9757 = vrot.slane %v9755, 7
      %v9758 = vshll.u32 %v9409, 16
      %v9760 = vor.u32 %v9757, %v9758
      %v9761 = vsel %vm382, %v9753, %v9760
      %v9762 = vrot.slane %v9757, 4
      %v9764 = vshrl.u32 %v9410, 16
      %v9766 = vrot.slane %v9764, 7
      %v9767 = vshll.u32 %v9410, 16
      %v9769 = vor.u32 %v9766, %v9767
      %v9770 = vsel %vm382, %v9762, %v9769
      %v9771 = vrot.slane %v9766, 4
      %v9773 = vshrl.u32 %v9411, 16
      %v9775 = vrot.slane %v9773, 7
      %v9776 = vshll.u32 %v9411, 16
      %v9778 = vor.u32 %v9775, %v9776
      %v9779 = vsel %vm382, %v9771, %v9778
      %v9821 = vsel %vm5719, %v7955, %v9419
      %v9822 = vsel %vm5719, %v7956, %v9428
      %v9823 = vsel %vm5719, %v7957, %v9437
      %v9824 = vsel %vm5719, %v7958, %v9446
      %v9825 = vsel %vm5719, %v7959, %v9455
      %v9826 = vsel %vm5719, %v7960, %v9464
      %v9827 = vsel %vm5719, %v7961, %v9473
      %v9828 = vsel %vm5719, %v7962, %v9482
      %v9829 = vsel %vm5719, %v7963, %v9491
      %v9830 = vsel %vm5719, %v7964, %v9500
      %v9831 = vsel %vm5719, %v7965, %v9509
      %v9832 = vsel %vm5719, %v7966, %v9518
      %v9833 = vsel %vm5719, %v7967, %v9527
      %v9834 = vsel %vm5719, %v7968, %v9536
      %v9835 = vsel %vm5719, %v7969, %v9545
      %v9836 = vsel %vm5719, %v7970, %v9554
      %v9837 = vsel %vm5719, %v7971, %v9563
      %v9838 = vsel %vm5719, %v7972, %v9572
      %v9839 = vsel %vm5719, %v7973, %v9581
      %v9840 = vsel %vm5719, %v7974, %v9590
      %v9841 = vsel %vm5719, %v7975, %v9599
      %v9842 = vsel %vm5719, %v7976, %v9608
      %v9843 = vsel %vm5719, %v7977, %v9617
      %v9844 = vsel %vm5719, %v7978, %v9626
      %v9845 = vsel %vm5719, %v7979, %v9635
      %v9846 = vsel %vm5719, %v7980, %v9644
      %v9847 = vsel %vm5719, %v7981, %v9653
      %v9848 = vsel %vm5719, %v7982, %v9662
      %v9849 = vsel %vm5719, %v7983, %v9671
      %v9850 = vsel %vm5719, %v7984, %v9680
      %v9851 = vsel %vm5719, %v7985, %v9689
      %v9852 = vsel %vm5719, %v7986, %v9698
      %v9853 = vsel %vm5719, %v7987, %v9707
      %v9854 = vsel %vm5719, %v7988, %v9716
      %v9855 = vsel %vm5719, %v7989, %v9725
      %v9856 = vsel %vm5719, %v7990, %v9734
      %v9857 = vsel %vm5719, %v7991, %v9743
      %v9858 = vsel %vm5719, %v7992, %v9752
      %v9859 = vsel %vm5719, %v8912, %v9761
      %v9860 = vsel %vm5719, %v8913, %v9770
      %v9861 = vsel %vm5719, %v9412, %v9779
      %v9862 = vld [vmem:[#allocation2 + $0xac] sm:$0xf]
      %v9863 = vld [vmem:[#allocation2 + $0xb0] sm:$0xf]
      %v9864 = vld [vmem:[#allocation2 + $0xb4] sm:$0x7]
      %v9865 = vsel %vm6175, %v7957, %v9821
      %v9866 = vsel %vm6175, %v7958, %v9822
      %v9867 = vsel %vm6175, %v7959, %v9823
      %v9868 = vsel %vm6175, %v7960, %v9824
      %v9869 = vsel %vm6175, %v7961, %v9825
      %v9870 = vsel %vm6175, %v7962, %v9826
      %v9871 = vsel %vm6175, %v7963, %v9827
      %v9872 = vsel %vm6175, %v7964, %v9828
      %v9873 = vsel %vm6175, %v7965, %v9829
      %v9874 = vsel %vm6175, %v7966, %v9830
      %v9875 = vsel %vm6175, %v7967, %v9831
      %v9876 = vsel %vm6175, %v7968, %v9832
      %v9877 = vsel %vm6175, %v7969, %v9833
      %v9878 = vsel %vm6175, %v7970, %v9834
      %v9879 = vsel %vm6175, %v7971, %v9835
      %v9880 = vsel %vm6175, %v7972, %v9836
      %v9881 = vsel %vm6175, %v7973, %v9837
      %v9882 = vsel %vm6175, %v7974, %v9838
      %v9883 = vsel %vm6175, %v7975, %v9839
      %v9884 = vsel %vm6175, %v7976, %v9840
      %v9885 = vsel %vm6175, %v7977, %v9841
      %v9886 = vsel %vm6175, %v7978, %v9842
      %v9887 = vsel %vm6175, %v7979, %v9843
      %v9888 = vsel %vm6175, %v7980, %v9844
      %v9889 = vsel %vm6175, %v7981, %v9845
      %v9890 = vsel %vm6175, %v7982, %v9846
      %v9891 = vsel %vm6175, %v7983, %v9847
      %v9892 = vsel %vm6175, %v7984, %v9848
      %v9893 = vsel %vm6175, %v7985, %v9849
      %v9894 = vsel %vm6175, %v7986, %v9850
      %v9895 = vsel %vm6175, %v7987, %v9851
      %v9896 = vsel %vm6175, %v7988, %v9852
      %v9897 = vsel %vm6175, %v7989, %v9853
      %v9898 = vsel %vm6175, %v7990, %v9854
      %v9899 = vsel %vm6175, %v7991, %v9855
      %v9900 = vsel %vm6175, %v7992, %v9856
      %v9901 = vsel %vm6175, %v8912, %v9857
      %v9902 = vsel %vm6175, %v8913, %v9858
      %v9903 = vsel %vm6175, %v9862, %v9859
      %v9904 = vsel %vm6175, %v9863, %v9860
      %v9905 = vsel %vm6175, %v9864, %v9861
      %v9906 = vld [vmem:[#allocation2 + $0x14] sm:$0xe]
      %v9908 = vshrl.u32 %v9865, 16
      %v9910 = vrot.slane %v9908, 7
      %v9911 = vshll.u32 %v9865, 16
      %v9913 = vor.u32 %v9910, %v9911
      %v9914 = vrot.slane %v9910, 4
      %v9916 = vshrl.u32 %v9866, 16
      %v9918 = vrot.slane %v9916, 7
      %v9919 = vshll.u32 %v9866, 16
      %v9921 = vor.u32 %v9918, %v9919
      %v9922 = vsel %vm382, %v9914, %v9921
      %v9923 = vrot.slane %v9918, 4
      %v9925 = vshrl.u32 %v9867, 16
      %v9927 = vrot.slane %v9925, 7
      %v9928 = vshll.u32 %v9867, 16
      %v9930 = vor.u32 %v9927, %v9928
      %v9931 = vsel %vm382, %v9923, %v9930
      %v9932 = vrot.slane %v9927, 4
      %v9934 = vshrl.u32 %v9868, 16
      %v9936 = vrot.slane %v9934, 7
      %v9937 = vshll.u32 %v9868, 16
      %v9939 = vor.u32 %v9936, %v9937
      %v9940 = vsel %vm382, %v9932, %v9939
      %v9941 = vrot.slane %v9936, 4
      %v9943 = vshrl.u32 %v9869, 16
      %v9945 = vrot.slane %v9943, 7
      %v9946 = vshll.u32 %v9869, 16
      %v9948 = vor.u32 %v9945, %v9946
      %v9949 = vsel %vm382, %v9941, %v9948
      %v9950 = vrot.slane %v9945, 4
      %v9952 = vshrl.u32 %v9870, 16
      %v9954 = vrot.slane %v9952, 7
      %v9955 = vshll.u32 %v9870, 16
      %v9957 = vor.u32 %v9954, %v9955
      %v9958 = vsel %vm382, %v9950, %v9957
      %v9959 = vrot.slane %v9954, 4
      %v9961 = vshrl.u32 %v9871, 16
      %v9963 = vrot.slane %v9961, 7
      %v9964 = vshll.u32 %v9871, 16
      %v9966 = vor.u32 %v9963, %v9964
      %v9967 = vsel %vm382, %v9959, %v9966
      %v9968 = vrot.slane %v9963, 4
      %v9970 = vshrl.u32 %v9872, 16
      %v9972 = vrot.slane %v9970, 7
      %v9973 = vshll.u32 %v9872, 16
      %v9975 = vor.u32 %v9972, %v9973
      %v9976 = vsel %vm382, %v9968, %v9975
      %v9977 = vrot.slane %v9972, 4
      %v9979 = vshrl.u32 %v9873, 16
      %v9981 = vrot.slane %v9979, 7
      %v9982 = vshll.u32 %v9873, 16
      %v9984 = vor.u32 %v9981, %v9982
      %v9985 = vsel %vm382, %v9977, %v9984
      %v9986 = vrot.slane %v9981, 4
      %v9988 = vshrl.u32 %v9874, 16
      %v9990 = vrot.slane %v9988, 7
      %v9991 = vshll.u32 %v9874, 16
      %v9993 = vor.u32 %v9990, %v9991
      %v9994 = vsel %vm382, %v9986, %v9993
      %v9995 = vrot.slane %v9990, 4
      %v9997 = vshrl.u32 %v9875, 16
      %v9999 = vrot.slane %v9997, 7
      %v10000 = vshll.u32 %v9875, 16
      %v10002 = vor.u32 %v9999, %v10000
      %v10003 = vsel %vm382, %v9995, %v10002
      %v10004 = vrot.slane %v9999, 4
      %v10006 = vshrl.u32 %v9876, 16
      %v10008 = vrot.slane %v10006, 7
      %v10009 = vshll.u32 %v9876, 16
      %v10011 = vor.u32 %v10008, %v10009
      %v10012 = vsel %vm382, %v10004, %v10011
      %v10013 = vrot.slane %v10008, 4
      %v10015 = vshrl.u32 %v9877, 16
      %v10017 = vrot.slane %v10015, 7
      %v10018 = vshll.u32 %v9877, 16
      %v10020 = vor.u32 %v10017, %v10018
      %v10021 = vsel %vm382, %v10013, %v10020
      %v10022 = vrot.slane %v10017, 4
      %v10024 = vshrl.u32 %v9878, 16
      %v10026 = vrot.slane %v10024, 7
      %v10027 = vshll.u32 %v9878, 16
      %v10029 = vor.u32 %v10026, %v10027
      %v10030 = vsel %vm382, %v10022, %v10029
      %v10031 = vrot.slane %v10026, 4
      %v10033 = vshrl.u32 %v9879, 16
      %v10035 = vrot.slane %v10033, 7
      %v10036 = vshll.u32 %v9879, 16
      %v10038 = vor.u32 %v10035, %v10036
      %v10039 = vsel %vm382, %v10031, %v10038
      %v10040 = vrot.slane %v10035, 4
      %v10042 = vshrl.u32 %v9880, 16
      %v10044 = vrot.slane %v10042, 7
      %v10045 = vshll.u32 %v9880, 16
      %v10047 = vor.u32 %v10044, %v10045
      %v10048 = vsel %vm382, %v10040, %v10047
      %v10049 = vrot.slane %v10044, 4
      %v10051 = vshrl.u32 %v9881, 16
      %v10053 = vrot.slane %v10051, 7
      %v10054 = vshll.u32 %v9881, 16
      %v10056 = vor.u32 %v10053, %v10054
      %v10057 = vsel %vm382, %v10049, %v10056
      %v10058 = vrot.slane %v10053, 4
      %v10060 = vshrl.u32 %v9882, 16
      %v10062 = vrot.slane %v10060, 7
      %v10063 = vshll.u32 %v9882, 16
      %v10065 = vor.u32 %v10062, %v10063
      %v10066 = vsel %vm382, %v10058, %v10065
      %v10067 = vrot.slane %v10062, 4
      %v10069 = vshrl.u32 %v9883, 16
      %v10071 = vrot.slane %v10069, 7
      %v10072 = vshll.u32 %v9883, 16
      %v10074 = vor.u32 %v10071, %v10072
      %v10075 = vsel %vm382, %v10067, %v10074
      %v10076 = vrot.slane %v10071, 4
      %v10078 = vshrl.u32 %v9884, 16
      %v10080 = vrot.slane %v10078, 7
      %v10081 = vshll.u32 %v9884, 16
      %v10083 = vor.u32 %v10080, %v10081
      %v10084 = vsel %vm382, %v10076, %v10083
      %v10085 = vrot.slane %v10080, 4
      %v10087 = vshrl.u32 %v9885, 16
      %v10089 = vrot.slane %v10087, 7
      %v10090 = vshll.u32 %v9885, 16
      %v10092 = vor.u32 %v10089, %v10090
      %v10093 = vsel %vm382, %v10085, %v10092
      %v10094 = vrot.slane %v10089, 4
      %v10096 = vshrl.u32 %v9886, 16
      %v10098 = vrot.slane %v10096, 7
      %v10099 = vshll.u32 %v9886, 16
      %v10101 = vor.u32 %v10098, %v10099
      %v10102 = vsel %vm382, %v10094, %v10101
      %v10103 = vrot.slane %v10098, 4
      %v10105 = vshrl.u32 %v9887, 16
      %v10107 = vrot.slane %v10105, 7
      %v10108 = vshll.u32 %v9887, 16
      %v10110 = vor.u32 %v10107, %v10108
      %v10111 = vsel %vm382, %v10103, %v10110
      %v10112 = vrot.slane %v10107, 4
      %v10114 = vshrl.u32 %v9888, 16
      %v10116 = vrot.slane %v10114, 7
      %v10117 = vshll.u32 %v9888, 16
      %v10119 = vor.u32 %v10116, %v10117
      %v10120 = vsel %vm382, %v10112, %v10119
      %v10121 = vrot.slane %v10116, 4
      %v10123 = vshrl.u32 %v9889, 16
      %v10125 = vrot.slane %v10123, 7
      %v10126 = vshll.u32 %v9889, 16
      %v10128 = vor.u32 %v10125, %v10126
      %v10129 = vsel %vm382, %v10121, %v10128
      %v10130 = vrot.slane %v10125, 4
      %v10132 = vshrl.u32 %v9890, 16
      %v10134 = vrot.slane %v10132, 7
      %v10135 = vshll.u32 %v9890, 16
      %v10137 = vor.u32 %v10134, %v10135
      %v10138 = vsel %vm382, %v10130, %v10137
      %v10139 = vrot.slane %v10134, 4
      %v10141 = vshrl.u32 %v9891, 16
      %v10143 = vrot.slane %v10141, 7
      %v10144 = vshll.u32 %v9891, 16
      %v10146 = vor.u32 %v10143, %v10144
      %v10147 = vsel %vm382, %v10139, %v10146
      %v10148 = vrot.slane %v10143, 4
      %v10150 = vshrl.u32 %v9892, 16
      %v10152 = vrot.slane %v10150, 7
      %v10153 = vshll.u32 %v9892, 16
      %v10155 = vor.u32 %v10152, %v10153
      %v10156 = vsel %vm382, %v10148, %v10155
      %v10157 = vrot.slane %v10152, 4
      %v10159 = vshrl.u32 %v9893, 16
      %v10161 = vrot.slane %v10159, 7
      %v10162 = vshll.u32 %v9893, 16
      %v10164 = vor.u32 %v10161, %v10162
      %v10165 = vsel %vm382, %v10157, %v10164
      %v10166 = vrot.slane %v10161, 4
      %v10168 = vshrl.u32 %v9894, 16
      %v10170 = vrot.slane %v10168, 7
      %v10171 = vshll.u32 %v9894, 16
      %v10173 = vor.u32 %v10170, %v10171
      %v10174 = vsel %vm382, %v10166, %v10173
      %v10175 = vrot.slane %v10170, 4
      %v10177 = vshrl.u32 %v9895, 16
      %v10179 = vrot.slane %v10177, 7
      %v10180 = vshll.u32 %v9895, 16
      %v10182 = vor.u32 %v10179, %v10180
      %v10183 = vsel %vm382, %v10175, %v10182
      %v10184 = vrot.slane %v10179, 4
      %v10186 = vshrl.u32 %v9896, 16
      %v10188 = vrot.slane %v10186, 7
      %v10189 = vshll.u32 %v9896, 16
      %v10191 = vor.u32 %v10188, %v10189
      %v10192 = vsel %vm382, %v10184, %v10191
      %v10193 = vrot.slane %v10188, 4
      %v10195 = vshrl.u32 %v9897, 16
      %v10197 = vrot.slane %v10195, 7
      %v10198 = vshll.u32 %v9897, 16
      %v10200 = vor.u32 %v10197, %v10198
      %v10201 = vsel %vm382, %v10193, %v10200
      %v10202 = vrot.slane %v10197, 4
      %v10204 = vshrl.u32 %v9898, 16
      %v10206 = vrot.slane %v10204, 7
      %v10207 = vshll.u32 %v9898, 16
      %v10209 = vor.u32 %v10206, %v10207
      %v10210 = vsel %vm382, %v10202, %v10209
      %v10211 = vrot.slane %v10206, 4
      %v10213 = vshrl.u32 %v9899, 16
      %v10215 = vrot.slane %v10213, 7
      %v10216 = vshll.u32 %v9899, 16
      %v10218 = vor.u32 %v10215, %v10216
      %v10219 = vsel %vm382, %v10211, %v10218
      %v10220 = vrot.slane %v10215, 4
      %v10222 = vshrl.u32 %v9900, 16
      %v10224 = vrot.slane %v10222, 7
      %v10225 = vshll.u32 %v9900, 16
      %v10227 = vor.u32 %v10224, %v10225
      %v10228 = vsel %vm382, %v10220, %v10227
      %v10229 = vrot.slane %v10224, 4
      %v10231 = vshrl.u32 %v9901, 16
      %v10233 = vrot.slane %v10231, 7
      %v10234 = vshll.u32 %v9901, 16
      %v10236 = vor.u32 %v10233, %v10234
      %v10237 = vsel %vm382, %v10229, %v10236
      %v10238 = vrot.slane %v10233, 4
      %v10240 = vshrl.u32 %v9902, 16
      %v10242 = vrot.slane %v10240, 7
      %v10243 = vshll.u32 %v9902, 16
      %v10245 = vor.u32 %v10242, %v10243
      %v10246 = vsel %vm382, %v10238, %v10245
      %v10247 = vrot.slane %v10242, 4
      %v10249 = vshrl.u32 %v9903, 16
      %v10251 = vrot.slane %v10249, 7
      %v10252 = vshll.u32 %v9903, 16
      %v10254 = vor.u32 %v10251, %v10252
      %v10255 = vsel %vm382, %v10247, %v10254
      %v10256 = vrot.slane %v10251, 4
      %v10258 = vshrl.u32 %v9904, 16
      %v10260 = vrot.slane %v10258, 7
      %v10261 = vshll.u32 %v9904, 16
      %v10263 = vor.u32 %v10260, %v10261
      %v10264 = vsel %vm382, %v10256, %v10263
      %v10265 = vrot.slane %v10260, 4
      %v10267 = vshrl.u32 %v9905, 16
      %v10269 = vrot.slane %v10267, 7
      %v10270 = vshll.u32 %v9905, 16
      %v10272 = vor.u32 %v10269, %v10270
      %v10273 = vsel %vm382, %v10265, %v10272
      %v10315 = vsel %vm6221, %v9906, %v9913
      %v10316 = vsel %vm6221, %v7958, %v9922
      %v10317 = vsel %vm6221, %v7959, %v9931
      %v10318 = vsel %vm6221, %v7960, %v9940
      %v10319 = vsel %vm6221, %v7961, %v9949
      %v10320 = vsel %vm6221, %v7962, %v9958
      %v10321 = vsel %vm6221, %v7963, %v9967
      %v10322 = vsel %vm6221, %v7964, %v9976
      %v10323 = vsel %vm6221, %v7965, %v9985
      %v10324 = vsel %vm6221, %v7966, %v9994
      %v10325 = vsel %vm6221, %v7967, %v10003
      %v10326 = vsel %vm6221, %v7968, %v10012
      %v10327 = vsel %vm6221, %v7969, %v10021
      %v10328 = vsel %vm6221, %v7970, %v10030
      %v10329 = vsel %vm6221, %v7971, %v10039
      %v10330 = vsel %vm6221, %v7972, %v10048
      %v10331 = vsel %vm6221, %v7973, %v10057
      %v10332 = vsel %vm6221, %v7974, %v10066
      %v10333 = vsel %vm6221, %v7975, %v10075
      %v10334 = vsel %vm6221, %v7976, %v10084
      %v10335 = vsel %vm6221, %v7977, %v10093
      %v10336 = vsel %vm6221, %v7978, %v10102
      %v10337 = vsel %vm6221, %v7979, %v10111
      %v10338 = vsel %vm6221, %v7980, %v10120
      %v10339 = vsel %vm6221, %v7981, %v10129
      %v10340 = vsel %vm6221, %v7982, %v10138
      %v10341 = vsel %vm6221, %v7983, %v10147
      %v10342 = vsel %vm6221, %v7984, %v10156
      %v10343 = vsel %vm6221, %v7985, %v10165
      %v10344 = vsel %vm6221, %v7986, %v10174
      %v10345 = vsel %vm6221, %v7987, %v10183
      %v10346 = vsel %vm6221, %v7988, %v10192
      %v10347 = vsel %vm6221, %v7989, %v10201
      %v10348 = vsel %vm6221, %v7990, %v10210
      %v10349 = vsel %vm6221, %v7991, %v10219
      %v10350 = vsel %vm6221, %v7992, %v10228
      %v10351 = vsel %vm6221, %v8912, %v10237
      %v10352 = vsel %vm6221, %v8913, %v10246
      %v10353 = vsel %vm6221, %v9862, %v10255
      %v10354 = vsel %vm6221, %v9863, %v10264
      %v10355 = vsel %vm6221, %v9864, %v10273
      %v10356 = vld [vmem:[#allocation2 + $0xb4] sm:$0xf]
      %v10358 = vshrl.u32 %v10315, 16
      %v10360 = vrot.slane %v10358, 7
      %v10361 = vshll.u32 %v10315, 16
      %v10363 = vor.u32 %v10360, %v10361
      %v10364 = vrot.slane %v10360, 4
      %v10366 = vshrl.u32 %v10316, 16
      %v10368 = vrot.slane %v10366, 7
      %v10369 = vshll.u32 %v10316, 16
      %v10371 = vor.u32 %v10368, %v10369
      %v10372 = vsel %vm382, %v10364, %v10371
      %v10373 = vrot.slane %v10368, 4
      %v10375 = vshrl.u32 %v10317, 16
      %v10377 = vrot.slane %v10375, 7
      %v10378 = vshll.u32 %v10317, 16
      %v10380 = vor.u32 %v10377, %v10378
      %v10381 = vsel %vm382, %v10373, %v10380
      %v10382 = vrot.slane %v10377, 4
      %v10384 = vshrl.u32 %v10318, 16
      %v10386 = vrot.slane %v10384, 7
      %v10387 = vshll.u32 %v10318, 16
      %v10389 = vor.u32 %v10386, %v10387
      %v10390 = vsel %vm382, %v10382, %v10389
      %v10391 = vrot.slane %v10386, 4
      %v10393 = vshrl.u32 %v10319, 16
      %v10395 = vrot.slane %v10393, 7
      %v10396 = vshll.u32 %v10319, 16
      %v10398 = vor.u32 %v10395, %v10396
      %v10399 = vsel %vm382, %v10391, %v10398
      %v10400 = vrot.slane %v10395, 4
      %v10402 = vshrl.u32 %v10320, 16
      %v10404 = vrot.slane %v10402, 7
      %v10405 = vshll.u32 %v10320, 16
      %v10407 = vor.u32 %v10404, %v10405
      %v10408 = vsel %vm382, %v10400, %v10407
      %v10409 = vrot.slane %v10404, 4
      %v10411 = vshrl.u32 %v10321, 16
      %v10413 = vrot.slane %v10411, 7
      %v10414 = vshll.u32 %v10321, 16
      %v10416 = vor.u32 %v10413, %v10414
      %v10417 = vsel %vm382, %v10409, %v10416
      %v10418 = vrot.slane %v10413, 4
      %v10420 = vshrl.u32 %v10322, 16
      %v10422 = vrot.slane %v10420, 7
      %v10423 = vshll.u32 %v10322, 16
      %v10425 = vor.u32 %v10422, %v10423
      %v10426 = vsel %vm382, %v10418, %v10425
      %v10427 = vrot.slane %v10422, 4
      %v10429 = vshrl.u32 %v10323, 16
      %v10431 = vrot.slane %v10429, 7
      %v10432 = vshll.u32 %v10323, 16
      %v10434 = vor.u32 %v10431, %v10432
      %v10435 = vsel %vm382, %v10427, %v10434
      %v10436 = vrot.slane %v10431, 4
      %v10438 = vshrl.u32 %v10324, 16
      %v10440 = vrot.slane %v10438, 7
      %v10441 = vshll.u32 %v10324, 16
      %v10443 = vor.u32 %v10440, %v10441
      %v10444 = vsel %vm382, %v10436, %v10443
      %v10445 = vrot.slane %v10440, 4
      %v10447 = vshrl.u32 %v10325, 16
      %v10449 = vrot.slane %v10447, 7
      %v10450 = vshll.u32 %v10325, 16
      %v10452 = vor.u32 %v10449, %v10450
      %v10453 = vsel %vm382, %v10445, %v10452
      %v10454 = vrot.slane %v10449, 4
      %v10456 = vshrl.u32 %v10326, 16
      %v10458 = vrot.slane %v10456, 7
      %v10459 = vshll.u32 %v10326, 16
      %v10461 = vor.u32 %v10458, %v10459
      %v10462 = vsel %vm382, %v10454, %v10461
      %v10463 = vrot.slane %v10458, 4
      %v10465 = vshrl.u32 %v10327, 16
      %v10467 = vrot.slane %v10465, 7
      %v10468 = vshll.u32 %v10327, 16
      %v10470 = vor.u32 %v10467, %v10468
      %v10471 = vsel %vm382, %v10463, %v10470
      %v10472 = vrot.slane %v10467, 4
      %v10474 = vshrl.u32 %v10328, 16
      %v10476 = vrot.slane %v10474, 7
      %v10477 = vshll.u32 %v10328, 16
      %v10479 = vor.u32 %v10476, %v10477
      %v10480 = vsel %vm382, %v10472, %v10479
      %v10481 = vrot.slane %v10476, 4
      %v10483 = vshrl.u32 %v10329, 16
      %v10485 = vrot.slane %v10483, 7
      %v10486 = vshll.u32 %v10329, 16
      %v10488 = vor.u32 %v10485, %v10486
      %v10489 = vsel %vm382, %v10481, %v10488
      %v10490 = vrot.slane %v10485, 4
      %v10492 = vshrl.u32 %v10330, 16
      %v10494 = vrot.slane %v10492, 7
      %v10495 = vshll.u32 %v10330, 16
      %v10497 = vor.u32 %v10494, %v10495
      %v10498 = vsel %vm382, %v10490, %v10497
      %v10499 = vrot.slane %v10494, 4
      %v10501 = vshrl.u32 %v10331, 16
      %v10503 = vrot.slane %v10501, 7
      %v10504 = vshll.u32 %v10331, 16
      %v10506 = vor.u32 %v10503, %v10504
      %v10507 = vsel %vm382, %v10499, %v10506
      %v10508 = vrot.slane %v10503, 4
      %v10510 = vshrl.u32 %v10332, 16
      %v10512 = vrot.slane %v10510, 7
      %v10513 = vshll.u32 %v10332, 16
      %v10515 = vor.u32 %v10512, %v10513
      %v10516 = vsel %vm382, %v10508, %v10515
      %v10517 = vrot.slane %v10512, 4
      %v10519 = vshrl.u32 %v10333, 16
      %v10521 = vrot.slane %v10519, 7
      %v10522 = vshll.u32 %v10333, 16
      %v10524 = vor.u32 %v10521, %v10522
      %v10525 = vsel %vm382, %v10517, %v10524
      %v10526 = vrot.slane %v10521, 4
      %v10528 = vshrl.u32 %v10334, 16
      %v10530 = vrot.slane %v10528, 7
      %v10531 = vshll.u32 %v10334, 16
      %v10533 = vor.u32 %v10530, %v10531
      %v10534 = vsel %vm382, %v10526, %v10533
      %v10535 = vrot.slane %v10530, 4
      %v10537 = vshrl.u32 %v10335, 16
      %v10539 = vrot.slane %v10537, 7
      %v10540 = vshll.u32 %v10335, 16
      %v10542 = vor.u32 %v10539, %v10540
      %v10543 = vsel %vm382, %v10535, %v10542
      %v10544 = vrot.slane %v10539, 4
      %v10546 = vshrl.u32 %v10336, 16
      %v10548 = vrot.slane %v10546, 7
      %v10549 = vshll.u32 %v10336, 16
      %v10551 = vor.u32 %v10548, %v10549
      %v10552 = vsel %vm382, %v10544, %v10551
      %v10553 = vrot.slane %v10548, 4
      %v10555 = vshrl.u32 %v10337, 16
      %v10557 = vrot.slane %v10555, 7
      %v10558 = vshll.u32 %v10337, 16
      %v10560 = vor.u32 %v10557, %v10558
      %v10561 = vsel %vm382, %v10553, %v10560
      %v10562 = vrot.slane %v10557, 4
      %v10564 = vshrl.u32 %v10338, 16
      %v10566 = vrot.slane %v10564, 7
      %v10567 = vshll.u32 %v10338, 16
      %v10569 = vor.u32 %v10566, %v10567
      %v10570 = vsel %vm382, %v10562, %v10569
      %v10571 = vrot.slane %v10566, 4
      %v10573 = vshrl.u32 %v10339, 16
      %v10575 = vrot.slane %v10573, 7
      %v10576 = vshll.u32 %v10339, 16
      %v10578 = vor.u32 %v10575, %v10576
      %v10579 = vsel %vm382, %v10571, %v10578
      %v10580 = vrot.slane %v10575, 4
      %v10582 = vshrl.u32 %v10340, 16
      %v10584 = vrot.slane %v10582, 7
      %v10585 = vshll.u32 %v10340, 16
      %v10587 = vor.u32 %v10584, %v10585
      %v10588 = vsel %vm382, %v10580, %v10587
      %v10589 = vrot.slane %v10584, 4
      %v10591 = vshrl.u32 %v10341, 16
      %v10593 = vrot.slane %v10591, 7
      %v10594 = vshll.u32 %v10341, 16
      %v10596 = vor.u32 %v10593, %v10594
      %v10597 = vsel %vm382, %v10589, %v10596
      %v10598 = vrot.slane %v10593, 4
      %v10600 = vshrl.u32 %v10342, 16
      %v10602 = vrot.slane %v10600, 7
      %v10603 = vshll.u32 %v10342, 16
      %v10605 = vor.u32 %v10602, %v10603
      %v10606 = vsel %vm382, %v10598, %v10605
      %v10607 = vrot.slane %v10602, 4
      %v10609 = vshrl.u32 %v10343, 16
      %v10611 = vrot.slane %v10609, 7
      %v10612 = vshll.u32 %v10343, 16
      %v10614 = vor.u32 %v10611, %v10612
      %v10615 = vsel %vm382, %v10607, %v10614
      %v10616 = vrot.slane %v10611, 4
      %v10618 = vshrl.u32 %v10344, 16
      %v10620 = vrot.slane %v10618, 7
      %v10621 = vshll.u32 %v10344, 16
      %v10623 = vor.u32 %v10620, %v10621
      %v10624 = vsel %vm382, %v10616, %v10623
      %v10625 = vrot.slane %v10620, 4
      %v10627 = vshrl.u32 %v10345, 16
      %v10629 = vrot.slane %v10627, 7
      %v10630 = vshll.u32 %v10345, 16
      %v10632 = vor.u32 %v10629, %v10630
      %v10633 = vsel %vm382, %v10625, %v10632
      %v10634 = vrot.slane %v10629, 4
      %v10636 = vshrl.u32 %v10346, 16
      %v10638 = vrot.slane %v10636, 7
      %v10639 = vshll.u32 %v10346, 16
      %v10641 = vor.u32 %v10638, %v10639
      %v10642 = vsel %vm382, %v10634, %v10641
      %v10643 = vrot.slane %v10638, 4
      %v10645 = vshrl.u32 %v10347, 16
      %v10647 = vrot.slane %v10645, 7
      %v10648 = vshll.u32 %v10347, 16
      %v10650 = vor.u32 %v10647, %v10648
      %v10651 = vsel %vm382, %v10643, %v10650
      %v10652 = vrot.slane %v10647, 4
      %v10654 = vshrl.u32 %v10348, 16
      %v10656 = vrot.slane %v10654, 7
      %v10657 = vshll.u32 %v10348, 16
      %v10659 = vor.u32 %v10656, %v10657
      %v10660 = vsel %vm382, %v10652, %v10659
      %v10661 = vrot.slane %v10656, 4
      %v10663 = vshrl.u32 %v10349, 16
      %v10665 = vrot.slane %v10663, 7
      %v10666 = vshll.u32 %v10349, 16
      %v10668 = vor.u32 %v10665, %v10666
      %v10669 = vsel %vm382, %v10661, %v10668
      %v10670 = vrot.slane %v10665, 4
      %v10672 = vshrl.u32 %v10350, 16
      %v10674 = vrot.slane %v10672, 7
      %v10675 = vshll.u32 %v10350, 16
      %v10677 = vor.u32 %v10674, %v10675
      %v10678 = vsel %vm382, %v10670, %v10677
      %v10679 = vrot.slane %v10674, 4
      %v10681 = vshrl.u32 %v10351, 16
      %v10683 = vrot.slane %v10681, 7
      %v10684 = vshll.u32 %v10351, 16
      %v10686 = vor.u32 %v10683, %v10684
      %v10687 = vsel %vm382, %v10679, %v10686
      %v10688 = vrot.slane %v10683, 4
      %v10690 = vshrl.u32 %v10352, 16
      %v10692 = vrot.slane %v10690, 7
      %v10693 = vshll.u32 %v10352, 16
      %v10695 = vor.u32 %v10692, %v10693
      %v10696 = vsel %vm382, %v10688, %v10695
      %v10697 = vrot.slane %v10692, 4
      %v10699 = vshrl.u32 %v10353, 16
      %v10701 = vrot.slane %v10699, 7
      %v10702 = vshll.u32 %v10353, 16
      %v10704 = vor.u32 %v10701, %v10702
      %v10705 = vsel %vm382, %v10697, %v10704
      %v10706 = vrot.slane %v10701, 4
      %v10708 = vshrl.u32 %v10354, 16
      %v10710 = vrot.slane %v10708, 7
      %v10711 = vshll.u32 %v10354, 16
      %v10713 = vor.u32 %v10710, %v10711
      %v10714 = vsel %vm382, %v10706, %v10713
      %v10715 = vrot.slane %v10710, 4
      %v10717 = vshrl.u32 %v10355, 16
      %v10719 = vrot.slane %v10717, 7
      %v10720 = vshll.u32 %v10355, 16
      %v10722 = vor.u32 %v10719, %v10720
      %v10723 = vsel %vm382, %v10715, %v10722
      %v10765 = vsel %vm6675, %v9906, %v10363
      %v10766 = vsel %vm6675, %v7958, %v10372
      %v10767 = vsel %vm6675, %v7959, %v10381
      %v10768 = vsel %vm6675, %v7960, %v10390
      %v10769 = vsel %vm6675, %v7961, %v10399
      %v10770 = vsel %vm6675, %v7962, %v10408
      %v10771 = vsel %vm6675, %v7963, %v10417
      %v10772 = vsel %vm6675, %v7964, %v10426
      %v10773 = vsel %vm6675, %v7965, %v10435
      %v10774 = vsel %vm6675, %v7966, %v10444
      %v10775 = vsel %vm6675, %v7967, %v10453
      %v10776 = vsel %vm6675, %v7968, %v10462
      %v10777 = vsel %vm6675, %v7969, %v10471
      %v10778 = vsel %vm6675, %v7970, %v10480
      %v10779 = vsel %vm6675, %v7971, %v10489
      %v10780 = vsel %vm6675, %v7972, %v10498
      %v10781 = vsel %vm6675, %v7973, %v10507
      %v10782 = vsel %vm6675, %v7974, %v10516
      %v10783 = vsel %vm6675, %v7975, %v10525
      %v10784 = vsel %vm6675, %v7976, %v10534
      %v10785 = vsel %vm6675, %v7977, %v10543
      %v10786 = vsel %vm6675, %v7978, %v10552
      %v10787 = vsel %vm6675, %v7979, %v10561
      %v10788 = vsel %vm6675, %v7980, %v10570
      %v10789 = vsel %vm6675, %v7981, %v10579
      %v10790 = vsel %vm6675, %v7982, %v10588
      %v10791 = vsel %vm6675, %v7983, %v10597
      %v10792 = vsel %vm6675, %v7984, %v10606
      %v10793 = vsel %vm6675, %v7985, %v10615
      %v10794 = vsel %vm6675, %v7986, %v10624
      %v10795 = vsel %vm6675, %v7987, %v10633
      %v10796 = vsel %vm6675, %v7988, %v10642
      %v10797 = vsel %vm6675, %v7989, %v10651
      %v10798 = vsel %vm6675, %v7990, %v10660
      %v10799 = vsel %vm6675, %v7991, %v10669
      %v10800 = vsel %vm6675, %v7992, %v10678
      %v10801 = vsel %vm6675, %v8912, %v10687
      %v10802 = vsel %vm6675, %v8913, %v10696
      %v10803 = vsel %vm6675, %v9862, %v10705
      %v10804 = vsel %vm6675, %v9863, %v10714
      %v10805 = vsel %vm6675, %v10356, %v10723
      %v10806 = vld [vmem:[%s3] sm:$0xf]
      %v10807 = vld [vmem:[%s3 + $0x4] sm:$0xf]
      %v10808 = vld [vmem:[%s3 + $0x8] sm:$0xf]
      %v10809 = vld [vmem:[%s3 + $0xc] sm:$0xf]
      %v10810 = vld [vmem:[%s3 + $0x10] sm:$0xf]
      %v10811 = vld [vmem:[%s3 + $0x14] sm:$0xf]
      %v10812 = vld [vmem:[%s3 + $0x18] sm:$0xf]
      %v10813 = vld [vmem:[%s3 + $0x1c] sm:$0xf]
      %v10814 = vld [vmem:[%s3 + $0x20] sm:$0xf]
      %v10815 = vld [vmem:[%s3 + $0x24] sm:$0xf]
      %v10816 = vld [vmem:[%s3 + $0x28] sm:$0xf]
      %v10817 = vld [vmem:[%s3 + $0x2c] sm:$0xf]
      %v10818 = vld [vmem:[%s3 + $0x30] sm:$0xf]
      %v10819 = vld [vmem:[%s3 + $0x34] sm:$0xf]
      %v10820 = vld [vmem:[%s3 + $0x38] sm:$0xf]
      %v10821 = vld [vmem:[%s3 + $0x3c] sm:$0xf]
      %v10822 = vlaneseq
      %v10823 = vshrl.u32 %v10822, 7
      %v10824 = vsub.s32 2, %v10823
      %v10825 = vrot.slane %v325, %v10824
      %v10867 = vunpack.c.l.b16 %v10765
      %v10868 = vunpack.c.l.b16 %v10766
      %v10869 = vunpack.c.l.b16 %v10767
      %v10870 = vunpack.c.l.b16 %v10768
      %v10871 = vunpack.c.l.b16 %v10769
      %v10872 = vunpack.c.l.b16 %v10770
      %v10873 = vunpack.c.l.b16 %v10771
      %v10874 = vunpack.c.l.b16 %v10772
      %v10875 = vunpack.c.l.b16 %v10773
      %v10876 = vunpack.c.l.b16 %v10774
      %v10877 = vunpack.c.l.b16 %v10775
      %v10878 = vunpack.c.l.b16 %v10776
      %v10879 = vunpack.c.l.b16 %v10777
      %v10880 = vunpack.c.l.b16 %v10778
      %v10881 = vunpack.c.l.b16 %v10779
      %v10882 = vunpack.c.l.b16 %v10780
      %v10883 = vunpack.c.l.b16 %v10781
      %v10884 = vunpack.c.l.b16 %v10782
      %v10885 = vunpack.c.l.b16 %v10783
      %v10886 = vunpack.c.l.b16 %v10784
      %v10887 = vunpack.c.l.b16 %v10785
      %v10888 = vunpack.c.l.b16 %v10786
      %v10889 = vunpack.c.l.b16 %v10787
      %v10890 = vunpack.c.l.b16 %v10788
      %v10891 = vunpack.c.l.b16 %v10789
      %v10892 = vunpack.c.l.b16 %v10790
      %v10893 = vunpack.c.l.b16 %v10791
      %v10894 = vunpack.c.l.b16 %v10792
      %v10895 = vunpack.c.l.b16 %v10793
      %v10896 = vunpack.c.l.b16 %v10794
      %v10897 = vunpack.c.l.b16 %v10795
      %v10898 = vunpack.c.l.b16 %v10796
      %v10899 = vunpack.c.l.b16 %v10797
      %v10900 = vunpack.c.l.b16 %v10798
      %v10901 = vunpack.c.l.b16 %v10799
      %v10902 = vunpack.c.l.b16 %v10800
      %v10903 = vunpack.c.l.b16 %v10801
      %v10904 = vunpack.c.l.b16 %v10802
      %v10905 = vunpack.c.l.b16 %v10803
      %v10906 = vunpack.c.l.b16 %v10804
      %v10907 = vunpack.c.l.b16 %v10805
      %v10908 = vpack.c.b16 %v10868, %v10867
      %v10909 = vpack.c.b16 %v10870, %v10869
      %v10910 = vpack.c.b16 %v10872, %v10871
      %v10911 = vpack.c.b16 %v10874, %v10873
      %v10912 = vpack.c.b16 %v10876, %v10875
      %v10913 = vpack.c.b16 %v10878, %v10877
      %v10914 = vpack.c.b16 %v10880, %v10879
      %v10915 = vpack.c.b16 %v10882, %v10881
      %v10916 = vpack.c.b16 %v10884, %v10883
      %v10917 = vpack.c.b16 %v10886, %v10885
      %v10918 = vpack.c.b16 %v10888, %v10887
      %v10919 = vpack.c.b16 %v10890, %v10889
      %v10920 = vpack.c.b16 %v10892, %v10891
      %v10921 = vpack.c.b16 %v10894, %v10893
      %v10922 = vpack.c.b16 %v10896, %v10895
      %v10923 = vpack.c.b16 %v10898, %v10897
      %v10924 = vpack.c.b16 %v10900, %v10899
      %v10925 = vpack.c.b16 %v10902, %v10901
      %v10926 = vpack.c.b16 %v10904, %v10903
      %v10927 = vpack.c.b16 %v10906, %v10905
      %v10928 = vpack.c.b16 %v10907, %v10907
      %v10930 = vshrl.u32 %v10908, 16
      %v10932 = vrot.slane %v10930, 1
      %v10933 = vshll.u32 %v10908, 16
      %v10935 = vrot.slane %v10933, 2
      %v10936 = vor.u32 %v10932, %v10935
      %v10938 = vshrl.u32 %v10909, 16
      %v10940 = vrot.slane %v10938, 1
      %v10941 = vshll.u32 %v10909, 16
      %v10943 = vrot.slane %v10941, 2
      %v10944 = vor.u32 %v10940, %v10943
      %v10945 = vsel %vm3345, %v10936, %v10944
      %v10947 = vshrl.u32 %v10910, 16
      %v10949 = vrot.slane %v10947, 1
      %v10950 = vshll.u32 %v10910, 16
      %v10952 = vrot.slane %v10950, 2
      %v10953 = vor.u32 %v10949, %v10952
      %v10954 = vsel %vm3345, %v10944, %v10953
      %v10956 = vshrl.u32 %v10911, 16
      %v10958 = vrot.slane %v10956, 1
      %v10959 = vshll.u32 %v10911, 16
      %v10961 = vrot.slane %v10959, 2
      %v10962 = vor.u32 %v10958, %v10961
      %v10963 = vsel %vm3345, %v10953, %v10962
      %v10965 = vshrl.u32 %v10912, 16
      %v10967 = vrot.slane %v10965, 1
      %v10968 = vshll.u32 %v10912, 16
      %v10970 = vrot.slane %v10968, 2
      %v10971 = vor.u32 %v10967, %v10970
      %v10972 = vsel %vm3345, %v10962, %v10971
      %v10974 = vshrl.u32 %v10913, 16
      %v10976 = vrot.slane %v10974, 1
      %v10977 = vshll.u32 %v10913, 16
      %v10979 = vrot.slane %v10977, 2
      %v10980 = vor.u32 %v10976, %v10979
      %v10981 = vsel %vm3345, %v10971, %v10980
      %v10983 = vshrl.u32 %v10914, 16
      %v10985 = vrot.slane %v10983, 1
      %v10986 = vshll.u32 %v10914, 16
      %v10988 = vrot.slane %v10986, 2
      %v10989 = vor.u32 %v10985, %v10988
      %v10990 = vsel %vm3345, %v10980, %v10989
      %v10992 = vshrl.u32 %v10915, 16
      %v10994 = vrot.slane %v10992, 1
      %v10995 = vshll.u32 %v10915, 16
      %v10997 = vrot.slane %v10995, 2
      %v10998 = vor.u32 %v10994, %v10997
      %v10999 = vsel %vm3345, %v10989, %v10998
      %v11001 = vshrl.u32 %v10916, 16
      %v11003 = vrot.slane %v11001, 1
      %v11004 = vshll.u32 %v10916, 16
      %v11006 = vrot.slane %v11004, 2
      %v11007 = vor.u32 %v11003, %v11006
      %v11008 = vsel %vm3345, %v10998, %v11007
      %v11010 = vshrl.u32 %v10917, 16
      %v11012 = vrot.slane %v11010, 1
      %v11013 = vshll.u32 %v10917, 16
      %v11015 = vrot.slane %v11013, 2
      %v11016 = vor.u32 %v11012, %v11015
      %v11017 = vsel %vm3345, %v11007, %v11016
      %v11019 = vshrl.u32 %v10918, 16
      %v11021 = vrot.slane %v11019, 1
      %v11022 = vshll.u32 %v10918, 16
      %v11024 = vrot.slane %v11022, 2
      %v11025 = vor.u32 %v11021, %v11024
      %v11026 = vsel %vm3345, %v11016, %v11025
      %v11028 = vshrl.u32 %v10919, 16
      %v11030 = vrot.slane %v11028, 1
      %v11031 = vshll.u32 %v10919, 16
      %v11033 = vrot.slane %v11031, 2
      %v11034 = vor.u32 %v11030, %v11033
      %v11035 = vsel %vm3345, %v11025, %v11034
      %v11037 = vshrl.u32 %v10920, 16
      %v11039 = vrot.slane %v11037, 1
      %v11040 = vshll.u32 %v10920, 16
      %v11042 = vrot.slane %v11040, 2
      %v11043 = vor.u32 %v11039, %v11042
      %v11044 = vsel %vm3345, %v11034, %v11043
      %v11046 = vshrl.u32 %v10921, 16
      %v11048 = vrot.slane %v11046, 1
      %v11049 = vshll.u32 %v10921, 16
      %v11051 = vrot.slane %v11049, 2
      %v11052 = vor.u32 %v11048, %v11051
      %v11053 = vsel %vm3345, %v11043, %v11052
      %v11055 = vshrl.u32 %v10922, 16
      %v11057 = vrot.slane %v11055, 1
      %v11058 = vshll.u32 %v10922, 16
      %v11060 = vrot.slane %v11058, 2
      %v11061 = vor.u32 %v11057, %v11060
      %v11062 = vsel %vm3345, %v11052, %v11061
      %v11064 = vshrl.u32 %v10923, 16
      %v11066 = vrot.slane %v11064, 1
      %v11067 = vshll.u32 %v10923, 16
      %v11069 = vrot.slane %v11067, 2
      %v11070 = vor.u32 %v11066, %v11069
      %v11071 = vsel %vm3345, %v11061, %v11070
      %v11073 = vshrl.u32 %v10924, 16
      %v11075 = vrot.slane %v11073, 1
      %v11076 = vshll.u32 %v10924, 16
      %v11078 = vrot.slane %v11076, 2
      %v11079 = vor.u32 %v11075, %v11078
      %v11080 = vsel %vm3345, %v11070, %v11079
      %v11082 = vshrl.u32 %v10925, 16
      %v11084 = vrot.slane %v11082, 1
      %v11085 = vshll.u32 %v10925, 16
      %v11087 = vrot.slane %v11085, 2
      %v11088 = vor.u32 %v11084, %v11087
      %v11089 = vsel %vm3345, %v11079, %v11088
      %v11091 = vshrl.u32 %v10926, 16
      %v11093 = vrot.slane %v11091, 1
      %v11094 = vshll.u32 %v10926, 16
      %v11096 = vrot.slane %v11094, 2
      %v11097 = vor.u32 %v11093, %v11096
      %v11098 = vsel %vm3345, %v11088, %v11097
      %v11100 = vshrl.u32 %v10927, 16
      %v11102 = vrot.slane %v11100, 1
      %v11103 = vshll.u32 %v10927, 16
      %v11105 = vrot.slane %v11103, 2
      %v11106 = vor.u32 %v11102, %v11105
      %v11107 = vsel %vm3345, %v11097, %v11106
      %v11109 = vshrl.u32 %v10928, 16
      %v11111 = vrot.slane %v11109, 1
      %v11112 = vshll.u32 %v10928, 16
      %v11114 = vrot.slane %v11112, 2
      %v11115 = vor.u32 %v11111, %v11114
      %v11116 = vsel %vm3345, %v11106, %v11115
      %v11154 = vunpack.c.l.b16 %v10806
      %v11155 = vunpack.c.l.b16 %v10807
      %v11156 = vunpack.c.l.b16 %v10808
      %v11157 = vunpack.c.l.b16 %v10809
      %v11158 = vunpack.c.l.b16 %v10810
      %v11159 = vunpack.c.l.b16 %v10811
      %v11160 = vunpack.c.l.b16 %v10812
      %v11161 = vunpack.c.l.b16 %v10813
      %v11162 = vunpack.c.l.b16 %v10814
      %v11163 = vunpack.c.l.b16 %v10815
      %v11164 = vunpack.c.l.b16 %v10816
      %v11165 = vunpack.c.l.b16 %v10817
      %v11166 = vunpack.c.l.b16 %v10818
      %v11167 = vunpack.c.l.b16 %v10819
      %v11168 = vunpack.c.l.b16 %v10820
      %v11169 = vunpack.c.l.b16 %v10821
      %v11170 = vpack.c.b16 %v11155, %v11154
      %v11171 = vpack.c.b16 %v11157, %v11156
      %v11172 = vpack.c.b16 %v11159, %v11158
      %v11173 = vpack.c.b16 %v11161, %v11160
      %v11174 = vpack.c.b16 %v11163, %v11162
      %v11175 = vpack.c.b16 %v11165, %v11164
      %v11176 = vpack.c.b16 %v11167, %v11166
      %v11177 = vpack.c.b16 %v11169, %v11168
      %11186 = vmatprep.subr.bf16.mxu0 0
      %11187 = vmatpush1.bf16.msra.mxu0 %v11177
      %11188 = vmatprep.subr.bf16.mxu0 0
      %11189 = vmatpush1.bf16.msra.mxu0 %v11176
      %11190 = vmatprep.subr.bf16.mxu0 0
      %11191 = vmatpush1.bf16.msra.mxu0 %v11175
      %11192 = vmatprep.subr.bf16.mxu0 0
      %11193 = vmatpush1.bf16.msra.mxu0 %v11174
      %11194 = vmatprep.subr.bf16.mxu0 0
      %11195 = vmatpush1.bf16.msra.mxu0 %v11173
      %11196 = vmatprep.subr.bf16.mxu0 0
      %11197 = vmatpush1.bf16.msra.mxu0 %v11172
      %11198 = vmatprep.subr.bf16.mxu0 0
      %11199 = vmatpush1.bf16.msra.mxu0 %v11171
      %11200 = vmatprep.subr.bf16.mxu0 0
      %11201 = vmatpush1.bf16.msra.mxu0 %v11170
      %11202 = vmatprep.subr.bf16.mxu0 0
      %11203 = vmatpush2.bf16.msra.mxu0 0
      %11204 = vmatprep.subr.bf16.mxu0 0
      %11205 = vmatpush2.bf16.msra.mxu0 0
      %11206 = vmatprep.subr.bf16.mxu0 0
      %11207 = vmatpush2.bf16.msra.mxu0 0
      %11208 = vmatprep.subr.bf16.mxu0 0
      %11209 = vmatpush2.bf16.msra.mxu0 0
      %11210 = vmatprep.subr.bf16.mxu0 0
      %11211 = vmatpush2.bf16.msra.mxu0 0
      %11212 = vmatprep.subr.bf16.mxu0 0
      %11213 = vmatpush2.bf16.msra.mxu0 0
      %11214 = vmatprep.subr.bf16.mxu0 0
      %11215 = vmatpush2.bf16.msra.mxu0 0
      %11216 = vmatprep.subr.bf16.mxu0 0
      %11217 = vmatpush2.bf16.msra.mxu0 0
      %11218 = vmatprep.mubr.bf16.mxu0 0
      %11219 = vmatmul.mubr.bf16.gmra.mxu0 %v10945
      %v11220 = vpop.f32.mrf.mxu0
      %v11221 = vadd.f32 %v10825, %v11220
      %v11222 = vpop.f32.mrf.mxu0
      %v11223 = vpop.f32.mrf.mxu0
      %v11224 = vadd.f32 %v10825, %v11223
      %v11225 = vpop.f32.mrf.mxu0
      %11226 = vmatprep.mubr.bf16.mxu0 0
      %11227 = vmatmul.mubr.bf16.gmra.mxu0 %v10954
      %v11228 = vpop.f32.mrf.mxu0
      %v11229 = vadd.f32 %v10825, %v11228
      %v11230 = vpop.f32.mrf.mxu0
      %v11231 = vpop.f32.mrf.mxu0
      %v11232 = vadd.f32 %v10825, %v11231
      %v11233 = vpop.f32.mrf.mxu0
      %11234 = vmatprep.mubr.bf16.mxu0 0
      %11235 = vmatmul.mubr.bf16.gmra.mxu0 %v10963
      %v11236 = vpop.f32.mrf.mxu0
      %v11237 = vadd.f32 %v10825, %v11236
      %v11238 = vpop.f32.mrf.mxu0
      %v11239 = vpop.f32.mrf.mxu0
      %v11240 = vadd.f32 %v10825, %v11239
      %v11241 = vpop.f32.mrf.mxu0
      %11242 = vmatprep.mubr.bf16.mxu0 0
      %11243 = vmatmul.mubr.bf16.gmra.mxu0 %v10972
      %v11244 = vpop.f32.mrf.mxu0
      %v11245 = vadd.f32 %v10825, %v11244
      %v11246 = vpop.f32.mrf.mxu0
      %v11247 = vpop.f32.mrf.mxu0
      %v11248 = vadd.f32 %v10825, %v11247
      %v11249 = vpop.f32.mrf.mxu0
      %11250 = vmatprep.mubr.bf16.mxu0 0
      %11251 = vmatmul.mubr.bf16.gmra.mxu0 %v10981
      %v11252 = vpop.f32.mrf.mxu0
      %v11253 = vadd.f32 %v10825, %v11252
      %v11254 = vpop.f32.mrf.mxu0
      %v11255 = vpop.f32.mrf.mxu0
      %v11256 = vadd.f32 %v10825, %v11255
      %v11257 = vpop.f32.mrf.mxu0
      %11258 = vmatprep.mubr.bf16.mxu0 0
      %11259 = vmatmul.mubr.bf16.gmra.mxu0 %v10990
      %v11260 = vpop.f32.mrf.mxu0
      %v11261 = vadd.f32 %v10825, %v11260
      %v11262 = vpop.f32.mrf.mxu0
      %v11263 = vpop.f32.mrf.mxu0
      %v11264 = vadd.f32 %v10825, %v11263
      %v11265 = vpop.f32.mrf.mxu0
      %11266 = vmatprep.mubr.bf16.mxu0 0
      %11267 = vmatmul.mubr.bf16.gmra.mxu0 %v10999
      %v11268 = vpop.f32.mrf.mxu0
      %v11269 = vadd.f32 %v10825, %v11268
      %v11270 = vpop.f32.mrf.mxu0
      %v11271 = vpop.f32.mrf.mxu0
      %v11272 = vadd.f32 %v10825, %v11271
      %v11273 = vpop.f32.mrf.mxu0
      %11274 = vmatprep.mubr.bf16.mxu0 0
      %11275 = vmatmul.mubr.bf16.gmra.mxu0 %v11008
      %v11276 = vpop.f32.mrf.mxu0
      %v11277 = vadd.f32 %v10825, %v11276
      %v11278 = vpop.f32.mrf.mxu0
      %v11279 = vpop.f32.mrf.mxu0
      %v11280 = vadd.f32 %v10825, %v11279
      %v11281 = vpop.f32.mrf.mxu0
      %11282 = vmatprep.mubr.bf16.mxu0 0
      %11283 = vmatmul.mubr.bf16.gmra.mxu0 %v11017
      %v11284 = vpop.f32.mrf.mxu0
      %v11285 = vadd.f32 %v10825, %v11284
      %v11286 = vpop.f32.mrf.mxu0
      %v11287 = vpop.f32.mrf.mxu0
      %v11288 = vadd.f32 %v10825, %v11287
      %v11289 = vpop.f32.mrf.mxu0
      %11290 = vmatprep.mubr.bf16.mxu0 0
      %11291 = vmatmul.mubr.bf16.gmra.mxu0 %v11026
      %v11292 = vpop.f32.mrf.mxu0
      %v11293 = vadd.f32 %v10825, %v11292
      %v11294 = vpop.f32.mrf.mxu0
      %v11295 = vpop.f32.mrf.mxu0
      %v11296 = vadd.f32 %v10825, %v11295
      %v11297 = vpop.f32.mrf.mxu0
      %11298 = vmatprep.mubr.bf16.mxu0 0
      %11299 = vmatmul.mubr.bf16.gmra.mxu0 %v11035
      %v11300 = vpop.f32.mrf.mxu0
      %v11301 = vadd.f32 %v10825, %v11300
      %v11302 = vpop.f32.mrf.mxu0
      %v11303 = vpop.f32.mrf.mxu0
      %v11304 = vadd.f32 %v10825, %v11303
      %v11305 = vpop.f32.mrf.mxu0
      %11306 = vmatprep.mubr.bf16.mxu0 0
      %11307 = vmatmul.mubr.bf16.gmra.mxu0 %v11044
      %v11308 = vpop.f32.mrf.mxu0
      %v11309 = vadd.f32 %v10825, %v11308
      %v11310 = vpop.f32.mrf.mxu0
      %v11311 = vpop.f32.mrf.mxu0
      %v11312 = vadd.f32 %v10825, %v11311
      %v11313 = vpop.f32.mrf.mxu0
      %11314 = vmatprep.mubr.bf16.mxu0 0
      %11315 = vmatmul.mubr.bf16.gmra.mxu0 %v11053
      %v11316 = vpop.f32.mrf.mxu0
      %v11317 = vadd.f32 %v10825, %v11316
      %v11318 = vpop.f32.mrf.mxu0
      %v11319 = vpop.f32.mrf.mxu0
      %v11320 = vadd.f32 %v10825, %v11319
      %v11321 = vpop.f32.mrf.mxu0
      %11322 = vmatprep.mubr.bf16.mxu0 0
      %11323 = vmatmul.mubr.bf16.gmra.mxu0 %v11062
      %v11324 = vpop.f32.mrf.mxu0
      %v11325 = vadd.f32 %v10825, %v11324
      %v11326 = vpop.f32.mrf.mxu0
      %v11327 = vpop.f32.mrf.mxu0
      %v11328 = vadd.f32 %v10825, %v11327
      %v11329 = vpop.f32.mrf.mxu0
      %11330 = vmatprep.mubr.bf16.mxu0 0
      %11331 = vmatmul.mubr.bf16.gmra.mxu0 %v11071
      %v11332 = vpop.f32.mrf.mxu0
      %v11333 = vadd.f32 %v10825, %v11332
      %v11334 = vpop.f32.mrf.mxu0
      %v11335 = vpop.f32.mrf.mxu0
      %v11336 = vadd.f32 %v10825, %v11335
      %v11337 = vpop.f32.mrf.mxu0
      %11338 = vmatprep.mubr.bf16.mxu0 0
      %11339 = vmatmul.mubr.bf16.gmra.mxu0 %v11080
      %v11340 = vpop.f32.mrf.mxu0
      %v11341 = vadd.f32 %v10825, %v11340
      %v11342 = vpop.f32.mrf.mxu0
      %v11343 = vpop.f32.mrf.mxu0
      %v11344 = vadd.f32 %v10825, %v11343
      %v11345 = vpop.f32.mrf.mxu0
      %11346 = vmatprep.mubr.bf16.mxu0 0
      %11347 = vmatmul.mubr.bf16.gmra.mxu0 %v11089
      %v11348 = vpop.f32.mrf.mxu0
      %v11349 = vadd.f32 %v10825, %v11348
      %v11350 = vpop.f32.mrf.mxu0
      %v11351 = vpop.f32.mrf.mxu0
      %v11352 = vadd.f32 %v10825, %v11351
      %v11353 = vpop.f32.mrf.mxu0
      %11354 = vmatprep.mubr.bf16.mxu0 0
      %11355 = vmatmul.mubr.bf16.gmra.mxu0 %v11098
      %v11356 = vpop.f32.mrf.mxu0
      %v11357 = vadd.f32 %v10825, %v11356
      %v11358 = vpop.f32.mrf.mxu0
      %v11359 = vpop.f32.mrf.mxu0
      %v11360 = vadd.f32 %v10825, %v11359
      %v11361 = vpop.f32.mrf.mxu0
      %11362 = vmatprep.mubr.bf16.mxu0 0
      %11363 = vmatmul.mubr.bf16.gmra.mxu0 %v11107
      %v11364 = vpop.f32.mrf.mxu0
      %v11365 = vadd.f32 %v10825, %v11364
      %v11366 = vpop.f32.mrf.mxu0
      %v11367 = vpop.f32.mrf.mxu0
      %v11368 = vadd.f32 %v10825, %v11367
      %v11369 = vpop.f32.mrf.mxu0
      %11370 = vmatprep.mubr.bf16.mxu0 0
      %11371 = vmatmul.mubr.bf16.gmra.mxu0 %v11116
      %v11372 = vpop.f32.mrf.mxu0
      %v11373 = vadd.f32 %v10825, %v11372
      %v11374 = vpop.f32.mrf.mxu0
      %v11375 = vpop.f32.mrf.mxu0
      %v11376 = vadd.f32 %v10825, %v11375
      %v11377 = vpop.f32.mrf.mxu0
      %11378 = vmatprep.mubr.bf16.mxu0 0
      %11379 = vmatmul.mubr.bf16.gmra.mxu0 %v11115
      %v11380 = vpop.f32.mrf.mxu0
      %v11381 = vadd.f32 %v10825, %v11380
      %v11382 = vpop.f32.mrf.mxu0
      %v11383 = vpop.f32.mrf.mxu0
      %v11384 = vpop.f32.mrf.mxu0
      %11385 = vdwg.mxu0
      %v11386 = vpack.c.bf16 %v11224, %v11221
      %v11387 = vpack.c.bf16 %v11232, %v11229
      %v11388 = vpack.c.bf16 %v11240, %v11237
      %v11389 = vpack.c.bf16 %v11248, %v11245
      %v11390 = vpack.c.bf16 %v11256, %v11253
      %v11391 = vpack.c.bf16 %v11264, %v11261
      %v11392 = vpack.c.bf16 %v11272, %v11269
      %v11393 = vpack.c.bf16 %v11280, %v11277
      %v11394 = vpack.c.bf16 %v11288, %v11285
      %v11395 = vpack.c.bf16 %v11296, %v11293
      %v11396 = vpack.c.bf16 %v11304, %v11301
      %v11397 = vpack.c.bf16 %v11312, %v11309
      %v11398 = vpack.c.bf16 %v11320, %v11317
      %v11399 = vpack.c.bf16 %v11328, %v11325
      %v11400 = vpack.c.bf16 %v11336, %v11333
      %v11401 = vpack.c.bf16 %v11344, %v11341
      %v11402 = vpack.c.bf16 %v11352, %v11349
      %v11403 = vpack.c.bf16 %v11360, %v11357
      %v11404 = vpack.c.bf16 %v11368, %v11365
      %v11405 = vpack.c.bf16 %v11376, %v11373
      %v11406 = vpack.c.bf16 %v11381, %v11381
      %v11407 = vld [vmem:[%s273 + $0xc] sm:$0xf]
      %v11408 = vld [vmem:[%s273 + $0x10] sm:$0xf]
      %v11409 = vld [vmem:[%s273 + $0x14] sm:$0xf]
      %v11410 = vld [vmem:[%s273 + $0x18] sm:$0xf]
      %v11411 = vld [vmem:[%s273 + $0x1c] sm:$0xf]
      %v11412 = vld [vmem:[%s273 + $0x20] sm:$0xf]
      %v11413 = vld [vmem:[%s273 + $0x24] sm:$0xf]
      %v11414 = vld [vmem:[%s273 + $0x28] sm:$0xf]
      %v11415 = vld [vmem:[%s273 + $0x2c] sm:$0xf]
      %v11416 = vld [vmem:[%s273 + $0x30] sm:$0xf]
      %v11417 = vld [vmem:[%s273 + $0x34] sm:$0xf]
      %v11418 = vld [vmem:[%s273 + $0x38] sm:$0xf]
      %v11419 = vld [vmem:[%s273 + $0x3c] sm:$0xf]
      %v11420 = vld [vmem:[%s273 + $0x40] sm:$0xf]
      %v11421 = vld [vmem:[%s273 + $0x44] sm:$0xf]
      %v11422 = vld [vmem:[%s273 + $0x48] sm:$0xf]
      %v11423 = vld [vmem:[%s273 + $0x4c] sm:$0xf]
      %v11424 = vld [vmem:[%s273 + $0x50] sm:$0xf]
      %v11425 = vld [vmem:[%s273 + $0x54] sm:$0xf]
      %v11426 = vld [vmem:[%s273 + $0x58] sm:$0xf]
      %v11427 = vld [vmem:[%s273 + $0x5c] sm:$0xf]
      %v11428 = vld [vmem:[%s273 + $0x60] sm:$0xf]
      %v11429 = vld [vmem:[%s273 + $0x64] sm:$0xf]
      %v11430 = vld [vmem:[%s273 + $0x68] sm:$0xf]
      %v11431 = vld [vmem:[%s273 + $0x6c] sm:$0xf]
      %v11432 = vld [vmem:[%s273 + $0x70] sm:$0xf]
      %v11433 = vld [vmem:[%s273 + $0x74] sm:$0xf]
      %v11434 = vld [vmem:[%s273 + $0x78] sm:$0xf]
      %v11435 = vld [vmem:[%s273 + $0x7c] sm:$0xf]
      %v11436 = vld [vmem:[%s273 + $0x80] sm:$0xf]
      %v11437 = vld [vmem:[%s273 + $0x84] sm:$0xf]
      %v11438 = vld [vmem:[%s273 + $0x88] sm:$0xf]
      %v11439 = vld [vmem:[%s273 + $0x8c] sm:$0xf]
      %v11440 = vld [vmem:[%s273 + $0x90] sm:$0xf]
      %v11441 = vld [vmem:[%s273 + $0x94] sm:$0xf]
      %v11442 = vld [vmem:[%s273 + $0x98] sm:$0xf]
      %v11443 = vld [vmem:[%s273 + $0x9c] sm:$0xf]
      %v11444 = vld [vmem:[%s273 + $0xa0] sm:$0xf]
      %v11445 = vld [vmem:[%s273 + $0xa4] sm:$0xf]
      %v11446 = vld [vmem:[%s273 + $0xa8] sm:$0xf]
      %v11447 = vld [vmem:[%s273 + $0xac] sm:$0x3]
      %vm11448 = vcmp.lt.s32.totalorder %v283, 4
      %vm11449 = vcmp.lt.s32.totalorder %v283, 12
      %vm11450 = vcmp.lt.s32.totalorder %v283, 20
      %v11451 = vsel %vm11450, 1, 0
      %vm11452 = vcmp.eq.s32.totalorder %v11451, 1
      %vm11453 = vmpackc.low %vm11452, %vm11452
      %v11454 = vsel %vm11453, 65537, 0
      %v11455 = vlaneseq
      %v11456 = vshrl.u32 %v11455, 7
      %v11457 = vsub.s32 0, %v11456
      %v11458 = vrot.slane %v11454, %v11457
      %vm11459 = vcmp.ne.s16.totalorder %v11458, 0
      %v11460 = vsel %vm11459, %v7746, %v11386
      %v11461 = vsel %vm11459, %v7747, %v11387
      %v11462 = vsel %vm11459, %v7748, %v11388
      %v11463 = vsel %vm11459, %v7749, %v11389
      %v11464 = vsel %vm11459, %v7750, %v11390
      %v11465 = vsel %vm11459, %v7751, %v11391
      %v11466 = vsel %vm11459, %v7752, %v11392
      %v11467 = vsel %vm11459, %v7753, %v11393
      %v11468 = vsel %vm11459, %v7754, %v11394
      %v11469 = vsel %vm11459, %v7755, %v11395
      %v11470 = vsel %vm11459, %v7756, %v11396
      %v11471 = vsel %vm11459, %v7757, %v11397
      %v11472 = vsel %vm11459, %v7758, %v11398
      %v11473 = vsel %vm11459, %v7759, %v11399
      %v11474 = vsel %vm11459, %v7760, %v11400
      %v11475 = vsel %vm11459, %v7761, %v11401
      %v11476 = vsel %vm11459, %v7762, %v11402
      %v11477 = vsel %vm11459, %v7763, %v11403
      %v11478 = vsel %vm11459, %v7764, %v11404
      %v11479 = vsel %vm11459, %v7765, %v11405
      %v11480 = vsel %vm11459, %v7766, %v11406
      %v11481 = vsel %vm11449, 1, 0
      %vm11482 = vcmp.eq.s32.totalorder %v11481, 1
      %vm11483 = vmpackc.low %vm11482, %vm11482
      %v11484 = vsel %vm11483, 65537, 0
      %v11485 = vlaneseq
      %v11486 = vshrl.u32 %v11485, 7
      %v11487 = vsub.s32 0, %v11486
      %v11488 = vrot.slane %v11484, %v11487
      %vm11489 = vcmp.ne.s16.totalorder %v11488, 0
      %v11490 = vsel %vm11489, %v4049, %v11460
      %v11491 = vsel %vm11489, %v4050, %v11461
      %v11492 = vsel %vm11489, %v4051, %v11462
      %v11493 = vsel %vm11489, %v4052, %v11463
      %v11494 = vsel %vm11489, %v4053, %v11464
      %v11495 = vsel %vm11489, %v4054, %v11465
      %v11496 = vsel %vm11489, %v4055, %v11466
      %v11497 = vsel %vm11489, %v4056, %v11467
      %v11498 = vsel %vm11489, %v4057, %v11468
      %v11499 = vsel %vm11489, %v4058, %v11469
      %v11500 = vsel %vm11489, %v4059, %v11470
      %v11501 = vsel %vm11489, %v4060, %v11471
      %v11502 = vsel %vm11489, %v4061, %v11472
      %v11503 = vsel %vm11489, %v4062, %v11473
      %v11504 = vsel %vm11489, %v4063, %v11474
      %v11505 = vsel %vm11489, %v4064, %v11475
      %v11506 = vsel %vm11489, %v4065, %v11476
      %v11507 = vsel %vm11489, %v4066, %v11477
      %v11508 = vsel %vm11489, %v4067, %v11478
      %v11509 = vsel %vm11489, %v4068, %v11479
      %v11510 = vsel %vm11489, %v4069, %v11480
      %v11511 = vsel %vm11448, 1, 0
      %vm11512 = vcmp.eq.s32.totalorder %v11511, 1
      %vm11513 = vmpackc.low %vm11512, %vm11512
      %v11535 = vunpack.c.l.b16 %v11490
      %v11536 = vunpack.c.h.b16 %v11490
      %v11537 = vunpack.c.l.b16 %v11491
      %v11538 = vunpack.c.h.b16 %v11491
      %v11539 = vunpack.c.l.b16 %v11492
      %v11540 = vunpack.c.h.b16 %v11492
      %v11541 = vunpack.c.l.b16 %v11493
      %v11542 = vunpack.c.h.b16 %v11493
      %v11543 = vunpack.c.l.b16 %v11494
      %v11544 = vunpack.c.h.b16 %v11494
      %v11545 = vunpack.c.l.b16 %v11495
      %v11546 = vunpack.c.h.b16 %v11495
      %v11547 = vunpack.c.l.b16 %v11496
      %v11548 = vunpack.c.h.b16 %v11496
      %v11549 = vunpack.c.l.b16 %v11497
      %v11550 = vunpack.c.h.b16 %v11497
      %v11551 = vunpack.c.l.b16 %v11498
      %v11552 = vunpack.c.h.b16 %v11498
      %v11553 = vunpack.c.l.b16 %v11499
      %v11554 = vunpack.c.h.b16 %v11499
      %v11555 = vunpack.c.l.b16 %v11500
      %v11556 = vunpack.c.h.b16 %v11500
      %v11557 = vunpack.c.l.b16 %v11501
      %v11558 = vunpack.c.h.b16 %v11501
      %v11559 = vunpack.c.l.b16 %v11502
      %v11560 = vunpack.c.h.b16 %v11502
      %v11561 = vunpack.c.l.b16 %v11503
      %v11562 = vunpack.c.h.b16 %v11503
      %v11563 = vunpack.c.l.b16 %v11504
      %v11564 = vunpack.c.h.b16 %v11504
      %v11565 = vunpack.c.l.b16 %v11505
      %v11566 = vunpack.c.h.b16 %v11505
      %v11567 = vunpack.c.l.b16 %v11506
      %v11568 = vunpack.c.h.b16 %v11506
      %v11569 = vunpack.c.l.b16 %v11507
      %v11570 = vunpack.c.h.b16 %v11507
      %v11571 = vunpack.c.l.b16 %v11508
      %v11572 = vunpack.c.h.b16 %v11508
      %v11573 = vunpack.c.l.b16 %v11509
      %v11574 = vunpack.c.h.b16 %v11509
      %v11575 = vunpack.c.l.b16 %v11510
      %v11576 = vpack.c.b16 %v11535, %v11535
      %v11577 = vpack.c.b16 %v11536, %v11536
      %v11578 = vpack.c.b16 %v11537, %v11537
      %v11579 = vpack.c.b16 %v11538, %v11538
      %v11580 = vpack.c.b16 %v11539, %v11539
      %v11581 = vpack.c.b16 %v11540, %v11540
      %v11582 = vpack.c.b16 %v11541, %v11541
      %v11583 = vpack.c.b16 %v11542, %v11542
      %v11584 = vpack.c.b16 %v11543, %v11543
      %v11585 = vpack.c.b16 %v11544, %v11544
      %v11586 = vpack.c.b16 %v11545, %v11545
      %v11587 = vpack.c.b16 %v11546, %v11546
      %v11588 = vpack.c.b16 %v11547, %v11547
      %v11589 = vpack.c.b16 %v11548, %v11548
      %v11590 = vpack.c.b16 %v11549, %v11549
      %v11591 = vpack.c.b16 %v11550, %v11550
      %v11592 = vpack.c.b16 %v11551, %v11551
      %v11593 = vpack.c.b16 %v11552, %v11552
      %v11594 = vpack.c.b16 %v11553, %v11553
      %v11595 = vpack.c.b16 %v11554, %v11554
      %v11596 = vpack.c.b16 %v11555, %v11555
      %v11597 = vpack.c.b16 %v11556, %v11556
      %v11598 = vpack.c.b16 %v11557, %v11557
      %v11599 = vpack.c.b16 %v11558, %v11558
      %v11600 = vpack.c.b16 %v11559, %v11559
      %v11601 = vpack.c.b16 %v11560, %v11560
      %v11602 = vpack.c.b16 %v11561, %v11561
      %v11603 = vpack.c.b16 %v11562, %v11562
      %v11604 = vpack.c.b16 %v11563, %v11563
      %v11605 = vpack.c.b16 %v11564, %v11564
      %v11606 = vpack.c.b16 %v11565, %v11565
      %v11607 = vpack.c.b16 %v11566, %v11566
      %v11608 = vpack.c.b16 %v11567, %v11567
      %v11609 = vpack.c.b16 %v11568, %v11568
      %v11610 = vpack.c.b16 %v11569, %v11569
      %v11611 = vpack.c.b16 %v11570, %v11570
      %v11612 = vpack.c.b16 %v11571, %v11571
      %v11613 = vpack.c.b16 %v11572, %v11572
      %v11614 = vpack.c.b16 %v11573, %v11573
      %v11615 = vpack.c.b16 %v11574, %v11574
      %v11616 = vpack.c.b16 %v11575, %v11575
      %v11658 = vsel %vm11513, %v11407, %v11576
      %v11659 = vsel %vm11513, %v11408, %v11577
      %v11660 = vsel %vm11513, %v11409, %v11578
      %v11661 = vsel %vm11513, %v11410, %v11579
      %v11662 = vsel %vm11513, %v11411, %v11580
      %v11663 = vsel %vm11513, %v11412, %v11581
      %v11664 = vsel %vm11513, %v11413, %v11582
      %v11665 = vsel %vm11513, %v11414, %v11583
      %v11666 = vsel %vm11513, %v11415, %v11584
      %v11667 = vsel %vm11513, %v11416, %v11585
      %v11668 = vsel %vm11513, %v11417, %v11586
      %v11669 = vsel %vm11513, %v11418, %v11587
      %v11670 = vsel %vm11513, %v11419, %v11588
      %v11671 = vsel %vm11513, %v11420, %v11589
      %v11672 = vsel %vm11513, %v11421, %v11590
      %v11673 = vsel %vm11513, %v11422, %v11591
      %v11674 = vsel %vm11513, %v11423, %v11592
      %v11675 = vsel %vm11513, %v11424, %v11593
      %v11676 = vsel %vm11513, %v11425, %v11594
      %v11677 = vsel %vm11513, %v11426, %v11595
      %v11678 = vsel %vm11513, %v11427, %v11596
      %v11679 = vsel %vm11513, %v11428, %v11597
      %v11680 = vsel %vm11513, %v11429, %v11598
      %v11681 = vsel %vm11513, %v11430, %v11599
      %v11682 = vsel %vm11513, %v11431, %v11600
      %v11683 = vsel %vm11513, %v11432, %v11601
      %v11684 = vsel %vm11513, %v11433, %v11602
      %v11685 = vsel %vm11513, %v11434, %v11603
      %v11686 = vsel %vm11513, %v11435, %v11604
      %v11687 = vsel %vm11513, %v11436, %v11605
      %v11688 = vsel %vm11513, %v11437, %v11606
      %v11689 = vsel %vm11513, %v11438, %v11607
      %v11690 = vsel %vm11513, %v11439, %v11608
      %v11691 = vsel %vm11513, %v11440, %v11609
      %v11692 = vsel %vm11513, %v11441, %v11610
      %v11693 = vsel %vm11513, %v11442, %v11611
      %v11694 = vsel %vm11513, %v11443, %v11612
      %v11695 = vsel %vm11513, %v11444, %v11613
      %v11696 = vsel %vm11513, %v11445, %v11614
      %v11697 = vsel %vm11513, %v11446, %v11615
      %v11698 = vsel %vm11513, %v11447, %v11616
      %v11699 = vld [vmem:[%s4] sm:$0xf]
      %v11700 = vld [vmem:[%s4 + $0x4] sm:$0xf]
      %v11701 = vld [vmem:[%s4 + $0x8] sm:$0xf]
      %v11702 = vld [vmem:[%s4 + $0xc] sm:$0xf]
      %v11703 = vld [vmem:[%s4 + $0x10] sm:$0xf]
      %v11704 = vld [vmem:[%s4 + $0x14] sm:$0xf]
      %v11705 = vld [vmem:[%s4 + $0x18] sm:$0xf]
      %v11706 = vld [vmem:[%s4 + $0x1c] sm:$0xf]
      %v11707 = vld [vmem:[%s4 + $0x20] sm:$0xf]
      %v11708 = vld [vmem:[%s4 + $0x24] sm:$0xf]
      %v11709 = vld [vmem:[%s4 + $0x28] sm:$0xf]
      %v11710 = vld [vmem:[%s4 + $0x2c] sm:$0xf]
      %v11711 = vld [vmem:[%s4 + $0x30] sm:$0xf]
      %v11712 = vld [vmem:[%s4 + $0x34] sm:$0xf]
      %v11713 = vld [vmem:[%s4 + $0x38] sm:$0xf]
      %v11714 = vld [vmem:[%s4 + $0x3c] sm:$0xf]
      %v11715 = vlaneseq
      %v11716 = vshrl.u32 %v11715, 7
      %v11717 = vsub.s32 3, %v11716
      %v11718 = vrot.slane %v325, %v11717
      %v11760 = vunpack.c.l.b16 %v11658
      %v11761 = vunpack.c.l.b16 %v11659
      %v11762 = vunpack.c.l.b16 %v11660
      %v11763 = vunpack.c.l.b16 %v11661
      %v11764 = vunpack.c.l.b16 %v11662
      %v11765 = vunpack.c.l.b16 %v11663
      %v11766 = vunpack.c.l.b16 %v11664
      %v11767 = vunpack.c.l.b16 %v11665
      %v11768 = vunpack.c.l.b16 %v11666
      %v11769 = vunpack.c.l.b16 %v11667
      %v11770 = vunpack.c.l.b16 %v11668
      %v11771 = vunpack.c.l.b16 %v11669
      %v11772 = vunpack.c.l.b16 %v11670
      %v11773 = vunpack.c.l.b16 %v11671
      %v11774 = vunpack.c.l.b16 %v11672
      %v11775 = vunpack.c.l.b16 %v11673
      %v11776 = vunpack.c.l.b16 %v11674
      %v11777 = vunpack.c.l.b16 %v11675
      %v11778 = vunpack.c.l.b16 %v11676
      %v11779 = vunpack.c.l.b16 %v11677
      %v11780 = vunpack.c.l.b16 %v11678
      %v11781 = vunpack.c.l.b16 %v11679
      %v11782 = vunpack.c.l.b16 %v11680
      %v11783 = vunpack.c.l.b16 %v11681
      %v11784 = vunpack.c.l.b16 %v11682
      %v11785 = vunpack.c.l.b16 %v11683
      %v11786 = vunpack.c.l.b16 %v11684
      %v11787 = vunpack.c.l.b16 %v11685
      %v11788 = vunpack.c.l.b16 %v11686
      %v11789 = vunpack.c.l.b16 %v11687
      %v11790 = vunpack.c.l.b16 %v11688
      %v11791 = vunpack.c.l.b16 %v11689
      %v11792 = vunpack.c.l.b16 %v11690
      %v11793 = vunpack.c.l.b16 %v11691
      %v11794 = vunpack.c.l.b16 %v11692
      %v11795 = vunpack.c.l.b16 %v11693
      %v11796 = vunpack.c.l.b16 %v11694
      %v11797 = vunpack.c.l.b16 %v11695
      %v11798 = vunpack.c.l.b16 %v11696
      %v11799 = vunpack.c.l.b16 %v11697
      %v11800 = vunpack.c.l.b16 %v11698
      %v11801 = vpack.c.b16 %v11761, %v11760
      %v11802 = vpack.c.b16 %v11763, %v11762
      %v11803 = vpack.c.b16 %v11765, %v11764
      %v11804 = vpack.c.b16 %v11767, %v11766
      %v11805 = vpack.c.b16 %v11769, %v11768
      %v11806 = vpack.c.b16 %v11771, %v11770
      %v11807 = vpack.c.b16 %v11773, %v11772
      %v11808 = vpack.c.b16 %v11775, %v11774
      %v11809 = vpack.c.b16 %v11777, %v11776
      %v11810 = vpack.c.b16 %v11779, %v11778
      %v11811 = vpack.c.b16 %v11781, %v11780
      %v11812 = vpack.c.b16 %v11783, %v11782
      %v11813 = vpack.c.b16 %v11785, %v11784
      %v11814 = vpack.c.b16 %v11787, %v11786
      %v11815 = vpack.c.b16 %v11789, %v11788
      %v11816 = vpack.c.b16 %v11791, %v11790
      %v11817 = vpack.c.b16 %v11793, %v11792
      %v11818 = vpack.c.b16 %v11795, %v11794
      %v11819 = vpack.c.b16 %v11797, %v11796
      %v11820 = vpack.c.b16 %v11799, %v11798
      %v11821 = vpack.c.b16 %v11800, %v11800
      %v11859 = vunpack.c.l.b16 %v11699
      %v11860 = vunpack.c.l.b16 %v11700
      %v11861 = vunpack.c.l.b16 %v11701
      %v11862 = vunpack.c.l.b16 %v11702
      %v11863 = vunpack.c.l.b16 %v11703
      %v11864 = vunpack.c.l.b16 %v11704
      %v11865 = vunpack.c.l.b16 %v11705
      %v11866 = vunpack.c.l.b16 %v11706
      %v11867 = vunpack.c.l.b16 %v11707
      %v11868 = vunpack.c.l.b16 %v11708
      %v11869 = vunpack.c.l.b16 %v11709
      %v11870 = vunpack.c.l.b16 %v11710
      %v11871 = vunpack.c.l.b16 %v11711
      %v11872 = vunpack.c.l.b16 %v11712
      %v11873 = vunpack.c.l.b16 %v11713
      %v11874 = vunpack.c.l.b16 %v11714
      %v11875 = vpack.c.b16 %v11860, %v11859
      %v11876 = vpack.c.b16 %v11862, %v11861
      %v11877 = vpack.c.b16 %v11864, %v11863
      %v11878 = vpack.c.b16 %v11866, %v11865
      %v11879 = vpack.c.b16 %v11868, %v11867
      %v11880 = vpack.c.b16 %v11870, %v11869
      %v11881 = vpack.c.b16 %v11872, %v11871
      %v11882 = vpack.c.b16 %v11874, %v11873
      %11891 = vmatprep.subr.bf16.mxu0 0
      %11892 = vmatpush1.bf16.msra.mxu0 %v11882
      %11893 = vmatprep.subr.bf16.mxu0 0
      %11894 = vmatpush1.bf16.msra.mxu0 %v11881
      %11895 = vmatprep.subr.bf16.mxu0 0
      %11896 = vmatpush1.bf16.msra.mxu0 %v11880
      %11897 = vmatprep.subr.bf16.mxu0 0
      %11898 = vmatpush1.bf16.msra.mxu0 %v11879
      %11899 = vmatprep.subr.bf16.mxu0 0
      %11900 = vmatpush1.bf16.msra.mxu0 %v11878
      %11901 = vmatprep.subr.bf16.mxu0 0
      %11902 = vmatpush1.bf16.msra.mxu0 %v11877
      %11903 = vmatprep.subr.bf16.mxu0 0
      %11904 = vmatpush1.bf16.msra.mxu0 %v11876
      %11905 = vmatprep.subr.bf16.mxu0 0
      %11906 = vmatpush1.bf16.msra.mxu0 %v11875
      %11907 = vmatprep.subr.bf16.mxu0 0
      %11908 = vmatpush2.bf16.msra.mxu0 0
      %11909 = vmatprep.subr.bf16.mxu0 0
      %11910 = vmatpush2.bf16.msra.mxu0 0
      %11911 = vmatprep.subr.bf16.mxu0 0
      %11912 = vmatpush2.bf16.msra.mxu0 0
      %11913 = vmatprep.subr.bf16.mxu0 0
      %11914 = vmatpush2.bf16.msra.mxu0 0
      %11915 = vmatprep.subr.bf16.mxu0 0
      %11916 = vmatpush2.bf16.msra.mxu0 0
      %11917 = vmatprep.subr.bf16.mxu0 0
      %11918 = vmatpush2.bf16.msra.mxu0 0
      %11919 = vmatprep.subr.bf16.mxu0 0
      %11920 = vmatpush2.bf16.msra.mxu0 0
      %11921 = vmatprep.subr.bf16.mxu0 0
      %11922 = vmatpush2.bf16.msra.mxu0 0
      %11923 = vmatprep.mubr.bf16.mxu0 0
      %11924 = vmatmul.mubr.bf16.gmra.mxu0 %v11801
      %v11925 = vpop.f32.mrf.mxu0
      %v11926 = vadd.f32 %v11718, %v11925
      %v11927 = vpop.f32.mrf.mxu0
      %v11928 = vpop.f32.mrf.mxu0
      %v11929 = vadd.f32 %v11718, %v11928
      %v11930 = vpop.f32.mrf.mxu0
      %11931 = vmatprep.mubr.bf16.mxu0 0
      %11932 = vmatmul.mubr.bf16.gmra.mxu0 %v11802
      %v11933 = vpop.f32.mrf.mxu0
      %v11934 = vadd.f32 %v11718, %v11933
      %v11935 = vpop.f32.mrf.mxu0
      %v11936 = vpop.f32.mrf.mxu0
      %v11937 = vadd.f32 %v11718, %v11936
      %v11938 = vpop.f32.mrf.mxu0
      %11939 = vmatprep.mubr.bf16.mxu0 0
      %11940 = vmatmul.mubr.bf16.gmra.mxu0 %v11803
      %v11941 = vpop.f32.mrf.mxu0
      %v11942 = vadd.f32 %v11718, %v11941
      %v11943 = vpop.f32.mrf.mxu0
      %v11944 = vpop.f32.mrf.mxu0
      %v11945 = vadd.f32 %v11718, %v11944
      %v11946 = vpop.f32.mrf.mxu0
      %11947 = vmatprep.mubr.bf16.mxu0 0
      %11948 = vmatmul.mubr.bf16.gmra.mxu0 %v11804
      %v11949 = vpop.f32.mrf.mxu0
      %v11950 = vadd.f32 %v11718, %v11949
      %v11951 = vpop.f32.mrf.mxu0
      %v11952 = vpop.f32.mrf.mxu0
      %v11953 = vadd.f32 %v11718, %v11952
      %v11954 = vpop.f32.mrf.mxu0
      %11955 = vmatprep.mubr.bf16.mxu0 0
      %11956 = vmatmul.mubr.bf16.gmra.mxu0 %v11805
      %v11957 = vpop.f32.mrf.mxu0
      %v11958 = vadd.f32 %v11718, %v11957
      %v11959 = vpop.f32.mrf.mxu0
      %v11960 = vpop.f32.mrf.mxu0
      %v11961 = vadd.f32 %v11718, %v11960
      %v11962 = vpop.f32.mrf.mxu0
      %11963 = vmatprep.mubr.bf16.mxu0 0
      %11964 = vmatmul.mubr.bf16.gmra.mxu0 %v11806
      %v11965 = vpop.f32.mrf.mxu0
      %v11966 = vadd.f32 %v11718, %v11965
      %v11967 = vpop.f32.mrf.mxu0
      %v11968 = vpop.f32.mrf.mxu0
      %v11969 = vadd.f32 %v11718, %v11968
      %v11970 = vpop.f32.mrf.mxu0
      %11971 = vmatprep.mubr.bf16.mxu0 0
      %11972 = vmatmul.mubr.bf16.gmra.mxu0 %v11807
      %v11973 = vpop.f32.mrf.mxu0
      %v11974 = vadd.f32 %v11718, %v11973
      %v11975 = vpop.f32.mrf.mxu0
      %v11976 = vpop.f32.mrf.mxu0
      %v11977 = vadd.f32 %v11718, %v11976
      %v11978 = vpop.f32.mrf.mxu0
      %11979 = vmatprep.mubr.bf16.mxu0 0
      %11980 = vmatmul.mubr.bf16.gmra.mxu0 %v11808
      %v11981 = vpop.f32.mrf.mxu0
      %v11982 = vadd.f32 %v11718, %v11981
      %v11983 = vpop.f32.mrf.mxu0
      %v11984 = vpop.f32.mrf.mxu0
      %v11985 = vadd.f32 %v11718, %v11984
      %v11986 = vpop.f32.mrf.mxu0
      %11987 = vmatprep.mubr.bf16.mxu0 0
      %11988 = vmatmul.mubr.bf16.gmra.mxu0 %v11809
      %v11989 = vpop.f32.mrf.mxu0
      %v11990 = vadd.f32 %v11718, %v11989
      %v11991 = vpop.f32.mrf.mxu0
      %v11992 = vpop.f32.mrf.mxu0
      %v11993 = vadd.f32 %v11718, %v11992
      %v11994 = vpop.f32.mrf.mxu0
      %11995 = vmatprep.mubr.bf16.mxu0 0
      %11996 = vmatmul.mubr.bf16.gmra.mxu0 %v11810
      %v11997 = vpop.f32.mrf.mxu0
      %v11998 = vadd.f32 %v11718, %v11997
      %v11999 = vpop.f32.mrf.mxu0
      %v12000 = vpop.f32.mrf.mxu0
      %v12001 = vadd.f32 %v11718, %v12000
      %v12002 = vpop.f32.mrf.mxu0
      %12003 = vmatprep.mubr.bf16.mxu0 0
      %12004 = vmatmul.mubr.bf16.gmra.mxu0 %v11811
      %v12005 = vpop.f32.mrf.mxu0
      %v12006 = vadd.f32 %v11718, %v12005
      %v12007 = vpop.f32.mrf.mxu0
      %v12008 = vpop.f32.mrf.mxu0
      %v12009 = vadd.f32 %v11718, %v12008
      %v12010 = vpop.f32.mrf.mxu0
      %12011 = vmatprep.mubr.bf16.mxu0 0
      %12012 = vmatmul.mubr.bf16.gmra.mxu0 %v11812
      %v12013 = vpop.f32.mrf.mxu0
      %v12014 = vadd.f32 %v11718, %v12013
      %v12015 = vpop.f32.mrf.mxu0
      %v12016 = vpop.f32.mrf.mxu0
      %v12017 = vadd.f32 %v11718, %v12016
      %v12018 = vpop.f32.mrf.mxu0
      %12019 = vmatprep.mubr.bf16.mxu0 0
      %12020 = vmatmul.mubr.bf16.gmra.mxu0 %v11813
      %v12021 = vpop.f32.mrf.mxu0
      %v12022 = vadd.f32 %v11718, %v12021
      %v12023 = vpop.f32.mrf.mxu0
      %v12024 = vpop.f32.mrf.mxu0
      %v12025 = vadd.f32 %v11718, %v12024
      %v12026 = vpop.f32.mrf.mxu0
      %12027 = vmatprep.mubr.bf16.mxu0 0
      %12028 = vmatmul.mubr.bf16.gmra.mxu0 %v11814
      %v12029 = vpop.f32.mrf.mxu0
      %v12030 = vadd.f32 %v11718, %v12029
      %v12031 = vpop.f32.mrf.mxu0
      %v12032 = vpop.f32.mrf.mxu0
      %v12033 = vadd.f32 %v11718, %v12032
      %v12034 = vpop.f32.mrf.mxu0
      %12035 = vmatprep.mubr.bf16.mxu0 0
      %12036 = vmatmul.mubr.bf16.gmra.mxu0 %v11815
      %v12037 = vpop.f32.mrf.mxu0
      %v12038 = vadd.f32 %v11718, %v12037
      %v12039 = vpop.f32.mrf.mxu0
      %v12040 = vpop.f32.mrf.mxu0
      %v12041 = vadd.f32 %v11718, %v12040
      %v12042 = vpop.f32.mrf.mxu0
      %12043 = vmatprep.mubr.bf16.mxu0 0
      %12044 = vmatmul.mubr.bf16.gmra.mxu0 %v11816
      %v12045 = vpop.f32.mrf.mxu0
      %v12046 = vadd.f32 %v11718, %v12045
      %v12047 = vpop.f32.mrf.mxu0
      %v12048 = vpop.f32.mrf.mxu0
      %v12049 = vadd.f32 %v11718, %v12048
      %v12050 = vpop.f32.mrf.mxu0
      %12051 = vmatprep.mubr.bf16.mxu0 0
      %12052 = vmatmul.mubr.bf16.gmra.mxu0 %v11817
      %v12053 = vpop.f32.mrf.mxu0
      %v12054 = vadd.f32 %v11718, %v12053
      %v12055 = vpop.f32.mrf.mxu0
      %v12056 = vpop.f32.mrf.mxu0
      %v12057 = vadd.f32 %v11718, %v12056
      %v12058 = vpop.f32.mrf.mxu0
      %12059 = vmatprep.mubr.bf16.mxu0 0
      %12060 = vmatmul.mubr.bf16.gmra.mxu0 %v11818
      %v12061 = vpop.f32.mrf.mxu0
      %v12062 = vadd.f32 %v11718, %v12061
      %v12063 = vpop.f32.mrf.mxu0
      %v12064 = vpop.f32.mrf.mxu0
      %v12065 = vadd.f32 %v11718, %v12064
      %v12066 = vpop.f32.mrf.mxu0
      %12067 = vmatprep.mubr.bf16.mxu0 0
      %12068 = vmatmul.mubr.bf16.gmra.mxu0 %v11819
      %v12069 = vpop.f32.mrf.mxu0
      %v12070 = vadd.f32 %v11718, %v12069
      %v12071 = vpop.f32.mrf.mxu0
      %v12072 = vpop.f32.mrf.mxu0
      %v12073 = vadd.f32 %v11718, %v12072
      %v12074 = vpop.f32.mrf.mxu0
      %12075 = vmatprep.mubr.bf16.mxu0 0
      %12076 = vmatmul.mubr.bf16.gmra.mxu0 %v11820
      %v12077 = vpop.f32.mrf.mxu0
      %v12078 = vadd.f32 %v11718, %v12077
      %v12079 = vpop.f32.mrf.mxu0
      %v12080 = vpop.f32.mrf.mxu0
      %v12081 = vadd.f32 %v11718, %v12080
      %v12082 = vpop.f32.mrf.mxu0
      %12083 = vmatprep.mubr.bf16.mxu0 0
      %12084 = vmatmul.mubr.bf16.gmra.mxu0 %v11821
      %v12085 = vpop.f32.mrf.mxu0
      %v12086 = vadd.f32 %v11718, %v12085
      %v12087 = vpop.f32.mrf.mxu0
      %v12088 = vpop.f32.mrf.mxu0
      %v12089 = vpop.f32.mrf.mxu0
      %12090 = vdwg.mxu0
      %v12091 = vmax.f32 %v11926, 0.0
      %v12092 = vmax.f32 %v11929, 0.0
      %v12093 = vmax.f32 %v11934, 0.0
      %v12094 = vmax.f32 %v11937, 0.0
      %v12095 = vmax.f32 %v11942, 0.0
      %v12096 = vmax.f32 %v11945, 0.0
      %v12097 = vmax.f32 %v11950, 0.0
      %v12098 = vmax.f32 %v11953, 0.0
      %v12099 = vmax.f32 %v11958, 0.0
      %v12100 = vmax.f32 %v11961, 0.0
      %v12101 = vmax.f32 %v11966, 0.0
      %v12102 = vmax.f32 %v11969, 0.0
      %v12103 = vmax.f32 %v11974, 0.0
      %v12104 = vmax.f32 %v11977, 0.0
      %v12105 = vmax.f32 %v11982, 0.0
      %v12106 = vmax.f32 %v11985, 0.0
      %v12107 = vmax.f32 %v11990, 0.0
      %v12108 = vmax.f32 %v11993, 0.0
      %v12109 = vmax.f32 %v11998, 0.0
      %v12110 = vmax.f32 %v12001, 0.0
      %v12111 = vmax.f32 %v12006, 0.0
      %v12112 = vmax.f32 %v12009, 0.0
      %v12113 = vmax.f32 %v12014, 0.0
      %v12114 = vmax.f32 %v12017, 0.0
      %v12115 = vmax.f32 %v12022, 0.0
      %v12116 = vmax.f32 %v12025, 0.0
      %v12117 = vmax.f32 %v12030, 0.0
      %v12118 = vmax.f32 %v12033, 0.0
      %v12119 = vmax.f32 %v12038, 0.0
      %v12120 = vmax.f32 %v12041, 0.0
      %v12121 = vmax.f32 %v12046, 0.0
      %v12122 = vmax.f32 %v12049, 0.0
      %v12123 = vmax.f32 %v12054, 0.0
      %v12124 = vmax.f32 %v12057, 0.0
      %v12125 = vmax.f32 %v12062, 0.0
      %v12126 = vmax.f32 %v12065, 0.0
      %v12127 = vmax.f32 %v12070, 0.0
      %v12128 = vmax.f32 %v12073, 0.0
      %v12129 = vmax.f32 %v12078, 0.0
      %v12130 = vmax.f32 %v12081, 0.0
      %v12131 = vmax.f32 %v12086, 0.0
      %v12132 = vpack.c.bf16 %v12092, %v12091
      %v12133 = vpack.c.bf16 %v12094, %v12093
      %v12134 = vpack.c.bf16 %v12096, %v12095
      %v12135 = vpack.c.bf16 %v12098, %v12097
      %v12136 = vpack.c.bf16 %v12100, %v12099
      %v12137 = vpack.c.bf16 %v12102, %v12101
      %v12138 = vpack.c.bf16 %v12104, %v12103
      %v12139 = vpack.c.bf16 %v12106, %v12105
      %v12140 = vpack.c.bf16 %v12108, %v12107
      %v12141 = vpack.c.bf16 %v12110, %v12109
      %v12142 = vpack.c.bf16 %v12112, %v12111
      %v12143 = vpack.c.bf16 %v12114, %v12113
      %v12144 = vpack.c.bf16 %v12116, %v12115
      %v12145 = vpack.c.bf16 %v12118, %v12117
      %v12146 = vpack.c.bf16 %v12120, %v12119
      %v12147 = vpack.c.bf16 %v12122, %v12121
      %v12148 = vpack.c.bf16 %v12124, %v12123
      %v12149 = vpack.c.bf16 %v12126, %v12125
      %v12150 = vpack.c.bf16 %v12128, %v12127
      %v12151 = vpack.c.bf16 %v12130, %v12129
      %v12152 = vpack.c.bf16 %v12131, %v12131
      %v12174 = vunpack.c.l.b16 %v12132
      %v12175 = vunpack.c.h.b16 %v12132
      %v12176 = vunpack.c.l.b16 %v12133
      %v12177 = vunpack.c.h.b16 %v12133
      %v12178 = vunpack.c.l.b16 %v12134
      %v12179 = vunpack.c.h.b16 %v12134
      %v12180 = vunpack.c.l.b16 %v12135
      %v12181 = vunpack.c.h.b16 %v12135
      %v12182 = vunpack.c.l.b16 %v12136
      %v12183 = vunpack.c.h.b16 %v12136
      %v12184 = vunpack.c.l.b16 %v12137
      %v12185 = vunpack.c.h.b16 %v12137
      %v12186 = vunpack.c.l.b16 %v12138
      %v12187 = vunpack.c.h.b16 %v12138
      %v12188 = vunpack.c.l.b16 %v12139
      %v12189 = vunpack.c.h.b16 %v12139
      %v12190 = vunpack.c.l.b16 %v12140
      %v12191 = vunpack.c.h.b16 %v12140
      %v12192 = vunpack.c.l.b16 %v12141
      %v12193 = vunpack.c.h.b16 %v12141
      %v12194 = vunpack.c.l.b16 %v12142
      %v12195 = vunpack.c.h.b16 %v12142
      %v12196 = vunpack.c.l.b16 %v12143
      %v12197 = vunpack.c.h.b16 %v12143
      %v12198 = vunpack.c.l.b16 %v12144
      %v12199 = vunpack.c.h.b16 %v12144
      %v12200 = vunpack.c.l.b16 %v12145
      %v12201 = vunpack.c.h.b16 %v12145
      %v12202 = vunpack.c.l.b16 %v12146
      %v12203 = vunpack.c.h.b16 %v12146
      %v12204 = vunpack.c.l.b16 %v12147
      %v12205 = vunpack.c.h.b16 %v12147
      %v12206 = vunpack.c.l.b16 %v12148
      %v12207 = vunpack.c.h.b16 %v12148
      %v12208 = vunpack.c.l.b16 %v12149
      %v12209 = vunpack.c.h.b16 %v12149
      %v12210 = vunpack.c.l.b16 %v12150
      %v12211 = vunpack.c.h.b16 %v12150
      %v12212 = vunpack.c.l.b16 %v12151
      %v12213 = vunpack.c.h.b16 %v12151
      %v12214 = vunpack.c.l.b16 %v12152
      %v12215 = vpack.c.b16 %v12174, %v12174
      %v12216 = vpack.c.b16 %v12175, %v12175
      %v12217 = vpack.c.b16 %v12176, %v12176
      %v12218 = vpack.c.b16 %v12177, %v12177
      %v12219 = vpack.c.b16 %v12178, %v12178
      %v12220 = vpack.c.b16 %v12179, %v12179
      %v12221 = vpack.c.b16 %v12180, %v12180
      %v12222 = vpack.c.b16 %v12181, %v12181
      %v12223 = vpack.c.b16 %v12182, %v12182
      %v12224 = vpack.c.b16 %v12183, %v12183
      %v12225 = vpack.c.b16 %v12184, %v12184
      %v12226 = vpack.c.b16 %v12185, %v12185
      %v12227 = vpack.c.b16 %v12186, %v12186
      %v12228 = vpack.c.b16 %v12187, %v12187
      %v12229 = vpack.c.b16 %v12188, %v12188
      %v12230 = vpack.c.b16 %v12189, %v12189
      %v12231 = vpack.c.b16 %v12190, %v12190
      %v12232 = vpack.c.b16 %v12191, %v12191
      %v12233 = vpack.c.b16 %v12192, %v12192
      %v12234 = vpack.c.b16 %v12193, %v12193
      %v12235 = vpack.c.b16 %v12194, %v12194
      %v12236 = vpack.c.b16 %v12195, %v12195
      %v12237 = vpack.c.b16 %v12196, %v12196
      %v12238 = vpack.c.b16 %v12197, %v12197
      %v12239 = vpack.c.b16 %v12198, %v12198
      %v12240 = vpack.c.b16 %v12199, %v12199
      %v12241 = vpack.c.b16 %v12200, %v12200
      %v12242 = vpack.c.b16 %v12201, %v12201
      %v12243 = vpack.c.b16 %v12202, %v12202
      %v12244 = vpack.c.b16 %v12203, %v12203
      %v12245 = vpack.c.b16 %v12204, %v12204
      %v12246 = vpack.c.b16 %v12205, %v12205
      %v12247 = vpack.c.b16 %v12206, %v12206
      %v12248 = vpack.c.b16 %v12207, %v12207
      %v12249 = vpack.c.b16 %v12208, %v12208
      %v12250 = vpack.c.b16 %v12209, %v12209
      %v12251 = vpack.c.b16 %v12210, %v12210
      %v12252 = vpack.c.b16 %v12211, %v12211
      %v12253 = vpack.c.b16 %v12212, %v12212
      %v12254 = vpack.c.b16 %v12213, %v12213
      %v12255 = vpack.c.b16 %v12214, %v12214
      %12297 = vst [vmem:[%s278] sm:$0xf] %v12215
      %12298 = vst [vmem:[%s278 + $0x4] sm:$0xf] %v12216
      %12299 = vst [vmem:[%s278 + $0x8] sm:$0xf] %v12217
      %12300 = vst [vmem:[%s278 + $0xc] sm:$0xf] %v12218
      %12301 = vst [vmem:[%s278 + $0x10] sm:$0xf] %v12219
      %12302 = vst [vmem:[%s278 + $0x14] sm:$0xf] %v12220
      %12303 = vst [vmem:[%s278 + $0x18] sm:$0xf] %v12221
      %12304 = vst [vmem:[%s278 + $0x1c] sm:$0xf] %v12222
      %12305 = vst [vmem:[%s278 + $0x20] sm:$0xf] %v12223
      %12306 = vst [vmem:[%s278 + $0x24] sm:$0xf] %v12224
      %12307 = vst [vmem:[%s278 + $0x28] sm:$0xf] %v12225
      %12308 = vst [vmem:[%s278 + $0x2c] sm:$0xf] %v12226
      %12309 = vst [vmem:[%s278 + $0x30] sm:$0xf] %v12227
      %12310 = vst [vmem:[%s278 + $0x34] sm:$0xf] %v12228
      %12311 = vst [vmem:[%s278 + $0x38] sm:$0xf] %v12229
      %12312 = vst [vmem:[%s278 + $0x3c] sm:$0xf] %v12230
      %12313 = vst [vmem:[%s278 + $0x40] sm:$0xf] %v12231
      %12314 = vst [vmem:[%s278 + $0x44] sm:$0xf] %v12232
      %12315 = vst [vmem:[%s278 + $0x48] sm:$0xf] %v12233
      %12316 = vst [vmem:[%s278 + $0x4c] sm:$0xf] %v12234
      %12317 = vst [vmem:[%s278 + $0x50] sm:$0xf] %v12235
      %12318 = vst [vmem:[%s278 + $0x54] sm:$0xf] %v12236
      %12319 = vst [vmem:[%s278 + $0x58] sm:$0xf] %v12237
      %12320 = vst [vmem:[%s278 + $0x5c] sm:$0xf] %v12238
      %12321 = vst [vmem:[%s278 + $0x60] sm:$0xf] %v12239
      %12322 = vst [vmem:[%s278 + $0x64] sm:$0xf] %v12240
      %12323 = vst [vmem:[%s278 + $0x68] sm:$0xf] %v12241
      %12324 = vst [vmem:[%s278 + $0x6c] sm:$0xf] %v12242
      %12325 = vst [vmem:[%s278 + $0x70] sm:$0xf] %v12243
      %12326 = vst [vmem:[%s278 + $0x74] sm:$0xf] %v12244
      %12327 = vst [vmem:[%s278 + $0x78] sm:$0xf] %v12245
      %12328 = vst [vmem:[%s278 + $0x7c] sm:$0xf] %v12246
      %12329 = vst [vmem:[%s278 + $0x80] sm:$0xf] %v12247
      %12330 = vst [vmem:[%s278 + $0x84] sm:$0xf] %v12248
      %12331 = vst [vmem:[%s278 + $0x88] sm:$0xf] %v12249
      %12332 = vst [vmem:[%s278 + $0x8c] sm:$0xf] %v12250
      %12333 = vst [vmem:[%s278 + $0x90] sm:$0xf] %v12251
      %12334 = vst [vmem:[%s278 + $0x94] sm:$0xf] %v12252
      %12335 = vst [vmem:[%s278 + $0x98] sm:$0xf] %v12253
      %12336 = vst [vmem:[%s278 + $0x9c] sm:$0xf] %v12254
      %12337 = vst [vmem:[%s278 + $0xa0] sm:$0x3] %v12255
      %p12338 = scmp.lt.s32.totalorder %s18, 1
      %s12339 = scalar_select %p12338, %s18, 1
      %s12340 = smul.addr %s12339, 41
      %s12341 = smul.addr %s12340, 4
      %s12342 = scalar_lea.vmem %s7, %s12341
      // Predicated region
      $region49: #{tpu_custom_call.1} parent=47 // pred_check
        %p12343 = pneg %p188
      $region50: #{tpu_custom_call.1} parent=47 // pred_check_branch
        %12345 = sbr.rel (%p12343) target = $region52
      $region51: #{tpu_custom_call.1} parent=47 // pred_region
        _
      $region52: #{tpu_custom_call.1} parent=47 // pred_fallthru
        _
    $region48: #{tpu_custom_call.1} parent=5 // pred_fallthru
      _
    %p12346 = scmp.le.s32.totalorder 2, %s13
    // Predicated region
    $region53: #{tpu_custom_call.1} parent=5 // pred_check
      %p12347 = pneg %p12346
    $region54: #{tpu_custom_call.1} parent=5 // pred_check_branch
      %12349 = sbr.rel (%p12347) target = $region56
    $region55: #{tpu_custom_call.1} parent=5 // pred_region
      %s12350 = ssub.s32 %s13, 2
      // Predicated region
      $region57: #{tpu_custom_call.1} parent=55 // pred_check
        %p12351 = pneg %p194
      $region58: #{tpu_custom_call.1} parent=55 // pred_check_branch
        %12353 = sbr.rel (%p12351) target = $region60
      $region59: #{tpu_custom_call.1} parent=55 // pred_region
        %p12354 = scmp.lt.s32.totalorder %s19, 1
        %s12355 = scalar_select %p12354, %s19, 1
        %s12356 = smul.addr %s12355, 41
        %s12357 = smul.addr %s12356, 4
        %s12358 = scalar_lea.vmem %s7, %s12357
      $region60: #{tpu_custom_call.1} parent=55 // pred_fallthru
        _
    $region56: #{tpu_custom_call.1} parent=5 // pred_fallthru
      _
  $region6: #{tpu_custom_call.1} parent=0 // loop_footer
    %s17 = sadd.s32 1, %s13
  $region7: #{tpu_custom_call.1} parent=0 // loop_footer_branch
    %12 = sbr.rel target = $region3
  $region8: #{tpu_custom_call.1} parent=0 // loop_exit
    _

</llo_original>
